<compile_context>
chip_gen: v5e
topology: v5e:2x2
jax: 0.10.0
libtpu: 0.0.40
codegen_flags: <defaults>
</compile_context>

<pallas_src>
import functools

import jax
import jax.numpy as jnp
from jax.experimental import pallas as pl
from jax.experimental.pallas import tpu as pltpu


def _round_up(x, m):
    return (x + m - 1) // m * m


def _vmem_limit_bytes():
    """Per-generation VMEM budget: ~80% of physical per-core VMEM
    (≈51 MiB on v7x, ≈102 MiB on v5e/v6e), leaving headroom for Mosaic
    internal scratch / spills."""
    try:
        phys = pltpu.get_tpu_info().vmem_capacity_bytes
    except Exception:
        phys = 64 * 1024 * 1024  # conservative (v7x-sized) fallback
    return int(phys) * 4 // 5


def _ffn_resident_kernel(x_ref, w1_ref, b1_ref, w2_ref, b2_ref, o_ref):
    """Weight-resident path. Grid = (token tiles,). W1/W2/b1/b2 have constant
    block indices so they are DMA'd into VMEM once and reused by every tile."""
    x = x_ref[...].astype(jnp.bfloat16)                 # cast per tile (free under MXU)
    h = jnp.dot(x, w1_ref[...], preferred_element_type=jnp.float32)
    h = jnp.maximum(h + b1_ref[...], 0.0)               # bias + ReLU in fp32 (VPU)
    # Dropout (eval mode) -> identity.
    out = jnp.dot(h.astype(jnp.bfloat16), w2_ref[...],
                  preferred_element_type=jnp.float32)
    o_ref[...] = (out + b2_ref[...]).astype(o_ref.dtype)


def _ffn_streamed_kernel(x_ref, w1_ref, b1_ref, w2_ref, b2_ref, o_ref):
    """Streamed fallback. Grid = (token tiles, d_ff tiles); the fp32 output
    block is resident across the d_ff axis and used directly as accumulator."""
    k = pl.program_id(1)
    x = x_ref[...].astype(jnp.bfloat16)
    h = jnp.dot(x, w1_ref[...], preferred_element_type=jnp.float32)
    h = jnp.maximum(h + b1_ref[...], 0.0)
    # Dropout (eval mode) -> identity.
    contrib = jnp.dot(h.astype(jnp.bfloat16), w2_ref[...],
                      preferred_element_type=jnp.float32)

    @pl.when(k == 0)
    def _():
        o_ref[...] = contrib

    @pl.when(k > 0)
    def _():
        o_ref[...] += contrib

    @pl.when(k == pl.num_programs(1) - 1)
    def _():
        o_ref[...] += b2_ref[...]


def prepare_ffn_params(w1, b1, w2, b2):
    """One-time setup: pad d_ff to a multiple of 512 (zero columns contribute
    exactly 0) and store weights in bf16. Doing this once removes the per-call
    HBM astype/pad passes over the weights from the forward path."""
    d_model = w1.shape[0]
    d_ff = w1.shape[1]
    Fp = _round_up(d_ff, 512)
    if Fp != d_ff:
        w1 = jnp.pad(w1, ((0, 0), (0, Fp - d_ff)))
        b1 = jnp.pad(b1, ((0, Fp - d_ff),))
        w2 = jnp.pad(w2, ((0, Fp - d_ff), (0, 0)))
    return (w1.astype(jnp.bfloat16),
            b1.reshape(1, Fp).astype(jnp.float32),
            w2.astype(jnp.bfloat16),
            b2.reshape(1, d_model).astype(jnp.float32))


@functools.partial(jax.jit, static_argnames=("tile_n", "tile_ff"))
def feed_forward(x, w1, b1, w2, b2, *, tile_n=512, tile_ff=1024):
    """x: [B, S, d_model] (fp32/bf16) -> [B, S, d_model]. Weights must come
    from prepare_ffn_params (bf16, d_ff padded to a multiple of 512)."""
    B, S, d_model = x.shape
    Fp = w1.shape[1]
    N = B * S
    out_bytes = jnp.dtype(x.dtype).itemsize

    vmem_limit = _vmem_limit_bytes()
    budget = int(vmem_limit * 0.9)

    # Token tile: multiple of 16 (bf16 sublane packing), capped at tile_n.
    tn = min(_round_up(tile_n, 16), _round_up(N, 16))

    # ---- decide resident vs. streamed (trace-time, shape-based) -------------
    def resident_bytes(tn_):
        w = 2 * 2 * (2 * d_model * Fp)                       # W1+W2 bf16 (2 bufs, conservative)
        xo = 2 * tn_ * d_model * 4 + 2 * tn_ * d_model * out_bytes
        h = tn_ * Fp * (4 + 2)                               # fp32 + bf16 intermediates
        return w + xo + h + 4 * (Fp + d_model)

    use_resident = False
    tn_res = tn
    while True:
        if resident_bytes(tn_res) <= budget:
            use_resident = True
            break
        if tn_res <= 256:
            break
        tn_res = max(256, tn_res // 2)

    x2d = x.reshape(N, d_model)

    if use_resident:
        tn = tn_res
        Np = _round_up(N, tn)
        if Np != N:
            x2d = jnp.pad(x2d, ((0, Np - N), (0, 0)))

        flops = 4 * Np * d_model * Fp
        bytes_accessed = (Np * d_model * out_bytes * 2       # x in + out
                          + 2 * d_model * Fp * 2             # W1 + W2 read once
                          + 4 * (Fp + d_model))              # biases

        out = pl.pallas_call(
            _ffn_resident_kernel,
            out_shape=jax.ShapeDtypeStruct((Np, d_model), x.dtype),
            grid_spec=pltpu.PrefetchScalarGridSpec(
                num_scalar_prefetch=0,
                grid=(Np // tn,),
                in_specs=[
                    pl.BlockSpec((tn, d_model), lambda i: (i, 0)),   # x tile
                    pl.BlockSpec((d_model, Fp), lambda i: (0, 0)),   # W1 (resident)
                    pl.BlockSpec((1, Fp), lambda i: (0, 0)),         # b1 (resident)
                    pl.BlockSpec((Fp, d_model), lambda i: (0, 0)),   # W2 (resident)
                    pl.BlockSpec((1, d_model), lambda i: (0, 0)),    # b2 (resident)
                ],
                out_specs=pl.BlockSpec((tn, d_model), lambda i: (i, 0)),
            ),
            compiler_params=pltpu.CompilerParams(
                dimension_semantics=("parallel",),
                vmem_limit_bytes=vmem_limit,
            ),
            cost_estimate=pl.CostEstimate(
                flops=flops, transcendentals=0, bytes_accessed=bytes_accessed),
        )(x2d, w1, b1, w2, b2)

        if Np != N:
            out = out[:N]
        return out.reshape(B, S, d_model)

    # ---- streamed fallback (weights too large for VMEM residence) -----------
    tf = min(tile_ff, Fp)
    while Fp % tf:
        tf //= 2

    def streamed_bytes(tn_, tf_):
        x_buf = 2 * tn_ * d_model * 4
        w_buf = 2 * 2 * (2 * d_model * tf_)                  # W1 + W2 tiles, double-buffered
        o_buf = 2 * tn_ * d_model * 4
        h = tn_ * tf_ * (4 + 2)
        return x_buf + w_buf + o_buf + h + 4 * (tf_ + d_model)

    while streamed_bytes(tn, tf) > budget and (tn > 256 or tf > 512):
        if tf > 512:
            tf //= 2
        else:
            tn = max(256, tn // 2)

    Np = _round_up(N, tn)
    if Np != N:
        x2d = jnp.pad(x2d, ((0, Np - N), (0, 0)))
    n_token_tiles = Np // tn

    flops = 4 * Np * d_model * Fp
    bytes_accessed = (Np * d_model * out_bytes                       # x read once
                      + n_token_tiles * 2 * d_model * Fp * 2         # weights re-streamed
                      + n_token_tiles * 4 * (Fp + d_model)           # biases re-streamed
                      + Np * d_model * 4)                            # fp32 output

    out = pl.pallas_call(
        _ffn_streamed_kernel,
        out_shape=jax.ShapeDtypeStruct((Np, d_model), jnp.float32),
        grid_spec=pltpu.PrefetchScalarGridSpec(
            num_scalar_prefetch=0,
            grid=(n_token_tiles, Fp // tf),
            in_specs=[
                pl.BlockSpec((tn, d_model), lambda i, k: (i, 0)),    # x tile
                pl.BlockSpec((d_model, tf), lambda i, k: (0, k)),    # W1 tile
                pl.BlockSpec((1, tf), lambda i, k: (0, k)),          # b1 tile
                pl.BlockSpec((tf, d_model), lambda i, k: (k, 0)),    # W2 tile
                pl.BlockSpec((1, d_model), lambda i, k: (0, 0)),     # b2
            ],
            out_specs=pl.BlockSpec((tn, d_model), lambda i, k: (i, 0)),
        ),
        compiler_params=pltpu.CompilerParams(
            dimension_semantics=("parallel", "arbitrary"),
            vmem_limit_bytes=vmem_limit,
        ),
        cost_estimate=pl.CostEstimate(
            flops=flops, transcendentals=0, bytes_accessed=bytes_accessed),
    )(x2d, w1, b1, w2, b2)

    out = out.astype(x.dtype)
    if Np != N:
        out = out[:N]
    return out.reshape(B, S, d_model)


if __name__ == "__main__":
    # Small shapes consistent with the module: d_model=512, d_ff=2048.
    B, S = 2, 8
    dm, dff = 512, 2048

    key = jax.random.PRNGKey(0)
    kx, k1, k2, k3, k4 = jax.random.split(key, 5)

    x = jax.random.normal(kx, (B, S, dm), dtype=jnp.float32)
    # Synthetic parameters with nn.Linear-compatible shapes, stored as [in, out].
    w1 = jax.random.normal(k1, (dm, dff), dtype=jnp.float32) * 0.02
    b1 = jax.random.normal(k2, (dff,), dtype=jnp.float32) * 0.02
    w2 = jax.random.normal(k3, (dff, dm), dtype=jnp.float32) * 0.02
    b2 = jax.random.normal(k4, (dm,), dtype=jnp.float32) * 0.02

    # One-time weight prep (bf16 + padding) — not part of the per-call path.
    params = prepare_ffn_params(w1, b1, w2, b2)
    params = tuple(jax.block_until_ready(p) for p in params)

    out = feed_forward(x, *params)
    out = jax.block_until_ready(out)

    # Pure-JAX fp32 reference (dropout in eval mode = identity). The kernel
    # feeds the MXU in bf16, so compare with bf16-appropriate tolerance.
    ref = jnp.maximum(x @ w1 + b1, 0.0) @ w2 + b2
    assert out.shape == (B, S, dm)
    assert jnp.allclose(out, ref, atol=2e-2, rtol=2e-2), "mismatch vs reference"

    print("KERNEL_OK")
</pallas_src>

<mosaic_0001>
module attributes {stable_mosaic.version = 11 : i64} {
  func.func @_ffn_resident_kernel(%arg0: i32, %arg1: memref<16x512xf32, #tpu.memory_space<vmem>>, %arg2: memref<512x2048xbf16, #tpu.memory_space<vmem>>, %arg3: memref<1x2048xf32, #tpu.memory_space<vmem>>, %arg4: memref<2048x512xbf16, #tpu.memory_space<vmem>>, %arg5: memref<1x512xf32, #tpu.memory_space<vmem>>, %arg6: memref<16x512xf32, #tpu.memory_space<vmem>>) attributes {dimension_semantics = [#tpu.dimension_semantics<parallel>], iteration_bounds = array<i64: 1>, scalar_prefetch = 0 : i64, scratch_operands = 0 : i64, tpu.core_type = #tpu.core_type<tc>, window_params = [{transform_indices = @transform_0, window_bounds = array<i64: 16, 512>}, {pipeline_mode = #tpu.pipeline_mode<synchronous>, transform_indices = @transform_1, window_bounds = array<i64: 512, 2048>}, {pipeline_mode = #tpu.pipeline_mode<synchronous>, transform_indices = @transform_2, window_bounds = array<i64: 1, 2048>}, {pipeline_mode = #tpu.pipeline_mode<synchronous>, transform_indices = @transform_3, window_bounds = array<i64: 2048, 512>}, {pipeline_mode = #tpu.pipeline_mode<synchronous>, transform_indices = @transform_4, window_bounds = array<i64: 1, 512>}, {transform_indices = @transform_5, window_bounds = array<i64: 16, 512>}]} {
    %c0 = arith.constant 0 : index
    %c0_0 = arith.constant 0 : index
    %0 = vector.load %arg1[%c0, %c0_0] : memref<16x512xf32, #tpu.memory_space<vmem>>, vector<16x512xf32>
    %1 = arith.truncf %0 : vector<16x512xf32> to vector<16x512xbf16>
    %c0_1 = arith.constant 0 : index
    %c0_2 = arith.constant 0 : index
    %2 = vector.load %arg2[%c0_1, %c0_2] : memref<512x2048xbf16, #tpu.memory_space<vmem>>, vector<512x2048xbf16>
    %cst = arith.constant dense<0.000000e+00> : vector<16x2048xf32>
    %3 = tpu.matmul %1, %2, %cst {dimension_numbers = #tpu.dot_dimension_numbers<[1], [0], [0], [1], [0, 0, 1, 1], [], []>} : vector<16x512xbf16>, vector<512x2048xbf16>, vector<16x2048xf32> -> vector<16x2048xf32>
    %c0_3 = arith.constant 0 : index
    %c0_4 = arith.constant 0 : index
    %4 = vector.load %arg3[%c0_3, %c0_4] : memref<1x2048xf32, #tpu.memory_space<vmem>>, vector<1x2048xf32>
    %5 = vector.broadcast %4 : vector<1x2048xf32> to vector<16x2048xf32>
    %6 = arith.addf %3, %5 : vector<16x2048xf32>
    %cst_5 = arith.constant 0.000000e+00 : f32
    %7 = vector.broadcast %cst_5 : f32 to vector<16x2048xf32>
    %8 = arith.maximumf %6, %7 : vector<16x2048xf32>
    %9 = arith.truncf %8 : vector<16x2048xf32> to vector<16x2048xbf16>
    %c0_6 = arith.constant 0 : index
    %c0_7 = arith.constant 0 : index
    %10 = vector.load %arg4[%c0_6, %c0_7] : memref<2048x512xbf16, #tpu.memory_space<vmem>>, vector<2048x512xbf16>
    %cst_8 = arith.constant dense<0.000000e+00> : vector<16x512xf32>
    %11 = tpu.matmul %9, %10, %cst_8 {dimension_numbers = #tpu.dot_dimension_numbers<[1], [0], [0], [1], [0, 0, 1, 1], [], []>} : vector<16x2048xbf16>, vector<2048x512xbf16>, vector<16x512xf32> -> vector<16x512xf32>
    %c0_9 = arith.constant 0 : index
    %c0_10 = arith.constant 0 : index
    %12 = vector.load %arg5[%c0_9, %c0_10] : memref<1x512xf32, #tpu.memory_space<vmem>>, vector<1x512xf32>
    %13 = vector.broadcast %12 : vector<1x512xf32> to vector<16x512xf32>
    %14 = arith.addf %11, %13 : vector<16x512xf32>
    %c0_11 = arith.constant 0 : index
    %c0_12 = arith.constant 0 : index
    %15 = vector.load %arg6[%c0_11, %c0_12] : memref<16x512xf32, #tpu.memory_space<vmem>>, vector<16x512xf32>
    tpu.vector_store %arg6[%c0_11, %c0_12], %14 {strides = array<i32>} : memref<16x512xf32, #tpu.memory_space<vmem>>, vector<16x512xf32>,
    return
  }
  func.func @transform_0(%arg0: i32) -> (i32, i32) {
    %c0_i32 = arith.constant 0 : i32
    %c0_i32_0 = arith.constant 0 : i32
    return %arg0, %c0_i32 : i32, i32
  }
  func.func @transform_1(%arg0: i32) -> (i32, i32) {
    %c0_i32 = arith.constant 0 : i32
    %c0_i32_0 = arith.constant 0 : i32
    %c0_i32_1 = arith.constant 0 : i32
    return %c0_i32, %c0_i32_0 : i32, i32
  }
  func.func @transform_2(%arg0: i32) -> (i32, i32) {
    %c0_i32 = arith.constant 0 : i32
    %c0_i32_0 = arith.constant 0 : i32
    %c0_i32_1 = arith.constant 0 : i32
    return %c0_i32, %c0_i32_0 : i32, i32
  }
  func.func @transform_3(%arg0: i32) -> (i32, i32) {
    %c0_i32 = arith.constant 0 : i32
    %c0_i32_0 = arith.constant 0 : i32
    %c0_i32_1 = arith.constant 0 : i32
    return %c0_i32, %c0_i32_0 : i32, i32
  }
  func.func @transform_4(%arg0: i32) -> (i32, i32) {
    %c0_i32 = arith.constant 0 : i32
    %c0_i32_0 = arith.constant 0 : i32
    %c0_i32_1 = arith.constant 0 : i32
    return %c0_i32, %c0_i32_0 : i32, i32
  }
  func.func @transform_5(%arg0: i32) -> (i32, i32) {
    %c0_i32 = arith.constant 0 : i32
    %c0_i32_0 = arith.constant 0 : i32
    return %arg0, %c0_i32 : i32, i32
  }
}

</mosaic_0001>

<llo_original>
// kernel: feed_forward.1
$region0: #{feed_forward.1}
  #allocation0 [shape = 'u32[]', space=smem, size = 0x4, offset = 0x4, fixed_abs, tag = 'smem constant byte address 0x4 - core index']
  #allocation1 [shape = 'u32[72,128]{1,0:T(1,128)}', space=vmem, size = 0x9000, scoped, tag = 'internal scratch']
  %s0 = inlined_call_operand.hbm [shape: f32[16,512], index: 0, kind: input, shape index: {}]
  %s1 = inlined_call_operand.hbm [shape: bf16[512,2048], index: 1, kind: input, shape index: {}]
  %s2 = inlined_call_operand.hbm [shape: f32[1,2048], index: 2, kind: input, shape index: {}]
  %s3 = inlined_call_operand.hbm [shape: bf16[2048,512], index: 3, kind: input, shape index: {}]
  %s4 = inlined_call_operand.hbm [shape: f32[1,512], index: 4, kind: input, shape index: {}]
  %s5 = inlined_call_operand.hbm [shape: f32[16,512], index: 5, kind: output, shape index: {}]
  %s6 = sld [smem:[#allocation0]]
  $region50: #{feed_forward.1} parent=0
    _
  %s8 = ssub.s32 1, %s6
  %s9 = scalar_select 0, %s8, %s6
  $region1: #{feed_forward.1} parent=0
    #allocation2 [shape = 'u8[32768]{0}', space=vmem, size = 0x8000, scoped, tag = 'input window, operand 0, single buffered']
    #allocation3 [shape = 's32[1]{0}', space=sflag, size = 0x4, scoped, tag = 'scoped memory for feed_forward.1']
    #allocation4 [shape = 's32[1]{0}', space=sflag, size = 0x4, scoped, tag = 'scoped memory for feed_forward.1']
    #allocation5 [shape = 'u8[2097152]{0}', space=vmem, size = 0x200000, scoped, tag = 'input window, operand 1, single buffered']
    #allocation6 [shape = 's32[1]{0}', space=sflag, size = 0x4, scoped, tag = 'scoped memory for feed_forward.1']
    #allocation7 [shape = 'u8[8192]{0}', space=vmem, size = 0x2000, scoped, tag = 'input window, operand 2, single buffered']
    #allocation8 [shape = 'u8[2097152]{0}', space=vmem, size = 0x200000, scoped, tag = 'input window, operand 3, single buffered']
    #allocation9 [shape = 's32[1]{0}', space=sflag, size = 0x4, scoped, tag = 'scoped memory for feed_forward.1']
    #allocation10 [shape = 'u8[2048]{0}', space=vmem, size = 0x800, scoped, tag = 'input window, operand 4, single buffered']
    #allocation11 [shape = 'u8[32768]{0}', space=vmem, size = 0x8000, scoped, tag = 'output window, operand 0, single buffered']
    %10 = vsyncpa [#allocation3], 0
    %11 = vsyncpa [#allocation6], 0
    %12 = vsyncpa [#allocation9], 0
    %13 = vsyncpa [#allocation4], 0
    // Predicated region
    $region2: #{feed_forward.1} parent=1 // pred_check
      _
    $region3: #{feed_forward.1} parent=1 // pred_check_branch
      %15 = sbr.rel (0) target = $region5
    $region4: #{feed_forward.1} parent=1 // pred_region
      %17 = vsyncadd [#allocation3], 0
      %s18 = sshll.u32 %s0, 4
      %s19 = int_to_ptr.hbm [resolvable:$true] %s18
      %s20 = sshll.u32 [#allocation2], 4
      %s21 = int_to_ptr.vmem [resolvable:$true] %s20
      %26 = dma.hbm_to_vmem [thread:$0]  %s19, 1024, %s21, [#allocation3], 512, 512, 32
    $region5: #{feed_forward.1} parent=1 // pred_fallthru
      _
    // Predicated region
    $region6: #{feed_forward.1} parent=1 // pred_check
      _
    $region7: #{feed_forward.1} parent=1 // pred_check_branch
      %28 = sbr.rel (0) target = $region9
    $region8: #{feed_forward.1} parent=1 // pred_region
      %30 = vsyncadd [#allocation6], 0
      %s31 = sshll.u32 %s1, 4
      %s32 = int_to_ptr.hbm [resolvable:$true] %s31
      %s33 = sshll.u32 [#allocation5], 4
      %s34 = int_to_ptr.vmem [resolvable:$true] %s33
      %39 = dma.hbm_to_vmem [thread:$0]  %s32, 65536, %s34, [#allocation6], 1024, 1024, 64
    $region9: #{feed_forward.1} parent=1 // pred_fallthru
      _
    // Predicated region
    $region10: #{feed_forward.1} parent=1 // pred_check
      _
    $region11: #{feed_forward.1} parent=1 // pred_check_branch
      %41 = sbr.rel (0) target = $region13
    $region12: #{feed_forward.1} parent=1 // pred_region
      %43 = vsyncadd [#allocation6], 0
      %s45 = sshll.u32 %s2, 4
      %s46 = int_to_ptr.hbm [resolvable:$true] %s45
      %s47 = sshll.u32 [#allocation7], 4
      %s48 = int_to_ptr.vmem [resolvable:$true] %s47
      %50 = dma.hbm_to_vmem [thread:$0]  %s46, 256, %s48, [#allocation6]
    $region13: #{feed_forward.1} parent=1 // pred_fallthru
      _
    // Predicated region
    $region14: #{feed_forward.1} parent=1 // pred_check
      _
    $region15: #{feed_forward.1} parent=1 // pred_check_branch
      %52 = sbr.rel (0) target = $region17
    $region16: #{feed_forward.1} parent=1 // pred_region
      %54 = vsyncadd [#allocation9], 0
      %s55 = sshll.u32 %s3, 4
      %s56 = int_to_ptr.hbm [resolvable:$true] %s55
      %s57 = sshll.u32 [#allocation8], 4
      %s58 = int_to_ptr.vmem [resolvable:$true] %s57
      %63 = dma.hbm_to_vmem [thread:$0]  %s56, 65536, %s58, [#allocation9], 256, 256, 16
    $region17: #{feed_forward.1} parent=1 // pred_fallthru
      _
    // Predicated region
    $region18: #{feed_forward.1} parent=1 // pred_check
      _
    $region19: #{feed_forward.1} parent=1 // pred_check_branch
      %65 = sbr.rel (0) target = $region21
    $region20: #{feed_forward.1} parent=1 // pred_region
      %67 = vsyncadd [#allocation9], 0
      %s69 = sshll.u32 %s4, 4
      %s70 = int_to_ptr.hbm [resolvable:$true] %s69
      %s71 = sshll.u32 [#allocation10], 4
      %s72 = int_to_ptr.vmem [resolvable:$true] %s71
      %74 = dma.hbm_to_vmem [thread:$0]  %s70, 64, %s72, [#allocation9]
    $region21: #{feed_forward.1} parent=1 // pred_fallthru
      _
    // Predicated region
    $region22: #{feed_forward.1} parent=1 // pred_check
      _
    $region23: #{feed_forward.1} parent=1 // pred_check_branch
      %76 = sbr.rel (0) target = $region25
    $region24: #{feed_forward.1} parent=1 // pred_region
      %78 = dma.done [#allocation3], 1024
    $region25: #{feed_forward.1} parent=1 // pred_fallthru
      _
    // Predicated region
    $region26: #{feed_forward.1} parent=1 // pred_check
      _
    $region27: #{feed_forward.1} parent=1 // pred_check_branch
      %80 = sbr.rel (0) target = $region29
    $region28: #{feed_forward.1} parent=1 // pred_region
      %82 = dma.done [#allocation6], 65536
    $region29: #{feed_forward.1} parent=1 // pred_fallthru
      _
    // Predicated region
    $region30: #{feed_forward.1} parent=1 // pred_check
      _
    $region31: #{feed_forward.1} parent=1 // pred_check_branch
      %84 = sbr.rel (0) target = $region33
    $region32: #{feed_forward.1} parent=1 // pred_region
      %86 = dma.done [#allocation6], 256
    $region33: #{feed_forward.1} parent=1 // pred_fallthru
      _
    // Predicated region
    $region34: #{feed_forward.1} parent=1 // pred_check
      _
    $region35: #{feed_forward.1} parent=1 // pred_check_branch
      %88 = sbr.rel (0) target = $region37
    $region36: #{feed_forward.1} parent=1 // pred_region
      %90 = dma.done [#allocation9], 65536
    $region37: #{feed_forward.1} parent=1 // pred_fallthru
      _
    // Predicated region
    $region38: #{feed_forward.1} parent=1 // pred_check
      _
    $region39: #{feed_forward.1} parent=1 // pred_check_branch
      %92 = sbr.rel (0) target = $region41
    $region40: #{feed_forward.1} parent=1 // pred_region
      %94 = dma.done [#allocation9], 64
    $region41: #{feed_forward.1} parent=1 // pred_fallthru
      _
    %v95 = vld [vmem:[#allocation2] sm:$0xff]
    %v96 = vld [vmem:[#allocation2 + $0x8] sm:$0xff]
    %v97 = vld [vmem:[#allocation2 + $0x10] sm:$0xff]
    %v98 = vld [vmem:[#allocation2 + $0x18] sm:$0xff]
    %v99 = vld [vmem:[#allocation2 + $0x20] sm:$0xff]
    %v100 = vld [vmem:[#allocation2 + $0x28] sm:$0xff]
    %v101 = vld [vmem:[#allocation2 + $0x30] sm:$0xff]
    %v102 = vld [vmem:[#allocation2 + $0x38] sm:$0xff]
    %v103 = vpack.c.bf16 %v99, %v95
    %v104 = vpack.c.bf16 %v100, %v96
    %v105 = vpack.c.bf16 %v101, %v97
    %v106 = vpack.c.bf16 %v102, %v98
    %v107 = vld [vmem:[#allocation5] sm:$0xff]
    %v108 = vld [vmem:[#allocation5 + $0x8] sm:$0xff]
    %v109 = vld [vmem:[#allocation5 + $0x10] sm:$0xff]
    %v110 = vld [vmem:[#allocation5 + $0x18] sm:$0xff]
    %v111 = vld [vmem:[#allocation5 + $0x20] sm:$0xff]
    %v112 = vld [vmem:[#allocation5 + $0x28] sm:$0xff]
    %v113 = vld [vmem:[#allocation5 + $0x30] sm:$0xff]
    %v114 = vld [vmem:[#allocation5 + $0x38] sm:$0xff]
    %v115 = vld [vmem:[#allocation5 + $0x40] sm:$0xff]
    %v116 = vld [vmem:[#allocation5 + $0x48] sm:$0xff]
    %v117 = vld [vmem:[#allocation5 + $0x50] sm:$0xff]
    %v118 = vld [vmem:[#allocation5 + $0x58] sm:$0xff]
    %v119 = vld [vmem:[#allocation5 + $0x60] sm:$0xff]
    %v120 = vld [vmem:[#allocation5 + $0x68] sm:$0xff]
    %v121 = vld [vmem:[#allocation5 + $0x70] sm:$0xff]
    %v122 = vld [vmem:[#allocation5 + $0x78] sm:$0xff]
    %v123 = vld [vmem:[#allocation5 + $0x80] sm:$0xff]
    %v124 = vld [vmem:[#allocation5 + $0x88] sm:$0xff]
    %v125 = vld [vmem:[#allocation5 + $0x90] sm:$0xff]
    %v126 = vld [vmem:[#allocation5 + $0x98] sm:$0xff]
    %v127 = vld [vmem:[#allocation5 + $0xa0] sm:$0xff]
    %v128 = vld [vmem:[#allocation5 + $0xa8] sm:$0xff]
    %v129 = vld [vmem:[#allocation5 + $0xb0] sm:$0xff]
    %v130 = vld [vmem:[#allocation5 + $0xb8] sm:$0xff]
    %v131 = vld [vmem:[#allocation5 + $0xc0] sm:$0xff]
    %v132 = vld [vmem:[#allocation5 + $0xc8] sm:$0xff]
    %v133 = vld [vmem:[#allocation5 + $0xd0] sm:$0xff]
    %v134 = vld [vmem:[#allocation5 + $0xd8] sm:$0xff]
    %v135 = vld [vmem:[#allocation5 + $0xe0] sm:$0xff]
    %v136 = vld [vmem:[#allocation5 + $0xe8] sm:$0xff]
    %v137 = vld [vmem:[#allocation5 + $0xf0] sm:$0xff]
    %v138 = vld [vmem:[#allocation5 + $0xf8] sm:$0xff]
    %v139 = vld [vmem:[#allocation5 + $0x100] sm:$0xff]
    %v140 = vld [vmem:[#allocation5 + $0x108] sm:$0xff]
    %v141 = vld [vmem:[#allocation5 + $0x110] sm:$0xff]
    %v142 = vld [vmem:[#allocation5 + $0x118] sm:$0xff]
    %v143 = vld [vmem:[#allocation5 + $0x120] sm:$0xff]
    %v144 = vld [vmem:[#allocation5 + $0x128] sm:$0xff]
    %v145 = vld [vmem:[#allocation5 + $0x130] sm:$0xff]
    %v146 = vld [vmem:[#allocation5 + $0x138] sm:$0xff]
    %v147 = vld [vmem:[#allocation5 + $0x140] sm:$0xff]
    %v148 = vld [vmem:[#allocation5 + $0x148] sm:$0xff]
    %v149 = vld [vmem:[#allocation5 + $0x150] sm:$0xff]
    %v150 = vld [vmem:[#allocation5 + $0x158] sm:$0xff]
    %v151 = vld [vmem:[#allocation5 + $0x160] sm:$0xff]
    %v152 = vld [vmem:[#allocation5 + $0x168] sm:$0xff]
    %v153 = vld [vmem:[#allocation5 + $0x170] sm:$0xff]
    %v154 = vld [vmem:[#allocation5 + $0x178] sm:$0xff]
    %v155 = vld [vmem:[#allocation5 + $0x180] sm:$0xff]
    %v156 = vld [vmem:[#allocation5 + $0x188] sm:$0xff]
    %v157 = vld [vmem:[#allocation5 + $0x190] sm:$0xff]
    %v158 = vld [vmem:[#allocation5 + $0x198] sm:$0xff]
    %v159 = vld [vmem:[#allocation5 + $0x1a0] sm:$0xff]
    %v160 = vld [vmem:[#allocation5 + $0x1a8] sm:$0xff]
    %v161 = vld [vmem:[#allocation5 + $0x1b0] sm:$0xff]
    %v162 = vld [vmem:[#allocation5 + $0x1b8] sm:$0xff]
    %v163 = vld [vmem:[#allocation5 + $0x1c0] sm:$0xff]
    %v164 = vld [vmem:[#allocation5 + $0x1c8] sm:$0xff]
    %v165 = vld [vmem:[#allocation5 + $0x1d0] sm:$0xff]
    %v166 = vld [vmem:[#allocation5 + $0x1d8] sm:$0xff]
    %v167 = vld [vmem:[#allocation5 + $0x1e0] sm:$0xff]
    %v168 = vld [vmem:[#allocation5 + $0x1e8] sm:$0xff]
    %v169 = vld [vmem:[#allocation5 + $0x1f0] sm:$0xff]
    %v170 = vld [vmem:[#allocation5 + $0x1f8] sm:$0xff]
    %v171 = vld [vmem:[#allocation5 + $0x200] sm:$0xff]
    %v172 = vld [vmem:[#allocation5 + $0x208] sm:$0xff]
    %v173 = vld [vmem:[#allocation5 + $0x210] sm:$0xff]
    %v174 = vld [vmem:[#allocation5 + $0x218] sm:$0xff]
    %v175 = vld [vmem:[#allocation5 + $0x220] sm:$0xff]
    %v176 = vld [vmem:[#allocation5 + $0x228] sm:$0xff]
    %v177 = vld [vmem:[#allocation5 + $0x230] sm:$0xff]
    %v178 = vld [vmem:[#allocation5 + $0x238] sm:$0xff]
    %v179 = vld [vmem:[#allocation5 + $0x240] sm:$0xff]
    %v180 = vld [vmem:[#allocation5 + $0x248] sm:$0xff]
    %v181 = vld [vmem:[#allocation5 + $0x250] sm:$0xff]
    %v182 = vld [vmem:[#allocation5 + $0x258] sm:$0xff]
    %v183 = vld [vmem:[#allocation5 + $0x260] sm:$0xff]
    %v184 = vld [vmem:[#allocation5 + $0x268] sm:$0xff]
    %v185 = vld [vmem:[#allocation5 + $0x270] sm:$0xff]
    %v186 = vld [vmem:[#allocation5 + $0x278] sm:$0xff]
    %v187 = vld [vmem:[#allocation5 + $0x280] sm:$0xff]
    %v188 = vld [vmem:[#allocation5 + $0x288] sm:$0xff]
    %v189 = vld [vmem:[#allocation5 + $0x290] sm:$0xff]
    %v190 = vld [vmem:[#allocation5 + $0x298] sm:$0xff]
    %v191 = vld [vmem:[#allocation5 + $0x2a0] sm:$0xff]
    %v192 = vld [vmem:[#allocation5 + $0x2a8] sm:$0xff]
    %v193 = vld [vmem:[#allocation5 + $0x2b0] sm:$0xff]
    %v194 = vld [vmem:[#allocation5 + $0x2b8] sm:$0xff]
    %v195 = vld [vmem:[#allocation5 + $0x2c0] sm:$0xff]
    %v196 = vld [vmem:[#allocation5 + $0x2c8] sm:$0xff]
    %v197 = vld [vmem:[#allocation5 + $0x2d0] sm:$0xff]
    %v198 = vld [vmem:[#allocation5 + $0x2d8] sm:$0xff]
    %v199 = vld [vmem:[#allocation5 + $0x2e0] sm:$0xff]
    %v200 = vld [vmem:[#allocation5 + $0x2e8] sm:$0xff]
    %v201 = vld [vmem:[#allocation5 + $0x2f0] sm:$0xff]
    %v202 = vld [vmem:[#allocation5 + $0x2f8] sm:$0xff]
    %v203 = vld [vmem:[#allocation5 + $0x300] sm:$0xff]
    %v204 = vld [vmem:[#allocation5 + $0x308] sm:$0xff]
    %v205 = vld [vmem:[#allocation5 + $0x310] sm:$0xff]
    %v206 = vld [vmem:[#allocation5 + $0x318] sm:$0xff]
    %v207 = vld [vmem:[#allocation5 + $0x320] sm:$0xff]
    %v208 = vld [vmem:[#allocation5 + $0x328] sm:$0xff]
    %v209 = vld [vmem:[#allocation5 + $0x330] sm:$0xff]
    %v210 = vld [vmem:[#allocation5 + $0x338] sm:$0xff]
    %v211 = vld [vmem:[#allocation5 + $0x340] sm:$0xff]
    %v212 = vld [vmem:[#allocation5 + $0x348] sm:$0xff]
    %v213 = vld [vmem:[#allocation5 + $0x350] sm:$0xff]
    %v214 = vld [vmem:[#allocation5 + $0x358] sm:$0xff]
    %v215 = vld [vmem:[#allocation5 + $0x360] sm:$0xff]
    %v216 = vld [vmem:[#allocation5 + $0x368] sm:$0xff]
    %v217 = vld [vmem:[#allocation5 + $0x370] sm:$0xff]
    %v218 = vld [vmem:[#allocation5 + $0x378] sm:$0xff]
    %v219 = vld [vmem:[#allocation5 + $0x380] sm:$0xff]
    %v220 = vld [vmem:[#allocation5 + $0x388] sm:$0xff]
    %v221 = vld [vmem:[#allocation5 + $0x390] sm:$0xff]
    %v222 = vld [vmem:[#allocation5 + $0x398] sm:$0xff]
    %v223 = vld [vmem:[#allocation5 + $0x3a0] sm:$0xff]
    %v224 = vld [vmem:[#allocation5 + $0x3a8] sm:$0xff]
    %v225 = vld [vmem:[#allocation5 + $0x3b0] sm:$0xff]
    %v226 = vld [vmem:[#allocation5 + $0x3b8] sm:$0xff]
    %v227 = vld [vmem:[#allocation5 + $0x3c0] sm:$0xff]
    %v228 = vld [vmem:[#allocation5 + $0x3c8] sm:$0xff]
    %v229 = vld [vmem:[#allocation5 + $0x3d0] sm:$0xff]
    %v230 = vld [vmem:[#allocation5 + $0x3d8] sm:$0xff]
    %v231 = vld [vmem:[#allocation5 + $0x3e0] sm:$0xff]
    %v232 = vld [vmem:[#allocation5 + $0x3e8] sm:$0xff]
    %v233 = vld [vmem:[#allocation5 + $0x3f0] sm:$0xff]
    %v234 = vld [vmem:[#allocation5 + $0x3f8] sm:$0xff]
    %v235 = vld [vmem:[#allocation5 + $0x400] sm:$0xff]
    %v236 = vld [vmem:[#allocation5 + $0x408] sm:$0xff]
    %v237 = vld [vmem:[#allocation5 + $0x410] sm:$0xff]
    %v238 = vld [vmem:[#allocation5 + $0x418] sm:$0xff]
    %v239 = vld [vmem:[#allocation5 + $0x420] sm:$0xff]
    %v240 = vld [vmem:[#allocation5 + $0x428] sm:$0xff]
    %v241 = vld [vmem:[#allocation5 + $0x430] sm:$0xff]
    %v242 = vld [vmem:[#allocation5 + $0x438] sm:$0xff]
    %v243 = vld [vmem:[#allocation5 + $0x440] sm:$0xff]
    %v244 = vld [vmem:[#allocation5 + $0x448] sm:$0xff]
    %v245 = vld [vmem:[#allocation5 + $0x450] sm:$0xff]
    %v246 = vld [vmem:[#allocation5 + $0x458] sm:$0xff]
    %v247 = vld [vmem:[#allocation5 + $0x460] sm:$0xff]
    %v248 = vld [vmem:[#allocation5 + $0x468] sm:$0xff]
    %v249 = vld [vmem:[#allocation5 + $0x470] sm:$0xff]
    %v250 = vld [vmem:[#allocation5 + $0x478] sm:$0xff]
    %v251 = vld [vmem:[#allocation5 + $0x480] sm:$0xff]
    %v252 = vld [vmem:[#allocation5 + $0x488] sm:$0xff]
    %v253 = vld [vmem:[#allocation5 + $0x490] sm:$0xff]
    %v254 = vld [vmem:[#allocation5 + $0x498] sm:$0xff]
    %v255 = vld [vmem:[#allocation5 + $0x4a0] sm:$0xff]
    %v256 = vld [vmem:[#allocation5 + $0x4a8] sm:$0xff]
    %v257 = vld [vmem:[#allocation5 + $0x4b0] sm:$0xff]
    %v258 = vld [vmem:[#allocation5 + $0x4b8] sm:$0xff]
    %v259 = vld [vmem:[#allocation5 + $0x4c0] sm:$0xff]
    %v260 = vld [vmem:[#allocation5 + $0x4c8] sm:$0xff]
    %v261 = vld [vmem:[#allocation5 + $0x4d0] sm:$0xff]
    %v262 = vld [vmem:[#allocation5 + $0x4d8] sm:$0xff]
    %v263 = vld [vmem:[#allocation5 + $0x4e0] sm:$0xff]
    %v264 = vld [vmem:[#allocation5 + $0x4e8] sm:$0xff]
    %v265 = vld [vmem:[#allocation5 + $0x4f0] sm:$0xff]
    %v266 = vld [vmem:[#allocation5 + $0x4f8] sm:$0xff]
    %v267 = vld [vmem:[#allocation5 + $0x500] sm:$0xff]
    %v268 = vld [vmem:[#allocation5 + $0x508] sm:$0xff]
    %v269 = vld [vmem:[#allocation5 + $0x510] sm:$0xff]
    %v270 = vld [vmem:[#allocation5 + $0x518] sm:$0xff]
    %v271 = vld [vmem:[#allocation5 + $0x520] sm:$0xff]
    %v272 = vld [vmem:[#allocation5 + $0x528] sm:$0xff]
    %v273 = vld [vmem:[#allocation5 + $0x530] sm:$0xff]
    %v274 = vld [vmem:[#allocation5 + $0x538] sm:$0xff]
    %v275 = vld [vmem:[#allocation5 + $0x540] sm:$0xff]
    %v276 = vld [vmem:[#allocation5 + $0x548] sm:$0xff]
    %v277 = vld [vmem:[#allocation5 + $0x550] sm:$0xff]
    %v278 = vld [vmem:[#allocation5 + $0x558] sm:$0xff]
    %v279 = vld [vmem:[#allocation5 + $0x560] sm:$0xff]
    %v280 = vld [vmem:[#allocation5 + $0x568] sm:$0xff]
    %v281 = vld [vmem:[#allocation5 + $0x570] sm:$0xff]
    %v282 = vld [vmem:[#allocation5 + $0x578] sm:$0xff]
    %v283 = vld [vmem:[#allocation5 + $0x580] sm:$0xff]
    %v284 = vld [vmem:[#allocation5 + $0x588] sm:$0xff]
    %v285 = vld [vmem:[#allocation5 + $0x590] sm:$0xff]
    %v286 = vld [vmem:[#allocation5 + $0x598] sm:$0xff]
    %v287 = vld [vmem:[#allocation5 + $0x5a0] sm:$0xff]
    %v288 = vld [vmem:[#allocation5 + $0x5a8] sm:$0xff]
    %v289 = vld [vmem:[#allocation5 + $0x5b0] sm:$0xff]
    %v290 = vld [vmem:[#allocation5 + $0x5b8] sm:$0xff]
    %v291 = vld [vmem:[#allocation5 + $0x5c0] sm:$0xff]
    %v292 = vld [vmem:[#allocation5 + $0x5c8] sm:$0xff]
    %v293 = vld [vmem:[#allocation5 + $0x5d0] sm:$0xff]
    %v294 = vld [vmem:[#allocation5 + $0x5d8] sm:$0xff]
    %v295 = vld [vmem:[#allocation5 + $0x5e0] sm:$0xff]
    %v296 = vld [vmem:[#allocation5 + $0x5e8] sm:$0xff]
    %v297 = vld [vmem:[#allocation5 + $0x5f0] sm:$0xff]
    %v298 = vld [vmem:[#allocation5 + $0x5f8] sm:$0xff]
    %v299 = vld [vmem:[#allocation5 + $0x600] sm:$0xff]
    %v300 = vld [vmem:[#allocation5 + $0x608] sm:$0xff]
    %v301 = vld [vmem:[#allocation5 + $0x610] sm:$0xff]
    %v302 = vld [vmem:[#allocation5 + $0x618] sm:$0xff]
    %v303 = vld [vmem:[#allocation5 + $0x620] sm:$0xff]
    %v304 = vld [vmem:[#allocation5 + $0x628] sm:$0xff]
    %v305 = vld [vmem:[#allocation5 + $0x630] sm:$0xff]
    %v306 = vld [vmem:[#allocation5 + $0x638] sm:$0xff]
    %v307 = vld [vmem:[#allocation5 + $0x640] sm:$0xff]
    %v308 = vld [vmem:[#allocation5 + $0x648] sm:$0xff]
    %v309 = vld [vmem:[#allocation5 + $0x650] sm:$0xff]
    %v310 = vld [vmem:[#allocation5 + $0x658] sm:$0xff]
    %v311 = vld [vmem:[#allocation5 + $0x660] sm:$0xff]
    %v312 = vld [vmem:[#allocation5 + $0x668] sm:$0xff]
    %v313 = vld [vmem:[#allocation5 + $0x670] sm:$0xff]
    %v314 = vld [vmem:[#allocation5 + $0x678] sm:$0xff]
    %v315 = vld [vmem:[#allocation5 + $0x680] sm:$0xff]
    %v316 = vld [vmem:[#allocation5 + $0x688] sm:$0xff]
    %v317 = vld [vmem:[#allocation5 + $0x690] sm:$0xff]
    %v318 = vld [vmem:[#allocation5 + $0x698] sm:$0xff]
    %v319 = vld [vmem:[#allocation5 + $0x6a0] sm:$0xff]
    %v320 = vld [vmem:[#allocation5 + $0x6a8] sm:$0xff]
    %v321 = vld [vmem:[#allocation5 + $0x6b0] sm:$0xff]
    %v322 = vld [vmem:[#allocation5 + $0x6b8] sm:$0xff]
    %v323 = vld [vmem:[#allocation5 + $0x6c0] sm:$0xff]
    %v324 = vld [vmem:[#allocation5 + $0x6c8] sm:$0xff]
    %v325 = vld [vmem:[#allocation5 + $0x6d0] sm:$0xff]
    %v326 = vld [vmem:[#allocation5 + $0x6d8] sm:$0xff]
    %v327 = vld [vmem:[#allocation5 + $0x6e0] sm:$0xff]
    %v328 = vld [vmem:[#allocation5 + $0x6e8] sm:$0xff]
    %v329 = vld [vmem:[#allocation5 + $0x6f0] sm:$0xff]
    %v330 = vld [vmem:[#allocation5 + $0x6f8] sm:$0xff]
    %v331 = vld [vmem:[#allocation5 + $0x700] sm:$0xff]
    %v332 = vld [vmem:[#allocation5 + $0x708] sm:$0xff]
    %v333 = vld [vmem:[#allocation5 + $0x710] sm:$0xff]
    %v334 = vld [vmem:[#allocation5 + $0x718] sm:$0xff]
    %v335 = vld [vmem:[#allocation5 + $0x720] sm:$0xff]
    %v336 = vld [vmem:[#allocation5 + $0x728] sm:$0xff]
    %v337 = vld [vmem:[#allocation5 + $0x730] sm:$0xff]
    %v338 = vld [vmem:[#allocation5 + $0x738] sm:$0xff]
    %v339 = vld [vmem:[#allocation5 + $0x740] sm:$0xff]
    %v340 = vld [vmem:[#allocation5 + $0x748] sm:$0xff]
    %v341 = vld [vmem:[#allocation5 + $0x750] sm:$0xff]
    %v342 = vld [vmem:[#allocation5 + $0x758] sm:$0xff]
    %v343 = vld [vmem:[#allocation5 + $0x760] sm:$0xff]
    %v344 = vld [vmem:[#allocation5 + $0x768] sm:$0xff]
    %v345 = vld [vmem:[#allocation5 + $0x770] sm:$0xff]
    %v346 = vld [vmem:[#allocation5 + $0x778] sm:$0xff]
    %v347 = vld [vmem:[#allocation5 + $0x780] sm:$0xff]
    %v348 = vld [vmem:[#allocation5 + $0x788] sm:$0xff]
    %v349 = vld [vmem:[#allocation5 + $0x790] sm:$0xff]
    %v350 = vld [vmem:[#allocation5 + $0x798] sm:$0xff]
    %v351 = vld [vmem:[#allocation5 + $0x7a0] sm:$0xff]
    %v352 = vld [vmem:[#allocation5 + $0x7a8] sm:$0xff]
    %v353 = vld [vmem:[#allocation5 + $0x7b0] sm:$0xff]
    %v354 = vld [vmem:[#allocation5 + $0x7b8] sm:$0xff]
    %v355 = vld [vmem:[#allocation5 + $0x7c0] sm:$0xff]
    %v356 = vld [vmem:[#allocation5 + $0x7c8] sm:$0xff]
    %v357 = vld [vmem:[#allocation5 + $0x7d0] sm:$0xff]
    %v358 = vld [vmem:[#allocation5 + $0x7d8] sm:$0xff]
    %v359 = vld [vmem:[#allocation5 + $0x7e0] sm:$0xff]
    %v360 = vld [vmem:[#allocation5 + $0x7e8] sm:$0xff]
    %v361 = vld [vmem:[#allocation5 + $0x7f0] sm:$0xff]
    %v362 = vld [vmem:[#allocation5 + $0x7f8] sm:$0xff]
    %v363 = vld [vmem:[#allocation5 + $0x800] sm:$0xff]
    %v364 = vld [vmem:[#allocation5 + $0x808] sm:$0xff]
    %v365 = vld [vmem:[#allocation5 + $0x810] sm:$0xff]
    %v366 = vld [vmem:[#allocation5 + $0x818] sm:$0xff]
    %v367 = vld [vmem:[#allocation5 + $0x820] sm:$0xff]
    %v368 = vld [vmem:[#allocation5 + $0x828] sm:$0xff]
    %v369 = vld [vmem:[#allocation5 + $0x830] sm:$0xff]
    %v370 = vld [vmem:[#allocation5 + $0x838] sm:$0xff]
    %v371 = vld [vmem:[#allocation5 + $0x840] sm:$0xff]
    %v372 = vld [vmem:[#allocation5 + $0x848] sm:$0xff]
    %v373 = vld [vmem:[#allocation5 + $0x850] sm:$0xff]
    %v374 = vld [vmem:[#allocation5 + $0x858] sm:$0xff]
    %v375 = vld [vmem:[#allocation5 + $0x860] sm:$0xff]
    %v376 = vld [vmem:[#allocation5 + $0x868] sm:$0xff]
    %v377 = vld [vmem:[#allocation5 + $0x870] sm:$0xff]
    %v378 = vld [vmem:[#allocation5 + $0x878] sm:$0xff]
    %v379 = vld [vmem:[#allocation5 + $0x880] sm:$0xff]
    %v380 = vld [vmem:[#allocation5 + $0x888] sm:$0xff]
    %v381 = vld [vmem:[#allocation5 + $0x890] sm:$0xff]
    %v382 = vld [vmem:[#allocation5 + $0x898] sm:$0xff]
    %v383 = vld [vmem:[#allocation5 + $0x8a0] sm:$0xff]
    %v384 = vld [vmem:[#allocation5 + $0x8a8] sm:$0xff]
    %v385 = vld [vmem:[#allocation5 + $0x8b0] sm:$0xff]
    %v386 = vld [vmem:[#allocation5 + $0x8b8] sm:$0xff]
    %v387 = vld [vmem:[#allocation5 + $0x8c0] sm:$0xff]
    %v388 = vld [vmem:[#allocation5 + $0x8c8] sm:$0xff]
    %v389 = vld [vmem:[#allocation5 + $0x8d0] sm:$0xff]
    %v390 = vld [vmem:[#allocation5 + $0x8d8] sm:$0xff]
    %v391 = vld [vmem:[#allocation5 + $0x8e0] sm:$0xff]
    %v392 = vld [vmem:[#allocation5 + $0x8e8] sm:$0xff]
    %v393 = vld [vmem:[#allocation5 + $0x8f0] sm:$0xff]
    %v394 = vld [vmem:[#allocation5 + $0x8f8] sm:$0xff]
    %v395 = vld [vmem:[#allocation5 + $0x900] sm:$0xff]
    %v396 = vld [vmem:[#allocation5 + $0x908] sm:$0xff]
    %v397 = vld [vmem:[#allocation5 + $0x910] sm:$0xff]
    %v398 = vld [vmem:[#allocation5 + $0x918] sm:$0xff]
    %v399 = vld [vmem:[#allocation5 + $0x920] sm:$0xff]
    %v400 = vld [vmem:[#allocation5 + $0x928] sm:$0xff]
    %v401 = vld [vmem:[#allocation5 + $0x930] sm:$0xff]
    %v402 = vld [vmem:[#allocation5 + $0x938] sm:$0xff]
    %v403 = vld [vmem:[#allocation5 + $0x940] sm:$0xff]
    %v404 = vld [vmem:[#allocation5 + $0x948] sm:$0xff]
    %v405 = vld [vmem:[#allocation5 + $0x950] sm:$0xff]
    %v406 = vld [vmem:[#allocation5 + $0x958] sm:$0xff]
    %v407 = vld [vmem:[#allocation5 + $0x960] sm:$0xff]
    %v408 = vld [vmem:[#allocation5 + $0x968] sm:$0xff]
    %v409 = vld [vmem:[#allocation5 + $0x970] sm:$0xff]
    %v410 = vld [vmem:[#allocation5 + $0x978] sm:$0xff]
    %v411 = vld [vmem:[#allocation5 + $0x980] sm:$0xff]
    %v412 = vld [vmem:[#allocation5 + $0x988] sm:$0xff]
    %v413 = vld [vmem:[#allocation5 + $0x990] sm:$0xff]
    %v414 = vld [vmem:[#allocation5 + $0x998] sm:$0xff]
    %v415 = vld [vmem:[#allocation5 + $0x9a0] sm:$0xff]
    %v416 = vld [vmem:[#allocation5 + $0x9a8] sm:$0xff]
    %v417 = vld [vmem:[#allocation5 + $0x9b0] sm:$0xff]
    %v418 = vld [vmem:[#allocation5 + $0x9b8] sm:$0xff]
    %v419 = vld [vmem:[#allocation5 + $0x9c0] sm:$0xff]
    %v420 = vld [vmem:[#allocation5 + $0x9c8] sm:$0xff]
    %v421 = vld [vmem:[#allocation5 + $0x9d0] sm:$0xff]
    %v422 = vld [vmem:[#allocation5 + $0x9d8] sm:$0xff]
    %v423 = vld [vmem:[#allocation5 + $0x9e0] sm:$0xff]
    %v424 = vld [vmem:[#allocation5 + $0x9e8] sm:$0xff]
    %v425 = vld [vmem:[#allocation5 + $0x9f0] sm:$0xff]
    %v426 = vld [vmem:[#allocation5 + $0x9f8] sm:$0xff]
    %v427 = vld [vmem:[#allocation5 + $0xa00] sm:$0xff]
    %v428 = vld [vmem:[#allocation5 + $0xa08] sm:$0xff]
    %v429 = vld [vmem:[#allocation5 + $0xa10] sm:$0xff]
    %v430 = vld [vmem:[#allocation5 + $0xa18] sm:$0xff]
    %v431 = vld [vmem:[#allocation5 + $0xa20] sm:$0xff]
    %v432 = vld [vmem:[#allocation5 + $0xa28] sm:$0xff]
    %v433 = vld [vmem:[#allocation5 + $0xa30] sm:$0xff]
    %v434 = vld [vmem:[#allocation5 + $0xa38] sm:$0xff]
    %v435 = vld [vmem:[#allocation5 + $0xa40] sm:$0xff]
    %v436 = vld [vmem:[#allocation5 + $0xa48] sm:$0xff]
    %v437 = vld [vmem:[#allocation5 + $0xa50] sm:$0xff]
    %v438 = vld [vmem:[#allocation5 + $0xa58] sm:$0xff]
    %v439 = vld [vmem:[#allocation5 + $0xa60] sm:$0xff]
    %v440 = vld [vmem:[#allocation5 + $0xa68] sm:$0xff]
    %v441 = vld [vmem:[#allocation5 + $0xa70] sm:$0xff]
    %v442 = vld [vmem:[#allocation5 + $0xa78] sm:$0xff]
    %v443 = vld [vmem:[#allocation5 + $0xa80] sm:$0xff]
    %v444 = vld [vmem:[#allocation5 + $0xa88] sm:$0xff]
    %v445 = vld [vmem:[#allocation5 + $0xa90] sm:$0xff]
    %v446 = vld [vmem:[#allocation5 + $0xa98] sm:$0xff]
    %v447 = vld [vmem:[#allocation5 + $0xaa0] sm:$0xff]
    %v448 = vld [vmem:[#allocation5 + $0xaa8] sm:$0xff]
    %v449 = vld [vmem:[#allocation5 + $0xab0] sm:$0xff]
    %v450 = vld [vmem:[#allocation5 + $0xab8] sm:$0xff]
    %v451 = vld [vmem:[#allocation5 + $0xac0] sm:$0xff]
    %v452 = vld [vmem:[#allocation5 + $0xac8] sm:$0xff]
    %v453 = vld [vmem:[#allocation5 + $0xad0] sm:$0xff]
    %v454 = vld [vmem:[#allocation5 + $0xad8] sm:$0xff]
    %v455 = vld [vmem:[#allocation5 + $0xae0] sm:$0xff]
    %v456 = vld [vmem:[#allocation5 + $0xae8] sm:$0xff]
    %v457 = vld [vmem:[#allocation5 + $0xaf0] sm:$0xff]
    %v458 = vld [vmem:[#allocation5 + $0xaf8] sm:$0xff]
    %v459 = vld [vmem:[#allocation5 + $0xb00] sm:$0xff]
    %v460 = vld [vmem:[#allocation5 + $0xb08] sm:$0xff]
    %v461 = vld [vmem:[#allocation5 + $0xb10] sm:$0xff]
    %v462 = vld [vmem:[#allocation5 + $0xb18] sm:$0xff]
    %v463 = vld [vmem:[#allocation5 + $0xb20] sm:$0xff]
    %v464 = vld [vmem:[#allocation5 + $0xb28] sm:$0xff]
    %v465 = vld [vmem:[#allocation5 + $0xb30] sm:$0xff]
    %v466 = vld [vmem:[#allocation5 + $0xb38] sm:$0xff]
    %v467 = vld [vmem:[#allocation5 + $0xb40] sm:$0xff]
    %v468 = vld [vmem:[#allocation5 + $0xb48] sm:$0xff]
    %v469 = vld [vmem:[#allocation5 + $0xb50] sm:$0xff]
    %v470 = vld [vmem:[#allocation5 + $0xb58] sm:$0xff]
    %v471 = vld [vmem:[#allocation5 + $0xb60] sm:$0xff]
    %v472 = vld [vmem:[#allocation5 + $0xb68] sm:$0xff]
    %v473 = vld [vmem:[#allocation5 + $0xb70] sm:$0xff]
    %v474 = vld [vmem:[#allocation5 + $0xb78] sm:$0xff]
    %v475 = vld [vmem:[#allocation5 + $0xb80] sm:$0xff]
    %v476 = vld [vmem:[#allocation5 + $0xb88] sm:$0xff]
    %v477 = vld [vmem:[#allocation5 + $0xb90] sm:$0xff]
    %v478 = vld [vmem:[#allocation5 + $0xb98] sm:$0xff]
    %v479 = vld [vmem:[#allocation5 + $0xba0] sm:$0xff]
    %v480 = vld [vmem:[#allocation5 + $0xba8] sm:$0xff]
    %v481 = vld [vmem:[#allocation5 + $0xbb0] sm:$0xff]
    %v482 = vld [vmem:[#allocation5 + $0xbb8] sm:$0xff]
    %v483 = vld [vmem:[#allocation5 + $0xbc0] sm:$0xff]
    %v484 = vld [vmem:[#allocation5 + $0xbc8] sm:$0xff]
    %v485 = vld [vmem:[#allocation5 + $0xbd0] sm:$0xff]
    %v486 = vld [vmem:[#allocation5 + $0xbd8] sm:$0xff]
    %v487 = vld [vmem:[#allocation5 + $0xbe0] sm:$0xff]
    %v488 = vld [vmem:[#allocation5 + $0xbe8] sm:$0xff]
    %v489 = vld [vmem:[#allocation5 + $0xbf0] sm:$0xff]
    %v490 = vld [vmem:[#allocation5 + $0xbf8] sm:$0xff]
    %v491 = vld [vmem:[#allocation5 + $0xc00] sm:$0xff]
    %v492 = vld [vmem:[#allocation5 + $0xc08] sm:$0xff]
    %v493 = vld [vmem:[#allocation5 + $0xc10] sm:$0xff]
    %v494 = vld [vmem:[#allocation5 + $0xc18] sm:$0xff]
    %v495 = vld [vmem:[#allocation5 + $0xc20] sm:$0xff]
    %v496 = vld [vmem:[#allocation5 + $0xc28] sm:$0xff]
    %v497 = vld [vmem:[#allocation5 + $0xc30] sm:$0xff]
    %v498 = vld [vmem:[#allocation5 + $0xc38] sm:$0xff]
    %v499 = vld [vmem:[#allocation5 + $0xc40] sm:$0xff]
    %v500 = vld [vmem:[#allocation5 + $0xc48] sm:$0xff]
    %v501 = vld [vmem:[#allocation5 + $0xc50] sm:$0xff]
    %v502 = vld [vmem:[#allocation5 + $0xc58] sm:$0xff]
    %v503 = vld [vmem:[#allocation5 + $0xc60] sm:$0xff]
    %v504 = vld [vmem:[#allocation5 + $0xc68] sm:$0xff]
    %v505 = vld [vmem:[#allocation5 + $0xc70] sm:$0xff]
    %v506 = vld [vmem:[#allocation5 + $0xc78] sm:$0xff]
    %v507 = vld [vmem:[#allocation5 + $0xc80] sm:$0xff]
    %v508 = vld [vmem:[#allocation5 + $0xc88] sm:$0xff]
    %v509 = vld [vmem:[#allocation5 + $0xc90] sm:$0xff]
    %v510 = vld [vmem:[#allocation5 + $0xc98] sm:$0xff]
    %v511 = vld [vmem:[#allocation5 + $0xca0] sm:$0xff]
    %v512 = vld [vmem:[#allocation5 + $0xca8] sm:$0xff]
    %v513 = vld [vmem:[#allocation5 + $0xcb0] sm:$0xff]
    %v514 = vld [vmem:[#allocation5 + $0xcb8] sm:$0xff]
    %v515 = vld [vmem:[#allocation5 + $0xcc0] sm:$0xff]
    %v516 = vld [vmem:[#allocation5 + $0xcc8] sm:$0xff]
    %v517 = vld [vmem:[#allocation5 + $0xcd0] sm:$0xff]
    %v518 = vld [vmem:[#allocation5 + $0xcd8] sm:$0xff]
    %v519 = vld [vmem:[#allocation5 + $0xce0] sm:$0xff]
    %v520 = vld [vmem:[#allocation5 + $0xce8] sm:$0xff]
    %v521 = vld [vmem:[#allocation5 + $0xcf0] sm:$0xff]
    %v522 = vld [vmem:[#allocation5 + $0xcf8] sm:$0xff]
    %v523 = vld [vmem:[#allocation5 + $0xd00] sm:$0xff]
    %v524 = vld [vmem:[#allocation5 + $0xd08] sm:$0xff]
    %v525 = vld [vmem:[#allocation5 + $0xd10] sm:$0xff]
    %v526 = vld [vmem:[#allocation5 + $0xd18] sm:$0xff]
    %v527 = vld [vmem:[#allocation5 + $0xd20] sm:$0xff]
    %v528 = vld [vmem:[#allocation5 + $0xd28] sm:$0xff]
    %v529 = vld [vmem:[#allocation5 + $0xd30] sm:$0xff]
    %v530 = vld [vmem:[#allocation5 + $0xd38] sm:$0xff]
    %v531 = vld [vmem:[#allocation5 + $0xd40] sm:$0xff]
    %v532 = vld [vmem:[#allocation5 + $0xd48] sm:$0xff]
    %v533 = vld [vmem:[#allocation5 + $0xd50] sm:$0xff]
    %v534 = vld [vmem:[#allocation5 + $0xd58] sm:$0xff]
    %v535 = vld [vmem:[#allocation5 + $0xd60] sm:$0xff]
    %v536 = vld [vmem:[#allocation5 + $0xd68] sm:$0xff]
    %v537 = vld [vmem:[#allocation5 + $0xd70] sm:$0xff]
    %v538 = vld [vmem:[#allocation5 + $0xd78] sm:$0xff]
    %v539 = vld [vmem:[#allocation5 + $0xd80] sm:$0xff]
    %v540 = vld [vmem:[#allocation5 + $0xd88] sm:$0xff]
    %v541 = vld [vmem:[#allocation5 + $0xd90] sm:$0xff]
    %v542 = vld [vmem:[#allocation5 + $0xd98] sm:$0xff]
    %v543 = vld [vmem:[#allocation5 + $0xda0] sm:$0xff]
    %v544 = vld [vmem:[#allocation5 + $0xda8] sm:$0xff]
    %v545 = vld [vmem:[#allocation5 + $0xdb0] sm:$0xff]
    %v546 = vld [vmem:[#allocation5 + $0xdb8] sm:$0xff]
    %v547 = vld [vmem:[#allocation5 + $0xdc0] sm:$0xff]
    %v548 = vld [vmem:[#allocation5 + $0xdc8] sm:$0xff]
    %v549 = vld [vmem:[#allocation5 + $0xdd0] sm:$0xff]
    %v550 = vld [vmem:[#allocation5 + $0xdd8] sm:$0xff]
    %v551 = vld [vmem:[#allocation5 + $0xde0] sm:$0xff]
    %v552 = vld [vmem:[#allocation5 + $0xde8] sm:$0xff]
    %v553 = vld [vmem:[#allocation5 + $0xdf0] sm:$0xff]
    %v554 = vld [vmem:[#allocation5 + $0xdf8] sm:$0xff]
    %v555 = vld [vmem:[#allocation5 + $0xe00] sm:$0xff]
    %v556 = vld [vmem:[#allocation5 + $0xe08] sm:$0xff]
    %v557 = vld [vmem:[#allocation5 + $0xe10] sm:$0xff]
    %v558 = vld [vmem:[#allocation5 + $0xe18] sm:$0xff]
    %v559 = vld [vmem:[#allocation5 + $0xe20] sm:$0xff]
    %v560 = vld [vmem:[#allocation5 + $0xe28] sm:$0xff]
    %v561 = vld [vmem:[#allocation5 + $0xe30] sm:$0xff]
    %v562 = vld [vmem:[#allocation5 + $0xe38] sm:$0xff]
    %v563 = vld [vmem:[#allocation5 + $0xe40] sm:$0xff]
    %v564 = vld [vmem:[#allocation5 + $0xe48] sm:$0xff]
    %v565 = vld [vmem:[#allocation5 + $0xe50] sm:$0xff]
    %v566 = vld [vmem:[#allocation5 + $0xe58] sm:$0xff]
    %v567 = vld [vmem:[#allocation5 + $0xe60] sm:$0xff]
    %v568 = vld [vmem:[#allocation5 + $0xe68] sm:$0xff]
    %v569 = vld [vmem:[#allocation5 + $0xe70] sm:$0xff]
    %v570 = vld [vmem:[#allocation5 + $0xe78] sm:$0xff]
    %v571 = vld [vmem:[#allocation5 + $0xe80] sm:$0xff]
    %v572 = vld [vmem:[#allocation5 + $0xe88] sm:$0xff]
    %v573 = vld [vmem:[#allocation5 + $0xe90] sm:$0xff]
    %v574 = vld [vmem:[#allocation5 + $0xe98] sm:$0xff]
    %v575 = vld [vmem:[#allocation5 + $0xea0] sm:$0xff]
    %v576 = vld [vmem:[#allocation5 + $0xea8] sm:$0xff]
    %v577 = vld [vmem:[#allocation5 + $0xeb0] sm:$0xff]
    %v578 = vld [vmem:[#allocation5 + $0xeb8] sm:$0xff]
    %v579 = vld [vmem:[#allocation5 + $0xec0] sm:$0xff]
    %v580 = vld [vmem:[#allocation5 + $0xec8] sm:$0xff]
    %v581 = vld [vmem:[#allocation5 + $0xed0] sm:$0xff]
    %v582 = vld [vmem:[#allocation5 + $0xed8] sm:$0xff]
    %v583 = vld [vmem:[#allocation5 + $0xee0] sm:$0xff]
    %v584 = vld [vmem:[#allocation5 + $0xee8] sm:$0xff]
    %v585 = vld [vmem:[#allocation5 + $0xef0] sm:$0xff]
    %v586 = vld [vmem:[#allocation5 + $0xef8] sm:$0xff]
    %v587 = vld [vmem:[#allocation5 + $0xf00] sm:$0xff]
    %v588 = vld [vmem:[#allocation5 + $0xf08] sm:$0xff]
    %v589 = vld [vmem:[#allocation5 + $0xf10] sm:$0xff]
    %v590 = vld [vmem:[#allocation5 + $0xf18] sm:$0xff]
    %v591 = vld [vmem:[#allocation5 + $0xf20] sm:$0xff]
    %v592 = vld [vmem:[#allocation5 + $0xf28] sm:$0xff]
    %v593 = vld [vmem:[#allocation5 + $0xf30] sm:$0xff]
    %v594 = vld [vmem:[#allocation5 + $0xf38] sm:$0xff]
    %v595 = vld [vmem:[#allocation5 + $0xf40] sm:$0xff]
    %v596 = vld [vmem:[#allocation5 + $0xf48] sm:$0xff]
    %v597 = vld [vmem:[#allocation5 + $0xf50] sm:$0xff]
    %v598 = vld [vmem:[#allocation5 + $0xf58] sm:$0xff]
    %v599 = vld [vmem:[#allocation5 + $0xf60] sm:$0xff]
    %v600 = vld [vmem:[#allocation5 + $0xf68] sm:$0xff]
    %v601 = vld [vmem:[#allocation5 + $0xf70] sm:$0xff]
    %v602 = vld [vmem:[#allocation5 + $0xf78] sm:$0xff]
    %v603 = vld [vmem:[#allocation5 + $0xf80] sm:$0xff]
    %v604 = vld [vmem:[#allocation5 + $0xf88] sm:$0xff]
    %v605 = vld [vmem:[#allocation5 + $0xf90] sm:$0xff]
    %v606 = vld [vmem:[#allocation5 + $0xf98] sm:$0xff]
    %v607 = vld [vmem:[#allocation5 + $0xfa0] sm:$0xff]
    %v608 = vld [vmem:[#allocation5 + $0xfa8] sm:$0xff]
    %v609 = vld [vmem:[#allocation5 + $0xfb0] sm:$0xff]
    %v610 = vld [vmem:[#allocation5 + $0xfb8] sm:$0xff]
    %v611 = vld [vmem:[#allocation5 + $0xfc0] sm:$0xff]
    %v612 = vld [vmem:[#allocation5 + $0xfc8] sm:$0xff]
    %v613 = vld [vmem:[#allocation5 + $0xfd0] sm:$0xff]
    %v614 = vld [vmem:[#allocation5 + $0xfd8] sm:$0xff]
    %v615 = vld [vmem:[#allocation5 + $0xfe0] sm:$0xff]
    %v616 = vld [vmem:[#allocation5 + $0xfe8] sm:$0xff]
    %v617 = vld [vmem:[#allocation5 + $0xff0] sm:$0xff]
    %v618 = vld [vmem:[#allocation5 + $0xff8] sm:$0xff]
    %v619 = vld [vmem:[#allocation7] sm:$0xff]
    %v620 = vld [vmem:[#allocation7 + $0x8] sm:$0xff]
    %v623 = vperm.slane %v619, 0
    %v624 = vperm.slane %v619, 1
    %v625 = vperm.slane %v619, 2
    %v626 = vperm.slane %v619, 3
    %v627 = vperm.slane %v619, 4
    %v628 = vperm.slane %v619, 5
    %v629 = vperm.slane %v619, 6
    %v630 = vperm.slane %v619, 7
    %v631 = vperm.slane %v620, 0
    %v632 = vperm.slane %v620, 1
    %v633 = vperm.slane %v620, 2
    %v634 = vperm.slane %v620, 3
    %v635 = vperm.slane %v620, 4
    %v636 = vperm.slane %v620, 5
    %v637 = vperm.slane %v620, 6
    %v638 = vperm.slane %v620, 7
    %v1167 = vunpack.c.l.b16 %v107
    %v1168 = vunpack.c.h.b16 %v107
    %v1169 = vunpack.c.l.b16 %v108
    %v1170 = vunpack.c.h.b16 %v108
    %v1171 = vunpack.c.l.b16 %v109
    %v1172 = vunpack.c.h.b16 %v109
    %v1173 = vunpack.c.l.b16 %v110
    %v1174 = vunpack.c.h.b16 %v110
    %v1175 = vunpack.c.l.b16 %v111
    %v1176 = vunpack.c.h.b16 %v111
    %v1177 = vunpack.c.l.b16 %v112
    %v1178 = vunpack.c.h.b16 %v112
    %v1179 = vunpack.c.l.b16 %v113
    %v1180 = vunpack.c.h.b16 %v113
    %v1181 = vunpack.c.l.b16 %v114
    %v1182 = vunpack.c.h.b16 %v114
    %v1183 = vunpack.c.l.b16 %v115
    %v1184 = vunpack.c.h.b16 %v115
    %v1185 = vunpack.c.l.b16 %v116
    %v1186 = vunpack.c.h.b16 %v116
    %v1187 = vunpack.c.l.b16 %v117
    %v1188 = vunpack.c.h.b16 %v117
    %v1189 = vunpack.c.l.b16 %v118
    %v1190 = vunpack.c.h.b16 %v118
    %v1191 = vunpack.c.l.b16 %v119
    %v1192 = vunpack.c.h.b16 %v119
    %v1193 = vunpack.c.l.b16 %v120
    %v1194 = vunpack.c.h.b16 %v120
    %v1195 = vunpack.c.l.b16 %v121
    %v1196 = vunpack.c.h.b16 %v121
    %v1197 = vunpack.c.l.b16 %v122
    %v1198 = vunpack.c.h.b16 %v122
    %v1199 = vunpack.c.l.b16 %v123
    %v1200 = vunpack.c.h.b16 %v123
    %v1201 = vunpack.c.l.b16 %v124
    %v1202 = vunpack.c.h.b16 %v124
    %v1203 = vunpack.c.l.b16 %v125
    %v1204 = vunpack.c.h.b16 %v125
    %v1205 = vunpack.c.l.b16 %v126
    %v1206 = vunpack.c.h.b16 %v126
    %v1207 = vunpack.c.l.b16 %v127
    %v1208 = vunpack.c.h.b16 %v127
    %v1209 = vunpack.c.l.b16 %v128
    %v1210 = vunpack.c.h.b16 %v128
    %v1211 = vunpack.c.l.b16 %v129
    %v1212 = vunpack.c.h.b16 %v129
    %v1213 = vunpack.c.l.b16 %v130
    %v1214 = vunpack.c.h.b16 %v130
    %v1215 = vunpack.c.l.b16 %v131
    %v1216 = vunpack.c.h.b16 %v131
    %v1217 = vunpack.c.l.b16 %v132
    %v1218 = vunpack.c.h.b16 %v132
    %v1219 = vunpack.c.l.b16 %v133
    %v1220 = vunpack.c.h.b16 %v133
    %v1221 = vunpack.c.l.b16 %v134
    %v1222 = vunpack.c.h.b16 %v134
    %v1223 = vunpack.c.l.b16 %v135
    %v1224 = vunpack.c.h.b16 %v135
    %v1225 = vunpack.c.l.b16 %v136
    %v1226 = vunpack.c.h.b16 %v136
    %v1227 = vunpack.c.l.b16 %v137
    %v1228 = vunpack.c.h.b16 %v137
    %v1229 = vunpack.c.l.b16 %v138
    %v1230 = vunpack.c.h.b16 %v138
    %v1231 = vunpack.c.l.b16 %v139
    %v1232 = vunpack.c.h.b16 %v139
    %v1233 = vunpack.c.l.b16 %v140
    %v1234 = vunpack.c.h.b16 %v140
    %v1235 = vunpack.c.l.b16 %v141
    %v1236 = vunpack.c.h.b16 %v141
    %v1237 = vunpack.c.l.b16 %v142
    %v1238 = vunpack.c.h.b16 %v142
    %v1239 = vunpack.c.l.b16 %v143
    %v1240 = vunpack.c.h.b16 %v143
    %v1241 = vunpack.c.l.b16 %v144
    %v1242 = vunpack.c.h.b16 %v144
    %v1243 = vunpack.c.l.b16 %v145
    %v1244 = vunpack.c.h.b16 %v145
    %v1245 = vunpack.c.l.b16 %v146
    %v1246 = vunpack.c.h.b16 %v146
    %v1247 = vunpack.c.l.b16 %v147
    %v1248 = vunpack.c.h.b16 %v147
    %v1249 = vunpack.c.l.b16 %v148
    %v1250 = vunpack.c.h.b16 %v148
    %v1251 = vunpack.c.l.b16 %v149
    %v1252 = vunpack.c.h.b16 %v149
    %v1253 = vunpack.c.l.b16 %v150
    %v1254 = vunpack.c.h.b16 %v150
    %v1255 = vunpack.c.l.b16 %v151
    %v1256 = vunpack.c.h.b16 %v151
    %v1257 = vunpack.c.l.b16 %v152
    %v1258 = vunpack.c.h.b16 %v152
    %v1259 = vunpack.c.l.b16 %v153
    %v1260 = vunpack.c.h.b16 %v153
    %v1261 = vunpack.c.l.b16 %v154
    %v1262 = vunpack.c.h.b16 %v154
    %v1263 = vunpack.c.l.b16 %v155
    %v1264 = vunpack.c.h.b16 %v155
    %v1265 = vunpack.c.l.b16 %v156
    %v1266 = vunpack.c.h.b16 %v156
    %v1267 = vunpack.c.l.b16 %v157
    %v1268 = vunpack.c.h.b16 %v157
    %v1269 = vunpack.c.l.b16 %v158
    %v1270 = vunpack.c.h.b16 %v158
    %v1271 = vunpack.c.l.b16 %v159
    %v1272 = vunpack.c.h.b16 %v159
    %v1273 = vunpack.c.l.b16 %v160
    %v1274 = vunpack.c.h.b16 %v160
    %v1275 = vunpack.c.l.b16 %v161
    %v1276 = vunpack.c.h.b16 %v161
    %v1277 = vunpack.c.l.b16 %v162
    %v1278 = vunpack.c.h.b16 %v162
    %v1279 = vunpack.c.l.b16 %v163
    %v1280 = vunpack.c.h.b16 %v163
    %v1281 = vunpack.c.l.b16 %v164
    %v1282 = vunpack.c.h.b16 %v164
    %v1283 = vunpack.c.l.b16 %v165
    %v1284 = vunpack.c.h.b16 %v165
    %v1285 = vunpack.c.l.b16 %v166
    %v1286 = vunpack.c.h.b16 %v166
    %v1287 = vunpack.c.l.b16 %v167
    %v1288 = vunpack.c.h.b16 %v167
    %v1289 = vunpack.c.l.b16 %v168
    %v1290 = vunpack.c.h.b16 %v168
    %v1291 = vunpack.c.l.b16 %v169
    %v1292 = vunpack.c.h.b16 %v169
    %v1293 = vunpack.c.l.b16 %v170
    %v1294 = vunpack.c.h.b16 %v170
    %v1295 = vunpack.c.l.b16 %v171
    %v1296 = vunpack.c.h.b16 %v171
    %v1297 = vunpack.c.l.b16 %v172
    %v1298 = vunpack.c.h.b16 %v172
    %v1299 = vunpack.c.l.b16 %v173
    %v1300 = vunpack.c.h.b16 %v173
    %v1301 = vunpack.c.l.b16 %v174
    %v1302 = vunpack.c.h.b16 %v174
    %v1303 = vunpack.c.l.b16 %v175
    %v1304 = vunpack.c.h.b16 %v175
    %v1305 = vunpack.c.l.b16 %v176
    %v1306 = vunpack.c.h.b16 %v176
    %v1307 = vunpack.c.l.b16 %v177
    %v1308 = vunpack.c.h.b16 %v177
    %v1309 = vunpack.c.l.b16 %v178
    %v1310 = vunpack.c.h.b16 %v178
    %v1311 = vunpack.c.l.b16 %v179
    %v1312 = vunpack.c.h.b16 %v179
    %v1313 = vunpack.c.l.b16 %v180
    %v1314 = vunpack.c.h.b16 %v180
    %v1315 = vunpack.c.l.b16 %v181
    %v1316 = vunpack.c.h.b16 %v181
    %v1317 = vunpack.c.l.b16 %v182
    %v1318 = vunpack.c.h.b16 %v182
    %v1319 = vunpack.c.l.b16 %v183
    %v1320 = vunpack.c.h.b16 %v183
    %v1321 = vunpack.c.l.b16 %v184
    %v1322 = vunpack.c.h.b16 %v184
    %v1323 = vunpack.c.l.b16 %v185
    %v1324 = vunpack.c.h.b16 %v185
    %v1325 = vunpack.c.l.b16 %v186
    %v1326 = vunpack.c.h.b16 %v186
    %v1327 = vunpack.c.l.b16 %v187
    %v1328 = vunpack.c.h.b16 %v187
    %v1329 = vunpack.c.l.b16 %v188
    %v1330 = vunpack.c.h.b16 %v188
    %v1331 = vunpack.c.l.b16 %v189
    %v1332 = vunpack.c.h.b16 %v189
    %v1333 = vunpack.c.l.b16 %v190
    %v1334 = vunpack.c.h.b16 %v190
    %v1335 = vunpack.c.l.b16 %v191
    %v1336 = vunpack.c.h.b16 %v191
    %v1337 = vunpack.c.l.b16 %v192
    %v1338 = vunpack.c.h.b16 %v192
    %v1339 = vunpack.c.l.b16 %v193
    %v1340 = vunpack.c.h.b16 %v193
    %v1341 = vunpack.c.l.b16 %v194
    %v1342 = vunpack.c.h.b16 %v194
    %v1343 = vunpack.c.l.b16 %v195
    %v1344 = vunpack.c.h.b16 %v195
    %v1345 = vunpack.c.l.b16 %v196
    %v1346 = vunpack.c.h.b16 %v196
    %v1347 = vunpack.c.l.b16 %v197
    %v1348 = vunpack.c.h.b16 %v197
    %v1349 = vunpack.c.l.b16 %v198
    %v1350 = vunpack.c.h.b16 %v198
    %v1351 = vunpack.c.l.b16 %v199
    %v1352 = vunpack.c.h.b16 %v199
    %v1353 = vunpack.c.l.b16 %v200
    %v1354 = vunpack.c.h.b16 %v200
    %v1355 = vunpack.c.l.b16 %v201
    %v1356 = vunpack.c.h.b16 %v201
    %v1357 = vunpack.c.l.b16 %v202
    %v1358 = vunpack.c.h.b16 %v202
    %v1359 = vunpack.c.l.b16 %v203
    %v1360 = vunpack.c.h.b16 %v203
    %v1361 = vunpack.c.l.b16 %v204
    %v1362 = vunpack.c.h.b16 %v204
    %v1363 = vunpack.c.l.b16 %v205
    %v1364 = vunpack.c.h.b16 %v205
    %v1365 = vunpack.c.l.b16 %v206
    %v1366 = vunpack.c.h.b16 %v206
    %v1367 = vunpack.c.l.b16 %v207
    %v1368 = vunpack.c.h.b16 %v207
    %v1369 = vunpack.c.l.b16 %v208
    %v1370 = vunpack.c.h.b16 %v208
    %v1371 = vunpack.c.l.b16 %v209
    %v1372 = vunpack.c.h.b16 %v209
    %v1373 = vunpack.c.l.b16 %v210
    %v1374 = vunpack.c.h.b16 %v210
    %v1375 = vunpack.c.l.b16 %v211
    %v1376 = vunpack.c.h.b16 %v211
    %v1377 = vunpack.c.l.b16 %v212
    %v1378 = vunpack.c.h.b16 %v212
    %v1379 = vunpack.c.l.b16 %v213
    %v1380 = vunpack.c.h.b16 %v213
    %v1381 = vunpack.c.l.b16 %v214
    %v1382 = vunpack.c.h.b16 %v214
    %v1383 = vunpack.c.l.b16 %v215
    %v1384 = vunpack.c.h.b16 %v215
    %v1385 = vunpack.c.l.b16 %v216
    %v1386 = vunpack.c.h.b16 %v216
    %v1387 = vunpack.c.l.b16 %v217
    %v1388 = vunpack.c.h.b16 %v217
    %v1389 = vunpack.c.l.b16 %v218
    %v1390 = vunpack.c.h.b16 %v218
    %v1391 = vunpack.c.l.b16 %v219
    %v1392 = vunpack.c.h.b16 %v219
    %v1393 = vunpack.c.l.b16 %v220
    %v1394 = vunpack.c.h.b16 %v220
    %v1395 = vunpack.c.l.b16 %v221
    %v1396 = vunpack.c.h.b16 %v221
    %v1397 = vunpack.c.l.b16 %v222
    %v1398 = vunpack.c.h.b16 %v222
    %v1399 = vunpack.c.l.b16 %v223
    %v1400 = vunpack.c.h.b16 %v223
    %v1401 = vunpack.c.l.b16 %v224
    %v1402 = vunpack.c.h.b16 %v224
    %v1403 = vunpack.c.l.b16 %v225
    %v1404 = vunpack.c.h.b16 %v225
    %v1405 = vunpack.c.l.b16 %v226
    %v1406 = vunpack.c.h.b16 %v226
    %v1407 = vunpack.c.l.b16 %v227
    %v1408 = vunpack.c.h.b16 %v227
    %v1409 = vunpack.c.l.b16 %v228
    %v1410 = vunpack.c.h.b16 %v228
    %v1411 = vunpack.c.l.b16 %v229
    %v1412 = vunpack.c.h.b16 %v229
    %v1413 = vunpack.c.l.b16 %v230
    %v1414 = vunpack.c.h.b16 %v230
    %v1415 = vunpack.c.l.b16 %v231
    %v1416 = vunpack.c.h.b16 %v231
    %v1417 = vunpack.c.l.b16 %v232
    %v1418 = vunpack.c.h.b16 %v232
    %v1419 = vunpack.c.l.b16 %v233
    %v1420 = vunpack.c.h.b16 %v233
    %v1421 = vunpack.c.l.b16 %v234
    %v1422 = vunpack.c.h.b16 %v234
    %v1423 = vunpack.c.l.b16 %v235
    %v1424 = vunpack.c.h.b16 %v235
    %v1425 = vunpack.c.l.b16 %v236
    %v1426 = vunpack.c.h.b16 %v236
    %v1427 = vunpack.c.l.b16 %v237
    %v1428 = vunpack.c.h.b16 %v237
    %v1429 = vunpack.c.l.b16 %v238
    %v1430 = vunpack.c.h.b16 %v238
    %v1431 = vunpack.c.l.b16 %v239
    %v1432 = vunpack.c.h.b16 %v239
    %v1433 = vunpack.c.l.b16 %v240
    %v1434 = vunpack.c.h.b16 %v240
    %v1435 = vunpack.c.l.b16 %v241
    %v1436 = vunpack.c.h.b16 %v241
    %v1437 = vunpack.c.l.b16 %v242
    %v1438 = vunpack.c.h.b16 %v242
    %v1439 = vunpack.c.l.b16 %v243
    %v1440 = vunpack.c.h.b16 %v243
    %v1441 = vunpack.c.l.b16 %v244
    %v1442 = vunpack.c.h.b16 %v244
    %v1443 = vunpack.c.l.b16 %v245
    %v1444 = vunpack.c.h.b16 %v245
    %v1445 = vunpack.c.l.b16 %v246
    %v1446 = vunpack.c.h.b16 %v246
    %v1447 = vunpack.c.l.b16 %v247
    %v1448 = vunpack.c.h.b16 %v247
    %v1449 = vunpack.c.l.b16 %v248
    %v1450 = vunpack.c.h.b16 %v248
    %v1451 = vunpack.c.l.b16 %v249
    %v1452 = vunpack.c.h.b16 %v249
    %v1453 = vunpack.c.l.b16 %v250
    %v1454 = vunpack.c.h.b16 %v250
    %v1455 = vunpack.c.l.b16 %v251
    %v1456 = vunpack.c.h.b16 %v251
    %v1457 = vunpack.c.l.b16 %v252
    %v1458 = vunpack.c.h.b16 %v252
    %v1459 = vunpack.c.l.b16 %v253
    %v1460 = vunpack.c.h.b16 %v253
    %v1461 = vunpack.c.l.b16 %v254
    %v1462 = vunpack.c.h.b16 %v254
    %v1463 = vunpack.c.l.b16 %v255
    %v1464 = vunpack.c.h.b16 %v255
    %v1465 = vunpack.c.l.b16 %v256
    %v1466 = vunpack.c.h.b16 %v256
    %v1467 = vunpack.c.l.b16 %v257
    %v1468 = vunpack.c.h.b16 %v257
    %v1469 = vunpack.c.l.b16 %v258
    %v1470 = vunpack.c.h.b16 %v258
    %v1471 = vunpack.c.l.b16 %v259
    %v1472 = vunpack.c.h.b16 %v259
    %v1473 = vunpack.c.l.b16 %v260
    %v1474 = vunpack.c.h.b16 %v260
    %v1475 = vunpack.c.l.b16 %v261
    %v1476 = vunpack.c.h.b16 %v261
    %v1477 = vunpack.c.l.b16 %v262
    %v1478 = vunpack.c.h.b16 %v262
    %v1479 = vunpack.c.l.b16 %v263
    %v1480 = vunpack.c.h.b16 %v263
    %v1481 = vunpack.c.l.b16 %v264
    %v1482 = vunpack.c.h.b16 %v264
    %v1483 = vunpack.c.l.b16 %v265
    %v1484 = vunpack.c.h.b16 %v265
    %v1485 = vunpack.c.l.b16 %v266
    %v1486 = vunpack.c.h.b16 %v266
    %v1487 = vunpack.c.l.b16 %v267
    %v1488 = vunpack.c.h.b16 %v267
    %v1489 = vunpack.c.l.b16 %v268
    %v1490 = vunpack.c.h.b16 %v268
    %v1491 = vunpack.c.l.b16 %v269
    %v1492 = vunpack.c.h.b16 %v269
    %v1493 = vunpack.c.l.b16 %v270
    %v1494 = vunpack.c.h.b16 %v270
    %v1495 = vunpack.c.l.b16 %v271
    %v1496 = vunpack.c.h.b16 %v271
    %v1497 = vunpack.c.l.b16 %v272
    %v1498 = vunpack.c.h.b16 %v272
    %v1499 = vunpack.c.l.b16 %v273
    %v1500 = vunpack.c.h.b16 %v273
    %v1501 = vunpack.c.l.b16 %v274
    %v1502 = vunpack.c.h.b16 %v274
    %v1503 = vunpack.c.l.b16 %v275
    %v1504 = vunpack.c.h.b16 %v275
    %v1505 = vunpack.c.l.b16 %v276
    %v1506 = vunpack.c.h.b16 %v276
    %v1507 = vunpack.c.l.b16 %v277
    %v1508 = vunpack.c.h.b16 %v277
    %v1509 = vunpack.c.l.b16 %v278
    %v1510 = vunpack.c.h.b16 %v278
    %v1511 = vunpack.c.l.b16 %v279
    %v1512 = vunpack.c.h.b16 %v279
    %v1513 = vunpack.c.l.b16 %v280
    %v1514 = vunpack.c.h.b16 %v280
    %v1515 = vunpack.c.l.b16 %v281
    %v1516 = vunpack.c.h.b16 %v281
    %v1517 = vunpack.c.l.b16 %v282
    %v1518 = vunpack.c.h.b16 %v282
    %v1519 = vunpack.c.l.b16 %v283
    %v1520 = vunpack.c.h.b16 %v283
    %v1521 = vunpack.c.l.b16 %v284
    %v1522 = vunpack.c.h.b16 %v284
    %v1523 = vunpack.c.l.b16 %v285
    %v1524 = vunpack.c.h.b16 %v285
    %v1525 = vunpack.c.l.b16 %v286
    %v1526 = vunpack.c.h.b16 %v286
    %v1527 = vunpack.c.l.b16 %v287
    %v1528 = vunpack.c.h.b16 %v287
    %v1529 = vunpack.c.l.b16 %v288
    %v1530 = vunpack.c.h.b16 %v288
    %v1531 = vunpack.c.l.b16 %v289
    %v1532 = vunpack.c.h.b16 %v289
    %v1533 = vunpack.c.l.b16 %v290
    %v1534 = vunpack.c.h.b16 %v290
    %v1535 = vunpack.c.l.b16 %v291
    %v1536 = vunpack.c.h.b16 %v291
    %v1537 = vunpack.c.l.b16 %v292
    %v1538 = vunpack.c.h.b16 %v292
    %v1539 = vunpack.c.l.b16 %v293
    %v1540 = vunpack.c.h.b16 %v293
    %v1541 = vunpack.c.l.b16 %v294
    %v1542 = vunpack.c.h.b16 %v294
    %v1543 = vunpack.c.l.b16 %v295
    %v1544 = vunpack.c.h.b16 %v295
    %v1545 = vunpack.c.l.b16 %v296
    %v1546 = vunpack.c.h.b16 %v296
    %v1547 = vunpack.c.l.b16 %v297
    %v1548 = vunpack.c.h.b16 %v297
    %v1549 = vunpack.c.l.b16 %v298
    %v1550 = vunpack.c.h.b16 %v298
    %v1551 = vunpack.c.l.b16 %v299
    %v1552 = vunpack.c.h.b16 %v299
    %v1553 = vunpack.c.l.b16 %v300
    %v1554 = vunpack.c.h.b16 %v300
    %v1555 = vunpack.c.l.b16 %v301
    %v1556 = vunpack.c.h.b16 %v301
    %v1557 = vunpack.c.l.b16 %v302
    %v1558 = vunpack.c.h.b16 %v302
    %v1559 = vunpack.c.l.b16 %v303
    %v1560 = vunpack.c.h.b16 %v303
    %v1561 = vunpack.c.l.b16 %v304
    %v1562 = vunpack.c.h.b16 %v304
    %v1563 = vunpack.c.l.b16 %v305
    %v1564 = vunpack.c.h.b16 %v305
    %v1565 = vunpack.c.l.b16 %v306
    %v1566 = vunpack.c.h.b16 %v306
    %v1567 = vunpack.c.l.b16 %v307
    %v1568 = vunpack.c.h.b16 %v307
    %v1569 = vunpack.c.l.b16 %v308
    %v1570 = vunpack.c.h.b16 %v308
    %v1571 = vunpack.c.l.b16 %v309
    %v1572 = vunpack.c.h.b16 %v309
    %v1573 = vunpack.c.l.b16 %v310
    %v1574 = vunpack.c.h.b16 %v310
    %v1575 = vunpack.c.l.b16 %v311
    %v1576 = vunpack.c.h.b16 %v311
    %v1577 = vunpack.c.l.b16 %v312
    %v1578 = vunpack.c.h.b16 %v312
    %v1579 = vunpack.c.l.b16 %v313
    %v1580 = vunpack.c.h.b16 %v313
    %v1581 = vunpack.c.l.b16 %v314
    %v1582 = vunpack.c.h.b16 %v314
    %v1583 = vunpack.c.l.b16 %v315
    %v1584 = vunpack.c.h.b16 %v315
    %v1585 = vunpack.c.l.b16 %v316
    %v1586 = vunpack.c.h.b16 %v316
    %v1587 = vunpack.c.l.b16 %v317
    %v1588 = vunpack.c.h.b16 %v317
    %v1589 = vunpack.c.l.b16 %v318
    %v1590 = vunpack.c.h.b16 %v318
    %v1591 = vunpack.c.l.b16 %v319
    %v1592 = vunpack.c.h.b16 %v319
    %v1593 = vunpack.c.l.b16 %v320
    %v1594 = vunpack.c.h.b16 %v320
    %v1595 = vunpack.c.l.b16 %v321
    %v1596 = vunpack.c.h.b16 %v321
    %v1597 = vunpack.c.l.b16 %v322
    %v1598 = vunpack.c.h.b16 %v322
    %v1599 = vunpack.c.l.b16 %v323
    %v1600 = vunpack.c.h.b16 %v323
    %v1601 = vunpack.c.l.b16 %v324
    %v1602 = vunpack.c.h.b16 %v324
    %v1603 = vunpack.c.l.b16 %v325
    %v1604 = vunpack.c.h.b16 %v325
    %v1605 = vunpack.c.l.b16 %v326
    %v1606 = vunpack.c.h.b16 %v326
    %v1607 = vunpack.c.l.b16 %v327
    %v1608 = vunpack.c.h.b16 %v327
    %v1609 = vunpack.c.l.b16 %v328
    %v1610 = vunpack.c.h.b16 %v328
    %v1611 = vunpack.c.l.b16 %v329
    %v1612 = vunpack.c.h.b16 %v329
    %v1613 = vunpack.c.l.b16 %v330
    %v1614 = vunpack.c.h.b16 %v330
    %v1615 = vunpack.c.l.b16 %v331
    %v1616 = vunpack.c.h.b16 %v331
    %v1617 = vunpack.c.l.b16 %v332
    %v1618 = vunpack.c.h.b16 %v332
    %v1619 = vunpack.c.l.b16 %v333
    %v1620 = vunpack.c.h.b16 %v333
    %v1621 = vunpack.c.l.b16 %v334
    %v1622 = vunpack.c.h.b16 %v334
    %v1623 = vunpack.c.l.b16 %v335
    %v1624 = vunpack.c.h.b16 %v335
    %v1625 = vunpack.c.l.b16 %v336
    %v1626 = vunpack.c.h.b16 %v336
    %v1627 = vunpack.c.l.b16 %v337
    %v1628 = vunpack.c.h.b16 %v337
    %v1629 = vunpack.c.l.b16 %v338
    %v1630 = vunpack.c.h.b16 %v338
    %v1631 = vunpack.c.l.b16 %v339
    %v1632 = vunpack.c.h.b16 %v339
    %v1633 = vunpack.c.l.b16 %v340
    %v1634 = vunpack.c.h.b16 %v340
    %v1635 = vunpack.c.l.b16 %v341
    %v1636 = vunpack.c.h.b16 %v341
    %v1637 = vunpack.c.l.b16 %v342
    %v1638 = vunpack.c.h.b16 %v342
    %v1639 = vunpack.c.l.b16 %v343
    %v1640 = vunpack.c.h.b16 %v343
    %v1641 = vunpack.c.l.b16 %v344
    %v1642 = vunpack.c.h.b16 %v344
    %v1643 = vunpack.c.l.b16 %v345
    %v1644 = vunpack.c.h.b16 %v345
    %v1645 = vunpack.c.l.b16 %v346
    %v1646 = vunpack.c.h.b16 %v346
    %v1647 = vunpack.c.l.b16 %v347
    %v1648 = vunpack.c.h.b16 %v347
    %v1649 = vunpack.c.l.b16 %v348
    %v1650 = vunpack.c.h.b16 %v348
    %v1651 = vunpack.c.l.b16 %v349
    %v1652 = vunpack.c.h.b16 %v349
    %v1653 = vunpack.c.l.b16 %v350
    %v1654 = vunpack.c.h.b16 %v350
    %v1655 = vunpack.c.l.b16 %v351
    %v1656 = vunpack.c.h.b16 %v351
    %v1657 = vunpack.c.l.b16 %v352
    %v1658 = vunpack.c.h.b16 %v352
    %v1659 = vunpack.c.l.b16 %v353
    %v1660 = vunpack.c.h.b16 %v353
    %v1661 = vunpack.c.l.b16 %v354
    %v1662 = vunpack.c.h.b16 %v354
    %v1663 = vunpack.c.l.b16 %v355
    %v1664 = vunpack.c.h.b16 %v355
    %v1665 = vunpack.c.l.b16 %v356
    %v1666 = vunpack.c.h.b16 %v356
    %v1667 = vunpack.c.l.b16 %v357
    %v1668 = vunpack.c.h.b16 %v357
    %v1669 = vunpack.c.l.b16 %v358
    %v1670 = vunpack.c.h.b16 %v358
    %v1671 = vunpack.c.l.b16 %v359
    %v1672 = vunpack.c.h.b16 %v359
    %v1673 = vunpack.c.l.b16 %v360
    %v1674 = vunpack.c.h.b16 %v360
    %v1675 = vunpack.c.l.b16 %v361
    %v1676 = vunpack.c.h.b16 %v361
    %v1677 = vunpack.c.l.b16 %v362
    %v1678 = vunpack.c.h.b16 %v362
    %v1679 = vunpack.c.l.b16 %v363
    %v1680 = vunpack.c.h.b16 %v363
    %v1681 = vunpack.c.l.b16 %v364
    %v1682 = vunpack.c.h.b16 %v364
    %v1683 = vunpack.c.l.b16 %v365
    %v1684 = vunpack.c.h.b16 %v365
    %v1685 = vunpack.c.l.b16 %v366
    %v1686 = vunpack.c.h.b16 %v366
    %v1687 = vunpack.c.l.b16 %v367
    %v1688 = vunpack.c.h.b16 %v367
    %v1689 = vunpack.c.l.b16 %v368
    %v1690 = vunpack.c.h.b16 %v368
    %v1691 = vunpack.c.l.b16 %v369
    %v1692 = vunpack.c.h.b16 %v369
    %v1693 = vunpack.c.l.b16 %v370
    %v1694 = vunpack.c.h.b16 %v370
    %v1695 = vunpack.c.l.b16 %v371
    %v1696 = vunpack.c.h.b16 %v371
    %v1697 = vunpack.c.l.b16 %v372
    %v1698 = vunpack.c.h.b16 %v372
    %v1699 = vunpack.c.l.b16 %v373
    %v1700 = vunpack.c.h.b16 %v373
    %v1701 = vunpack.c.l.b16 %v374
    %v1702 = vunpack.c.h.b16 %v374
    %v1703 = vunpack.c.l.b16 %v375
    %v1704 = vunpack.c.h.b16 %v375
    %v1705 = vunpack.c.l.b16 %v376
    %v1706 = vunpack.c.h.b16 %v376
    %v1707 = vunpack.c.l.b16 %v377
    %v1708 = vunpack.c.h.b16 %v377
    %v1709 = vunpack.c.l.b16 %v378
    %v1710 = vunpack.c.h.b16 %v378
    %v1711 = vunpack.c.l.b16 %v379
    %v1712 = vunpack.c.h.b16 %v379
    %v1713 = vunpack.c.l.b16 %v380
    %v1714 = vunpack.c.h.b16 %v380
    %v1715 = vunpack.c.l.b16 %v381
    %v1716 = vunpack.c.h.b16 %v381
    %v1717 = vunpack.c.l.b16 %v382
    %v1718 = vunpack.c.h.b16 %v382
    %v1719 = vunpack.c.l.b16 %v383
    %v1720 = vunpack.c.h.b16 %v383
    %v1721 = vunpack.c.l.b16 %v384
    %v1722 = vunpack.c.h.b16 %v384
    %v1723 = vunpack.c.l.b16 %v385
    %v1724 = vunpack.c.h.b16 %v385
    %v1725 = vunpack.c.l.b16 %v386
    %v1726 = vunpack.c.h.b16 %v386
    %v1727 = vunpack.c.l.b16 %v387
    %v1728 = vunpack.c.h.b16 %v387
    %v1729 = vunpack.c.l.b16 %v388
    %v1730 = vunpack.c.h.b16 %v388
    %v1731 = vunpack.c.l.b16 %v389
    %v1732 = vunpack.c.h.b16 %v389
    %v1733 = vunpack.c.l.b16 %v390
    %v1734 = vunpack.c.h.b16 %v390
    %v1735 = vunpack.c.l.b16 %v391
    %v1736 = vunpack.c.h.b16 %v391
    %v1737 = vunpack.c.l.b16 %v392
    %v1738 = vunpack.c.h.b16 %v392
    %v1739 = vunpack.c.l.b16 %v393
    %v1740 = vunpack.c.h.b16 %v393
    %v1741 = vunpack.c.l.b16 %v394
    %v1742 = vunpack.c.h.b16 %v394
    %v1743 = vunpack.c.l.b16 %v395
    %v1744 = vunpack.c.h.b16 %v395
    %v1745 = vunpack.c.l.b16 %v396
    %v1746 = vunpack.c.h.b16 %v396
    %v1747 = vunpack.c.l.b16 %v397
    %v1748 = vunpack.c.h.b16 %v397
    %v1749 = vunpack.c.l.b16 %v398
    %v1750 = vunpack.c.h.b16 %v398
    %v1751 = vunpack.c.l.b16 %v399
    %v1752 = vunpack.c.h.b16 %v399
    %v1753 = vunpack.c.l.b16 %v400
    %v1754 = vunpack.c.h.b16 %v400
    %v1755 = vunpack.c.l.b16 %v401
    %v1756 = vunpack.c.h.b16 %v401
    %v1757 = vunpack.c.l.b16 %v402
    %v1758 = vunpack.c.h.b16 %v402
    %v1759 = vunpack.c.l.b16 %v403
    %v1760 = vunpack.c.h.b16 %v403
    %v1761 = vunpack.c.l.b16 %v404
    %v1762 = vunpack.c.h.b16 %v404
    %v1763 = vunpack.c.l.b16 %v405
    %v1764 = vunpack.c.h.b16 %v405
    %v1765 = vunpack.c.l.b16 %v406
    %v1766 = vunpack.c.h.b16 %v406
    %v1767 = vunpack.c.l.b16 %v407
    %v1768 = vunpack.c.h.b16 %v407
    %v1769 = vunpack.c.l.b16 %v408
    %v1770 = vunpack.c.h.b16 %v408
    %v1771 = vunpack.c.l.b16 %v409
    %v1772 = vunpack.c.h.b16 %v409
    %v1773 = vunpack.c.l.b16 %v410
    %v1774 = vunpack.c.h.b16 %v410
    %v1775 = vunpack.c.l.b16 %v411
    %v1776 = vunpack.c.h.b16 %v411
    %v1777 = vunpack.c.l.b16 %v412
    %v1778 = vunpack.c.h.b16 %v412
    %v1779 = vunpack.c.l.b16 %v413
    %v1780 = vunpack.c.h.b16 %v413
    %v1781 = vunpack.c.l.b16 %v414
    %v1782 = vunpack.c.h.b16 %v414
    %v1783 = vunpack.c.l.b16 %v415
    %v1784 = vunpack.c.h.b16 %v415
    %v1785 = vunpack.c.l.b16 %v416
    %v1786 = vunpack.c.h.b16 %v416
    %v1787 = vunpack.c.l.b16 %v417
    %v1788 = vunpack.c.h.b16 %v417
    %v1789 = vunpack.c.l.b16 %v418
    %v1790 = vunpack.c.h.b16 %v418
    %v1791 = vunpack.c.l.b16 %v419
    %v1792 = vunpack.c.h.b16 %v419
    %v1793 = vunpack.c.l.b16 %v420
    %v1794 = vunpack.c.h.b16 %v420
    %v1795 = vunpack.c.l.b16 %v421
    %v1796 = vunpack.c.h.b16 %v421
    %v1797 = vunpack.c.l.b16 %v422
    %v1798 = vunpack.c.h.b16 %v422
    %v1799 = vunpack.c.l.b16 %v423
    %v1800 = vunpack.c.h.b16 %v423
    %v1801 = vunpack.c.l.b16 %v424
    %v1802 = vunpack.c.h.b16 %v424
    %v1803 = vunpack.c.l.b16 %v425
    %v1804 = vunpack.c.h.b16 %v425
    %v1805 = vunpack.c.l.b16 %v426
    %v1806 = vunpack.c.h.b16 %v426
    %v1807 = vunpack.c.l.b16 %v427
    %v1808 = vunpack.c.h.b16 %v427
    %v1809 = vunpack.c.l.b16 %v428
    %v1810 = vunpack.c.h.b16 %v428
    %v1811 = vunpack.c.l.b16 %v429
    %v1812 = vunpack.c.h.b16 %v429
    %v1813 = vunpack.c.l.b16 %v430
    %v1814 = vunpack.c.h.b16 %v430
    %v1815 = vunpack.c.l.b16 %v431
    %v1816 = vunpack.c.h.b16 %v431
    %v1817 = vunpack.c.l.b16 %v432
    %v1818 = vunpack.c.h.b16 %v432
    %v1819 = vunpack.c.l.b16 %v433
    %v1820 = vunpack.c.h.b16 %v433
    %v1821 = vunpack.c.l.b16 %v434
    %v1822 = vunpack.c.h.b16 %v434
    %v1823 = vunpack.c.l.b16 %v435
    %v1824 = vunpack.c.h.b16 %v435
    %v1825 = vunpack.c.l.b16 %v436
    %v1826 = vunpack.c.h.b16 %v436
    %v1827 = vunpack.c.l.b16 %v437
    %v1828 = vunpack.c.h.b16 %v437
    %v1829 = vunpack.c.l.b16 %v438
    %v1830 = vunpack.c.h.b16 %v438
    %v1831 = vunpack.c.l.b16 %v439
    %v1832 = vunpack.c.h.b16 %v439
    %v1833 = vunpack.c.l.b16 %v440
    %v1834 = vunpack.c.h.b16 %v440
    %v1835 = vunpack.c.l.b16 %v441
    %v1836 = vunpack.c.h.b16 %v441
    %v1837 = vunpack.c.l.b16 %v442
    %v1838 = vunpack.c.h.b16 %v442
    %v1839 = vunpack.c.l.b16 %v443
    %v1840 = vunpack.c.h.b16 %v443
    %v1841 = vunpack.c.l.b16 %v444
    %v1842 = vunpack.c.h.b16 %v444
    %v1843 = vunpack.c.l.b16 %v445
    %v1844 = vunpack.c.h.b16 %v445
    %v1845 = vunpack.c.l.b16 %v446
    %v1846 = vunpack.c.h.b16 %v446
    %v1847 = vunpack.c.l.b16 %v447
    %v1848 = vunpack.c.h.b16 %v447
    %v1849 = vunpack.c.l.b16 %v448
    %v1850 = vunpack.c.h.b16 %v448
    %v1851 = vunpack.c.l.b16 %v449
    %v1852 = vunpack.c.h.b16 %v449
    %v1853 = vunpack.c.l.b16 %v450
    %v1854 = vunpack.c.h.b16 %v450
    %v1855 = vunpack.c.l.b16 %v451
    %v1856 = vunpack.c.h.b16 %v451
    %v1857 = vunpack.c.l.b16 %v452
    %v1858 = vunpack.c.h.b16 %v452
    %v1859 = vunpack.c.l.b16 %v453
    %v1860 = vunpack.c.h.b16 %v453
    %v1861 = vunpack.c.l.b16 %v454
    %v1862 = vunpack.c.h.b16 %v454
    %v1863 = vunpack.c.l.b16 %v455
    %v1864 = vunpack.c.h.b16 %v455
    %v1865 = vunpack.c.l.b16 %v456
    %v1866 = vunpack.c.h.b16 %v456
    %v1867 = vunpack.c.l.b16 %v457
    %v1868 = vunpack.c.h.b16 %v457
    %v1869 = vunpack.c.l.b16 %v458
    %v1870 = vunpack.c.h.b16 %v458
    %v1871 = vunpack.c.l.b16 %v459
    %v1872 = vunpack.c.h.b16 %v459
    %v1873 = vunpack.c.l.b16 %v460
    %v1874 = vunpack.c.h.b16 %v460
    %v1875 = vunpack.c.l.b16 %v461
    %v1876 = vunpack.c.h.b16 %v461
    %v1877 = vunpack.c.l.b16 %v462
    %v1878 = vunpack.c.h.b16 %v462
    %v1879 = vunpack.c.l.b16 %v463
    %v1880 = vunpack.c.h.b16 %v463
    %v1881 = vunpack.c.l.b16 %v464
    %v1882 = vunpack.c.h.b16 %v464
    %v1883 = vunpack.c.l.b16 %v465
    %v1884 = vunpack.c.h.b16 %v465
    %v1885 = vunpack.c.l.b16 %v466
    %v1886 = vunpack.c.h.b16 %v466
    %v1887 = vunpack.c.l.b16 %v467
    %v1888 = vunpack.c.h.b16 %v467
    %v1889 = vunpack.c.l.b16 %v468
    %v1890 = vunpack.c.h.b16 %v468
    %v1891 = vunpack.c.l.b16 %v469
    %v1892 = vunpack.c.h.b16 %v469
    %v1893 = vunpack.c.l.b16 %v470
    %v1894 = vunpack.c.h.b16 %v470
    %v1895 = vunpack.c.l.b16 %v471
    %v1896 = vunpack.c.h.b16 %v471
    %v1897 = vunpack.c.l.b16 %v472
    %v1898 = vunpack.c.h.b16 %v472
    %v1899 = vunpack.c.l.b16 %v473
    %v1900 = vunpack.c.h.b16 %v473
    %v1901 = vunpack.c.l.b16 %v474
    %v1902 = vunpack.c.h.b16 %v474
    %v1903 = vunpack.c.l.b16 %v475
    %v1904 = vunpack.c.h.b16 %v475
    %v1905 = vunpack.c.l.b16 %v476
    %v1906 = vunpack.c.h.b16 %v476
    %v1907 = vunpack.c.l.b16 %v477
    %v1908 = vunpack.c.h.b16 %v477
    %v1909 = vunpack.c.l.b16 %v478
    %v1910 = vunpack.c.h.b16 %v478
    %v1911 = vunpack.c.l.b16 %v479
    %v1912 = vunpack.c.h.b16 %v479
    %v1913 = vunpack.c.l.b16 %v480
    %v1914 = vunpack.c.h.b16 %v480
    %v1915 = vunpack.c.l.b16 %v481
    %v1916 = vunpack.c.h.b16 %v481
    %v1917 = vunpack.c.l.b16 %v482
    %v1918 = vunpack.c.h.b16 %v482
    %v1919 = vunpack.c.l.b16 %v483
    %v1920 = vunpack.c.h.b16 %v483
    %v1921 = vunpack.c.l.b16 %v484
    %v1922 = vunpack.c.h.b16 %v484
    %v1923 = vunpack.c.l.b16 %v485
    %v1924 = vunpack.c.h.b16 %v485
    %v1925 = vunpack.c.l.b16 %v486
    %v1926 = vunpack.c.h.b16 %v486
    %v1927 = vunpack.c.l.b16 %v487
    %v1928 = vunpack.c.h.b16 %v487
    %v1929 = vunpack.c.l.b16 %v488
    %v1930 = vunpack.c.h.b16 %v488
    %v1931 = vunpack.c.l.b16 %v489
    %v1932 = vunpack.c.h.b16 %v489
    %v1933 = vunpack.c.l.b16 %v490
    %v1934 = vunpack.c.h.b16 %v490
    %v1935 = vunpack.c.l.b16 %v491
    %v1936 = vunpack.c.h.b16 %v491
    %v1937 = vunpack.c.l.b16 %v492
    %v1938 = vunpack.c.h.b16 %v492
    %v1939 = vunpack.c.l.b16 %v493
    %v1940 = vunpack.c.h.b16 %v493
    %v1941 = vunpack.c.l.b16 %v494
    %v1942 = vunpack.c.h.b16 %v494
    %v1943 = vunpack.c.l.b16 %v495
    %v1944 = vunpack.c.h.b16 %v495
    %v1945 = vunpack.c.l.b16 %v496
    %v1946 = vunpack.c.h.b16 %v496
    %v1947 = vunpack.c.l.b16 %v497
    %v1948 = vunpack.c.h.b16 %v497
    %v1949 = vunpack.c.l.b16 %v498
    %v1950 = vunpack.c.h.b16 %v498
    %v1951 = vunpack.c.l.b16 %v499
    %v1952 = vunpack.c.h.b16 %v499
    %v1953 = vunpack.c.l.b16 %v500
    %v1954 = vunpack.c.h.b16 %v500
    %v1955 = vunpack.c.l.b16 %v501
    %v1956 = vunpack.c.h.b16 %v501
    %v1957 = vunpack.c.l.b16 %v502
    %v1958 = vunpack.c.h.b16 %v502
    %v1959 = vunpack.c.l.b16 %v503
    %v1960 = vunpack.c.h.b16 %v503
    %v1961 = vunpack.c.l.b16 %v504
    %v1962 = vunpack.c.h.b16 %v504
    %v1963 = vunpack.c.l.b16 %v505
    %v1964 = vunpack.c.h.b16 %v505
    %v1965 = vunpack.c.l.b16 %v506
    %v1966 = vunpack.c.h.b16 %v506
    %v1967 = vunpack.c.l.b16 %v507
    %v1968 = vunpack.c.h.b16 %v507
    %v1969 = vunpack.c.l.b16 %v508
    %v1970 = vunpack.c.h.b16 %v508
    %v1971 = vunpack.c.l.b16 %v509
    %v1972 = vunpack.c.h.b16 %v509
    %v1973 = vunpack.c.l.b16 %v510
    %v1974 = vunpack.c.h.b16 %v510
    %v1975 = vunpack.c.l.b16 %v511
    %v1976 = vunpack.c.h.b16 %v511
    %v1977 = vunpack.c.l.b16 %v512
    %v1978 = vunpack.c.h.b16 %v512
    %v1979 = vunpack.c.l.b16 %v513
    %v1980 = vunpack.c.h.b16 %v513
    %v1981 = vunpack.c.l.b16 %v514
    %v1982 = vunpack.c.h.b16 %v514
    %v1983 = vunpack.c.l.b16 %v515
    %v1984 = vunpack.c.h.b16 %v515
    %v1985 = vunpack.c.l.b16 %v516
    %v1986 = vunpack.c.h.b16 %v516
    %v1987 = vunpack.c.l.b16 %v517
    %v1988 = vunpack.c.h.b16 %v517
    %v1989 = vunpack.c.l.b16 %v518
    %v1990 = vunpack.c.h.b16 %v518
    %v1991 = vunpack.c.l.b16 %v519
    %v1992 = vunpack.c.h.b16 %v519
    %v1993 = vunpack.c.l.b16 %v520
    %v1994 = vunpack.c.h.b16 %v520
    %v1995 = vunpack.c.l.b16 %v521
    %v1996 = vunpack.c.h.b16 %v521
    %v1997 = vunpack.c.l.b16 %v522
    %v1998 = vunpack.c.h.b16 %v522
    %v1999 = vunpack.c.l.b16 %v523
    %v2000 = vunpack.c.h.b16 %v523
    %v2001 = vunpack.c.l.b16 %v524
    %v2002 = vunpack.c.h.b16 %v524
    %v2003 = vunpack.c.l.b16 %v525
    %v2004 = vunpack.c.h.b16 %v525
    %v2005 = vunpack.c.l.b16 %v526
    %v2006 = vunpack.c.h.b16 %v526
    %v2007 = vunpack.c.l.b16 %v527
    %v2008 = vunpack.c.h.b16 %v527
    %v2009 = vunpack.c.l.b16 %v528
    %v2010 = vunpack.c.h.b16 %v528
    %v2011 = vunpack.c.l.b16 %v529
    %v2012 = vunpack.c.h.b16 %v529
    %v2013 = vunpack.c.l.b16 %v530
    %v2014 = vunpack.c.h.b16 %v530
    %v2015 = vunpack.c.l.b16 %v531
    %v2016 = vunpack.c.h.b16 %v531
    %v2017 = vunpack.c.l.b16 %v532
    %v2018 = vunpack.c.h.b16 %v532
    %v2019 = vunpack.c.l.b16 %v533
    %v2020 = vunpack.c.h.b16 %v533
    %v2021 = vunpack.c.l.b16 %v534
    %v2022 = vunpack.c.h.b16 %v534
    %v2023 = vunpack.c.l.b16 %v535
    %v2024 = vunpack.c.h.b16 %v535
    %v2025 = vunpack.c.l.b16 %v536
    %v2026 = vunpack.c.h.b16 %v536
    %v2027 = vunpack.c.l.b16 %v537
    %v2028 = vunpack.c.h.b16 %v537
    %v2029 = vunpack.c.l.b16 %v538
    %v2030 = vunpack.c.h.b16 %v538
    %v2031 = vunpack.c.l.b16 %v539
    %v2032 = vunpack.c.h.b16 %v539
    %v2033 = vunpack.c.l.b16 %v540
    %v2034 = vunpack.c.h.b16 %v540
    %v2035 = vunpack.c.l.b16 %v541
    %v2036 = vunpack.c.h.b16 %v541
    %v2037 = vunpack.c.l.b16 %v542
    %v2038 = vunpack.c.h.b16 %v542
    %v2039 = vunpack.c.l.b16 %v543
    %v2040 = vunpack.c.h.b16 %v543
    %v2041 = vunpack.c.l.b16 %v544
    %v2042 = vunpack.c.h.b16 %v544
    %v2043 = vunpack.c.l.b16 %v545
    %v2044 = vunpack.c.h.b16 %v545
    %v2045 = vunpack.c.l.b16 %v546
    %v2046 = vunpack.c.h.b16 %v546
    %v2047 = vunpack.c.l.b16 %v547
    %v2048 = vunpack.c.h.b16 %v547
    %v2049 = vunpack.c.l.b16 %v548
    %v2050 = vunpack.c.h.b16 %v548
    %v2051 = vunpack.c.l.b16 %v549
    %v2052 = vunpack.c.h.b16 %v549
    %v2053 = vunpack.c.l.b16 %v550
    %v2054 = vunpack.c.h.b16 %v550
    %v2055 = vunpack.c.l.b16 %v551
    %v2056 = vunpack.c.h.b16 %v551
    %v2057 = vunpack.c.l.b16 %v552
    %v2058 = vunpack.c.h.b16 %v552
    %v2059 = vunpack.c.l.b16 %v553
    %v2060 = vunpack.c.h.b16 %v553
    %v2061 = vunpack.c.l.b16 %v554
    %v2062 = vunpack.c.h.b16 %v554
    %v2063 = vunpack.c.l.b16 %v555
    %v2064 = vunpack.c.h.b16 %v555
    %v2065 = vunpack.c.l.b16 %v556
    %v2066 = vunpack.c.h.b16 %v556
    %v2067 = vunpack.c.l.b16 %v557
    %v2068 = vunpack.c.h.b16 %v557
    %v2069 = vunpack.c.l.b16 %v558
    %v2070 = vunpack.c.h.b16 %v558
    %v2071 = vunpack.c.l.b16 %v559
    %v2072 = vunpack.c.h.b16 %v559
    %v2073 = vunpack.c.l.b16 %v560
    %v2074 = vunpack.c.h.b16 %v560
    %v2075 = vunpack.c.l.b16 %v561
    %v2076 = vunpack.c.h.b16 %v561
    %v2077 = vunpack.c.l.b16 %v562
    %v2078 = vunpack.c.h.b16 %v562
    %v2079 = vunpack.c.l.b16 %v563
    %v2080 = vunpack.c.h.b16 %v563
    %v2081 = vunpack.c.l.b16 %v564
    %v2082 = vunpack.c.h.b16 %v564
    %v2083 = vunpack.c.l.b16 %v565
    %v2084 = vunpack.c.h.b16 %v565
    %v2085 = vunpack.c.l.b16 %v566
    %v2086 = vunpack.c.h.b16 %v566
    %v2087 = vunpack.c.l.b16 %v567
    %v2088 = vunpack.c.h.b16 %v567
    %v2089 = vunpack.c.l.b16 %v568
    %v2090 = vunpack.c.h.b16 %v568
    %v2091 = vunpack.c.l.b16 %v569
    %v2092 = vunpack.c.h.b16 %v569
    %v2093 = vunpack.c.l.b16 %v570
    %v2094 = vunpack.c.h.b16 %v570
    %v2095 = vunpack.c.l.b16 %v571
    %v2096 = vunpack.c.h.b16 %v571
    %v2097 = vunpack.c.l.b16 %v572
    %v2098 = vunpack.c.h.b16 %v572
    %v2099 = vunpack.c.l.b16 %v573
    %v2100 = vunpack.c.h.b16 %v573
    %v2101 = vunpack.c.l.b16 %v574
    %v2102 = vunpack.c.h.b16 %v574
    %v2103 = vunpack.c.l.b16 %v575
    %v2104 = vunpack.c.h.b16 %v575
    %v2105 = vunpack.c.l.b16 %v576
    %v2106 = vunpack.c.h.b16 %v576
    %v2107 = vunpack.c.l.b16 %v577
    %v2108 = vunpack.c.h.b16 %v577
    %v2109 = vunpack.c.l.b16 %v578
    %v2110 = vunpack.c.h.b16 %v578
    %v2111 = vunpack.c.l.b16 %v579
    %v2112 = vunpack.c.h.b16 %v579
    %v2113 = vunpack.c.l.b16 %v580
    %v2114 = vunpack.c.h.b16 %v580
    %v2115 = vunpack.c.l.b16 %v581
    %v2116 = vunpack.c.h.b16 %v581
    %v2117 = vunpack.c.l.b16 %v582
    %v2118 = vunpack.c.h.b16 %v582
    %v2119 = vunpack.c.l.b16 %v583
    %v2120 = vunpack.c.h.b16 %v583
    %v2121 = vunpack.c.l.b16 %v584
    %v2122 = vunpack.c.h.b16 %v584
    %v2123 = vunpack.c.l.b16 %v585
    %v2124 = vunpack.c.h.b16 %v585
    %v2125 = vunpack.c.l.b16 %v586
    %v2126 = vunpack.c.h.b16 %v586
    %v2127 = vunpack.c.l.b16 %v587
    %v2128 = vunpack.c.h.b16 %v587
    %v2129 = vunpack.c.l.b16 %v588
    %v2130 = vunpack.c.h.b16 %v588
    %v2131 = vunpack.c.l.b16 %v589
    %v2132 = vunpack.c.h.b16 %v589
    %v2133 = vunpack.c.l.b16 %v590
    %v2134 = vunpack.c.h.b16 %v590
    %v2135 = vunpack.c.l.b16 %v591
    %v2136 = vunpack.c.h.b16 %v591
    %v2137 = vunpack.c.l.b16 %v592
    %v2138 = vunpack.c.h.b16 %v592
    %v2139 = vunpack.c.l.b16 %v593
    %v2140 = vunpack.c.h.b16 %v593
    %v2141 = vunpack.c.l.b16 %v594
    %v2142 = vunpack.c.h.b16 %v594
    %v2143 = vunpack.c.l.b16 %v595
    %v2144 = vunpack.c.h.b16 %v595
    %v2145 = vunpack.c.l.b16 %v596
    %v2146 = vunpack.c.h.b16 %v596
    %v2147 = vunpack.c.l.b16 %v597
    %v2148 = vunpack.c.h.b16 %v597
    %v2149 = vunpack.c.l.b16 %v598
    %v2150 = vunpack.c.h.b16 %v598
    %v2151 = vunpack.c.l.b16 %v599
    %v2152 = vunpack.c.h.b16 %v599
    %v2153 = vunpack.c.l.b16 %v600
    %v2154 = vunpack.c.h.b16 %v600
    %v2155 = vunpack.c.l.b16 %v601
    %v2156 = vunpack.c.h.b16 %v601
    %v2157 = vunpack.c.l.b16 %v602
    %v2158 = vunpack.c.h.b16 %v602
    %v2159 = vunpack.c.l.b16 %v603
    %v2160 = vunpack.c.h.b16 %v603
    %v2161 = vunpack.c.l.b16 %v604
    %v2162 = vunpack.c.h.b16 %v604
    %v2163 = vunpack.c.l.b16 %v605
    %v2164 = vunpack.c.h.b16 %v605
    %v2165 = vunpack.c.l.b16 %v606
    %v2166 = vunpack.c.h.b16 %v606
    %v2167 = vunpack.c.l.b16 %v607
    %v2168 = vunpack.c.h.b16 %v607
    %v2169 = vunpack.c.l.b16 %v608
    %v2170 = vunpack.c.h.b16 %v608
    %v2171 = vunpack.c.l.b16 %v609
    %v2172 = vunpack.c.h.b16 %v609
    %v2173 = vunpack.c.l.b16 %v610
    %v2174 = vunpack.c.h.b16 %v610
    %v2175 = vunpack.c.l.b16 %v611
    %v2176 = vunpack.c.h.b16 %v611
    %v2177 = vunpack.c.l.b16 %v612
    %v2178 = vunpack.c.h.b16 %v612
    %v2179 = vunpack.c.l.b16 %v613
    %v2180 = vunpack.c.h.b16 %v613
    %v2181 = vunpack.c.l.b16 %v614
    %v2182 = vunpack.c.h.b16 %v614
    %v2183 = vunpack.c.l.b16 %v615
    %v2184 = vunpack.c.h.b16 %v615
    %v2185 = vunpack.c.l.b16 %v616
    %v2186 = vunpack.c.h.b16 %v616
    %v2187 = vunpack.c.l.b16 %v617
    %v2188 = vunpack.c.h.b16 %v617
    %v2189 = vunpack.c.l.b16 %v618
    %v2190 = vunpack.c.h.b16 %v618
    %v2191 = vpack.c.b16 %v1183, %v1167
    %v2192 = vpack.c.b16 %v1184, %v1168
    %v2193 = vpack.c.b16 %v1185, %v1169
    %v2194 = vpack.c.b16 %v1186, %v1170
    %v2195 = vpack.c.b16 %v1187, %v1171
    %v2196 = vpack.c.b16 %v1188, %v1172
    %v2197 = vpack.c.b16 %v1189, %v1173
    %v2198 = vpack.c.b16 %v1190, %v1174
    %v2199 = vpack.c.b16 %v1191, %v1175
    %v2200 = vpack.c.b16 %v1192, %v1176
    %v2201 = vpack.c.b16 %v1193, %v1177
    %v2202 = vpack.c.b16 %v1194, %v1178
    %v2203 = vpack.c.b16 %v1195, %v1179
    %v2204 = vpack.c.b16 %v1196, %v1180
    %v2205 = vpack.c.b16 %v1197, %v1181
    %v2206 = vpack.c.b16 %v1198, %v1182
    %v2207 = vpack.c.b16 %v1215, %v1199
    %v2208 = vpack.c.b16 %v1216, %v1200
    %v2209 = vpack.c.b16 %v1217, %v1201
    %v2210 = vpack.c.b16 %v1218, %v1202
    %v2211 = vpack.c.b16 %v1219, %v1203
    %v2212 = vpack.c.b16 %v1220, %v1204
    %v2213 = vpack.c.b16 %v1221, %v1205
    %v2214 = vpack.c.b16 %v1222, %v1206
    %v2215 = vpack.c.b16 %v1223, %v1207
    %v2216 = vpack.c.b16 %v1224, %v1208
    %v2217 = vpack.c.b16 %v1225, %v1209
    %v2218 = vpack.c.b16 %v1226, %v1210
    %v2219 = vpack.c.b16 %v1227, %v1211
    %v2220 = vpack.c.b16 %v1228, %v1212
    %v2221 = vpack.c.b16 %v1229, %v1213
    %v2222 = vpack.c.b16 %v1230, %v1214
    %v2223 = vpack.c.b16 %v1247, %v1231
    %v2224 = vpack.c.b16 %v1248, %v1232
    %v2225 = vpack.c.b16 %v1249, %v1233
    %v2226 = vpack.c.b16 %v1250, %v1234
    %v2227 = vpack.c.b16 %v1251, %v1235
    %v2228 = vpack.c.b16 %v1252, %v1236
    %v2229 = vpack.c.b16 %v1253, %v1237
    %v2230 = vpack.c.b16 %v1254, %v1238
    %v2231 = vpack.c.b16 %v1255, %v1239
    %v2232 = vpack.c.b16 %v1256, %v1240
    %v2233 = vpack.c.b16 %v1257, %v1241
    %v2234 = vpack.c.b16 %v1258, %v1242
    %v2235 = vpack.c.b16 %v1259, %v1243
    %v2236 = vpack.c.b16 %v1260, %v1244
    %v2237 = vpack.c.b16 %v1261, %v1245
    %v2238 = vpack.c.b16 %v1262, %v1246
    %v2239 = vpack.c.b16 %v1279, %v1263
    %v2240 = vpack.c.b16 %v1280, %v1264
    %v2241 = vpack.c.b16 %v1281, %v1265
    %v2242 = vpack.c.b16 %v1282, %v1266
    %v2243 = vpack.c.b16 %v1283, %v1267
    %v2244 = vpack.c.b16 %v1284, %v1268
    %v2245 = vpack.c.b16 %v1285, %v1269
    %v2246 = vpack.c.b16 %v1286, %v1270
    %v2247 = vpack.c.b16 %v1287, %v1271
    %v2248 = vpack.c.b16 %v1288, %v1272
    %v2249 = vpack.c.b16 %v1289, %v1273
    %v2250 = vpack.c.b16 %v1290, %v1274
    %v2251 = vpack.c.b16 %v1291, %v1275
    %v2252 = vpack.c.b16 %v1292, %v1276
    %v2253 = vpack.c.b16 %v1293, %v1277
    %v2254 = vpack.c.b16 %v1294, %v1278
    %v2255 = vpack.c.b16 %v1311, %v1295
    %v2256 = vpack.c.b16 %v1312, %v1296
    %v2257 = vpack.c.b16 %v1313, %v1297
    %v2258 = vpack.c.b16 %v1314, %v1298
    %v2259 = vpack.c.b16 %v1315, %v1299
    %v2260 = vpack.c.b16 %v1316, %v1300
    %v2261 = vpack.c.b16 %v1317, %v1301
    %v2262 = vpack.c.b16 %v1318, %v1302
    %v2263 = vpack.c.b16 %v1319, %v1303
    %v2264 = vpack.c.b16 %v1320, %v1304
    %v2265 = vpack.c.b16 %v1321, %v1305
    %v2266 = vpack.c.b16 %v1322, %v1306
    %v2267 = vpack.c.b16 %v1323, %v1307
    %v2268 = vpack.c.b16 %v1324, %v1308
    %v2269 = vpack.c.b16 %v1325, %v1309
    %v2270 = vpack.c.b16 %v1326, %v1310
    %v2271 = vpack.c.b16 %v1343, %v1327
    %v2272 = vpack.c.b16 %v1344, %v1328
    %v2273 = vpack.c.b16 %v1345, %v1329
    %v2274 = vpack.c.b16 %v1346, %v1330
    %v2275 = vpack.c.b16 %v1347, %v1331
    %v2276 = vpack.c.b16 %v1348, %v1332
    %v2277 = vpack.c.b16 %v1349, %v1333
    %v2278 = vpack.c.b16 %v1350, %v1334
    %v2279 = vpack.c.b16 %v1351, %v1335
    %v2280 = vpack.c.b16 %v1352, %v1336
    %v2281 = vpack.c.b16 %v1353, %v1337
    %v2282 = vpack.c.b16 %v1354, %v1338
    %v2283 = vpack.c.b16 %v1355, %v1339
    %v2284 = vpack.c.b16 %v1356, %v1340
    %v2285 = vpack.c.b16 %v1357, %v1341
    %v2286 = vpack.c.b16 %v1358, %v1342
    %v2287 = vpack.c.b16 %v1375, %v1359
    %v2288 = vpack.c.b16 %v1376, %v1360
    %v2289 = vpack.c.b16 %v1377, %v1361
    %v2290 = vpack.c.b16 %v1378, %v1362
    %v2291 = vpack.c.b16 %v1379, %v1363
    %v2292 = vpack.c.b16 %v1380, %v1364
    %v2293 = vpack.c.b16 %v1381, %v1365
    %v2294 = vpack.c.b16 %v1382, %v1366
    %v2295 = vpack.c.b16 %v1383, %v1367
    %v2296 = vpack.c.b16 %v1384, %v1368
    %v2297 = vpack.c.b16 %v1385, %v1369
    %v2298 = vpack.c.b16 %v1386, %v1370
    %v2299 = vpack.c.b16 %v1387, %v1371
    %v2300 = vpack.c.b16 %v1388, %v1372
    %v2301 = vpack.c.b16 %v1389, %v1373
    %v2302 = vpack.c.b16 %v1390, %v1374
    %v2303 = vpack.c.b16 %v1407, %v1391
    %v2304 = vpack.c.b16 %v1408, %v1392
    %v2305 = vpack.c.b16 %v1409, %v1393
    %v2306 = vpack.c.b16 %v1410, %v1394
    %v2307 = vpack.c.b16 %v1411, %v1395
    %v2308 = vpack.c.b16 %v1412, %v1396
    %v2309 = vpack.c.b16 %v1413, %v1397
    %v2310 = vpack.c.b16 %v1414, %v1398
    %v2311 = vpack.c.b16 %v1415, %v1399
    %v2312 = vpack.c.b16 %v1416, %v1400
    %v2313 = vpack.c.b16 %v1417, %v1401
    %v2314 = vpack.c.b16 %v1418, %v1402
    %v2315 = vpack.c.b16 %v1419, %v1403
    %v2316 = vpack.c.b16 %v1420, %v1404
    %v2317 = vpack.c.b16 %v1421, %v1405
    %v2318 = vpack.c.b16 %v1422, %v1406
    %v2319 = vpack.c.b16 %v1439, %v1423
    %v2320 = vpack.c.b16 %v1440, %v1424
    %v2321 = vpack.c.b16 %v1441, %v1425
    %v2322 = vpack.c.b16 %v1442, %v1426
    %v2323 = vpack.c.b16 %v1443, %v1427
    %v2324 = vpack.c.b16 %v1444, %v1428
    %v2325 = vpack.c.b16 %v1445, %v1429
    %v2326 = vpack.c.b16 %v1446, %v1430
    %v2327 = vpack.c.b16 %v1447, %v1431
    %v2328 = vpack.c.b16 %v1448, %v1432
    %v2329 = vpack.c.b16 %v1449, %v1433
    %v2330 = vpack.c.b16 %v1450, %v1434
    %v2331 = vpack.c.b16 %v1451, %v1435
    %v2332 = vpack.c.b16 %v1452, %v1436
    %v2333 = vpack.c.b16 %v1453, %v1437
    %v2334 = vpack.c.b16 %v1454, %v1438
    %v2335 = vpack.c.b16 %v1471, %v1455
    %v2336 = vpack.c.b16 %v1472, %v1456
    %v2337 = vpack.c.b16 %v1473, %v1457
    %v2338 = vpack.c.b16 %v1474, %v1458
    %v2339 = vpack.c.b16 %v1475, %v1459
    %v2340 = vpack.c.b16 %v1476, %v1460
    %v2341 = vpack.c.b16 %v1477, %v1461
    %v2342 = vpack.c.b16 %v1478, %v1462
    %v2343 = vpack.c.b16 %v1479, %v1463
    %v2344 = vpack.c.b16 %v1480, %v1464
    %v2345 = vpack.c.b16 %v1481, %v1465
    %v2346 = vpack.c.b16 %v1482, %v1466
    %v2347 = vpack.c.b16 %v1483, %v1467
    %v2348 = vpack.c.b16 %v1484, %v1468
    %v2349 = vpack.c.b16 %v1485, %v1469
    %v2350 = vpack.c.b16 %v1486, %v1470
    %v2351 = vpack.c.b16 %v1503, %v1487
    %v2352 = vpack.c.b16 %v1504, %v1488
    %v2353 = vpack.c.b16 %v1505, %v1489
    %v2354 = vpack.c.b16 %v1506, %v1490
    %v2355 = vpack.c.b16 %v1507, %v1491
    %v2356 = vpack.c.b16 %v1508, %v1492
    %v2357 = vpack.c.b16 %v1509, %v1493
    %v2358 = vpack.c.b16 %v1510, %v1494
    %v2359 = vpack.c.b16 %v1511, %v1495
    %v2360 = vpack.c.b16 %v1512, %v1496
    %v2361 = vpack.c.b16 %v1513, %v1497
    %v2362 = vpack.c.b16 %v1514, %v1498
    %v2363 = vpack.c.b16 %v1515, %v1499
    %v2364 = vpack.c.b16 %v1516, %v1500
    %v2365 = vpack.c.b16 %v1517, %v1501
    %v2366 = vpack.c.b16 %v1518, %v1502
    %v2367 = vpack.c.b16 %v1535, %v1519
    %v2368 = vpack.c.b16 %v1536, %v1520
    %v2369 = vpack.c.b16 %v1537, %v1521
    %v2370 = vpack.c.b16 %v1538, %v1522
    %v2371 = vpack.c.b16 %v1539, %v1523
    %v2372 = vpack.c.b16 %v1540, %v1524
    %v2373 = vpack.c.b16 %v1541, %v1525
    %v2374 = vpack.c.b16 %v1542, %v1526
    %v2375 = vpack.c.b16 %v1543, %v1527
    %v2376 = vpack.c.b16 %v1544, %v1528
    %v2377 = vpack.c.b16 %v1545, %v1529
    %v2378 = vpack.c.b16 %v1546, %v1530
    %v2379 = vpack.c.b16 %v1547, %v1531
    %v2380 = vpack.c.b16 %v1548, %v1532
    %v2381 = vpack.c.b16 %v1549, %v1533
    %v2382 = vpack.c.b16 %v1550, %v1534
    %v2383 = vpack.c.b16 %v1567, %v1551
    %v2384 = vpack.c.b16 %v1568, %v1552
    %v2385 = vpack.c.b16 %v1569, %v1553
    %v2386 = vpack.c.b16 %v1570, %v1554
    %v2387 = vpack.c.b16 %v1571, %v1555
    %v2388 = vpack.c.b16 %v1572, %v1556
    %v2389 = vpack.c.b16 %v1573, %v1557
    %v2390 = vpack.c.b16 %v1574, %v1558
    %v2391 = vpack.c.b16 %v1575, %v1559
    %v2392 = vpack.c.b16 %v1576, %v1560
    %v2393 = vpack.c.b16 %v1577, %v1561
    %v2394 = vpack.c.b16 %v1578, %v1562
    %v2395 = vpack.c.b16 %v1579, %v1563
    %v2396 = vpack.c.b16 %v1580, %v1564
    %v2397 = vpack.c.b16 %v1581, %v1565
    %v2398 = vpack.c.b16 %v1582, %v1566
    %v2399 = vpack.c.b16 %v1599, %v1583
    %v2400 = vpack.c.b16 %v1600, %v1584
    %v2401 = vpack.c.b16 %v1601, %v1585
    %v2402 = vpack.c.b16 %v1602, %v1586
    %v2403 = vpack.c.b16 %v1603, %v1587
    %v2404 = vpack.c.b16 %v1604, %v1588
    %v2405 = vpack.c.b16 %v1605, %v1589
    %v2406 = vpack.c.b16 %v1606, %v1590
    %v2407 = vpack.c.b16 %v1607, %v1591
    %v2408 = vpack.c.b16 %v1608, %v1592
    %v2409 = vpack.c.b16 %v1609, %v1593
    %v2410 = vpack.c.b16 %v1610, %v1594
    %v2411 = vpack.c.b16 %v1611, %v1595
    %v2412 = vpack.c.b16 %v1612, %v1596
    %v2413 = vpack.c.b16 %v1613, %v1597
    %v2414 = vpack.c.b16 %v1614, %v1598
    %v2415 = vpack.c.b16 %v1631, %v1615
    %v2416 = vpack.c.b16 %v1632, %v1616
    %v2417 = vpack.c.b16 %v1633, %v1617
    %v2418 = vpack.c.b16 %v1634, %v1618
    %v2419 = vpack.c.b16 %v1635, %v1619
    %v2420 = vpack.c.b16 %v1636, %v1620
    %v2421 = vpack.c.b16 %v1637, %v1621
    %v2422 = vpack.c.b16 %v1638, %v1622
    %v2423 = vpack.c.b16 %v1639, %v1623
    %v2424 = vpack.c.b16 %v1640, %v1624
    %v2425 = vpack.c.b16 %v1641, %v1625
    %v2426 = vpack.c.b16 %v1642, %v1626
    %v2427 = vpack.c.b16 %v1643, %v1627
    %v2428 = vpack.c.b16 %v1644, %v1628
    %v2429 = vpack.c.b16 %v1645, %v1629
    %v2430 = vpack.c.b16 %v1646, %v1630
    %v2431 = vpack.c.b16 %v1663, %v1647
    %v2432 = vpack.c.b16 %v1664, %v1648
    %v2433 = vpack.c.b16 %v1665, %v1649
    %v2434 = vpack.c.b16 %v1666, %v1650
    %v2435 = vpack.c.b16 %v1667, %v1651
    %v2436 = vpack.c.b16 %v1668, %v1652
    %v2437 = vpack.c.b16 %v1669, %v1653
    %v2438 = vpack.c.b16 %v1670, %v1654
    %v2439 = vpack.c.b16 %v1671, %v1655
    %v2440 = vpack.c.b16 %v1672, %v1656
    %v2441 = vpack.c.b16 %v1673, %v1657
    %v2442 = vpack.c.b16 %v1674, %v1658
    %v2443 = vpack.c.b16 %v1675, %v1659
    %v2444 = vpack.c.b16 %v1676, %v1660
    %v2445 = vpack.c.b16 %v1677, %v1661
    %v2446 = vpack.c.b16 %v1678, %v1662
    %v2447 = vpack.c.b16 %v1695, %v1679
    %v2448 = vpack.c.b16 %v1696, %v1680
    %v2449 = vpack.c.b16 %v1697, %v1681
    %v2450 = vpack.c.b16 %v1698, %v1682
    %v2451 = vpack.c.b16 %v1699, %v1683
    %v2452 = vpack.c.b16 %v1700, %v1684
    %v2453 = vpack.c.b16 %v1701, %v1685
    %v2454 = vpack.c.b16 %v1702, %v1686
    %v2455 = vpack.c.b16 %v1703, %v1687
    %v2456 = vpack.c.b16 %v1704, %v1688
    %v2457 = vpack.c.b16 %v1705, %v1689
    %v2458 = vpack.c.b16 %v1706, %v1690
    %v2459 = vpack.c.b16 %v1707, %v1691
    %v2460 = vpack.c.b16 %v1708, %v1692
    %v2461 = vpack.c.b16 %v1709, %v1693
    %v2462 = vpack.c.b16 %v1710, %v1694
    %v2463 = vpack.c.b16 %v1727, %v1711
    %v2464 = vpack.c.b16 %v1728, %v1712
    %v2465 = vpack.c.b16 %v1729, %v1713
    %v2466 = vpack.c.b16 %v1730, %v1714
    %v2467 = vpack.c.b16 %v1731, %v1715
    %v2468 = vpack.c.b16 %v1732, %v1716
    %v2469 = vpack.c.b16 %v1733, %v1717
    %v2470 = vpack.c.b16 %v1734, %v1718
    %v2471 = vpack.c.b16 %v1735, %v1719
    %v2472 = vpack.c.b16 %v1736, %v1720
    %v2473 = vpack.c.b16 %v1737, %v1721
    %v2474 = vpack.c.b16 %v1738, %v1722
    %v2475 = vpack.c.b16 %v1739, %v1723
    %v2476 = vpack.c.b16 %v1740, %v1724
    %v2477 = vpack.c.b16 %v1741, %v1725
    %v2478 = vpack.c.b16 %v1742, %v1726
    %v2479 = vpack.c.b16 %v1759, %v1743
    %v2480 = vpack.c.b16 %v1760, %v1744
    %v2481 = vpack.c.b16 %v1761, %v1745
    %v2482 = vpack.c.b16 %v1762, %v1746
    %v2483 = vpack.c.b16 %v1763, %v1747
    %v2484 = vpack.c.b16 %v1764, %v1748
    %v2485 = vpack.c.b16 %v1765, %v1749
    %v2486 = vpack.c.b16 %v1766, %v1750
    %v2487 = vpack.c.b16 %v1767, %v1751
    %v2488 = vpack.c.b16 %v1768, %v1752
    %v2489 = vpack.c.b16 %v1769, %v1753
    %v2490 = vpack.c.b16 %v1770, %v1754
    %v2491 = vpack.c.b16 %v1771, %v1755
    %v2492 = vpack.c.b16 %v1772, %v1756
    %v2493 = vpack.c.b16 %v1773, %v1757
    %v2494 = vpack.c.b16 %v1774, %v1758
    %v2495 = vpack.c.b16 %v1791, %v1775
    %v2496 = vpack.c.b16 %v1792, %v1776
    %v2497 = vpack.c.b16 %v1793, %v1777
    %v2498 = vpack.c.b16 %v1794, %v1778
    %v2499 = vpack.c.b16 %v1795, %v1779
    %v2500 = vpack.c.b16 %v1796, %v1780
    %v2501 = vpack.c.b16 %v1797, %v1781
    %v2502 = vpack.c.b16 %v1798, %v1782
    %v2503 = vpack.c.b16 %v1799, %v1783
    %v2504 = vpack.c.b16 %v1800, %v1784
    %v2505 = vpack.c.b16 %v1801, %v1785
    %v2506 = vpack.c.b16 %v1802, %v1786
    %v2507 = vpack.c.b16 %v1803, %v1787
    %v2508 = vpack.c.b16 %v1804, %v1788
    %v2509 = vpack.c.b16 %v1805, %v1789
    %v2510 = vpack.c.b16 %v1806, %v1790
    %v2511 = vpack.c.b16 %v1823, %v1807
    %v2512 = vpack.c.b16 %v1824, %v1808
    %v2513 = vpack.c.b16 %v1825, %v1809
    %v2514 = vpack.c.b16 %v1826, %v1810
    %v2515 = vpack.c.b16 %v1827, %v1811
    %v2516 = vpack.c.b16 %v1828, %v1812
    %v2517 = vpack.c.b16 %v1829, %v1813
    %v2518 = vpack.c.b16 %v1830, %v1814
    %v2519 = vpack.c.b16 %v1831, %v1815
    %v2520 = vpack.c.b16 %v1832, %v1816
    %v2521 = vpack.c.b16 %v1833, %v1817
    %v2522 = vpack.c.b16 %v1834, %v1818
    %v2523 = vpack.c.b16 %v1835, %v1819
    %v2524 = vpack.c.b16 %v1836, %v1820
    %v2525 = vpack.c.b16 %v1837, %v1821
    %v2526 = vpack.c.b16 %v1838, %v1822
    %v2527 = vpack.c.b16 %v1855, %v1839
    %v2528 = vpack.c.b16 %v1856, %v1840
    %v2529 = vpack.c.b16 %v1857, %v1841
    %v2530 = vpack.c.b16 %v1858, %v1842
    %v2531 = vpack.c.b16 %v1859, %v1843
    %v2532 = vpack.c.b16 %v1860, %v1844
    %v2533 = vpack.c.b16 %v1861, %v1845
    %v2534 = vpack.c.b16 %v1862, %v1846
    %v2535 = vpack.c.b16 %v1863, %v1847
    %v2536 = vpack.c.b16 %v1864, %v1848
    %v2537 = vpack.c.b16 %v1865, %v1849
    %v2538 = vpack.c.b16 %v1866, %v1850
    %v2539 = vpack.c.b16 %v1867, %v1851
    %v2540 = vpack.c.b16 %v1868, %v1852
    %v2541 = vpack.c.b16 %v1869, %v1853
    %v2542 = vpack.c.b16 %v1870, %v1854
    %v2543 = vpack.c.b16 %v1887, %v1871
    %v2544 = vpack.c.b16 %v1888, %v1872
    %v2545 = vpack.c.b16 %v1889, %v1873
    %v2546 = vpack.c.b16 %v1890, %v1874
    %v2547 = vpack.c.b16 %v1891, %v1875
    %v2548 = vpack.c.b16 %v1892, %v1876
    %v2549 = vpack.c.b16 %v1893, %v1877
    %v2550 = vpack.c.b16 %v1894, %v1878
    %v2551 = vpack.c.b16 %v1895, %v1879
    %v2552 = vpack.c.b16 %v1896, %v1880
    %v2553 = vpack.c.b16 %v1897, %v1881
    %v2554 = vpack.c.b16 %v1898, %v1882
    %v2555 = vpack.c.b16 %v1899, %v1883
    %v2556 = vpack.c.b16 %v1900, %v1884
    %v2557 = vpack.c.b16 %v1901, %v1885
    %v2558 = vpack.c.b16 %v1902, %v1886
    %v2559 = vpack.c.b16 %v1919, %v1903
    %v2560 = vpack.c.b16 %v1920, %v1904
    %v2561 = vpack.c.b16 %v1921, %v1905
    %v2562 = vpack.c.b16 %v1922, %v1906
    %v2563 = vpack.c.b16 %v1923, %v1907
    %v2564 = vpack.c.b16 %v1924, %v1908
    %v2565 = vpack.c.b16 %v1925, %v1909
    %v2566 = vpack.c.b16 %v1926, %v1910
    %v2567 = vpack.c.b16 %v1927, %v1911
    %v2568 = vpack.c.b16 %v1928, %v1912
    %v2569 = vpack.c.b16 %v1929, %v1913
    %v2570 = vpack.c.b16 %v1930, %v1914
    %v2571 = vpack.c.b16 %v1931, %v1915
    %v2572 = vpack.c.b16 %v1932, %v1916
    %v2573 = vpack.c.b16 %v1933, %v1917
    %v2574 = vpack.c.b16 %v1934, %v1918
    %v2575 = vpack.c.b16 %v1951, %v1935
    %v2576 = vpack.c.b16 %v1952, %v1936
    %v2577 = vpack.c.b16 %v1953, %v1937
    %v2578 = vpack.c.b16 %v1954, %v1938
    %v2579 = vpack.c.b16 %v1955, %v1939
    %v2580 = vpack.c.b16 %v1956, %v1940
    %v2581 = vpack.c.b16 %v1957, %v1941
    %v2582 = vpack.c.b16 %v1958, %v1942
    %v2583 = vpack.c.b16 %v1959, %v1943
    %v2584 = vpack.c.b16 %v1960, %v1944
    %v2585 = vpack.c.b16 %v1961, %v1945
    %v2586 = vpack.c.b16 %v1962, %v1946
    %v2587 = vpack.c.b16 %v1963, %v1947
    %v2588 = vpack.c.b16 %v1964, %v1948
    %v2589 = vpack.c.b16 %v1965, %v1949
    %v2590 = vpack.c.b16 %v1966, %v1950
    %v2591 = vpack.c.b16 %v1983, %v1967
    %v2592 = vpack.c.b16 %v1984, %v1968
    %v2593 = vpack.c.b16 %v1985, %v1969
    %v2594 = vpack.c.b16 %v1986, %v1970
    %v2595 = vpack.c.b16 %v1987, %v1971
    %v2596 = vpack.c.b16 %v1988, %v1972
    %v2597 = vpack.c.b16 %v1989, %v1973
    %v2598 = vpack.c.b16 %v1990, %v1974
    %v2599 = vpack.c.b16 %v1991, %v1975
    %v2600 = vpack.c.b16 %v1992, %v1976
    %v2601 = vpack.c.b16 %v1993, %v1977
    %v2602 = vpack.c.b16 %v1994, %v1978
    %v2603 = vpack.c.b16 %v1995, %v1979
    %v2604 = vpack.c.b16 %v1996, %v1980
    %v2605 = vpack.c.b16 %v1997, %v1981
    %v2606 = vpack.c.b16 %v1998, %v1982
    %v2607 = vpack.c.b16 %v2015, %v1999
    %v2608 = vpack.c.b16 %v2016, %v2000
    %v2609 = vpack.c.b16 %v2017, %v2001
    %v2610 = vpack.c.b16 %v2018, %v2002
    %v2611 = vpack.c.b16 %v2019, %v2003
    %v2612 = vpack.c.b16 %v2020, %v2004
    %v2613 = vpack.c.b16 %v2021, %v2005
    %v2614 = vpack.c.b16 %v2022, %v2006
    %v2615 = vpack.c.b16 %v2023, %v2007
    %v2616 = vpack.c.b16 %v2024, %v2008
    %v2617 = vpack.c.b16 %v2025, %v2009
    %v2618 = vpack.c.b16 %v2026, %v2010
    %v2619 = vpack.c.b16 %v2027, %v2011
    %v2620 = vpack.c.b16 %v2028, %v2012
    %v2621 = vpack.c.b16 %v2029, %v2013
    %v2622 = vpack.c.b16 %v2030, %v2014
    %v2623 = vpack.c.b16 %v2047, %v2031
    %v2624 = vpack.c.b16 %v2048, %v2032
    %v2625 = vpack.c.b16 %v2049, %v2033
    %v2626 = vpack.c.b16 %v2050, %v2034
    %v2627 = vpack.c.b16 %v2051, %v2035
    %v2628 = vpack.c.b16 %v2052, %v2036
    %v2629 = vpack.c.b16 %v2053, %v2037
    %v2630 = vpack.c.b16 %v2054, %v2038
    %v2631 = vpack.c.b16 %v2055, %v2039
    %v2632 = vpack.c.b16 %v2056, %v2040
    %v2633 = vpack.c.b16 %v2057, %v2041
    %v2634 = vpack.c.b16 %v2058, %v2042
    %v2635 = vpack.c.b16 %v2059, %v2043
    %v2636 = vpack.c.b16 %v2060, %v2044
    %v2637 = vpack.c.b16 %v2061, %v2045
    %v2638 = vpack.c.b16 %v2062, %v2046
    %v2639 = vpack.c.b16 %v2079, %v2063
    %v2640 = vpack.c.b16 %v2080, %v2064
    %v2641 = vpack.c.b16 %v2081, %v2065
    %v2642 = vpack.c.b16 %v2082, %v2066
    %v2643 = vpack.c.b16 %v2083, %v2067
    %v2644 = vpack.c.b16 %v2084, %v2068
    %v2645 = vpack.c.b16 %v2085, %v2069
    %v2646 = vpack.c.b16 %v2086, %v2070
    %v2647 = vpack.c.b16 %v2087, %v2071
    %v2648 = vpack.c.b16 %v2088, %v2072
    %v2649 = vpack.c.b16 %v2089, %v2073
    %v2650 = vpack.c.b16 %v2090, %v2074
    %v2651 = vpack.c.b16 %v2091, %v2075
    %v2652 = vpack.c.b16 %v2092, %v2076
    %v2653 = vpack.c.b16 %v2093, %v2077
    %v2654 = vpack.c.b16 %v2094, %v2078
    %v2655 = vpack.c.b16 %v2111, %v2095
    %v2656 = vpack.c.b16 %v2112, %v2096
    %v2657 = vpack.c.b16 %v2113, %v2097
    %v2658 = vpack.c.b16 %v2114, %v2098
    %v2659 = vpack.c.b16 %v2115, %v2099
    %v2660 = vpack.c.b16 %v2116, %v2100
    %v2661 = vpack.c.b16 %v2117, %v2101
    %v2662 = vpack.c.b16 %v2118, %v2102
    %v2663 = vpack.c.b16 %v2119, %v2103
    %v2664 = vpack.c.b16 %v2120, %v2104
    %v2665 = vpack.c.b16 %v2121, %v2105
    %v2666 = vpack.c.b16 %v2122, %v2106
    %v2667 = vpack.c.b16 %v2123, %v2107
    %v2668 = vpack.c.b16 %v2124, %v2108
    %v2669 = vpack.c.b16 %v2125, %v2109
    %v2670 = vpack.c.b16 %v2126, %v2110
    %v2671 = vpack.c.b16 %v2143, %v2127
    %v2672 = vpack.c.b16 %v2144, %v2128
    %v2673 = vpack.c.b16 %v2145, %v2129
    %v2674 = vpack.c.b16 %v2146, %v2130
    %v2675 = vpack.c.b16 %v2147, %v2131
    %v2676 = vpack.c.b16 %v2148, %v2132
    %v2677 = vpack.c.b16 %v2149, %v2133
    %v2678 = vpack.c.b16 %v2150, %v2134
    %v2679 = vpack.c.b16 %v2151, %v2135
    %v2680 = vpack.c.b16 %v2152, %v2136
    %v2681 = vpack.c.b16 %v2153, %v2137
    %v2682 = vpack.c.b16 %v2154, %v2138
    %v2683 = vpack.c.b16 %v2155, %v2139
    %v2684 = vpack.c.b16 %v2156, %v2140
    %v2685 = vpack.c.b16 %v2157, %v2141
    %v2686 = vpack.c.b16 %v2158, %v2142
    %v2687 = vpack.c.b16 %v2175, %v2159
    %v2688 = vpack.c.b16 %v2176, %v2160
    %v2689 = vpack.c.b16 %v2177, %v2161
    %v2690 = vpack.c.b16 %v2178, %v2162
    %v2691 = vpack.c.b16 %v2179, %v2163
    %v2692 = vpack.c.b16 %v2180, %v2164
    %v2693 = vpack.c.b16 %v2181, %v2165
    %v2694 = vpack.c.b16 %v2182, %v2166
    %v2695 = vpack.c.b16 %v2183, %v2167
    %v2696 = vpack.c.b16 %v2184, %v2168
    %v2697 = vpack.c.b16 %v2185, %v2169
    %v2698 = vpack.c.b16 %v2186, %v2170
    %v2699 = vpack.c.b16 %v2187, %v2171
    %v2700 = vpack.c.b16 %v2188, %v2172
    %v2701 = vpack.c.b16 %v2189, %v2173
    %v2702 = vpack.c.b16 %v2190, %v2174
    %3215 = vmatpush.bf16.msra.mxu0 %v2303
    %3216 = vmatpush.bf16.msra.mxu0 %v2287
    %3217 = vmatpush.bf16.msra.mxu0 %v2271
    %3218 = vmatpush.bf16.msra.mxu0 %v2255
    %3219 = vmatpush.bf16.msra.mxu0 %v2239
    %3220 = vmatpush.bf16.msra.mxu0 %v2223
    %3221 = vmatpush.bf16.msra.mxu0 %v2207
    %3222 = vmatpush.bf16.msra.mxu0 %v2191
    %3223 = vmatmul.bf16.gmra.mxu0 %v103
    %v3224 = vpop.f32.mrf.mxu0
    %v3225 = vadd.f32 %v623, %v3224
    %v3226 = vpop.f32.mrf.mxu0
    %v3227 = vadd.f32 %v623, %v3226
    %3228 = vdwg.mxu0
    %3229 = vmatpush.bf16.msra.mxu0 %v2431
    %3230 = vmatpush.bf16.msra.mxu0 %v2415
    %3231 = vmatpush.bf16.msra.mxu0 %v2399
    %3232 = vmatpush.bf16.msra.mxu0 %v2383
    %3233 = vmatpush.bf16.msra.mxu0 %v2367
    %3234 = vmatpush.bf16.msra.mxu0 %v2351
    %3235 = vmatpush.bf16.msra.mxu0 %v2335
    %3236 = vmatpush.bf16.msra.mxu0 %v2319
    %3237 = vmatmul.bf16.gmra.mxu0 %v104
    %v3238 = vpop.f32.mrf.mxu0
    %v3239 = vadd.f32 %v3225, %v3238
    %v3240 = vpop.f32.mrf.mxu0
    %v3241 = vadd.f32 %v3227, %v3240
    %3242 = vdwg.mxu0
    %3243 = vmatpush.bf16.msra.mxu0 %v2559
    %3244 = vmatpush.bf16.msra.mxu0 %v2543
    %3245 = vmatpush.bf16.msra.mxu0 %v2527
    %3246 = vmatpush.bf16.msra.mxu0 %v2511
    %3247 = vmatpush.bf16.msra.mxu0 %v2495
    %3248 = vmatpush.bf16.msra.mxu0 %v2479
    %3249 = vmatpush.bf16.msra.mxu0 %v2463
    %3250 = vmatpush.bf16.msra.mxu0 %v2447
    %3251 = vmatmul.bf16.gmra.mxu0 %v105
    %v3252 = vpop.f32.mrf.mxu0
    %v3253 = vadd.f32 %v3239, %v3252
    %v3254 = vpop.f32.mrf.mxu0
    %v3255 = vadd.f32 %v3241, %v3254
    %3256 = vdwg.mxu0
    %3257 = vmatpush.bf16.msra.mxu0 %v2687
    %3258 = vmatpush.bf16.msra.mxu0 %v2671
    %3259 = vmatpush.bf16.msra.mxu0 %v2655
    %3260 = vmatpush.bf16.msra.mxu0 %v2639
    %3261 = vmatpush.bf16.msra.mxu0 %v2623
    %3262 = vmatpush.bf16.msra.mxu0 %v2607
    %3263 = vmatpush.bf16.msra.mxu0 %v2591
    %3264 = vmatpush.bf16.msra.mxu0 %v2575
    %3265 = vmatmul.bf16.gmra.mxu0 %v106
    %v3266 = vpop.f32.mrf.mxu0
    %v3267 = vadd.f32 %v3253, %v3266
    %v3268 = vpop.f32.mrf.mxu0
    %v3269 = vadd.f32 %v3255, %v3268
    %3270 = vdwg.mxu0
    %3271 = vmatpush.bf16.msra.mxu0 %v2304
    %3272 = vmatpush.bf16.msra.mxu0 %v2288
    %3273 = vmatpush.bf16.msra.mxu0 %v2272
    %3274 = vmatpush.bf16.msra.mxu0 %v2256
    %3275 = vmatpush.bf16.msra.mxu0 %v2240
    %3276 = vmatpush.bf16.msra.mxu0 %v2224
    %3277 = vmatpush.bf16.msra.mxu0 %v2208
    %3278 = vmatpush.bf16.msra.mxu0 %v2192
    %3279 = vmatmul.bf16.gmra.mxu0 %v103
    %v3280 = vpop.f32.mrf.mxu0
    %v3281 = vadd.f32 %v624, %v3280
    %v3282 = vpop.f32.mrf.mxu0
    %v3283 = vadd.f32 %v624, %v3282
    %3284 = vdwg.mxu0
    %3285 = vmatpush.bf16.msra.mxu0 %v2432
    %3286 = vmatpush.bf16.msra.mxu0 %v2416
    %3287 = vmatpush.bf16.msra.mxu0 %v2400
    %3288 = vmatpush.bf16.msra.mxu0 %v2384
    %3289 = vmatpush.bf16.msra.mxu0 %v2368
    %3290 = vmatpush.bf16.msra.mxu0 %v2352
    %3291 = vmatpush.bf16.msra.mxu0 %v2336
    %3292 = vmatpush.bf16.msra.mxu0 %v2320
    %3293 = vmatmul.bf16.gmra.mxu0 %v104
    %v3294 = vpop.f32.mrf.mxu0
    %v3295 = vadd.f32 %v3281, %v3294
    %v3296 = vpop.f32.mrf.mxu0
    %v3297 = vadd.f32 %v3283, %v3296
    %3298 = vdwg.mxu0
    %3299 = vmatpush.bf16.msra.mxu0 %v2560
    %3300 = vmatpush.bf16.msra.mxu0 %v2544
    %3301 = vmatpush.bf16.msra.mxu0 %v2528
    %3302 = vmatpush.bf16.msra.mxu0 %v2512
    %3303 = vmatpush.bf16.msra.mxu0 %v2496
    %3304 = vmatpush.bf16.msra.mxu0 %v2480
    %3305 = vmatpush.bf16.msra.mxu0 %v2464
    %3306 = vmatpush.bf16.msra.mxu0 %v2448
    %3307 = vmatmul.bf16.gmra.mxu0 %v105
    %v3308 = vpop.f32.mrf.mxu0
    %v3309 = vadd.f32 %v3295, %v3308
    %v3310 = vpop.f32.mrf.mxu0
    %v3311 = vadd.f32 %v3297, %v3310
    %3312 = vdwg.mxu0
    %3313 = vmatpush.bf16.msra.mxu0 %v2688
    %3314 = vmatpush.bf16.msra.mxu0 %v2672
    %3315 = vmatpush.bf16.msra.mxu0 %v2656
    %3316 = vmatpush.bf16.msra.mxu0 %v2640
    %3317 = vmatpush.bf16.msra.mxu0 %v2624
    %3318 = vmatpush.bf16.msra.mxu0 %v2608
    %3319 = vmatpush.bf16.msra.mxu0 %v2592
    %3320 = vmatpush.bf16.msra.mxu0 %v2576
    %3321 = vmatmul.bf16.gmra.mxu0 %v106
    %v3322 = vpop.f32.mrf.mxu0
    %v3323 = vadd.f32 %v3309, %v3322
    %v3324 = vpop.f32.mrf.mxu0
    %v3325 = vadd.f32 %v3311, %v3324
    %3326 = vdwg.mxu0
    %3327 = vmatpush.bf16.msra.mxu0 %v2305
    %3328 = vmatpush.bf16.msra.mxu0 %v2289
    %3329 = vmatpush.bf16.msra.mxu0 %v2273
    %3330 = vmatpush.bf16.msra.mxu0 %v2257
    %3331 = vmatpush.bf16.msra.mxu0 %v2241
    %3332 = vmatpush.bf16.msra.mxu0 %v2225
    %3333 = vmatpush.bf16.msra.mxu0 %v2209
    %3334 = vmatpush.bf16.msra.mxu0 %v2193
    %3335 = vmatmul.bf16.gmra.mxu0 %v103
    %v3336 = vpop.f32.mrf.mxu0
    %v3337 = vadd.f32 %v625, %v3336
    %v3338 = vpop.f32.mrf.mxu0
    %v3339 = vadd.f32 %v625, %v3338
    %3340 = vdwg.mxu0
    %3341 = vmatpush.bf16.msra.mxu0 %v2433
    %3342 = vmatpush.bf16.msra.mxu0 %v2417
    %3343 = vmatpush.bf16.msra.mxu0 %v2401
    %3344 = vmatpush.bf16.msra.mxu0 %v2385
    %3345 = vmatpush.bf16.msra.mxu0 %v2369
    %3346 = vmatpush.bf16.msra.mxu0 %v2353
    %3347 = vmatpush.bf16.msra.mxu0 %v2337
    %3348 = vmatpush.bf16.msra.mxu0 %v2321
    %3349 = vmatmul.bf16.gmra.mxu0 %v104
    %v3350 = vpop.f32.mrf.mxu0
    %v3351 = vadd.f32 %v3337, %v3350
    %v3352 = vpop.f32.mrf.mxu0
    %v3353 = vadd.f32 %v3339, %v3352
    %3354 = vdwg.mxu0
    %3355 = vmatpush.bf16.msra.mxu0 %v2561
    %3356 = vmatpush.bf16.msra.mxu0 %v2545
    %3357 = vmatpush.bf16.msra.mxu0 %v2529
    %3358 = vmatpush.bf16.msra.mxu0 %v2513
    %3359 = vmatpush.bf16.msra.mxu0 %v2497
    %3360 = vmatpush.bf16.msra.mxu0 %v2481
    %3361 = vmatpush.bf16.msra.mxu0 %v2465
    %3362 = vmatpush.bf16.msra.mxu0 %v2449
    %3363 = vmatmul.bf16.gmra.mxu0 %v105
    %v3364 = vpop.f32.mrf.mxu0
    %v3365 = vadd.f32 %v3351, %v3364
    %v3366 = vpop.f32.mrf.mxu0
    %v3367 = vadd.f32 %v3353, %v3366
    %3368 = vdwg.mxu0
    %3369 = vmatpush.bf16.msra.mxu0 %v2689
    %3370 = vmatpush.bf16.msra.mxu0 %v2673
    %3371 = vmatpush.bf16.msra.mxu0 %v2657
    %3372 = vmatpush.bf16.msra.mxu0 %v2641
    %3373 = vmatpush.bf16.msra.mxu0 %v2625
    %3374 = vmatpush.bf16.msra.mxu0 %v2609
    %3375 = vmatpush.bf16.msra.mxu0 %v2593
    %3376 = vmatpush.bf16.msra.mxu0 %v2577
    %3377 = vmatmul.bf16.gmra.mxu0 %v106
    %v3378 = vpop.f32.mrf.mxu0
    %v3379 = vadd.f32 %v3365, %v3378
    %v3380 = vpop.f32.mrf.mxu0
    %v3381 = vadd.f32 %v3367, %v3380
    %3382 = vdwg.mxu0
    %3383 = vmatpush.bf16.msra.mxu0 %v2306
    %3384 = vmatpush.bf16.msra.mxu0 %v2290
    %3385 = vmatpush.bf16.msra.mxu0 %v2274
    %3386 = vmatpush.bf16.msra.mxu0 %v2258
    %3387 = vmatpush.bf16.msra.mxu0 %v2242
    %3388 = vmatpush.bf16.msra.mxu0 %v2226
    %3389 = vmatpush.bf16.msra.mxu0 %v2210
    %3390 = vmatpush.bf16.msra.mxu0 %v2194
    %3391 = vmatmul.bf16.gmra.mxu0 %v103
    %v3392 = vpop.f32.mrf.mxu0
    %v3393 = vadd.f32 %v626, %v3392
    %v3394 = vpop.f32.mrf.mxu0
    %v3395 = vadd.f32 %v626, %v3394
    %3396 = vdwg.mxu0
    %3397 = vmatpush.bf16.msra.mxu0 %v2434
    %3398 = vmatpush.bf16.msra.mxu0 %v2418
    %3399 = vmatpush.bf16.msra.mxu0 %v2402
    %3400 = vmatpush.bf16.msra.mxu0 %v2386
    %3401 = vmatpush.bf16.msra.mxu0 %v2370
    %3402 = vmatpush.bf16.msra.mxu0 %v2354
    %3403 = vmatpush.bf16.msra.mxu0 %v2338
    %3404 = vmatpush.bf16.msra.mxu0 %v2322
    %3405 = vmatmul.bf16.gmra.mxu0 %v104
    %v3406 = vpop.f32.mrf.mxu0
    %v3407 = vadd.f32 %v3393, %v3406
    %v3408 = vpop.f32.mrf.mxu0
    %v3409 = vadd.f32 %v3395, %v3408
    %3410 = vdwg.mxu0
    %3411 = vmatpush.bf16.msra.mxu0 %v2562
    %3412 = vmatpush.bf16.msra.mxu0 %v2546
    %3413 = vmatpush.bf16.msra.mxu0 %v2530
    %3414 = vmatpush.bf16.msra.mxu0 %v2514
    %3415 = vmatpush.bf16.msra.mxu0 %v2498
    %3416 = vmatpush.bf16.msra.mxu0 %v2482
    %3417 = vmatpush.bf16.msra.mxu0 %v2466
    %3418 = vmatpush.bf16.msra.mxu0 %v2450
    %3419 = vmatmul.bf16.gmra.mxu0 %v105
    %v3420 = vpop.f32.mrf.mxu0
    %v3421 = vadd.f32 %v3407, %v3420
    %v3422 = vpop.f32.mrf.mxu0
    %v3423 = vadd.f32 %v3409, %v3422
    %3424 = vdwg.mxu0
    %3425 = vmatpush.bf16.msra.mxu0 %v2690
    %3426 = vmatpush.bf16.msra.mxu0 %v2674
    %3427 = vmatpush.bf16.msra.mxu0 %v2658
    %3428 = vmatpush.bf16.msra.mxu0 %v2642
    %3429 = vmatpush.bf16.msra.mxu0 %v2626
    %3430 = vmatpush.bf16.msra.mxu0 %v2610
    %3431 = vmatpush.bf16.msra.mxu0 %v2594
    %3432 = vmatpush.bf16.msra.mxu0 %v2578
    %3433 = vmatmul.bf16.gmra.mxu0 %v106
    %v3434 = vpop.f32.mrf.mxu0
    %v3435 = vadd.f32 %v3421, %v3434
    %v3436 = vpop.f32.mrf.mxu0
    %v3437 = vadd.f32 %v3423, %v3436
    %3438 = vdwg.mxu0
    %3439 = vmatpush.bf16.msra.mxu0 %v2307
    %3440 = vmatpush.bf16.msra.mxu0 %v2291
    %3441 = vmatpush.bf16.msra.mxu0 %v2275
    %3442 = vmatpush.bf16.msra.mxu0 %v2259
    %3443 = vmatpush.bf16.msra.mxu0 %v2243
    %3444 = vmatpush.bf16.msra.mxu0 %v2227
    %3445 = vmatpush.bf16.msra.mxu0 %v2211
    %3446 = vmatpush.bf16.msra.mxu0 %v2195
    %3447 = vmatmul.bf16.gmra.mxu0 %v103
    %v3448 = vpop.f32.mrf.mxu0
    %v3449 = vadd.f32 %v627, %v3448
    %v3450 = vpop.f32.mrf.mxu0
    %v3451 = vadd.f32 %v627, %v3450
    %3452 = vdwg.mxu0
    %3453 = vmatpush.bf16.msra.mxu0 %v2435
    %3454 = vmatpush.bf16.msra.mxu0 %v2419
    %3455 = vmatpush.bf16.msra.mxu0 %v2403
    %3456 = vmatpush.bf16.msra.mxu0 %v2387
    %3457 = vmatpush.bf16.msra.mxu0 %v2371
    %3458 = vmatpush.bf16.msra.mxu0 %v2355
    %3459 = vmatpush.bf16.msra.mxu0 %v2339
    %3460 = vmatpush.bf16.msra.mxu0 %v2323
    %3461 = vmatmul.bf16.gmra.mxu0 %v104
    %v3462 = vpop.f32.mrf.mxu0
    %v3463 = vadd.f32 %v3449, %v3462
    %v3464 = vpop.f32.mrf.mxu0
    %v3465 = vadd.f32 %v3451, %v3464
    %3466 = vdwg.mxu0
    %3467 = vmatpush.bf16.msra.mxu0 %v2563
    %3468 = vmatpush.bf16.msra.mxu0 %v2547
    %3469 = vmatpush.bf16.msra.mxu0 %v2531
    %3470 = vmatpush.bf16.msra.mxu0 %v2515
    %3471 = vmatpush.bf16.msra.mxu0 %v2499
    %3472 = vmatpush.bf16.msra.mxu0 %v2483
    %3473 = vmatpush.bf16.msra.mxu0 %v2467
    %3474 = vmatpush.bf16.msra.mxu0 %v2451
    %3475 = vmatmul.bf16.gmra.mxu0 %v105
    %v3476 = vpop.f32.mrf.mxu0
    %v3477 = vadd.f32 %v3463, %v3476
    %v3478 = vpop.f32.mrf.mxu0
    %v3479 = vadd.f32 %v3465, %v3478
    %3480 = vdwg.mxu0
    %3481 = vmatpush.bf16.msra.mxu0 %v2691
    %3482 = vmatpush.bf16.msra.mxu0 %v2675
    %3483 = vmatpush.bf16.msra.mxu0 %v2659
    %3484 = vmatpush.bf16.msra.mxu0 %v2643
    %3485 = vmatpush.bf16.msra.mxu0 %v2627
    %3486 = vmatpush.bf16.msra.mxu0 %v2611
    %3487 = vmatpush.bf16.msra.mxu0 %v2595
    %3488 = vmatpush.bf16.msra.mxu0 %v2579
    %3489 = vmatmul.bf16.gmra.mxu0 %v106
    %v3490 = vpop.f32.mrf.mxu0
    %v3491 = vadd.f32 %v3477, %v3490
    %v3492 = vpop.f32.mrf.mxu0
    %v3493 = vadd.f32 %v3479, %v3492
    %3494 = vdwg.mxu0
    %3495 = vmatpush.bf16.msra.mxu0 %v2308
    %3496 = vmatpush.bf16.msra.mxu0 %v2292
    %3497 = vmatpush.bf16.msra.mxu0 %v2276
    %3498 = vmatpush.bf16.msra.mxu0 %v2260
    %3499 = vmatpush.bf16.msra.mxu0 %v2244
    %3500 = vmatpush.bf16.msra.mxu0 %v2228
    %3501 = vmatpush.bf16.msra.mxu0 %v2212
    %3502 = vmatpush.bf16.msra.mxu0 %v2196
    %3503 = vmatmul.bf16.gmra.mxu0 %v103
    %v3504 = vpop.f32.mrf.mxu0
    %v3505 = vadd.f32 %v628, %v3504
    %v3506 = vpop.f32.mrf.mxu0
    %v3507 = vadd.f32 %v628, %v3506
    %3508 = vdwg.mxu0
    %3509 = vmatpush.bf16.msra.mxu0 %v2436
    %3510 = vmatpush.bf16.msra.mxu0 %v2420
    %3511 = vmatpush.bf16.msra.mxu0 %v2404
    %3512 = vmatpush.bf16.msra.mxu0 %v2388
    %3513 = vmatpush.bf16.msra.mxu0 %v2372
    %3514 = vmatpush.bf16.msra.mxu0 %v2356
    %3515 = vmatpush.bf16.msra.mxu0 %v2340
    %3516 = vmatpush.bf16.msra.mxu0 %v2324
    %3517 = vmatmul.bf16.gmra.mxu0 %v104
    %v3518 = vpop.f32.mrf.mxu0
    %v3519 = vadd.f32 %v3505, %v3518
    %v3520 = vpop.f32.mrf.mxu0
    %v3521 = vadd.f32 %v3507, %v3520
    %3522 = vdwg.mxu0
    %3523 = vmatpush.bf16.msra.mxu0 %v2564
    %3524 = vmatpush.bf16.msra.mxu0 %v2548
    %3525 = vmatpush.bf16.msra.mxu0 %v2532
    %3526 = vmatpush.bf16.msra.mxu0 %v2516
    %3527 = vmatpush.bf16.msra.mxu0 %v2500
    %3528 = vmatpush.bf16.msra.mxu0 %v2484
    %3529 = vmatpush.bf16.msra.mxu0 %v2468
    %3530 = vmatpush.bf16.msra.mxu0 %v2452
    %3531 = vmatmul.bf16.gmra.mxu0 %v105
    %v3532 = vpop.f32.mrf.mxu0
    %v3533 = vadd.f32 %v3519, %v3532
    %v3534 = vpop.f32.mrf.mxu0
    %v3535 = vadd.f32 %v3521, %v3534
    %3536 = vdwg.mxu0
    %3537 = vmatpush.bf16.msra.mxu0 %v2692
    %3538 = vmatpush.bf16.msra.mxu0 %v2676
    %3539 = vmatpush.bf16.msra.mxu0 %v2660
    %3540 = vmatpush.bf16.msra.mxu0 %v2644
    %3541 = vmatpush.bf16.msra.mxu0 %v2628
    %3542 = vmatpush.bf16.msra.mxu0 %v2612
    %3543 = vmatpush.bf16.msra.mxu0 %v2596
    %3544 = vmatpush.bf16.msra.mxu0 %v2580
    %3545 = vmatmul.bf16.gmra.mxu0 %v106
    %v3546 = vpop.f32.mrf.mxu0
    %v3547 = vadd.f32 %v3533, %v3546
    %v3548 = vpop.f32.mrf.mxu0
    %v3549 = vadd.f32 %v3535, %v3548
    %3550 = vdwg.mxu0
    %3551 = vmatpush.bf16.msra.mxu0 %v2309
    %3552 = vmatpush.bf16.msra.mxu0 %v2293
    %3553 = vmatpush.bf16.msra.mxu0 %v2277
    %3554 = vmatpush.bf16.msra.mxu0 %v2261
    %3555 = vmatpush.bf16.msra.mxu0 %v2245
    %3556 = vmatpush.bf16.msra.mxu0 %v2229
    %3557 = vmatpush.bf16.msra.mxu0 %v2213
    %3558 = vmatpush.bf16.msra.mxu0 %v2197
    %3559 = vmatmul.bf16.gmra.mxu0 %v103
    %v3560 = vpop.f32.mrf.mxu0
    %v3561 = vadd.f32 %v629, %v3560
    %v3562 = vpop.f32.mrf.mxu0
    %v3563 = vadd.f32 %v629, %v3562
    %3564 = vdwg.mxu0
    %3565 = vmatpush.bf16.msra.mxu0 %v2437
    %3566 = vmatpush.bf16.msra.mxu0 %v2421
    %3567 = vmatpush.bf16.msra.mxu0 %v2405
    %3568 = vmatpush.bf16.msra.mxu0 %v2389
    %3569 = vmatpush.bf16.msra.mxu0 %v2373
    %3570 = vmatpush.bf16.msra.mxu0 %v2357
    %3571 = vmatpush.bf16.msra.mxu0 %v2341
    %3572 = vmatpush.bf16.msra.mxu0 %v2325
    %3573 = vmatmul.bf16.gmra.mxu0 %v104
    %v3574 = vpop.f32.mrf.mxu0
    %v3575 = vadd.f32 %v3561, %v3574
    %v3576 = vpop.f32.mrf.mxu0
    %v3577 = vadd.f32 %v3563, %v3576
    %3578 = vdwg.mxu0
    %3579 = vmatpush.bf16.msra.mxu0 %v2565
    %3580 = vmatpush.bf16.msra.mxu0 %v2549
    %3581 = vmatpush.bf16.msra.mxu0 %v2533
    %3582 = vmatpush.bf16.msra.mxu0 %v2517
    %3583 = vmatpush.bf16.msra.mxu0 %v2501
    %3584 = vmatpush.bf16.msra.mxu0 %v2485
    %3585 = vmatpush.bf16.msra.mxu0 %v2469
    %3586 = vmatpush.bf16.msra.mxu0 %v2453
    %3587 = vmatmul.bf16.gmra.mxu0 %v105
    %v3588 = vpop.f32.mrf.mxu0
    %v3589 = vadd.f32 %v3575, %v3588
    %v3590 = vpop.f32.mrf.mxu0
    %v3591 = vadd.f32 %v3577, %v3590
    %3592 = vdwg.mxu0
    %3593 = vmatpush.bf16.msra.mxu0 %v2693
    %3594 = vmatpush.bf16.msra.mxu0 %v2677
    %3595 = vmatpush.bf16.msra.mxu0 %v2661
    %3596 = vmatpush.bf16.msra.mxu0 %v2645
    %3597 = vmatpush.bf16.msra.mxu0 %v2629
    %3598 = vmatpush.bf16.msra.mxu0 %v2613
    %3599 = vmatpush.bf16.msra.mxu0 %v2597
    %3600 = vmatpush.bf16.msra.mxu0 %v2581
    %3601 = vmatmul.bf16.gmra.mxu0 %v106
    %v3602 = vpop.f32.mrf.mxu0
    %v3603 = vadd.f32 %v3589, %v3602
    %v3604 = vpop.f32.mrf.mxu0
    %v3605 = vadd.f32 %v3591, %v3604
    %3606 = vdwg.mxu0
    %3607 = vmatpush.bf16.msra.mxu0 %v2310
    %3608 = vmatpush.bf16.msra.mxu0 %v2294
    %3609 = vmatpush.bf16.msra.mxu0 %v2278
    %3610 = vmatpush.bf16.msra.mxu0 %v2262
    %3611 = vmatpush.bf16.msra.mxu0 %v2246
    %3612 = vmatpush.bf16.msra.mxu0 %v2230
    %3613 = vmatpush.bf16.msra.mxu0 %v2214
    %3614 = vmatpush.bf16.msra.mxu0 %v2198
    %3615 = vmatmul.bf16.gmra.mxu0 %v103
    %v3616 = vpop.f32.mrf.mxu0
    %v3617 = vadd.f32 %v630, %v3616
    %v3618 = vpop.f32.mrf.mxu0
    %v3619 = vadd.f32 %v630, %v3618
    %3620 = vdwg.mxu0
    %3621 = vmatpush.bf16.msra.mxu0 %v2438
    %3622 = vmatpush.bf16.msra.mxu0 %v2422
    %3623 = vmatpush.bf16.msra.mxu0 %v2406
    %3624 = vmatpush.bf16.msra.mxu0 %v2390
    %3625 = vmatpush.bf16.msra.mxu0 %v2374
    %3626 = vmatpush.bf16.msra.mxu0 %v2358
    %3627 = vmatpush.bf16.msra.mxu0 %v2342
    %3628 = vmatpush.bf16.msra.mxu0 %v2326
    %3629 = vmatmul.bf16.gmra.mxu0 %v104
    %v3630 = vpop.f32.mrf.mxu0
    %v3631 = vadd.f32 %v3617, %v3630
    %v3632 = vpop.f32.mrf.mxu0
    %v3633 = vadd.f32 %v3619, %v3632
    %3634 = vdwg.mxu0
    %3635 = vmatpush.bf16.msra.mxu0 %v2566
    %3636 = vmatpush.bf16.msra.mxu0 %v2550
    %3637 = vmatpush.bf16.msra.mxu0 %v2534
    %3638 = vmatpush.bf16.msra.mxu0 %v2518
    %3639 = vmatpush.bf16.msra.mxu0 %v2502
    %3640 = vmatpush.bf16.msra.mxu0 %v2486
    %3641 = vmatpush.bf16.msra.mxu0 %v2470
    %3642 = vmatpush.bf16.msra.mxu0 %v2454
    %3643 = vmatmul.bf16.gmra.mxu0 %v105
    %v3644 = vpop.f32.mrf.mxu0
    %v3645 = vadd.f32 %v3631, %v3644
    %v3646 = vpop.f32.mrf.mxu0
    %v3647 = vadd.f32 %v3633, %v3646
    %3648 = vdwg.mxu0
    %3649 = vmatpush.bf16.msra.mxu0 %v2694
    %3650 = vmatpush.bf16.msra.mxu0 %v2678
    %3651 = vmatpush.bf16.msra.mxu0 %v2662
    %3652 = vmatpush.bf16.msra.mxu0 %v2646
    %3653 = vmatpush.bf16.msra.mxu0 %v2630
    %3654 = vmatpush.bf16.msra.mxu0 %v2614
    %3655 = vmatpush.bf16.msra.mxu0 %v2598
    %3656 = vmatpush.bf16.msra.mxu0 %v2582
    %3657 = vmatmul.bf16.gmra.mxu0 %v106
    %v3658 = vpop.f32.mrf.mxu0
    %v3659 = vadd.f32 %v3645, %v3658
    %v3660 = vpop.f32.mrf.mxu0
    %v3661 = vadd.f32 %v3647, %v3660
    %3662 = vdwg.mxu0
    %3663 = vmatpush.bf16.msra.mxu0 %v2311
    %3664 = vmatpush.bf16.msra.mxu0 %v2295
    %3665 = vmatpush.bf16.msra.mxu0 %v2279
    %3666 = vmatpush.bf16.msra.mxu0 %v2263
    %3667 = vmatpush.bf16.msra.mxu0 %v2247
    %3668 = vmatpush.bf16.msra.mxu0 %v2231
    %3669 = vmatpush.bf16.msra.mxu0 %v2215
    %3670 = vmatpush.bf16.msra.mxu0 %v2199
    %3671 = vmatmul.bf16.gmra.mxu0 %v103
    %v3672 = vpop.f32.mrf.mxu0
    %v3673 = vadd.f32 %v631, %v3672
    %v3674 = vpop.f32.mrf.mxu0
    %v3675 = vadd.f32 %v631, %v3674
    %3676 = vdwg.mxu0
    %3677 = vmatpush.bf16.msra.mxu0 %v2439
    %3678 = vmatpush.bf16.msra.mxu0 %v2423
    %3679 = vmatpush.bf16.msra.mxu0 %v2407
    %3680 = vmatpush.bf16.msra.mxu0 %v2391
    %3681 = vmatpush.bf16.msra.mxu0 %v2375
    %3682 = vmatpush.bf16.msra.mxu0 %v2359
    %3683 = vmatpush.bf16.msra.mxu0 %v2343
    %3684 = vmatpush.bf16.msra.mxu0 %v2327
    %3685 = vmatmul.bf16.gmra.mxu0 %v104
    %v3686 = vpop.f32.mrf.mxu0
    %v3687 = vadd.f32 %v3673, %v3686
    %v3688 = vpop.f32.mrf.mxu0
    %v3689 = vadd.f32 %v3675, %v3688
    %3690 = vdwg.mxu0
    %3691 = vmatpush.bf16.msra.mxu0 %v2567
    %3692 = vmatpush.bf16.msra.mxu0 %v2551
    %3693 = vmatpush.bf16.msra.mxu0 %v2535
    %3694 = vmatpush.bf16.msra.mxu0 %v2519
    %3695 = vmatpush.bf16.msra.mxu0 %v2503
    %3696 = vmatpush.bf16.msra.mxu0 %v2487
    %3697 = vmatpush.bf16.msra.mxu0 %v2471
    %3698 = vmatpush.bf16.msra.mxu0 %v2455
    %3699 = vmatmul.bf16.gmra.mxu0 %v105
    %v3700 = vpop.f32.mrf.mxu0
    %v3701 = vadd.f32 %v3687, %v3700
    %v3702 = vpop.f32.mrf.mxu0
    %v3703 = vadd.f32 %v3689, %v3702
    %3704 = vdwg.mxu0
    %3705 = vmatpush.bf16.msra.mxu0 %v2695
    %3706 = vmatpush.bf16.msra.mxu0 %v2679
    %3707 = vmatpush.bf16.msra.mxu0 %v2663
    %3708 = vmatpush.bf16.msra.mxu0 %v2647
    %3709 = vmatpush.bf16.msra.mxu0 %v2631
    %3710 = vmatpush.bf16.msra.mxu0 %v2615
    %3711 = vmatpush.bf16.msra.mxu0 %v2599
    %3712 = vmatpush.bf16.msra.mxu0 %v2583
    %3713 = vmatmul.bf16.gmra.mxu0 %v106
    %v3714 = vpop.f32.mrf.mxu0
    %v3715 = vadd.f32 %v3701, %v3714
    %v3716 = vpop.f32.mrf.mxu0
    %v3717 = vadd.f32 %v3703, %v3716
    %3718 = vdwg.mxu0
    %3719 = vmatpush.bf16.msra.mxu0 %v2312
    %3720 = vmatpush.bf16.msra.mxu0 %v2296
    %3721 = vmatpush.bf16.msra.mxu0 %v2280
    %3722 = vmatpush.bf16.msra.mxu0 %v2264
    %3723 = vmatpush.bf16.msra.mxu0 %v2248
    %3724 = vmatpush.bf16.msra.mxu0 %v2232
    %3725 = vmatpush.bf16.msra.mxu0 %v2216
    %3726 = vmatpush.bf16.msra.mxu0 %v2200
    %3727 = vmatmul.bf16.gmra.mxu0 %v103
    %v3728 = vpop.f32.mrf.mxu0
    %v3729 = vadd.f32 %v632, %v3728
    %v3730 = vpop.f32.mrf.mxu0
    %v3731 = vadd.f32 %v632, %v3730
    %3732 = vdwg.mxu0
    %3733 = vmatpush.bf16.msra.mxu0 %v2440
    %3734 = vmatpush.bf16.msra.mxu0 %v2424
    %3735 = vmatpush.bf16.msra.mxu0 %v2408
    %3736 = vmatpush.bf16.msra.mxu0 %v2392
    %3737 = vmatpush.bf16.msra.mxu0 %v2376
    %3738 = vmatpush.bf16.msra.mxu0 %v2360
    %3739 = vmatpush.bf16.msra.mxu0 %v2344
    %3740 = vmatpush.bf16.msra.mxu0 %v2328
    %3741 = vmatmul.bf16.gmra.mxu0 %v104
    %v3742 = vpop.f32.mrf.mxu0
    %v3743 = vadd.f32 %v3729, %v3742
    %v3744 = vpop.f32.mrf.mxu0
    %v3745 = vadd.f32 %v3731, %v3744
    %3746 = vdwg.mxu0
    %3747 = vmatpush.bf16.msra.mxu0 %v2568
    %3748 = vmatpush.bf16.msra.mxu0 %v2552
    %3749 = vmatpush.bf16.msra.mxu0 %v2536
    %3750 = vmatpush.bf16.msra.mxu0 %v2520
    %3751 = vmatpush.bf16.msra.mxu0 %v2504
    %3752 = vmatpush.bf16.msra.mxu0 %v2488
    %3753 = vmatpush.bf16.msra.mxu0 %v2472
    %3754 = vmatpush.bf16.msra.mxu0 %v2456
    %3755 = vmatmul.bf16.gmra.mxu0 %v105
    %v3756 = vpop.f32.mrf.mxu0
    %v3757 = vadd.f32 %v3743, %v3756
    %v3758 = vpop.f32.mrf.mxu0
    %v3759 = vadd.f32 %v3745, %v3758
    %3760 = vdwg.mxu0
    %3761 = vmatpush.bf16.msra.mxu0 %v2696
    %3762 = vmatpush.bf16.msra.mxu0 %v2680
    %3763 = vmatpush.bf16.msra.mxu0 %v2664
    %3764 = vmatpush.bf16.msra.mxu0 %v2648
    %3765 = vmatpush.bf16.msra.mxu0 %v2632
    %3766 = vmatpush.bf16.msra.mxu0 %v2616
    %3767 = vmatpush.bf16.msra.mxu0 %v2600
    %3768 = vmatpush.bf16.msra.mxu0 %v2584
    %3769 = vmatmul.bf16.gmra.mxu0 %v106
    %v3770 = vpop.f32.mrf.mxu0
    %v3771 = vadd.f32 %v3757, %v3770
    %v3772 = vpop.f32.mrf.mxu0
    %v3773 = vadd.f32 %v3759, %v3772
    %3774 = vdwg.mxu0
    %3775 = vmatpush.bf16.msra.mxu0 %v2313
    %3776 = vmatpush.bf16.msra.mxu0 %v2297
    %3777 = vmatpush.bf16.msra.mxu0 %v2281
    %3778 = vmatpush.bf16.msra.mxu0 %v2265
    %3779 = vmatpush.bf16.msra.mxu0 %v2249
    %3780 = vmatpush.bf16.msra.mxu0 %v2233
    %3781 = vmatpush.bf16.msra.mxu0 %v2217
    %3782 = vmatpush.bf16.msra.mxu0 %v2201
    %3783 = vmatmul.bf16.gmra.mxu0 %v103
    %v3784 = vpop.f32.mrf.mxu0
    %v3785 = vadd.f32 %v633, %v3784
    %v3786 = vpop.f32.mrf.mxu0
    %v3787 = vadd.f32 %v633, %v3786
    %3788 = vdwg.mxu0
    %3789 = vmatpush.bf16.msra.mxu0 %v2441
    %3790 = vmatpush.bf16.msra.mxu0 %v2425
    %3791 = vmatpush.bf16.msra.mxu0 %v2409
    %3792 = vmatpush.bf16.msra.mxu0 %v2393
    %3793 = vmatpush.bf16.msra.mxu0 %v2377
    %3794 = vmatpush.bf16.msra.mxu0 %v2361
    %3795 = vmatpush.bf16.msra.mxu0 %v2345
    %3796 = vmatpush.bf16.msra.mxu0 %v2329
    %3797 = vmatmul.bf16.gmra.mxu0 %v104
    %v3798 = vpop.f32.mrf.mxu0
    %v3799 = vadd.f32 %v3785, %v3798
    %v3800 = vpop.f32.mrf.mxu0
    %v3801 = vadd.f32 %v3787, %v3800
    %3802 = vdwg.mxu0
    %3803 = vmatpush.bf16.msra.mxu0 %v2569
    %3804 = vmatpush.bf16.msra.mxu0 %v2553
    %3805 = vmatpush.bf16.msra.mxu0 %v2537
    %3806 = vmatpush.bf16.msra.mxu0 %v2521
    %3807 = vmatpush.bf16.msra.mxu0 %v2505
    %3808 = vmatpush.bf16.msra.mxu0 %v2489
    %3809 = vmatpush.bf16.msra.mxu0 %v2473
    %3810 = vmatpush.bf16.msra.mxu0 %v2457
    %3811 = vmatmul.bf16.gmra.mxu0 %v105
    %v3812 = vpop.f32.mrf.mxu0
    %v3813 = vadd.f32 %v3799, %v3812
    %v3814 = vpop.f32.mrf.mxu0
    %v3815 = vadd.f32 %v3801, %v3814
    %3816 = vdwg.mxu0
    %3817 = vmatpush.bf16.msra.mxu0 %v2697
    %3818 = vmatpush.bf16.msra.mxu0 %v2681
    %3819 = vmatpush.bf16.msra.mxu0 %v2665
    %3820 = vmatpush.bf16.msra.mxu0 %v2649
    %3821 = vmatpush.bf16.msra.mxu0 %v2633
    %3822 = vmatpush.bf16.msra.mxu0 %v2617
    %3823 = vmatpush.bf16.msra.mxu0 %v2601
    %3824 = vmatpush.bf16.msra.mxu0 %v2585
    %3825 = vmatmul.bf16.gmra.mxu0 %v106
    %v3826 = vpop.f32.mrf.mxu0
    %v3827 = vadd.f32 %v3813, %v3826
    %v3828 = vpop.f32.mrf.mxu0
    %v3829 = vadd.f32 %v3815, %v3828
    %3830 = vdwg.mxu0
    %3831 = vmatpush.bf16.msra.mxu0 %v2314
    %3832 = vmatpush.bf16.msra.mxu0 %v2298
    %3833 = vmatpush.bf16.msra.mxu0 %v2282
    %3834 = vmatpush.bf16.msra.mxu0 %v2266
    %3835 = vmatpush.bf16.msra.mxu0 %v2250
    %3836 = vmatpush.bf16.msra.mxu0 %v2234
    %3837 = vmatpush.bf16.msra.mxu0 %v2218
    %3838 = vmatpush.bf16.msra.mxu0 %v2202
    %3839 = vmatmul.bf16.gmra.mxu0 %v103
    %v3840 = vpop.f32.mrf.mxu0
    %v3841 = vadd.f32 %v634, %v3840
    %v3842 = vpop.f32.mrf.mxu0
    %v3843 = vadd.f32 %v634, %v3842
    %3844 = vdwg.mxu0
    %3845 = vmatpush.bf16.msra.mxu0 %v2442
    %3846 = vmatpush.bf16.msra.mxu0 %v2426
    %3847 = vmatpush.bf16.msra.mxu0 %v2410
    %3848 = vmatpush.bf16.msra.mxu0 %v2394
    %3849 = vmatpush.bf16.msra.mxu0 %v2378
    %3850 = vmatpush.bf16.msra.mxu0 %v2362
    %3851 = vmatpush.bf16.msra.mxu0 %v2346
    %3852 = vmatpush.bf16.msra.mxu0 %v2330
    %3853 = vmatmul.bf16.gmra.mxu0 %v104
    %v3854 = vpop.f32.mrf.mxu0
    %v3855 = vadd.f32 %v3841, %v3854
    %v3856 = vpop.f32.mrf.mxu0
    %v3857 = vadd.f32 %v3843, %v3856
    %3858 = vdwg.mxu0
    %3859 = vmatpush.bf16.msra.mxu0 %v2570
    %3860 = vmatpush.bf16.msra.mxu0 %v2554
    %3861 = vmatpush.bf16.msra.mxu0 %v2538
    %3862 = vmatpush.bf16.msra.mxu0 %v2522
    %3863 = vmatpush.bf16.msra.mxu0 %v2506
    %3864 = vmatpush.bf16.msra.mxu0 %v2490
    %3865 = vmatpush.bf16.msra.mxu0 %v2474
    %3866 = vmatpush.bf16.msra.mxu0 %v2458
    %3867 = vmatmul.bf16.gmra.mxu0 %v105
    %v3868 = vpop.f32.mrf.mxu0
    %v3869 = vadd.f32 %v3855, %v3868
    %v3870 = vpop.f32.mrf.mxu0
    %v3871 = vadd.f32 %v3857, %v3870
    %3872 = vdwg.mxu0
    %3873 = vmatpush.bf16.msra.mxu0 %v2698
    %3874 = vmatpush.bf16.msra.mxu0 %v2682
    %3875 = vmatpush.bf16.msra.mxu0 %v2666
    %3876 = vmatpush.bf16.msra.mxu0 %v2650
    %3877 = vmatpush.bf16.msra.mxu0 %v2634
    %3878 = vmatpush.bf16.msra.mxu0 %v2618
    %3879 = vmatpush.bf16.msra.mxu0 %v2602
    %3880 = vmatpush.bf16.msra.mxu0 %v2586
    %3881 = vmatmul.bf16.gmra.mxu0 %v106
    %v3882 = vpop.f32.mrf.mxu0
    %v3883 = vadd.f32 %v3869, %v3882
    %v3884 = vpop.f32.mrf.mxu0
    %v3885 = vadd.f32 %v3871, %v3884
    %3886 = vdwg.mxu0
    %3887 = vmatpush.bf16.msra.mxu0 %v2315
    %3888 = vmatpush.bf16.msra.mxu0 %v2299
    %3889 = vmatpush.bf16.msra.mxu0 %v2283
    %3890 = vmatpush.bf16.msra.mxu0 %v2267
    %3891 = vmatpush.bf16.msra.mxu0 %v2251
    %3892 = vmatpush.bf16.msra.mxu0 %v2235
    %3893 = vmatpush.bf16.msra.mxu0 %v2219
    %3894 = vmatpush.bf16.msra.mxu0 %v2203
    %3895 = vmatmul.bf16.gmra.mxu0 %v103
    %v3896 = vpop.f32.mrf.mxu0
    %v3897 = vadd.f32 %v635, %v3896
    %v3898 = vpop.f32.mrf.mxu0
    %v3899 = vadd.f32 %v635, %v3898
    %3900 = vdwg.mxu0
    %3901 = vmatpush.bf16.msra.mxu0 %v2443
    %3902 = vmatpush.bf16.msra.mxu0 %v2427
    %3903 = vmatpush.bf16.msra.mxu0 %v2411
    %3904 = vmatpush.bf16.msra.mxu0 %v2395
    %3905 = vmatpush.bf16.msra.mxu0 %v2379
    %3906 = vmatpush.bf16.msra.mxu0 %v2363
    %3907 = vmatpush.bf16.msra.mxu0 %v2347
    %3908 = vmatpush.bf16.msra.mxu0 %v2331
    %3909 = vmatmul.bf16.gmra.mxu0 %v104
    %v3910 = vpop.f32.mrf.mxu0
    %v3911 = vadd.f32 %v3897, %v3910
    %v3912 = vpop.f32.mrf.mxu0
    %v3913 = vadd.f32 %v3899, %v3912
    %3914 = vdwg.mxu0
    %3915 = vmatpush.bf16.msra.mxu0 %v2571
    %3916 = vmatpush.bf16.msra.mxu0 %v2555
    %3917 = vmatpush.bf16.msra.mxu0 %v2539
    %3918 = vmatpush.bf16.msra.mxu0 %v2523
    %3919 = vmatpush.bf16.msra.mxu0 %v2507
    %3920 = vmatpush.bf16.msra.mxu0 %v2491
    %3921 = vmatpush.bf16.msra.mxu0 %v2475
    %3922 = vmatpush.bf16.msra.mxu0 %v2459
    %3923 = vmatmul.bf16.gmra.mxu0 %v105
    %v3924 = vpop.f32.mrf.mxu0
    %v3925 = vadd.f32 %v3911, %v3924
    %v3926 = vpop.f32.mrf.mxu0
    %v3927 = vadd.f32 %v3913, %v3926
    %3928 = vdwg.mxu0
    %3929 = vmatpush.bf16.msra.mxu0 %v2699
    %3930 = vmatpush.bf16.msra.mxu0 %v2683
    %3931 = vmatpush.bf16.msra.mxu0 %v2667
    %3932 = vmatpush.bf16.msra.mxu0 %v2651
    %3933 = vmatpush.bf16.msra.mxu0 %v2635
    %3934 = vmatpush.bf16.msra.mxu0 %v2619
    %3935 = vmatpush.bf16.msra.mxu0 %v2603
    %3936 = vmatpush.bf16.msra.mxu0 %v2587
    %3937 = vmatmul.bf16.gmra.mxu0 %v106
    %v3938 = vpop.f32.mrf.mxu0
    %v3939 = vadd.f32 %v3925, %v3938
    %v3940 = vpop.f32.mrf.mxu0
    %v3941 = vadd.f32 %v3927, %v3940
    %3942 = vdwg.mxu0
    %3943 = vmatpush.bf16.msra.mxu0 %v2316
    %3944 = vmatpush.bf16.msra.mxu0 %v2300
    %3945 = vmatpush.bf16.msra.mxu0 %v2284
    %3946 = vmatpush.bf16.msra.mxu0 %v2268
    %3947 = vmatpush.bf16.msra.mxu0 %v2252
    %3948 = vmatpush.bf16.msra.mxu0 %v2236
    %3949 = vmatpush.bf16.msra.mxu0 %v2220
    %3950 = vmatpush.bf16.msra.mxu0 %v2204
    %3951 = vmatmul.bf16.gmra.mxu0 %v103
    %v3952 = vpop.f32.mrf.mxu0
    %v3953 = vadd.f32 %v636, %v3952
    %v3954 = vpop.f32.mrf.mxu0
    %v3955 = vadd.f32 %v636, %v3954
    %3956 = vdwg.mxu0
    %3957 = vmatpush.bf16.msra.mxu0 %v2444
    %3958 = vmatpush.bf16.msra.mxu0 %v2428
    %3959 = vmatpush.bf16.msra.mxu0 %v2412
    %3960 = vmatpush.bf16.msra.mxu0 %v2396
    %3961 = vmatpush.bf16.msra.mxu0 %v2380
    %3962 = vmatpush.bf16.msra.mxu0 %v2364
    %3963 = vmatpush.bf16.msra.mxu0 %v2348
    %3964 = vmatpush.bf16.msra.mxu0 %v2332
    %3965 = vmatmul.bf16.gmra.mxu0 %v104
    %v3966 = vpop.f32.mrf.mxu0
    %v3967 = vadd.f32 %v3953, %v3966
    %v3968 = vpop.f32.mrf.mxu0
    %v3969 = vadd.f32 %v3955, %v3968
    %3970 = vdwg.mxu0
    %3971 = vmatpush.bf16.msra.mxu0 %v2572
    %3972 = vmatpush.bf16.msra.mxu0 %v2556
    %3973 = vmatpush.bf16.msra.mxu0 %v2540
    %3974 = vmatpush.bf16.msra.mxu0 %v2524
    %3975 = vmatpush.bf16.msra.mxu0 %v2508
    %3976 = vmatpush.bf16.msra.mxu0 %v2492
    %3977 = vmatpush.bf16.msra.mxu0 %v2476
    %3978 = vmatpush.bf16.msra.mxu0 %v2460
    %3979 = vmatmul.bf16.gmra.mxu0 %v105
    %v3980 = vpop.f32.mrf.mxu0
    %v3981 = vadd.f32 %v3967, %v3980
    %v3982 = vpop.f32.mrf.mxu0
    %v3983 = vadd.f32 %v3969, %v3982
    %3984 = vdwg.mxu0
    %3985 = vmatpush.bf16.msra.mxu0 %v2700
    %3986 = vmatpush.bf16.msra.mxu0 %v2684
    %3987 = vmatpush.bf16.msra.mxu0 %v2668
    %3988 = vmatpush.bf16.msra.mxu0 %v2652
    %3989 = vmatpush.bf16.msra.mxu0 %v2636
    %3990 = vmatpush.bf16.msra.mxu0 %v2620
    %3991 = vmatpush.bf16.msra.mxu0 %v2604
    %3992 = vmatpush.bf16.msra.mxu0 %v2588
    %3993 = vmatmul.bf16.gmra.mxu0 %v106
    %v3994 = vpop.f32.mrf.mxu0
    %v3995 = vadd.f32 %v3981, %v3994
    %v3996 = vpop.f32.mrf.mxu0
    %v3997 = vadd.f32 %v3983, %v3996
    %3998 = vdwg.mxu0
    %3999 = vmatpush.bf16.msra.mxu0 %v2317
    %4000 = vmatpush.bf16.msra.mxu0 %v2301
    %4001 = vmatpush.bf16.msra.mxu0 %v2285
    %4002 = vmatpush.bf16.msra.mxu0 %v2269
    %4003 = vmatpush.bf16.msra.mxu0 %v2253
    %4004 = vmatpush.bf16.msra.mxu0 %v2237
    %4005 = vmatpush.bf16.msra.mxu0 %v2221
    %4006 = vmatpush.bf16.msra.mxu0 %v2205
    %4007 = vmatmul.bf16.gmra.mxu0 %v103
    %v4008 = vpop.f32.mrf.mxu0
    %v4009 = vadd.f32 %v637, %v4008
    %v4010 = vpop.f32.mrf.mxu0
    %v4011 = vadd.f32 %v637, %v4010
    %4012 = vdwg.mxu0
    %4013 = vmatpush.bf16.msra.mxu0 %v2445
    %4014 = vmatpush.bf16.msra.mxu0 %v2429
    %4015 = vmatpush.bf16.msra.mxu0 %v2413
    %4016 = vmatpush.bf16.msra.mxu0 %v2397
    %4017 = vmatpush.bf16.msra.mxu0 %v2381
    %4018 = vmatpush.bf16.msra.mxu0 %v2365
    %4019 = vmatpush.bf16.msra.mxu0 %v2349
    %4020 = vmatpush.bf16.msra.mxu0 %v2333
    %4021 = vmatmul.bf16.gmra.mxu0 %v104
    %v4022 = vpop.f32.mrf.mxu0
    %v4023 = vadd.f32 %v4009, %v4022
    %v4024 = vpop.f32.mrf.mxu0
    %v4025 = vadd.f32 %v4011, %v4024
    %4026 = vdwg.mxu0
    %4027 = vmatpush.bf16.msra.mxu0 %v2573
    %4028 = vmatpush.bf16.msra.mxu0 %v2557
    %4029 = vmatpush.bf16.msra.mxu0 %v2541
    %4030 = vmatpush.bf16.msra.mxu0 %v2525
    %4031 = vmatpush.bf16.msra.mxu0 %v2509
    %4032 = vmatpush.bf16.msra.mxu0 %v2493
    %4033 = vmatpush.bf16.msra.mxu0 %v2477
    %4034 = vmatpush.bf16.msra.mxu0 %v2461
    %4035 = vmatmul.bf16.gmra.mxu0 %v105
    %v4036 = vpop.f32.mrf.mxu0
    %v4037 = vadd.f32 %v4023, %v4036
    %v4038 = vpop.f32.mrf.mxu0
    %v4039 = vadd.f32 %v4025, %v4038
    %4040 = vdwg.mxu0
    %4041 = vmatpush.bf16.msra.mxu0 %v2701
    %4042 = vmatpush.bf16.msra.mxu0 %v2685
    %4043 = vmatpush.bf16.msra.mxu0 %v2669
    %4044 = vmatpush.bf16.msra.mxu0 %v2653
    %4045 = vmatpush.bf16.msra.mxu0 %v2637
    %4046 = vmatpush.bf16.msra.mxu0 %v2621
    %4047 = vmatpush.bf16.msra.mxu0 %v2605
    %4048 = vmatpush.bf16.msra.mxu0 %v2589
    %4049 = vmatmul.bf16.gmra.mxu0 %v106
    %v4050 = vpop.f32.mrf.mxu0
    %v4051 = vadd.f32 %v4037, %v4050
    %v4052 = vpop.f32.mrf.mxu0
    %v4053 = vadd.f32 %v4039, %v4052
    %4054 = vdwg.mxu0
    %4055 = vmatpush.bf16.msra.mxu0 %v2318
    %4056 = vmatpush.bf16.msra.mxu0 %v2302
    %4057 = vmatpush.bf16.msra.mxu0 %v2286
    %4058 = vmatpush.bf16.msra.mxu0 %v2270
    %4059 = vmatpush.bf16.msra.mxu0 %v2254
    %4060 = vmatpush.bf16.msra.mxu0 %v2238
    %4061 = vmatpush.bf16.msra.mxu0 %v2222
    %4062 = vmatpush.bf16.msra.mxu0 %v2206
    %4063 = vmatmul.bf16.gmra.mxu0 %v103
    %v4064 = vpop.f32.mrf.mxu0
    %v4065 = vadd.f32 %v638, %v4064
    %v4066 = vpop.f32.mrf.mxu0
    %v4067 = vadd.f32 %v638, %v4066
    %4068 = vdwg.mxu0
    %4069 = vmatpush.bf16.msra.mxu0 %v2446
    %4070 = vmatpush.bf16.msra.mxu0 %v2430
    %4071 = vmatpush.bf16.msra.mxu0 %v2414
    %4072 = vmatpush.bf16.msra.mxu0 %v2398
    %4073 = vmatpush.bf16.msra.mxu0 %v2382
    %4074 = vmatpush.bf16.msra.mxu0 %v2366
    %4075 = vmatpush.bf16.msra.mxu0 %v2350
    %4076 = vmatpush.bf16.msra.mxu0 %v2334
    %4077 = vmatmul.bf16.gmra.mxu0 %v104
    %v4078 = vpop.f32.mrf.mxu0
    %v4079 = vadd.f32 %v4065, %v4078
    %v4080 = vpop.f32.mrf.mxu0
    %v4081 = vadd.f32 %v4067, %v4080
    %4082 = vdwg.mxu0
    %4083 = vmatpush.bf16.msra.mxu0 %v2574
    %4084 = vmatpush.bf16.msra.mxu0 %v2558
    %4085 = vmatpush.bf16.msra.mxu0 %v2542
    %4086 = vmatpush.bf16.msra.mxu0 %v2526
    %4087 = vmatpush.bf16.msra.mxu0 %v2510
    %4088 = vmatpush.bf16.msra.mxu0 %v2494
    %4089 = vmatpush.bf16.msra.mxu0 %v2478
    %4090 = vmatpush.bf16.msra.mxu0 %v2462
    %4091 = vmatmul.bf16.gmra.mxu0 %v105
    %v4092 = vpop.f32.mrf.mxu0
    %v4093 = vadd.f32 %v4079, %v4092
    %v4094 = vpop.f32.mrf.mxu0
    %v4095 = vadd.f32 %v4081, %v4094
    %4096 = vdwg.mxu0
    %4097 = vmatpush.bf16.msra.mxu0 %v2702
    %4098 = vmatpush.bf16.msra.mxu0 %v2686
    %4099 = vmatpush.bf16.msra.mxu0 %v2670
    %4100 = vmatpush.bf16.msra.mxu0 %v2654
    %4101 = vmatpush.bf16.msra.mxu0 %v2638
    %4102 = vmatpush.bf16.msra.mxu0 %v2622
    %4103 = vmatpush.bf16.msra.mxu0 %v2606
    %4104 = vmatpush.bf16.msra.mxu0 %v2590
    %4105 = vmatmul.bf16.gmra.mxu0 %v106
    %v4106 = vpop.f32.mrf.mxu0
    %v4107 = vadd.f32 %v4093, %v4106
    %v4108 = vpop.f32.mrf.mxu0
    %v4109 = vadd.f32 %v4095, %v4108
    %4110 = vdwg.mxu0
    %v4111 = vmax.f32 %v3267, 0.0
    %v4112 = vmax.f32 %v3323, 0.0
    %v4113 = vmax.f32 %v3379, 0.0
    %v4114 = vmax.f32 %v3435, 0.0
    %v4115 = vmax.f32 %v3491, 0.0
    %v4116 = vmax.f32 %v3547, 0.0
    %v4117 = vmax.f32 %v3603, 0.0
    %v4118 = vmax.f32 %v3659, 0.0
    %v4119 = vmax.f32 %v3715, 0.0
    %v4120 = vmax.f32 %v3771, 0.0
    %v4121 = vmax.f32 %v3827, 0.0
    %v4122 = vmax.f32 %v3883, 0.0
    %v4123 = vmax.f32 %v3939, 0.0
    %v4124 = vmax.f32 %v3995, 0.0
    %v4125 = vmax.f32 %v4051, 0.0
    %v4126 = vmax.f32 %v4107, 0.0
    %v4127 = vmax.f32 %v3269, 0.0
    %v4128 = vmax.f32 %v3325, 0.0
    %v4129 = vmax.f32 %v3381, 0.0
    %v4130 = vmax.f32 %v3437, 0.0
    %v4131 = vmax.f32 %v3493, 0.0
    %v4132 = vmax.f32 %v3549, 0.0
    %v4133 = vmax.f32 %v3605, 0.0
    %v4134 = vmax.f32 %v3661, 0.0
    %v4135 = vmax.f32 %v3717, 0.0
    %v4136 = vmax.f32 %v3773, 0.0
    %v4137 = vmax.f32 %v3829, 0.0
    %v4138 = vmax.f32 %v3885, 0.0
    %v4139 = vmax.f32 %v3941, 0.0
    %v4140 = vmax.f32 %v3997, 0.0
    %v4141 = vmax.f32 %v4053, 0.0
    %v4142 = vmax.f32 %v4109, 0.0
    %v4143 = vpack.c.bf16 %v4127, %v4111
    %v4144 = vpack.c.bf16 %v4128, %v4112
    %v4145 = vpack.c.bf16 %v4129, %v4113
    %v4146 = vpack.c.bf16 %v4130, %v4114
    %v4147 = vpack.c.bf16 %v4131, %v4115
    %v4148 = vpack.c.bf16 %v4132, %v4116
    %v4149 = vpack.c.bf16 %v4133, %v4117
    %v4150 = vpack.c.bf16 %v4134, %v4118
    %v4151 = vpack.c.bf16 %v4135, %v4119
    %v4152 = vpack.c.bf16 %v4136, %v4120
    %v4153 = vpack.c.bf16 %v4137, %v4121
    %v4154 = vpack.c.bf16 %v4138, %v4122
    %v4155 = vpack.c.bf16 %v4139, %v4123
    %v4156 = vpack.c.bf16 %v4140, %v4124
    %v4157 = vpack.c.bf16 %v4141, %v4125
    %v4158 = vpack.c.bf16 %v4142, %v4126
    %v4159 = vld [vmem:[#allocation8] sm:$0xff]
    %v4160 = vld [vmem:[#allocation8 + $0x8] sm:$0xff]
    %v4161 = vld [vmem:[#allocation8 + $0x10] sm:$0xff]
    %v4162 = vld [vmem:[#allocation8 + $0x18] sm:$0xff]
    %v4163 = vld [vmem:[#allocation8 + $0x20] sm:$0xff]
    %v4164 = vld [vmem:[#allocation8 + $0x28] sm:$0xff]
    %v4165 = vld [vmem:[#allocation8 + $0x30] sm:$0xff]
    %v4166 = vld [vmem:[#allocation8 + $0x38] sm:$0xff]
    %v4167 = vld [vmem:[#allocation8 + $0x40] sm:$0xff]
    %v4168 = vld [vmem:[#allocation8 + $0x48] sm:$0xff]
    %v4169 = vld [vmem:[#allocation8 + $0x50] sm:$0xff]
    %v4170 = vld [vmem:[#allocation8 + $0x58] sm:$0xff]
    %v4171 = vld [vmem:[#allocation8 + $0x60] sm:$0xff]
    %v4172 = vld [vmem:[#allocation8 + $0x68] sm:$0xff]
    %v4173 = vld [vmem:[#allocation8 + $0x70] sm:$0xff]
    %v4174 = vld [vmem:[#allocation8 + $0x78] sm:$0xff]
    %v4175 = vld [vmem:[#allocation8 + $0x80] sm:$0xff]
    %v4176 = vld [vmem:[#allocation8 + $0x88] sm:$0xff]
    %v4177 = vld [vmem:[#allocation8 + $0x90] sm:$0xff]
    %v4178 = vld [vmem:[#allocation8 + $0x98] sm:$0xff]
    %v4179 = vld [vmem:[#allocation8 + $0xa0] sm:$0xff]
    %v4180 = vld [vmem:[#allocation8 + $0xa8] sm:$0xff]
    %v4181 = vld [vmem:[#allocation8 + $0xb0] sm:$0xff]
    %v4182 = vld [vmem:[#allocation8 + $0xb8] sm:$0xff]
    %v4183 = vld [vmem:[#allocation8 + $0xc0] sm:$0xff]
    %v4184 = vld [vmem:[#allocation8 + $0xc8] sm:$0xff]
    %v4185 = vld [vmem:[#allocation8 + $0xd0] sm:$0xff]
    %v4186 = vld [vmem:[#allocation8 + $0xd8] sm:$0xff]
    %v4187 = vld [vmem:[#allocation8 + $0xe0] sm:$0xff]
    %v4188 = vld [vmem:[#allocation8 + $0xe8] sm:$0xff]
    %v4189 = vld [vmem:[#allocation8 + $0xf0] sm:$0xff]
    %v4190 = vld [vmem:[#allocation8 + $0xf8] sm:$0xff]
    %v4191 = vld [vmem:[#allocation8 + $0x100] sm:$0xff]
    %v4192 = vld [vmem:[#allocation8 + $0x108] sm:$0xff]
    %v4193 = vld [vmem:[#allocation8 + $0x110] sm:$0xff]
    %v4194 = vld [vmem:[#allocation8 + $0x118] sm:$0xff]
    %v4195 = vld [vmem:[#allocation8 + $0x120] sm:$0xff]
    %v4196 = vld [vmem:[#allocation8 + $0x128] sm:$0xff]
    %v4197 = vld [vmem:[#allocation8 + $0x130] sm:$0xff]
    %v4198 = vld [vmem:[#allocation8 + $0x138] sm:$0xff]
    %v4199 = vld [vmem:[#allocation8 + $0x140] sm:$0xff]
    %v4200 = vld [vmem:[#allocation8 + $0x148] sm:$0xff]
    %v4201 = vld [vmem:[#allocation8 + $0x150] sm:$0xff]
    %v4202 = vld [vmem:[#allocation8 + $0x158] sm:$0xff]
    %v4203 = vld [vmem:[#allocation8 + $0x160] sm:$0xff]
    %v4204 = vld [vmem:[#allocation8 + $0x168] sm:$0xff]
    %v4205 = vld [vmem:[#allocation8 + $0x170] sm:$0xff]
    %v4206 = vld [vmem:[#allocation8 + $0x178] sm:$0xff]
    %v4207 = vld [vmem:[#allocation8 + $0x180] sm:$0xff]
    %v4208 = vld [vmem:[#allocation8 + $0x188] sm:$0xff]
    %v4209 = vld [vmem:[#allocation8 + $0x190] sm:$0xff]
    %v4210 = vld [vmem:[#allocation8 + $0x198] sm:$0xff]
    %v4211 = vld [vmem:[#allocation8 + $0x1a0] sm:$0xff]
    %v4212 = vld [vmem:[#allocation8 + $0x1a8] sm:$0xff]
    %v4213 = vld [vmem:[#allocation8 + $0x1b0] sm:$0xff]
    %v4214 = vld [vmem:[#allocation8 + $0x1b8] sm:$0xff]
    %v4215 = vld [vmem:[#allocation8 + $0x1c0] sm:$0xff]
    %v4216 = vld [vmem:[#allocation8 + $0x1c8] sm:$0xff]
    %v4217 = vld [vmem:[#allocation8 + $0x1d0] sm:$0xff]
    %v4218 = vld [vmem:[#allocation8 + $0x1d8] sm:$0xff]
    %v4219 = vld [vmem:[#allocation8 + $0x1e0] sm:$0xff]
    %v4220 = vld [vmem:[#allocation8 + $0x1e8] sm:$0xff]
    %v4221 = vld [vmem:[#allocation8 + $0x1f0] sm:$0xff]
    %v4222 = vld [vmem:[#allocation8 + $0x1f8] sm:$0xff]
    %v4223 = vld [vmem:[#allocation8 + $0x200] sm:$0xff]
    %v4224 = vld [vmem:[#allocation8 + $0x208] sm:$0xff]
    %v4225 = vld [vmem:[#allocation8 + $0x210] sm:$0xff]
    %v4226 = vld [vmem:[#allocation8 + $0x218] sm:$0xff]
    %v4227 = vld [vmem:[#allocation8 + $0x220] sm:$0xff]
    %v4228 = vld [vmem:[#allocation8 + $0x228] sm:$0xff]
    %v4229 = vld [vmem:[#allocation8 + $0x230] sm:$0xff]
    %v4230 = vld [vmem:[#allocation8 + $0x238] sm:$0xff]
    %v4231 = vld [vmem:[#allocation8 + $0x240] sm:$0xff]
    %v4232 = vld [vmem:[#allocation8 + $0x248] sm:$0xff]
    %v4233 = vld [vmem:[#allocation8 + $0x250] sm:$0xff]
    %v4234 = vld [vmem:[#allocation8 + $0x258] sm:$0xff]
    %v4235 = vld [vmem:[#allocation8 + $0x260] sm:$0xff]
    %v4236 = vld [vmem:[#allocation8 + $0x268] sm:$0xff]
    %v4237 = vld [vmem:[#allocation8 + $0x270] sm:$0xff]
    %v4238 = vld [vmem:[#allocation8 + $0x278] sm:$0xff]
    %v4239 = vld [vmem:[#allocation8 + $0x280] sm:$0xff]
    %v4240 = vld [vmem:[#allocation8 + $0x288] sm:$0xff]
    %v4241 = vld [vmem:[#allocation8 + $0x290] sm:$0xff]
    %v4242 = vld [vmem:[#allocation8 + $0x298] sm:$0xff]
    %v4243 = vld [vmem:[#allocation8 + $0x2a0] sm:$0xff]
    %v4244 = vld [vmem:[#allocation8 + $0x2a8] sm:$0xff]
    %v4245 = vld [vmem:[#allocation8 + $0x2b0] sm:$0xff]
    %v4246 = vld [vmem:[#allocation8 + $0x2b8] sm:$0xff]
    %v4247 = vld [vmem:[#allocation8 + $0x2c0] sm:$0xff]
    %v4248 = vld [vmem:[#allocation8 + $0x2c8] sm:$0xff]
    %v4249 = vld [vmem:[#allocation8 + $0x2d0] sm:$0xff]
    %v4250 = vld [vmem:[#allocation8 + $0x2d8] sm:$0xff]
    %v4251 = vld [vmem:[#allocation8 + $0x2e0] sm:$0xff]
    %v4252 = vld [vmem:[#allocation8 + $0x2e8] sm:$0xff]
    %v4253 = vld [vmem:[#allocation8 + $0x2f0] sm:$0xff]
    %v4254 = vld [vmem:[#allocation8 + $0x2f8] sm:$0xff]
    %v4255 = vld [vmem:[#allocation8 + $0x300] sm:$0xff]
    %v4256 = vld [vmem:[#allocation8 + $0x308] sm:$0xff]
    %v4257 = vld [vmem:[#allocation8 + $0x310] sm:$0xff]
    %v4258 = vld [vmem:[#allocation8 + $0x318] sm:$0xff]
    %v4259 = vld [vmem:[#allocation8 + $0x320] sm:$0xff]
    %v4260 = vld [vmem:[#allocation8 + $0x328] sm:$0xff]
    %v4261 = vld [vmem:[#allocation8 + $0x330] sm:$0xff]
    %v4262 = vld [vmem:[#allocation8 + $0x338] sm:$0xff]
    %v4263 = vld [vmem:[#allocation8 + $0x340] sm:$0xff]
    %v4264 = vld [vmem:[#allocation8 + $0x348] sm:$0xff]
    %v4265 = vld [vmem:[#allocation8 + $0x350] sm:$0xff]
    %v4266 = vld [vmem:[#allocation8 + $0x358] sm:$0xff]
    %v4267 = vld [vmem:[#allocation8 + $0x360] sm:$0xff]
    %v4268 = vld [vmem:[#allocation8 + $0x368] sm:$0xff]
    %v4269 = vld [vmem:[#allocation8 + $0x370] sm:$0xff]
    %v4270 = vld [vmem:[#allocation8 + $0x378] sm:$0xff]
    %v4271 = vld [vmem:[#allocation8 + $0x380] sm:$0xff]
    %v4272 = vld [vmem:[#allocation8 + $0x388] sm:$0xff]
    %v4273 = vld [vmem:[#allocation8 + $0x390] sm:$0xff]
    %v4274 = vld [vmem:[#allocation8 + $0x398] sm:$0xff]
    %v4275 = vld [vmem:[#allocation8 + $0x3a0] sm:$0xff]
    %v4276 = vld [vmem:[#allocation8 + $0x3a8] sm:$0xff]
    %v4277 = vld [vmem:[#allocation8 + $0x3b0] sm:$0xff]
    %v4278 = vld [vmem:[#allocation8 + $0x3b8] sm:$0xff]
    %v4279 = vld [vmem:[#allocation8 + $0x3c0] sm:$0xff]
    %v4280 = vld [vmem:[#allocation8 + $0x3c8] sm:$0xff]
    %v4281 = vld [vmem:[#allocation8 + $0x3d0] sm:$0xff]
    %v4282 = vld [vmem:[#allocation8 + $0x3d8] sm:$0xff]
    %v4283 = vld [vmem:[#allocation8 + $0x3e0] sm:$0xff]
    %v4284 = vld [vmem:[#allocation8 + $0x3e8] sm:$0xff]
    %v4285 = vld [vmem:[#allocation8 + $0x3f0] sm:$0xff]
    %v4286 = vld [vmem:[#allocation8 + $0x3f8] sm:$0xff]
    %v4287 = vld [vmem:[#allocation8 + $0x400] sm:$0xff]
    %v4288 = vld [vmem:[#allocation8 + $0x408] sm:$0xff]
    %v4289 = vld [vmem:[#allocation8 + $0x410] sm:$0xff]
    %v4290 = vld [vmem:[#allocation8 + $0x418] sm:$0xff]
    %v4291 = vld [vmem:[#allocation8 + $0x420] sm:$0xff]
    %v4292 = vld [vmem:[#allocation8 + $0x428] sm:$0xff]
    %v4293 = vld [vmem:[#allocation8 + $0x430] sm:$0xff]
    %v4294 = vld [vmem:[#allocation8 + $0x438] sm:$0xff]
    %v4295 = vld [vmem:[#allocation8 + $0x440] sm:$0xff]
    %v4296 = vld [vmem:[#allocation8 + $0x448] sm:$0xff]
    %v4297 = vld [vmem:[#allocation8 + $0x450] sm:$0xff]
    %v4298 = vld [vmem:[#allocation8 + $0x458] sm:$0xff]
    %v4299 = vld [vmem:[#allocation8 + $0x460] sm:$0xff]
    %v4300 = vld [vmem:[#allocation8 + $0x468] sm:$0xff]
    %v4301 = vld [vmem:[#allocation8 + $0x470] sm:$0xff]
    %v4302 = vld [vmem:[#allocation8 + $0x478] sm:$0xff]
    %v4303 = vld [vmem:[#allocation8 + $0x480] sm:$0xff]
    %v4304 = vld [vmem:[#allocation8 + $0x488] sm:$0xff]
    %v4305 = vld [vmem:[#allocation8 + $0x490] sm:$0xff]
    %v4306 = vld [vmem:[#allocation8 + $0x498] sm:$0xff]
    %v4307 = vld [vmem:[#allocation8 + $0x4a0] sm:$0xff]
    %v4308 = vld [vmem:[#allocation8 + $0x4a8] sm:$0xff]
    %v4309 = vld [vmem:[#allocation8 + $0x4b0] sm:$0xff]
    %v4310 = vld [vmem:[#allocation8 + $0x4b8] sm:$0xff]
    %v4311 = vld [vmem:[#allocation8 + $0x4c0] sm:$0xff]
    %v4312 = vld [vmem:[#allocation8 + $0x4c8] sm:$0xff]
    %v4313 = vld [vmem:[#allocation8 + $0x4d0] sm:$0xff]
    %v4314 = vld [vmem:[#allocation8 + $0x4d8] sm:$0xff]
    %v4315 = vld [vmem:[#allocation8 + $0x4e0] sm:$0xff]
    %v4316 = vld [vmem:[#allocation8 + $0x4e8] sm:$0xff]
    %v4317 = vld [vmem:[#allocation8 + $0x4f0] sm:$0xff]
    %v4318 = vld [vmem:[#allocation8 + $0x4f8] sm:$0xff]
    %v4319 = vld [vmem:[#allocation8 + $0x500] sm:$0xff]
    %v4320 = vld [vmem:[#allocation8 + $0x508] sm:$0xff]
    %v4321 = vld [vmem:[#allocation8 + $0x510] sm:$0xff]
    %v4322 = vld [vmem:[#allocation8 + $0x518] sm:$0xff]
    %v4323 = vld [vmem:[#allocation8 + $0x520] sm:$0xff]
    %v4324 = vld [vmem:[#allocation8 + $0x528] sm:$0xff]
    %v4325 = vld [vmem:[#allocation8 + $0x530] sm:$0xff]
    %v4326 = vld [vmem:[#allocation8 + $0x538] sm:$0xff]
    %v4327 = vld [vmem:[#allocation8 + $0x540] sm:$0xff]
    %v4328 = vld [vmem:[#allocation8 + $0x548] sm:$0xff]
    %v4329 = vld [vmem:[#allocation8 + $0x550] sm:$0xff]
    %v4330 = vld [vmem:[#allocation8 + $0x558] sm:$0xff]
    %v4331 = vld [vmem:[#allocation8 + $0x560] sm:$0xff]
    %v4332 = vld [vmem:[#allocation8 + $0x568] sm:$0xff]
    %v4333 = vld [vmem:[#allocation8 + $0x570] sm:$0xff]
    %v4334 = vld [vmem:[#allocation8 + $0x578] sm:$0xff]
    %v4335 = vld [vmem:[#allocation8 + $0x580] sm:$0xff]
    %v4336 = vld [vmem:[#allocation8 + $0x588] sm:$0xff]
    %v4337 = vld [vmem:[#allocation8 + $0x590] sm:$0xff]
    %v4338 = vld [vmem:[#allocation8 + $0x598] sm:$0xff]
    %v4339 = vld [vmem:[#allocation8 + $0x5a0] sm:$0xff]
    %v4340 = vld [vmem:[#allocation8 + $0x5a8] sm:$0xff]
    %v4341 = vld [vmem:[#allocation8 + $0x5b0] sm:$0xff]
    %v4342 = vld [vmem:[#allocation8 + $0x5b8] sm:$0xff]
    %v4343 = vld [vmem:[#allocation8 + $0x5c0] sm:$0xff]
    %v4344 = vld [vmem:[#allocation8 + $0x5c8] sm:$0xff]
    %v4345 = vld [vmem:[#allocation8 + $0x5d0] sm:$0xff]
    %v4346 = vld [vmem:[#allocation8 + $0x5d8] sm:$0xff]
    %v4347 = vld [vmem:[#allocation8 + $0x5e0] sm:$0xff]
    %v4348 = vld [vmem:[#allocation8 + $0x5e8] sm:$0xff]
    %v4349 = vld [vmem:[#allocation8 + $0x5f0] sm:$0xff]
    %v4350 = vld [vmem:[#allocation8 + $0x5f8] sm:$0xff]
    %v4351 = vld [vmem:[#allocation8 + $0x600] sm:$0xff]
    %v4352 = vld [vmem:[#allocation8 + $0x608] sm:$0xff]
    %v4353 = vld [vmem:[#allocation8 + $0x610] sm:$0xff]
    %v4354 = vld [vmem:[#allocation8 + $0x618] sm:$0xff]
    %v4355 = vld [vmem:[#allocation8 + $0x620] sm:$0xff]
    %v4356 = vld [vmem:[#allocation8 + $0x628] sm:$0xff]
    %v4357 = vld [vmem:[#allocation8 + $0x630] sm:$0xff]
    %v4358 = vld [vmem:[#allocation8 + $0x638] sm:$0xff]
    %v4359 = vld [vmem:[#allocation8 + $0x640] sm:$0xff]
    %v4360 = vld [vmem:[#allocation8 + $0x648] sm:$0xff]
    %v4361 = vld [vmem:[#allocation8 + $0x650] sm:$0xff]
    %v4362 = vld [vmem:[#allocation8 + $0x658] sm:$0xff]
    %v4363 = vld [vmem:[#allocation8 + $0x660] sm:$0xff]
    %v4364 = vld [vmem:[#allocation8 + $0x668] sm:$0xff]
    %v4365 = vld [vmem:[#allocation8 + $0x670] sm:$0xff]
    %v4366 = vld [vmem:[#allocation8 + $0x678] sm:$0xff]
    %v4367 = vld [vmem:[#allocation8 + $0x680] sm:$0xff]
    %v4368 = vld [vmem:[#allocation8 + $0x688] sm:$0xff]
    %v4369 = vld [vmem:[#allocation8 + $0x690] sm:$0xff]
    %v4370 = vld [vmem:[#allocation8 + $0x698] sm:$0xff]
    %v4371 = vld [vmem:[#allocation8 + $0x6a0] sm:$0xff]
    %v4372 = vld [vmem:[#allocation8 + $0x6a8] sm:$0xff]
    %v4373 = vld [vmem:[#allocation8 + $0x6b0] sm:$0xff]
    %v4374 = vld [vmem:[#allocation8 + $0x6b8] sm:$0xff]
    %v4375 = vld [vmem:[#allocation8 + $0x6c0] sm:$0xff]
    %v4376 = vld [vmem:[#allocation8 + $0x6c8] sm:$0xff]
    %v4377 = vld [vmem:[#allocation8 + $0x6d0] sm:$0xff]
    %v4378 = vld [vmem:[#allocation8 + $0x6d8] sm:$0xff]
    %v4379 = vld [vmem:[#allocation8 + $0x6e0] sm:$0xff]
    %v4380 = vld [vmem:[#allocation8 + $0x6e8] sm:$0xff]
    %v4381 = vld [vmem:[#allocation8 + $0x6f0] sm:$0xff]
    %v4382 = vld [vmem:[#allocation8 + $0x6f8] sm:$0xff]
    %v4383 = vld [vmem:[#allocation8 + $0x700] sm:$0xff]
    %v4384 = vld [vmem:[#allocation8 + $0x708] sm:$0xff]
    %v4385 = vld [vmem:[#allocation8 + $0x710] sm:$0xff]
    %v4386 = vld [vmem:[#allocation8 + $0x718] sm:$0xff]
    %v4387 = vld [vmem:[#allocation8 + $0x720] sm:$0xff]
    %v4388 = vld [vmem:[#allocation8 + $0x728] sm:$0xff]
    %v4389 = vld [vmem:[#allocation8 + $0x730] sm:$0xff]
    %v4390 = vld [vmem:[#allocation8 + $0x738] sm:$0xff]
    %v4391 = vld [vmem:[#allocation8 + $0x740] sm:$0xff]
    %v4392 = vld [vmem:[#allocation8 + $0x748] sm:$0xff]
    %v4393 = vld [vmem:[#allocation8 + $0x750] sm:$0xff]
    %v4394 = vld [vmem:[#allocation8 + $0x758] sm:$0xff]
    %v4395 = vld [vmem:[#allocation8 + $0x760] sm:$0xff]
    %v4396 = vld [vmem:[#allocation8 + $0x768] sm:$0xff]
    %v4397 = vld [vmem:[#allocation8 + $0x770] sm:$0xff]
    %v4398 = vld [vmem:[#allocation8 + $0x778] sm:$0xff]
    %v4399 = vld [vmem:[#allocation8 + $0x780] sm:$0xff]
    %v4400 = vld [vmem:[#allocation8 + $0x788] sm:$0xff]
    %v4401 = vld [vmem:[#allocation8 + $0x790] sm:$0xff]
    %v4402 = vld [vmem:[#allocation8 + $0x798] sm:$0xff]
    %v4403 = vld [vmem:[#allocation8 + $0x7a0] sm:$0xff]
    %v4404 = vld [vmem:[#allocation8 + $0x7a8] sm:$0xff]
    %v4405 = vld [vmem:[#allocation8 + $0x7b0] sm:$0xff]
    %v4406 = vld [vmem:[#allocation8 + $0x7b8] sm:$0xff]
    %v4407 = vld [vmem:[#allocation8 + $0x7c0] sm:$0xff]
    %v4408 = vld [vmem:[#allocation8 + $0x7c8] sm:$0xff]
    %v4409 = vld [vmem:[#allocation8 + $0x7d0] sm:$0xff]
    %v4410 = vld [vmem:[#allocation8 + $0x7d8] sm:$0xff]
    %v4411 = vld [vmem:[#allocation8 + $0x7e0] sm:$0xff]
    %v4412 = vld [vmem:[#allocation8 + $0x7e8] sm:$0xff]
    %v4413 = vld [vmem:[#allocation8 + $0x7f0] sm:$0xff]
    %v4414 = vld [vmem:[#allocation8 + $0x7f8] sm:$0xff]
    %v4415 = vld [vmem:[#allocation8 + $0x800] sm:$0xff]
    %v4416 = vld [vmem:[#allocation8 + $0x808] sm:$0xff]
    %v4417 = vld [vmem:[#allocation8 + $0x810] sm:$0xff]
    %v4418 = vld [vmem:[#allocation8 + $0x818] sm:$0xff]
    %v4419 = vld [vmem:[#allocation8 + $0x820] sm:$0xff]
    %v4420 = vld [vmem:[#allocation8 + $0x828] sm:$0xff]
    %v4421 = vld [vmem:[#allocation8 + $0x830] sm:$0xff]
    %v4422 = vld [vmem:[#allocation8 + $0x838] sm:$0xff]
    %v4423 = vld [vmem:[#allocation8 + $0x840] sm:$0xff]
    %v4424 = vld [vmem:[#allocation8 + $0x848] sm:$0xff]
    %v4425 = vld [vmem:[#allocation8 + $0x850] sm:$0xff]
    %v4426 = vld [vmem:[#allocation8 + $0x858] sm:$0xff]
    %v4427 = vld [vmem:[#allocation8 + $0x860] sm:$0xff]
    %v4428 = vld [vmem:[#allocation8 + $0x868] sm:$0xff]
    %v4429 = vld [vmem:[#allocation8 + $0x870] sm:$0xff]
    %v4430 = vld [vmem:[#allocation8 + $0x878] sm:$0xff]
    %v4431 = vld [vmem:[#allocation8 + $0x880] sm:$0xff]
    %v4432 = vld [vmem:[#allocation8 + $0x888] sm:$0xff]
    %v4433 = vld [vmem:[#allocation8 + $0x890] sm:$0xff]
    %v4434 = vld [vmem:[#allocation8 + $0x898] sm:$0xff]
    %v4435 = vld [vmem:[#allocation8 + $0x8a0] sm:$0xff]
    %v4436 = vld [vmem:[#allocation8 + $0x8a8] sm:$0xff]
    %v4437 = vld [vmem:[#allocation8 + $0x8b0] sm:$0xff]
    %v4438 = vld [vmem:[#allocation8 + $0x8b8] sm:$0xff]
    %v4439 = vld [vmem:[#allocation8 + $0x8c0] sm:$0xff]
    %v4440 = vld [vmem:[#allocation8 + $0x8c8] sm:$0xff]
    %v4441 = vld [vmem:[#allocation8 + $0x8d0] sm:$0xff]
    %v4442 = vld [vmem:[#allocation8 + $0x8d8] sm:$0xff]
    %v4443 = vld [vmem:[#allocation8 + $0x8e0] sm:$0xff]
    %v4444 = vld [vmem:[#allocation8 + $0x8e8] sm:$0xff]
    %v4445 = vld [vmem:[#allocation8 + $0x8f0] sm:$0xff]
    %v4446 = vld [vmem:[#allocation8 + $0x8f8] sm:$0xff]
    %v4447 = vld [vmem:[#allocation8 + $0x900] sm:$0xff]
    %v4448 = vld [vmem:[#allocation8 + $0x908] sm:$0xff]
    %v4449 = vld [vmem:[#allocation8 + $0x910] sm:$0xff]
    %v4450 = vld [vmem:[#allocation8 + $0x918] sm:$0xff]
    %v4451 = vld [vmem:[#allocation8 + $0x920] sm:$0xff]
    %v4452 = vld [vmem:[#allocation8 + $0x928] sm:$0xff]
    %v4453 = vld [vmem:[#allocation8 + $0x930] sm:$0xff]
    %v4454 = vld [vmem:[#allocation8 + $0x938] sm:$0xff]
    %v4455 = vld [vmem:[#allocation8 + $0x940] sm:$0xff]
    %v4456 = vld [vmem:[#allocation8 + $0x948] sm:$0xff]
    %v4457 = vld [vmem:[#allocation8 + $0x950] sm:$0xff]
    %v4458 = vld [vmem:[#allocation8 + $0x958] sm:$0xff]
    %v4459 = vld [vmem:[#allocation8 + $0x960] sm:$0xff]
    %v4460 = vld [vmem:[#allocation8 + $0x968] sm:$0xff]
    %v4461 = vld [vmem:[#allocation8 + $0x970] sm:$0xff]
    %v4462 = vld [vmem:[#allocation8 + $0x978] sm:$0xff]
    %v4463 = vld [vmem:[#allocation8 + $0x980] sm:$0xff]
    %v4464 = vld [vmem:[#allocation8 + $0x988] sm:$0xff]
    %v4465 = vld [vmem:[#allocation8 + $0x990] sm:$0xff]
    %v4466 = vld [vmem:[#allocation8 + $0x998] sm:$0xff]
    %v4467 = vld [vmem:[#allocation8 + $0x9a0] sm:$0xff]
    %v4468 = vld [vmem:[#allocation8 + $0x9a8] sm:$0xff]
    %v4469 = vld [vmem:[#allocation8 + $0x9b0] sm:$0xff]
    %v4470 = vld [vmem:[#allocation8 + $0x9b8] sm:$0xff]
    %v4471 = vld [vmem:[#allocation8 + $0x9c0] sm:$0xff]
    %v4472 = vld [vmem:[#allocation8 + $0x9c8] sm:$0xff]
    %v4473 = vld [vmem:[#allocation8 + $0x9d0] sm:$0xff]
    %v4474 = vld [vmem:[#allocation8 + $0x9d8] sm:$0xff]
    %v4475 = vld [vmem:[#allocation8 + $0x9e0] sm:$0xff]
    %v4476 = vld [vmem:[#allocation8 + $0x9e8] sm:$0xff]
    %v4477 = vld [vmem:[#allocation8 + $0x9f0] sm:$0xff]
    %v4478 = vld [vmem:[#allocation8 + $0x9f8] sm:$0xff]
    %v4479 = vld [vmem:[#allocation8 + $0xa00] sm:$0xff]
    %v4480 = vld [vmem:[#allocation8 + $0xa08] sm:$0xff]
    %v4481 = vld [vmem:[#allocation8 + $0xa10] sm:$0xff]
    %v4482 = vld [vmem:[#allocation8 + $0xa18] sm:$0xff]
    %v4483 = vld [vmem:[#allocation8 + $0xa20] sm:$0xff]
    %v4484 = vld [vmem:[#allocation8 + $0xa28] sm:$0xff]
    %v4485 = vld [vmem:[#allocation8 + $0xa30] sm:$0xff]
    %v4486 = vld [vmem:[#allocation8 + $0xa38] sm:$0xff]
    %v4487 = vld [vmem:[#allocation8 + $0xa40] sm:$0xff]
    %v4488 = vld [vmem:[#allocation8 + $0xa48] sm:$0xff]
    %v4489 = vld [vmem:[#allocation8 + $0xa50] sm:$0xff]
    %v4490 = vld [vmem:[#allocation8 + $0xa58] sm:$0xff]
    %v4491 = vld [vmem:[#allocation8 + $0xa60] sm:$0xff]
    %v4492 = vld [vmem:[#allocation8 + $0xa68] sm:$0xff]
    %v4493 = vld [vmem:[#allocation8 + $0xa70] sm:$0xff]
    %v4494 = vld [vmem:[#allocation8 + $0xa78] sm:$0xff]
    %v4495 = vld [vmem:[#allocation8 + $0xa80] sm:$0xff]
    %v4496 = vld [vmem:[#allocation8 + $0xa88] sm:$0xff]
    %v4497 = vld [vmem:[#allocation8 + $0xa90] sm:$0xff]
    %v4498 = vld [vmem:[#allocation8 + $0xa98] sm:$0xff]
    %v4499 = vld [vmem:[#allocation8 + $0xaa0] sm:$0xff]
    %v4500 = vld [vmem:[#allocation8 + $0xaa8] sm:$0xff]
    %v4501 = vld [vmem:[#allocation8 + $0xab0] sm:$0xff]
    %v4502 = vld [vmem:[#allocation8 + $0xab8] sm:$0xff]
    %v4503 = vld [vmem:[#allocation8 + $0xac0] sm:$0xff]
    %v4504 = vld [vmem:[#allocation8 + $0xac8] sm:$0xff]
    %v4505 = vld [vmem:[#allocation8 + $0xad0] sm:$0xff]
    %v4506 = vld [vmem:[#allocation8 + $0xad8] sm:$0xff]
    %v4507 = vld [vmem:[#allocation8 + $0xae0] sm:$0xff]
    %v4508 = vld [vmem:[#allocation8 + $0xae8] sm:$0xff]
    %v4509 = vld [vmem:[#allocation8 + $0xaf0] sm:$0xff]
    %v4510 = vld [vmem:[#allocation8 + $0xaf8] sm:$0xff]
    %v4511 = vld [vmem:[#allocation8 + $0xb00] sm:$0xff]
    %v4512 = vld [vmem:[#allocation8 + $0xb08] sm:$0xff]
    %v4513 = vld [vmem:[#allocation8 + $0xb10] sm:$0xff]
    %v4514 = vld [vmem:[#allocation8 + $0xb18] sm:$0xff]
    %v4515 = vld [vmem:[#allocation8 + $0xb20] sm:$0xff]
    %v4516 = vld [vmem:[#allocation8 + $0xb28] sm:$0xff]
    %v4517 = vld [vmem:[#allocation8 + $0xb30] sm:$0xff]
    %v4518 = vld [vmem:[#allocation8 + $0xb38] sm:$0xff]
    %v4519 = vld [vmem:[#allocation8 + $0xb40] sm:$0xff]
    %v4520 = vld [vmem:[#allocation8 + $0xb48] sm:$0xff]
    %v4521 = vld [vmem:[#allocation8 + $0xb50] sm:$0xff]
    %v4522 = vld [vmem:[#allocation8 + $0xb58] sm:$0xff]
    %v4523 = vld [vmem:[#allocation8 + $0xb60] sm:$0xff]
    %v4524 = vld [vmem:[#allocation8 + $0xb68] sm:$0xff]
    %v4525 = vld [vmem:[#allocation8 + $0xb70] sm:$0xff]
    %v4526 = vld [vmem:[#allocation8 + $0xb78] sm:$0xff]
    %v4527 = vld [vmem:[#allocation8 + $0xb80] sm:$0xff]
    %v4528 = vld [vmem:[#allocation8 + $0xb88] sm:$0xff]
    %v4529 = vld [vmem:[#allocation8 + $0xb90] sm:$0xff]
    %v4530 = vld [vmem:[#allocation8 + $0xb98] sm:$0xff]
    %v4531 = vld [vmem:[#allocation8 + $0xba0] sm:$0xff]
    %v4532 = vld [vmem:[#allocation8 + $0xba8] sm:$0xff]
    %v4533 = vld [vmem:[#allocation8 + $0xbb0] sm:$0xff]
    %v4534 = vld [vmem:[#allocation8 + $0xbb8] sm:$0xff]
    %v4535 = vld [vmem:[#allocation8 + $0xbc0] sm:$0xff]
    %v4536 = vld [vmem:[#allocation8 + $0xbc8] sm:$0xff]
    %v4537 = vld [vmem:[#allocation8 + $0xbd0] sm:$0xff]
    %v4538 = vld [vmem:[#allocation8 + $0xbd8] sm:$0xff]
    %v4539 = vld [vmem:[#allocation8 + $0xbe0] sm:$0xff]
    %v4540 = vld [vmem:[#allocation8 + $0xbe8] sm:$0xff]
    %v4541 = vld [vmem:[#allocation8 + $0xbf0] sm:$0xff]
    %v4542 = vld [vmem:[#allocation8 + $0xbf8] sm:$0xff]
    %v4543 = vld [vmem:[#allocation8 + $0xc00] sm:$0xff]
    %v4544 = vld [vmem:[#allocation8 + $0xc08] sm:$0xff]
    %v4545 = vld [vmem:[#allocation8 + $0xc10] sm:$0xff]
    %v4546 = vld [vmem:[#allocation8 + $0xc18] sm:$0xff]
    %v4547 = vld [vmem:[#allocation8 + $0xc20] sm:$0xff]
    %v4548 = vld [vmem:[#allocation8 + $0xc28] sm:$0xff]
    %v4549 = vld [vmem:[#allocation8 + $0xc30] sm:$0xff]
    %v4550 = vld [vmem:[#allocation8 + $0xc38] sm:$0xff]
    %v4551 = vld [vmem:[#allocation8 + $0xc40] sm:$0xff]
    %v4552 = vld [vmem:[#allocation8 + $0xc48] sm:$0xff]
    %v4553 = vld [vmem:[#allocation8 + $0xc50] sm:$0xff]
    %v4554 = vld [vmem:[#allocation8 + $0xc58] sm:$0xff]
    %v4555 = vld [vmem:[#allocation8 + $0xc60] sm:$0xff]
    %v4556 = vld [vmem:[#allocation8 + $0xc68] sm:$0xff]
    %v4557 = vld [vmem:[#allocation8 + $0xc70] sm:$0xff]
    %v4558 = vld [vmem:[#allocation8 + $0xc78] sm:$0xff]
    %v4559 = vld [vmem:[#allocation8 + $0xc80] sm:$0xff]
    %v4560 = vld [vmem:[#allocation8 + $0xc88] sm:$0xff]
    %v4561 = vld [vmem:[#allocation8 + $0xc90] sm:$0xff]
    %v4562 = vld [vmem:[#allocation8 + $0xc98] sm:$0xff]
    %v4563 = vld [vmem:[#allocation8 + $0xca0] sm:$0xff]
    %v4564 = vld [vmem:[#allocation8 + $0xca8] sm:$0xff]
    %v4565 = vld [vmem:[#allocation8 + $0xcb0] sm:$0xff]
    %v4566 = vld [vmem:[#allocation8 + $0xcb8] sm:$0xff]
    %v4567 = vld [vmem:[#allocation8 + $0xcc0] sm:$0xff]
    %v4568 = vld [vmem:[#allocation8 + $0xcc8] sm:$0xff]
    %v4569 = vld [vmem:[#allocation8 + $0xcd0] sm:$0xff]
    %v4570 = vld [vmem:[#allocation8 + $0xcd8] sm:$0xff]
    %v4571 = vld [vmem:[#allocation8 + $0xce0] sm:$0xff]
    %v4572 = vld [vmem:[#allocation8 + $0xce8] sm:$0xff]
    %v4573 = vld [vmem:[#allocation8 + $0xcf0] sm:$0xff]
    %v4574 = vld [vmem:[#allocation8 + $0xcf8] sm:$0xff]
    %v4575 = vld [vmem:[#allocation8 + $0xd00] sm:$0xff]
    %v4576 = vld [vmem:[#allocation8 + $0xd08] sm:$0xff]
    %v4577 = vld [vmem:[#allocation8 + $0xd10] sm:$0xff]
    %v4578 = vld [vmem:[#allocation8 + $0xd18] sm:$0xff]
    %v4579 = vld [vmem:[#allocation8 + $0xd20] sm:$0xff]
    %v4580 = vld [vmem:[#allocation8 + $0xd28] sm:$0xff]
    %v4581 = vld [vmem:[#allocation8 + $0xd30] sm:$0xff]
    %v4582 = vld [vmem:[#allocation8 + $0xd38] sm:$0xff]
    %v4583 = vld [vmem:[#allocation8 + $0xd40] sm:$0xff]
    %v4584 = vld [vmem:[#allocation8 + $0xd48] sm:$0xff]
    %v4585 = vld [vmem:[#allocation8 + $0xd50] sm:$0xff]
    %v4586 = vld [vmem:[#allocation8 + $0xd58] sm:$0xff]
    %v4587 = vld [vmem:[#allocation8 + $0xd60] sm:$0xff]
    %v4588 = vld [vmem:[#allocation8 + $0xd68] sm:$0xff]
    %v4589 = vld [vmem:[#allocation8 + $0xd70] sm:$0xff]
    %v4590 = vld [vmem:[#allocation8 + $0xd78] sm:$0xff]
    %v4591 = vld [vmem:[#allocation8 + $0xd80] sm:$0xff]
    %v4592 = vld [vmem:[#allocation8 + $0xd88] sm:$0xff]
    %v4593 = vld [vmem:[#allocation8 + $0xd90] sm:$0xff]
    %v4594 = vld [vmem:[#allocation8 + $0xd98] sm:$0xff]
    %v4595 = vld [vmem:[#allocation8 + $0xda0] sm:$0xff]
    %v4596 = vld [vmem:[#allocation8 + $0xda8] sm:$0xff]
    %v4597 = vld [vmem:[#allocation8 + $0xdb0] sm:$0xff]
    %v4598 = vld [vmem:[#allocation8 + $0xdb8] sm:$0xff]
    %v4599 = vld [vmem:[#allocation8 + $0xdc0] sm:$0xff]
    %v4600 = vld [vmem:[#allocation8 + $0xdc8] sm:$0xff]
    %v4601 = vld [vmem:[#allocation8 + $0xdd0] sm:$0xff]
    %v4602 = vld [vmem:[#allocation8 + $0xdd8] sm:$0xff]
    %v4603 = vld [vmem:[#allocation8 + $0xde0] sm:$0xff]
    %v4604 = vld [vmem:[#allocation8 + $0xde8] sm:$0xff]
    %v4605 = vld [vmem:[#allocation8 + $0xdf0] sm:$0xff]
    %v4606 = vld [vmem:[#allocation8 + $0xdf8] sm:$0xff]
    %v4607 = vld [vmem:[#allocation8 + $0xe00] sm:$0xff]
    %v4608 = vld [vmem:[#allocation8 + $0xe08] sm:$0xff]
    %v4609 = vld [vmem:[#allocation8 + $0xe10] sm:$0xff]
    %v4610 = vld [vmem:[#allocation8 + $0xe18] sm:$0xff]
    %v4611 = vld [vmem:[#allocation8 + $0xe20] sm:$0xff]
    %v4612 = vld [vmem:[#allocation8 + $0xe28] sm:$0xff]
    %v4613 = vld [vmem:[#allocation8 + $0xe30] sm:$0xff]
    %v4614 = vld [vmem:[#allocation8 + $0xe38] sm:$0xff]
    %v4615 = vld [vmem:[#allocation8 + $0xe40] sm:$0xff]
    %v4616 = vld [vmem:[#allocation8 + $0xe48] sm:$0xff]
    %v4617 = vld [vmem:[#allocation8 + $0xe50] sm:$0xff]
    %v4618 = vld [vmem:[#allocation8 + $0xe58] sm:$0xff]
    %v4619 = vld [vmem:[#allocation8 + $0xe60] sm:$0xff]
    %v4620 = vld [vmem:[#allocation8 + $0xe68] sm:$0xff]
    %v4621 = vld [vmem:[#allocation8 + $0xe70] sm:$0xff]
    %v4622 = vld [vmem:[#allocation8 + $0xe78] sm:$0xff]
    %v4623 = vld [vmem:[#allocation8 + $0xe80] sm:$0xff]
    %v4624 = vld [vmem:[#allocation8 + $0xe88] sm:$0xff]
    %v4625 = vld [vmem:[#allocation8 + $0xe90] sm:$0xff]
    %v4626 = vld [vmem:[#allocation8 + $0xe98] sm:$0xff]
    %v4627 = vld [vmem:[#allocation8 + $0xea0] sm:$0xff]
    %v4628 = vld [vmem:[#allocation8 + $0xea8] sm:$0xff]
    %v4629 = vld [vmem:[#allocation8 + $0xeb0] sm:$0xff]
    %v4630 = vld [vmem:[#allocation8 + $0xeb8] sm:$0xff]
    %v4631 = vld [vmem:[#allocation8 + $0xec0] sm:$0xff]
    %v4632 = vld [vmem:[#allocation8 + $0xec8] sm:$0xff]
    %v4633 = vld [vmem:[#allocation8 + $0xed0] sm:$0xff]
    %v4634 = vld [vmem:[#allocation8 + $0xed8] sm:$0xff]
    %v4635 = vld [vmem:[#allocation8 + $0xee0] sm:$0xff]
    %v4636 = vld [vmem:[#allocation8 + $0xee8] sm:$0xff]
    %v4637 = vld [vmem:[#allocation8 + $0xef0] sm:$0xff]
    %v4638 = vld [vmem:[#allocation8 + $0xef8] sm:$0xff]
    %v4639 = vld [vmem:[#allocation8 + $0xf00] sm:$0xff]
    %v4640 = vld [vmem:[#allocation8 + $0xf08] sm:$0xff]
    %v4641 = vld [vmem:[#allocation8 + $0xf10] sm:$0xff]
    %v4642 = vld [vmem:[#allocation8 + $0xf18] sm:$0xff]
    %v4643 = vld [vmem:[#allocation8 + $0xf20] sm:$0xff]
    %v4644 = vld [vmem:[#allocation8 + $0xf28] sm:$0xff]
    %v4645 = vld [vmem:[#allocation8 + $0xf30] sm:$0xff]
    %v4646 = vld [vmem:[#allocation8 + $0xf38] sm:$0xff]
    %v4647 = vld [vmem:[#allocation8 + $0xf40] sm:$0xff]
    %v4648 = vld [vmem:[#allocation8 + $0xf48] sm:$0xff]
    %v4649 = vld [vmem:[#allocation8 + $0xf50] sm:$0xff]
    %v4650 = vld [vmem:[#allocation8 + $0xf58] sm:$0xff]
    %v4651 = vld [vmem:[#allocation8 + $0xf60] sm:$0xff]
    %v4652 = vld [vmem:[#allocation8 + $0xf68] sm:$0xff]
    %v4653 = vld [vmem:[#allocation8 + $0xf70] sm:$0xff]
    %v4654 = vld [vmem:[#allocation8 + $0xf78] sm:$0xff]
    %v4655 = vld [vmem:[#allocation8 + $0xf80] sm:$0xff]
    %v4656 = vld [vmem:[#allocation8 + $0xf88] sm:$0xff]
    %v4657 = vld [vmem:[#allocation8 + $0xf90] sm:$0xff]
    %v4658 = vld [vmem:[#allocation8 + $0xf98] sm:$0xff]
    %v4659 = vld [vmem:[#allocation8 + $0xfa0] sm:$0xff]
    %v4660 = vld [vmem:[#allocation8 + $0xfa8] sm:$0xff]
    %v4661 = vld [vmem:[#allocation8 + $0xfb0] sm:$0xff]
    %v4662 = vld [vmem:[#allocation8 + $0xfb8] sm:$0xff]
    %v4663 = vld [vmem:[#allocation8 + $0xfc0] sm:$0xff]
    %v4664 = vld [vmem:[#allocation8 + $0xfc8] sm:$0xff]
    %v4665 = vld [vmem:[#allocation8 + $0xfd0] sm:$0xff]
    %v4666 = vld [vmem:[#allocation8 + $0xfd8] sm:$0xff]
    %v4667 = vld [vmem:[#allocation8 + $0xfe0] sm:$0xff]
    %v4668 = vld [vmem:[#allocation8 + $0xfe8] sm:$0xff]
    %v4669 = vld [vmem:[#allocation8 + $0xff0] sm:$0xff]
    %v4670 = vld [vmem:[#allocation8 + $0xff8] sm:$0xff]
    %v4671 = vld [vmem:[#allocation10] sm:$0xf]
    %v4673 = vperm.slane %v4671, 0
    %v4674 = vperm.slane %v4671, 1
    %v4675 = vperm.slane %v4671, 2
    %v4676 = vperm.slane %v4671, 3
    %v5193 = vunpack.c.l.b16 %v4159
    %v5194 = vunpack.c.h.b16 %v4159
    %v5195 = vunpack.c.l.b16 %v4160
    %v5196 = vunpack.c.h.b16 %v4160
    %v5197 = vunpack.c.l.b16 %v4161
    %v5198 = vunpack.c.h.b16 %v4161
    %v5199 = vunpack.c.l.b16 %v4162
    %v5200 = vunpack.c.h.b16 %v4162
    %v5201 = vunpack.c.l.b16 %v4163
    %v5202 = vunpack.c.h.b16 %v4163
    %v5203 = vunpack.c.l.b16 %v4164
    %v5204 = vunpack.c.h.b16 %v4164
    %v5205 = vunpack.c.l.b16 %v4165
    %v5206 = vunpack.c.h.b16 %v4165
    %v5207 = vunpack.c.l.b16 %v4166
    %v5208 = vunpack.c.h.b16 %v4166
    %v5209 = vunpack.c.l.b16 %v4167
    %v5210 = vunpack.c.h.b16 %v4167
    %v5211 = vunpack.c.l.b16 %v4168
    %v5212 = vunpack.c.h.b16 %v4168
    %v5213 = vunpack.c.l.b16 %v4169
    %v5214 = vunpack.c.h.b16 %v4169
    %v5215 = vunpack.c.l.b16 %v4170
    %v5216 = vunpack.c.h.b16 %v4170
    %v5217 = vunpack.c.l.b16 %v4171
    %v5218 = vunpack.c.h.b16 %v4171
    %v5219 = vunpack.c.l.b16 %v4172
    %v5220 = vunpack.c.h.b16 %v4172
    %v5221 = vunpack.c.l.b16 %v4173
    %v5222 = vunpack.c.h.b16 %v4173
    %v5223 = vunpack.c.l.b16 %v4174
    %v5224 = vunpack.c.h.b16 %v4174
    %v5225 = vunpack.c.l.b16 %v4175
    %v5226 = vunpack.c.h.b16 %v4175
    %v5227 = vunpack.c.l.b16 %v4176
    %v5228 = vunpack.c.h.b16 %v4176
    %v5229 = vunpack.c.l.b16 %v4177
    %v5230 = vunpack.c.h.b16 %v4177
    %v5231 = vunpack.c.l.b16 %v4178
    %v5232 = vunpack.c.h.b16 %v4178
    %v5233 = vunpack.c.l.b16 %v4179
    %v5234 = vunpack.c.h.b16 %v4179
    %v5235 = vunpack.c.l.b16 %v4180
    %v5236 = vunpack.c.h.b16 %v4180
    %v5237 = vunpack.c.l.b16 %v4181
    %v5238 = vunpack.c.h.b16 %v4181
    %v5239 = vunpack.c.l.b16 %v4182
    %v5240 = vunpack.c.h.b16 %v4182
    %v5241 = vunpack.c.l.b16 %v4183
    %v5242 = vunpack.c.h.b16 %v4183
    %v5243 = vunpack.c.l.b16 %v4184
    %v5244 = vunpack.c.h.b16 %v4184
    %v5245 = vunpack.c.l.b16 %v4185
    %v5246 = vunpack.c.h.b16 %v4185
    %v5247 = vunpack.c.l.b16 %v4186
    %v5248 = vunpack.c.h.b16 %v4186
    %v5249 = vunpack.c.l.b16 %v4187
    %v5250 = vunpack.c.h.b16 %v4187
    %v5251 = vunpack.c.l.b16 %v4188
    %v5252 = vunpack.c.h.b16 %v4188
    %v5253 = vunpack.c.l.b16 %v4189
    %v5254 = vunpack.c.h.b16 %v4189
    %v5255 = vunpack.c.l.b16 %v4190
    %v5256 = vunpack.c.h.b16 %v4190
    %v5257 = vunpack.c.l.b16 %v4191
    %v5258 = vunpack.c.h.b16 %v4191
    %v5259 = vunpack.c.l.b16 %v4192
    %v5260 = vunpack.c.h.b16 %v4192
    %v5261 = vunpack.c.l.b16 %v4193
    %v5262 = vunpack.c.h.b16 %v4193
    %v5263 = vunpack.c.l.b16 %v4194
    %v5264 = vunpack.c.h.b16 %v4194
    %v5265 = vunpack.c.l.b16 %v4195
    %v5266 = vunpack.c.h.b16 %v4195
    %v5267 = vunpack.c.l.b16 %v4196
    %v5268 = vunpack.c.h.b16 %v4196
    %v5269 = vunpack.c.l.b16 %v4197
    %v5270 = vunpack.c.h.b16 %v4197
    %v5271 = vunpack.c.l.b16 %v4198
    %v5272 = vunpack.c.h.b16 %v4198
    %v5273 = vunpack.c.l.b16 %v4199
    %v5274 = vunpack.c.h.b16 %v4199
    %v5275 = vunpack.c.l.b16 %v4200
    %v5276 = vunpack.c.h.b16 %v4200
    %v5277 = vunpack.c.l.b16 %v4201
    %v5278 = vunpack.c.h.b16 %v4201
    %v5279 = vunpack.c.l.b16 %v4202
    %v5280 = vunpack.c.h.b16 %v4202
    %v5281 = vunpack.c.l.b16 %v4203
    %v5282 = vunpack.c.h.b16 %v4203
    %v5283 = vunpack.c.l.b16 %v4204
    %v5284 = vunpack.c.h.b16 %v4204
    %v5285 = vunpack.c.l.b16 %v4205
    %v5286 = vunpack.c.h.b16 %v4205
    %v5287 = vunpack.c.l.b16 %v4206
    %v5288 = vunpack.c.h.b16 %v4206
    %v5289 = vunpack.c.l.b16 %v4207
    %v5290 = vunpack.c.h.b16 %v4207
    %v5291 = vunpack.c.l.b16 %v4208
    %v5292 = vunpack.c.h.b16 %v4208
    %v5293 = vunpack.c.l.b16 %v4209
    %v5294 = vunpack.c.h.b16 %v4209
    %v5295 = vunpack.c.l.b16 %v4210
    %v5296 = vunpack.c.h.b16 %v4210
    %v5297 = vunpack.c.l.b16 %v4211
    %v5298 = vunpack.c.h.b16 %v4211
    %v5299 = vunpack.c.l.b16 %v4212
    %v5300 = vunpack.c.h.b16 %v4212
    %v5301 = vunpack.c.l.b16 %v4213
    %v5302 = vunpack.c.h.b16 %v4213
    %v5303 = vunpack.c.l.b16 %v4214
    %v5304 = vunpack.c.h.b16 %v4214
    %v5305 = vunpack.c.l.b16 %v4215
    %v5306 = vunpack.c.h.b16 %v4215
    %v5307 = vunpack.c.l.b16 %v4216
    %v5308 = vunpack.c.h.b16 %v4216
    %v5309 = vunpack.c.l.b16 %v4217
    %v5310 = vunpack.c.h.b16 %v4217
    %v5311 = vunpack.c.l.b16 %v4218
    %v5312 = vunpack.c.h.b16 %v4218
    %v5313 = vunpack.c.l.b16 %v4219
    %v5314 = vunpack.c.h.b16 %v4219
    %v5315 = vunpack.c.l.b16 %v4220
    %v5316 = vunpack.c.h.b16 %v4220
    %v5317 = vunpack.c.l.b16 %v4221
    %v5318 = vunpack.c.h.b16 %v4221
    %v5319 = vunpack.c.l.b16 %v4222
    %v5320 = vunpack.c.h.b16 %v4222
    %v5321 = vunpack.c.l.b16 %v4223
    %v5322 = vunpack.c.h.b16 %v4223
    %v5323 = vunpack.c.l.b16 %v4224
    %v5324 = vunpack.c.h.b16 %v4224
    %v5325 = vunpack.c.l.b16 %v4225
    %v5326 = vunpack.c.h.b16 %v4225
    %v5327 = vunpack.c.l.b16 %v4226
    %v5328 = vunpack.c.h.b16 %v4226
    %v5329 = vunpack.c.l.b16 %v4227
    %v5330 = vunpack.c.h.b16 %v4227
    %v5331 = vunpack.c.l.b16 %v4228
    %v5332 = vunpack.c.h.b16 %v4228
    %v5333 = vunpack.c.l.b16 %v4229
    %v5334 = vunpack.c.h.b16 %v4229
    %v5335 = vunpack.c.l.b16 %v4230
    %v5336 = vunpack.c.h.b16 %v4230
    %v5337 = vunpack.c.l.b16 %v4231
    %v5338 = vunpack.c.h.b16 %v4231
    %v5339 = vunpack.c.l.b16 %v4232
    %v5340 = vunpack.c.h.b16 %v4232
    %v5341 = vunpack.c.l.b16 %v4233
    %v5342 = vunpack.c.h.b16 %v4233
    %v5343 = vunpack.c.l.b16 %v4234
    %v5344 = vunpack.c.h.b16 %v4234
    %v5345 = vunpack.c.l.b16 %v4235
    %v5346 = vunpack.c.h.b16 %v4235
    %v5347 = vunpack.c.l.b16 %v4236
    %v5348 = vunpack.c.h.b16 %v4236
    %v5349 = vunpack.c.l.b16 %v4237
    %v5350 = vunpack.c.h.b16 %v4237
    %v5351 = vunpack.c.l.b16 %v4238
    %v5352 = vunpack.c.h.b16 %v4238
    %v5353 = vunpack.c.l.b16 %v4239
    %v5354 = vunpack.c.h.b16 %v4239
    %v5355 = vunpack.c.l.b16 %v4240
    %v5356 = vunpack.c.h.b16 %v4240
    %v5357 = vunpack.c.l.b16 %v4241
    %v5358 = vunpack.c.h.b16 %v4241
    %v5359 = vunpack.c.l.b16 %v4242
    %v5360 = vunpack.c.h.b16 %v4242
    %v5361 = vunpack.c.l.b16 %v4243
    %v5362 = vunpack.c.h.b16 %v4243
    %v5363 = vunpack.c.l.b16 %v4244
    %v5364 = vunpack.c.h.b16 %v4244
    %v5365 = vunpack.c.l.b16 %v4245
    %v5366 = vunpack.c.h.b16 %v4245
    %v5367 = vunpack.c.l.b16 %v4246
    %v5368 = vunpack.c.h.b16 %v4246
    %v5369 = vunpack.c.l.b16 %v4247
    %v5370 = vunpack.c.h.b16 %v4247
    %v5371 = vunpack.c.l.b16 %v4248
    %v5372 = vunpack.c.h.b16 %v4248
    %v5373 = vunpack.c.l.b16 %v4249
    %v5374 = vunpack.c.h.b16 %v4249
    %v5375 = vunpack.c.l.b16 %v4250
    %v5376 = vunpack.c.h.b16 %v4250
    %v5377 = vunpack.c.l.b16 %v4251
    %v5378 = vunpack.c.h.b16 %v4251
    %v5379 = vunpack.c.l.b16 %v4252
    %v5380 = vunpack.c.h.b16 %v4252
    %v5381 = vunpack.c.l.b16 %v4253
    %v5382 = vunpack.c.h.b16 %v4253
    %v5383 = vunpack.c.l.b16 %v4254
    %v5384 = vunpack.c.h.b16 %v4254
    %v5385 = vunpack.c.l.b16 %v4255
    %v5386 = vunpack.c.h.b16 %v4255
    %v5387 = vunpack.c.l.b16 %v4256
    %v5388 = vunpack.c.h.b16 %v4256
    %v5389 = vunpack.c.l.b16 %v4257
    %v5390 = vunpack.c.h.b16 %v4257
    %v5391 = vunpack.c.l.b16 %v4258
    %v5392 = vunpack.c.h.b16 %v4258
    %v5393 = vunpack.c.l.b16 %v4259
    %v5394 = vunpack.c.h.b16 %v4259
    %v5395 = vunpack.c.l.b16 %v4260
    %v5396 = vunpack.c.h.b16 %v4260
    %v5397 = vunpack.c.l.b16 %v4261
    %v5398 = vunpack.c.h.b16 %v4261
    %v5399 = vunpack.c.l.b16 %v4262
    %v5400 = vunpack.c.h.b16 %v4262
    %v5401 = vunpack.c.l.b16 %v4263
    %v5402 = vunpack.c.h.b16 %v4263
    %v5403 = vunpack.c.l.b16 %v4264
    %v5404 = vunpack.c.h.b16 %v4264
    %v5405 = vunpack.c.l.b16 %v4265
    %v5406 = vunpack.c.h.b16 %v4265
    %v5407 = vunpack.c.l.b16 %v4266
    %v5408 = vunpack.c.h.b16 %v4266
    %v5409 = vunpack.c.l.b16 %v4267
    %v5410 = vunpack.c.h.b16 %v4267
    %v5411 = vunpack.c.l.b16 %v4268
    %v5412 = vunpack.c.h.b16 %v4268
    %v5413 = vunpack.c.l.b16 %v4269
    %v5414 = vunpack.c.h.b16 %v4269
    %v5415 = vunpack.c.l.b16 %v4270
    %v5416 = vunpack.c.h.b16 %v4270
    %v5417 = vunpack.c.l.b16 %v4271
    %v5418 = vunpack.c.h.b16 %v4271
    %v5419 = vunpack.c.l.b16 %v4272
    %v5420 = vunpack.c.h.b16 %v4272
    %v5421 = vunpack.c.l.b16 %v4273
    %v5422 = vunpack.c.h.b16 %v4273
    %v5423 = vunpack.c.l.b16 %v4274
    %v5424 = vunpack.c.h.b16 %v4274
    %v5425 = vunpack.c.l.b16 %v4275
    %v5426 = vunpack.c.h.b16 %v4275
    %v5427 = vunpack.c.l.b16 %v4276
    %v5428 = vunpack.c.h.b16 %v4276
    %v5429 = vunpack.c.l.b16 %v4277
    %v5430 = vunpack.c.h.b16 %v4277
    %v5431 = vunpack.c.l.b16 %v4278
    %v5432 = vunpack.c.h.b16 %v4278
    %v5433 = vunpack.c.l.b16 %v4279
    %v5434 = vunpack.c.h.b16 %v4279
    %v5435 = vunpack.c.l.b16 %v4280
    %v5436 = vunpack.c.h.b16 %v4280
    %v5437 = vunpack.c.l.b16 %v4281
    %v5438 = vunpack.c.h.b16 %v4281
    %v5439 = vunpack.c.l.b16 %v4282
    %v5440 = vunpack.c.h.b16 %v4282
    %v5441 = vunpack.c.l.b16 %v4283
    %v5442 = vunpack.c.h.b16 %v4283
    %v5443 = vunpack.c.l.b16 %v4284
    %v5444 = vunpack.c.h.b16 %v4284
    %v5445 = vunpack.c.l.b16 %v4285
    %v5446 = vunpack.c.h.b16 %v4285
    %v5447 = vunpack.c.l.b16 %v4286
    %v5448 = vunpack.c.h.b16 %v4286
    %v5449 = vunpack.c.l.b16 %v4287
    %v5450 = vunpack.c.h.b16 %v4287
    %v5451 = vunpack.c.l.b16 %v4288
    %v5452 = vunpack.c.h.b16 %v4288
    %v5453 = vunpack.c.l.b16 %v4289
    %v5454 = vunpack.c.h.b16 %v4289
    %v5455 = vunpack.c.l.b16 %v4290
    %v5456 = vunpack.c.h.b16 %v4290
    %v5457 = vunpack.c.l.b16 %v4291
    %v5458 = vunpack.c.h.b16 %v4291
    %v5459 = vunpack.c.l.b16 %v4292
    %v5460 = vunpack.c.h.b16 %v4292
    %v5461 = vunpack.c.l.b16 %v4293
    %v5462 = vunpack.c.h.b16 %v4293
    %v5463 = vunpack.c.l.b16 %v4294
    %v5464 = vunpack.c.h.b16 %v4294
    %v5465 = vunpack.c.l.b16 %v4295
    %v5466 = vunpack.c.h.b16 %v4295
    %v5467 = vunpack.c.l.b16 %v4296
    %v5468 = vunpack.c.h.b16 %v4296
    %v5469 = vunpack.c.l.b16 %v4297
    %v5470 = vunpack.c.h.b16 %v4297
    %v5471 = vunpack.c.l.b16 %v4298
    %v5472 = vunpack.c.h.b16 %v4298
    %v5473 = vunpack.c.l.b16 %v4299
    %v5474 = vunpack.c.h.b16 %v4299
    %v5475 = vunpack.c.l.b16 %v4300
    %v5476 = vunpack.c.h.b16 %v4300
    %v5477 = vunpack.c.l.b16 %v4301
    %v5478 = vunpack.c.h.b16 %v4301
    %v5479 = vunpack.c.l.b16 %v4302
    %v5480 = vunpack.c.h.b16 %v4302
    %v5481 = vunpack.c.l.b16 %v4303
    %v5482 = vunpack.c.h.b16 %v4303
    %v5483 = vunpack.c.l.b16 %v4304
    %v5484 = vunpack.c.h.b16 %v4304
    %v5485 = vunpack.c.l.b16 %v4305
    %v5486 = vunpack.c.h.b16 %v4305
    %v5487 = vunpack.c.l.b16 %v4306
    %v5488 = vunpack.c.h.b16 %v4306
    %v5489 = vunpack.c.l.b16 %v4307
    %v5490 = vunpack.c.h.b16 %v4307
    %v5491 = vunpack.c.l.b16 %v4308
    %v5492 = vunpack.c.h.b16 %v4308
    %v5493 = vunpack.c.l.b16 %v4309
    %v5494 = vunpack.c.h.b16 %v4309
    %v5495 = vunpack.c.l.b16 %v4310
    %v5496 = vunpack.c.h.b16 %v4310
    %v5497 = vunpack.c.l.b16 %v4311
    %v5498 = vunpack.c.h.b16 %v4311
    %v5499 = vunpack.c.l.b16 %v4312
    %v5500 = vunpack.c.h.b16 %v4312
    %v5501 = vunpack.c.l.b16 %v4313
    %v5502 = vunpack.c.h.b16 %v4313
    %v5503 = vunpack.c.l.b16 %v4314
    %v5504 = vunpack.c.h.b16 %v4314
    %v5505 = vunpack.c.l.b16 %v4315
    %v5506 = vunpack.c.h.b16 %v4315
    %v5507 = vunpack.c.l.b16 %v4316
    %v5508 = vunpack.c.h.b16 %v4316
    %v5509 = vunpack.c.l.b16 %v4317
    %v5510 = vunpack.c.h.b16 %v4317
    %v5511 = vunpack.c.l.b16 %v4318
    %v5512 = vunpack.c.h.b16 %v4318
    %v5513 = vunpack.c.l.b16 %v4319
    %v5514 = vunpack.c.h.b16 %v4319
    %v5515 = vunpack.c.l.b16 %v4320
    %v5516 = vunpack.c.h.b16 %v4320
    %v5517 = vunpack.c.l.b16 %v4321
    %v5518 = vunpack.c.h.b16 %v4321
    %v5519 = vunpack.c.l.b16 %v4322
    %v5520 = vunpack.c.h.b16 %v4322
    %v5521 = vunpack.c.l.b16 %v4323
    %v5522 = vunpack.c.h.b16 %v4323
    %v5523 = vunpack.c.l.b16 %v4324
    %v5524 = vunpack.c.h.b16 %v4324
    %v5525 = vunpack.c.l.b16 %v4325
    %v5526 = vunpack.c.h.b16 %v4325
    %v5527 = vunpack.c.l.b16 %v4326
    %v5528 = vunpack.c.h.b16 %v4326
    %v5529 = vunpack.c.l.b16 %v4327
    %v5530 = vunpack.c.h.b16 %v4327
    %v5531 = vunpack.c.l.b16 %v4328
    %v5532 = vunpack.c.h.b16 %v4328
    %v5533 = vunpack.c.l.b16 %v4329
    %v5534 = vunpack.c.h.b16 %v4329
    %v5535 = vunpack.c.l.b16 %v4330
    %v5536 = vunpack.c.h.b16 %v4330
    %v5537 = vunpack.c.l.b16 %v4331
    %v5538 = vunpack.c.h.b16 %v4331
    %v5539 = vunpack.c.l.b16 %v4332
    %v5540 = vunpack.c.h.b16 %v4332
    %v5541 = vunpack.c.l.b16 %v4333
    %v5542 = vunpack.c.h.b16 %v4333
    %v5543 = vunpack.c.l.b16 %v4334
    %v5544 = vunpack.c.h.b16 %v4334
    %v5545 = vunpack.c.l.b16 %v4335
    %v5546 = vunpack.c.h.b16 %v4335
    %v5547 = vunpack.c.l.b16 %v4336
    %v5548 = vunpack.c.h.b16 %v4336
    %v5549 = vunpack.c.l.b16 %v4337
    %v5550 = vunpack.c.h.b16 %v4337
    %v5551 = vunpack.c.l.b16 %v4338
    %v5552 = vunpack.c.h.b16 %v4338
    %v5553 = vunpack.c.l.b16 %v4339
    %v5554 = vunpack.c.h.b16 %v4339
    %v5555 = vunpack.c.l.b16 %v4340
    %v5556 = vunpack.c.h.b16 %v4340
    %v5557 = vunpack.c.l.b16 %v4341
    %v5558 = vunpack.c.h.b16 %v4341
    %v5559 = vunpack.c.l.b16 %v4342
    %v5560 = vunpack.c.h.b16 %v4342
    %v5561 = vunpack.c.l.b16 %v4343
    %v5562 = vunpack.c.h.b16 %v4343
    %v5563 = vunpack.c.l.b16 %v4344
    %v5564 = vunpack.c.h.b16 %v4344
    %v5565 = vunpack.c.l.b16 %v4345
    %v5566 = vunpack.c.h.b16 %v4345
    %v5567 = vunpack.c.l.b16 %v4346
    %v5568 = vunpack.c.h.b16 %v4346
    %v5569 = vunpack.c.l.b16 %v4347
    %v5570 = vunpack.c.h.b16 %v4347
    %v5571 = vunpack.c.l.b16 %v4348
    %v5572 = vunpack.c.h.b16 %v4348
    %v5573 = vunpack.c.l.b16 %v4349
    %v5574 = vunpack.c.h.b16 %v4349
    %v5575 = vunpack.c.l.b16 %v4350
    %v5576 = vunpack.c.h.b16 %v4350
    %v5577 = vunpack.c.l.b16 %v4351
    %v5578 = vunpack.c.h.b16 %v4351
    %v5579 = vunpack.c.l.b16 %v4352
    %v5580 = vunpack.c.h.b16 %v4352
    %v5581 = vunpack.c.l.b16 %v4353
    %v5582 = vunpack.c.h.b16 %v4353
    %v5583 = vunpack.c.l.b16 %v4354
    %v5584 = vunpack.c.h.b16 %v4354
    %v5585 = vunpack.c.l.b16 %v4355
    %v5586 = vunpack.c.h.b16 %v4355
    %v5587 = vunpack.c.l.b16 %v4356
    %v5588 = vunpack.c.h.b16 %v4356
    %v5589 = vunpack.c.l.b16 %v4357
    %v5590 = vunpack.c.h.b16 %v4357
    %v5591 = vunpack.c.l.b16 %v4358
    %v5592 = vunpack.c.h.b16 %v4358
    %v5593 = vunpack.c.l.b16 %v4359
    %v5594 = vunpack.c.h.b16 %v4359
    %v5595 = vunpack.c.l.b16 %v4360
    %v5596 = vunpack.c.h.b16 %v4360
    %v5597 = vunpack.c.l.b16 %v4361
    %v5598 = vunpack.c.h.b16 %v4361
    %v5599 = vunpack.c.l.b16 %v4362
    %v5600 = vunpack.c.h.b16 %v4362
    %v5601 = vunpack.c.l.b16 %v4363
    %v5602 = vunpack.c.h.b16 %v4363
    %v5603 = vunpack.c.l.b16 %v4364
    %v5604 = vunpack.c.h.b16 %v4364
    %v5605 = vunpack.c.l.b16 %v4365
    %v5606 = vunpack.c.h.b16 %v4365
    %v5607 = vunpack.c.l.b16 %v4366
    %v5608 = vunpack.c.h.b16 %v4366
    %v5609 = vunpack.c.l.b16 %v4367
    %v5610 = vunpack.c.h.b16 %v4367
    %v5611 = vunpack.c.l.b16 %v4368
    %v5612 = vunpack.c.h.b16 %v4368
    %v5613 = vunpack.c.l.b16 %v4369
    %v5614 = vunpack.c.h.b16 %v4369
    %v5615 = vunpack.c.l.b16 %v4370
    %v5616 = vunpack.c.h.b16 %v4370
    %v5617 = vunpack.c.l.b16 %v4371
    %v5618 = vunpack.c.h.b16 %v4371
    %v5619 = vunpack.c.l.b16 %v4372
    %v5620 = vunpack.c.h.b16 %v4372
    %v5621 = vunpack.c.l.b16 %v4373
    %v5622 = vunpack.c.h.b16 %v4373
    %v5623 = vunpack.c.l.b16 %v4374
    %v5624 = vunpack.c.h.b16 %v4374
    %v5625 = vunpack.c.l.b16 %v4375
    %v5626 = vunpack.c.h.b16 %v4375
    %v5627 = vunpack.c.l.b16 %v4376
    %v5628 = vunpack.c.h.b16 %v4376
    %v5629 = vunpack.c.l.b16 %v4377
    %v5630 = vunpack.c.h.b16 %v4377
    %v5631 = vunpack.c.l.b16 %v4378
    %v5632 = vunpack.c.h.b16 %v4378
    %v5633 = vunpack.c.l.b16 %v4379
    %v5634 = vunpack.c.h.b16 %v4379
    %v5635 = vunpack.c.l.b16 %v4380
    %v5636 = vunpack.c.h.b16 %v4380
    %v5637 = vunpack.c.l.b16 %v4381
    %v5638 = vunpack.c.h.b16 %v4381
    %v5639 = vunpack.c.l.b16 %v4382
    %v5640 = vunpack.c.h.b16 %v4382
    %v5641 = vunpack.c.l.b16 %v4383
    %v5642 = vunpack.c.h.b16 %v4383
    %v5643 = vunpack.c.l.b16 %v4384
    %v5644 = vunpack.c.h.b16 %v4384
    %v5645 = vunpack.c.l.b16 %v4385
    %v5646 = vunpack.c.h.b16 %v4385
    %v5647 = vunpack.c.l.b16 %v4386
    %v5648 = vunpack.c.h.b16 %v4386
    %v5649 = vunpack.c.l.b16 %v4387
    %v5650 = vunpack.c.h.b16 %v4387
    %v5651 = vunpack.c.l.b16 %v4388
    %v5652 = vunpack.c.h.b16 %v4388
    %v5653 = vunpack.c.l.b16 %v4389
    %v5654 = vunpack.c.h.b16 %v4389
    %v5655 = vunpack.c.l.b16 %v4390
    %v5656 = vunpack.c.h.b16 %v4390
    %v5657 = vunpack.c.l.b16 %v4391
    %v5658 = vunpack.c.h.b16 %v4391
    %v5659 = vunpack.c.l.b16 %v4392
    %v5660 = vunpack.c.h.b16 %v4392
    %v5661 = vunpack.c.l.b16 %v4393
    %v5662 = vunpack.c.h.b16 %v4393
    %v5663 = vunpack.c.l.b16 %v4394
    %v5664 = vunpack.c.h.b16 %v4394
    %v5665 = vunpack.c.l.b16 %v4395
    %v5666 = vunpack.c.h.b16 %v4395
    %v5667 = vunpack.c.l.b16 %v4396
    %v5668 = vunpack.c.h.b16 %v4396
    %v5669 = vunpack.c.l.b16 %v4397
    %v5670 = vunpack.c.h.b16 %v4397
    %v5671 = vunpack.c.l.b16 %v4398
    %v5672 = vunpack.c.h.b16 %v4398
    %v5673 = vunpack.c.l.b16 %v4399
    %v5674 = vunpack.c.h.b16 %v4399
    %v5675 = vunpack.c.l.b16 %v4400
    %v5676 = vunpack.c.h.b16 %v4400
    %v5677 = vunpack.c.l.b16 %v4401
    %v5678 = vunpack.c.h.b16 %v4401
    %v5679 = vunpack.c.l.b16 %v4402
    %v5680 = vunpack.c.h.b16 %v4402
    %v5681 = vunpack.c.l.b16 %v4403
    %v5682 = vunpack.c.h.b16 %v4403
    %v5683 = vunpack.c.l.b16 %v4404
    %v5684 = vunpack.c.h.b16 %v4404
    %v5685 = vunpack.c.l.b16 %v4405
    %v5686 = vunpack.c.h.b16 %v4405
    %v5687 = vunpack.c.l.b16 %v4406
    %v5688 = vunpack.c.h.b16 %v4406
    %v5689 = vunpack.c.l.b16 %v4407
    %v5690 = vunpack.c.h.b16 %v4407
    %v5691 = vunpack.c.l.b16 %v4408
    %v5692 = vunpack.c.h.b16 %v4408
    %v5693 = vunpack.c.l.b16 %v4409
    %v5694 = vunpack.c.h.b16 %v4409
    %v5695 = vunpack.c.l.b16 %v4410
    %v5696 = vunpack.c.h.b16 %v4410
    %v5697 = vunpack.c.l.b16 %v4411
    %v5698 = vunpack.c.h.b16 %v4411
    %v5699 = vunpack.c.l.b16 %v4412
    %v5700 = vunpack.c.h.b16 %v4412
    %v5701 = vunpack.c.l.b16 %v4413
    %v5702 = vunpack.c.h.b16 %v4413
    %v5703 = vunpack.c.l.b16 %v4414
    %v5704 = vunpack.c.h.b16 %v4414
    %v5705 = vunpack.c.l.b16 %v4415
    %v5706 = vunpack.c.h.b16 %v4415
    %v5707 = vunpack.c.l.b16 %v4416
    %v5708 = vunpack.c.h.b16 %v4416
    %v5709 = vunpack.c.l.b16 %v4417
    %v5710 = vunpack.c.h.b16 %v4417
    %v5711 = vunpack.c.l.b16 %v4418
    %v5712 = vunpack.c.h.b16 %v4418
    %v5713 = vunpack.c.l.b16 %v4419
    %v5714 = vunpack.c.h.b16 %v4419
    %v5715 = vunpack.c.l.b16 %v4420
    %v5716 = vunpack.c.h.b16 %v4420
    %v5717 = vunpack.c.l.b16 %v4421
    %v5718 = vunpack.c.h.b16 %v4421
    %v5719 = vunpack.c.l.b16 %v4422
    %v5720 = vunpack.c.h.b16 %v4422
    %v5721 = vunpack.c.l.b16 %v4423
    %v5722 = vunpack.c.h.b16 %v4423
    %v5723 = vunpack.c.l.b16 %v4424
    %v5724 = vunpack.c.h.b16 %v4424
    %v5725 = vunpack.c.l.b16 %v4425
    %v5726 = vunpack.c.h.b16 %v4425
    %v5727 = vunpack.c.l.b16 %v4426
    %v5728 = vunpack.c.h.b16 %v4426
    %v5729 = vunpack.c.l.b16 %v4427
    %v5730 = vunpack.c.h.b16 %v4427
    %v5731 = vunpack.c.l.b16 %v4428
    %v5732 = vunpack.c.h.b16 %v4428
    %v5733 = vunpack.c.l.b16 %v4429
    %v5734 = vunpack.c.h.b16 %v4429
    %v5735 = vunpack.c.l.b16 %v4430
    %v5736 = vunpack.c.h.b16 %v4430
    %v5737 = vunpack.c.l.b16 %v4431
    %v5738 = vunpack.c.h.b16 %v4431
    %v5739 = vunpack.c.l.b16 %v4432
    %v5740 = vunpack.c.h.b16 %v4432
    %v5741 = vunpack.c.l.b16 %v4433
    %v5742 = vunpack.c.h.b16 %v4433
    %v5743 = vunpack.c.l.b16 %v4434
    %v5744 = vunpack.c.h.b16 %v4434
    %v5745 = vunpack.c.l.b16 %v4435
    %v5746 = vunpack.c.h.b16 %v4435
    %v5747 = vunpack.c.l.b16 %v4436
    %v5748 = vunpack.c.h.b16 %v4436
    %v5749 = vunpack.c.l.b16 %v4437
    %v5750 = vunpack.c.h.b16 %v4437
    %v5751 = vunpack.c.l.b16 %v4438
    %v5752 = vunpack.c.h.b16 %v4438
    %v5753 = vunpack.c.l.b16 %v4439
    %v5754 = vunpack.c.h.b16 %v4439
    %v5755 = vunpack.c.l.b16 %v4440
    %v5756 = vunpack.c.h.b16 %v4440
    %v5757 = vunpack.c.l.b16 %v4441
    %v5758 = vunpack.c.h.b16 %v4441
    %v5759 = vunpack.c.l.b16 %v4442
    %v5760 = vunpack.c.h.b16 %v4442
    %v5761 = vunpack.c.l.b16 %v4443
    %v5762 = vunpack.c.h.b16 %v4443
    %v5763 = vunpack.c.l.b16 %v4444
    %v5764 = vunpack.c.h.b16 %v4444
    %v5765 = vunpack.c.l.b16 %v4445
    %v5766 = vunpack.c.h.b16 %v4445
    %v5767 = vunpack.c.l.b16 %v4446
    %v5768 = vunpack.c.h.b16 %v4446
    %v5769 = vunpack.c.l.b16 %v4447
    %v5770 = vunpack.c.h.b16 %v4447
    %v5771 = vunpack.c.l.b16 %v4448
    %v5772 = vunpack.c.h.b16 %v4448
    %v5773 = vunpack.c.l.b16 %v4449
    %v5774 = vunpack.c.h.b16 %v4449
    %v5775 = vunpack.c.l.b16 %v4450
    %v5776 = vunpack.c.h.b16 %v4450
    %v5777 = vunpack.c.l.b16 %v4451
    %v5778 = vunpack.c.h.b16 %v4451
    %v5779 = vunpack.c.l.b16 %v4452
    %v5780 = vunpack.c.h.b16 %v4452
    %v5781 = vunpack.c.l.b16 %v4453
    %v5782 = vunpack.c.h.b16 %v4453
    %v5783 = vunpack.c.l.b16 %v4454
    %v5784 = vunpack.c.h.b16 %v4454
    %v5785 = vunpack.c.l.b16 %v4455
    %v5786 = vunpack.c.h.b16 %v4455
    %v5787 = vunpack.c.l.b16 %v4456
    %v5788 = vunpack.c.h.b16 %v4456
    %v5789 = vunpack.c.l.b16 %v4457
    %v5790 = vunpack.c.h.b16 %v4457
    %v5791 = vunpack.c.l.b16 %v4458
    %v5792 = vunpack.c.h.b16 %v4458
    %v5793 = vunpack.c.l.b16 %v4459
    %v5794 = vunpack.c.h.b16 %v4459
    %v5795 = vunpack.c.l.b16 %v4460
    %v5796 = vunpack.c.h.b16 %v4460
    %v5797 = vunpack.c.l.b16 %v4461
    %v5798 = vunpack.c.h.b16 %v4461
    %v5799 = vunpack.c.l.b16 %v4462
    %v5800 = vunpack.c.h.b16 %v4462
    %v5801 = vunpack.c.l.b16 %v4463
    %v5802 = vunpack.c.h.b16 %v4463
    %v5803 = vunpack.c.l.b16 %v4464
    %v5804 = vunpack.c.h.b16 %v4464
    %v5805 = vunpack.c.l.b16 %v4465
    %v5806 = vunpack.c.h.b16 %v4465
    %v5807 = vunpack.c.l.b16 %v4466
    %v5808 = vunpack.c.h.b16 %v4466
    %v5809 = vunpack.c.l.b16 %v4467
    %v5810 = vunpack.c.h.b16 %v4467
    %v5811 = vunpack.c.l.b16 %v4468
    %v5812 = vunpack.c.h.b16 %v4468
    %v5813 = vunpack.c.l.b16 %v4469
    %v5814 = vunpack.c.h.b16 %v4469
    %v5815 = vunpack.c.l.b16 %v4470
    %v5816 = vunpack.c.h.b16 %v4470
    %v5817 = vunpack.c.l.b16 %v4471
    %v5818 = vunpack.c.h.b16 %v4471
    %v5819 = vunpack.c.l.b16 %v4472
    %v5820 = vunpack.c.h.b16 %v4472
    %v5821 = vunpack.c.l.b16 %v4473
    %v5822 = vunpack.c.h.b16 %v4473
    %v5823 = vunpack.c.l.b16 %v4474
    %v5824 = vunpack.c.h.b16 %v4474
    %v5825 = vunpack.c.l.b16 %v4475
    %v5826 = vunpack.c.h.b16 %v4475
    %v5827 = vunpack.c.l.b16 %v4476
    %v5828 = vunpack.c.h.b16 %v4476
    %v5829 = vunpack.c.l.b16 %v4477
    %v5830 = vunpack.c.h.b16 %v4477
    %v5831 = vunpack.c.l.b16 %v4478
    %v5832 = vunpack.c.h.b16 %v4478
    %v5833 = vunpack.c.l.b16 %v4479
    %v5834 = vunpack.c.h.b16 %v4479
    %v5835 = vunpack.c.l.b16 %v4480
    %v5836 = vunpack.c.h.b16 %v4480
    %v5837 = vunpack.c.l.b16 %v4481
    %v5838 = vunpack.c.h.b16 %v4481
    %v5839 = vunpack.c.l.b16 %v4482
    %v5840 = vunpack.c.h.b16 %v4482
    %v5841 = vunpack.c.l.b16 %v4483
    %v5842 = vunpack.c.h.b16 %v4483
    %v5843 = vunpack.c.l.b16 %v4484
    %v5844 = vunpack.c.h.b16 %v4484
    %v5845 = vunpack.c.l.b16 %v4485
    %v5846 = vunpack.c.h.b16 %v4485
    %v5847 = vunpack.c.l.b16 %v4486
    %v5848 = vunpack.c.h.b16 %v4486
    %v5849 = vunpack.c.l.b16 %v4487
    %v5850 = vunpack.c.h.b16 %v4487
    %v5851 = vunpack.c.l.b16 %v4488
    %v5852 = vunpack.c.h.b16 %v4488
    %v5853 = vunpack.c.l.b16 %v4489
    %v5854 = vunpack.c.h.b16 %v4489
    %v5855 = vunpack.c.l.b16 %v4490
    %v5856 = vunpack.c.h.b16 %v4490
    %v5857 = vunpack.c.l.b16 %v4491
    %v5858 = vunpack.c.h.b16 %v4491
    %v5859 = vunpack.c.l.b16 %v4492
    %v5860 = vunpack.c.h.b16 %v4492
    %v5861 = vunpack.c.l.b16 %v4493
    %v5862 = vunpack.c.h.b16 %v4493
    %v5863 = vunpack.c.l.b16 %v4494
    %v5864 = vunpack.c.h.b16 %v4494
    %v5865 = vunpack.c.l.b16 %v4495
    %v5866 = vunpack.c.h.b16 %v4495
    %v5867 = vunpack.c.l.b16 %v4496
    %v5868 = vunpack.c.h.b16 %v4496
    %v5869 = vunpack.c.l.b16 %v4497
    %v5870 = vunpack.c.h.b16 %v4497
    %v5871 = vunpack.c.l.b16 %v4498
    %v5872 = vunpack.c.h.b16 %v4498
    %v5873 = vunpack.c.l.b16 %v4499
    %v5874 = vunpack.c.h.b16 %v4499
    %v5875 = vunpack.c.l.b16 %v4500
    %v5876 = vunpack.c.h.b16 %v4500
    %v5877 = vunpack.c.l.b16 %v4501
    %v5878 = vunpack.c.h.b16 %v4501
    %v5879 = vunpack.c.l.b16 %v4502
    %v5880 = vunpack.c.h.b16 %v4502
    %v5881 = vunpack.c.l.b16 %v4503
    %v5882 = vunpack.c.h.b16 %v4503
    %v5883 = vunpack.c.l.b16 %v4504
    %v5884 = vunpack.c.h.b16 %v4504
    %v5885 = vunpack.c.l.b16 %v4505
    %v5886 = vunpack.c.h.b16 %v4505
    %v5887 = vunpack.c.l.b16 %v4506
    %v5888 = vunpack.c.h.b16 %v4506
    %v5889 = vunpack.c.l.b16 %v4507
    %v5890 = vunpack.c.h.b16 %v4507
    %v5891 = vunpack.c.l.b16 %v4508
    %v5892 = vunpack.c.h.b16 %v4508
    %v5893 = vunpack.c.l.b16 %v4509
    %v5894 = vunpack.c.h.b16 %v4509
    %v5895 = vunpack.c.l.b16 %v4510
    %v5896 = vunpack.c.h.b16 %v4510
    %v5897 = vunpack.c.l.b16 %v4511
    %v5898 = vunpack.c.h.b16 %v4511
    %v5899 = vunpack.c.l.b16 %v4512
    %v5900 = vunpack.c.h.b16 %v4512
    %v5901 = vunpack.c.l.b16 %v4513
    %v5902 = vunpack.c.h.b16 %v4513
    %v5903 = vunpack.c.l.b16 %v4514
    %v5904 = vunpack.c.h.b16 %v4514
    %v5905 = vunpack.c.l.b16 %v4515
    %v5906 = vunpack.c.h.b16 %v4515
    %v5907 = vunpack.c.l.b16 %v4516
    %v5908 = vunpack.c.h.b16 %v4516
    %v5909 = vunpack.c.l.b16 %v4517
    %v5910 = vunpack.c.h.b16 %v4517
    %v5911 = vunpack.c.l.b16 %v4518
    %v5912 = vunpack.c.h.b16 %v4518
    %v5913 = vunpack.c.l.b16 %v4519
    %v5914 = vunpack.c.h.b16 %v4519
    %v5915 = vunpack.c.l.b16 %v4520
    %v5916 = vunpack.c.h.b16 %v4520
    %v5917 = vunpack.c.l.b16 %v4521
    %v5918 = vunpack.c.h.b16 %v4521
    %v5919 = vunpack.c.l.b16 %v4522
    %v5920 = vunpack.c.h.b16 %v4522
    %v5921 = vunpack.c.l.b16 %v4523
    %v5922 = vunpack.c.h.b16 %v4523
    %v5923 = vunpack.c.l.b16 %v4524
    %v5924 = vunpack.c.h.b16 %v4524
    %v5925 = vunpack.c.l.b16 %v4525
    %v5926 = vunpack.c.h.b16 %v4525
    %v5927 = vunpack.c.l.b16 %v4526
    %v5928 = vunpack.c.h.b16 %v4526
    %v5929 = vunpack.c.l.b16 %v4527
    %v5930 = vunpack.c.h.b16 %v4527
    %v5931 = vunpack.c.l.b16 %v4528
    %v5932 = vunpack.c.h.b16 %v4528
    %v5933 = vunpack.c.l.b16 %v4529
    %v5934 = vunpack.c.h.b16 %v4529
    %v5935 = vunpack.c.l.b16 %v4530
    %v5936 = vunpack.c.h.b16 %v4530
    %v5937 = vunpack.c.l.b16 %v4531
    %v5938 = vunpack.c.h.b16 %v4531
    %v5939 = vunpack.c.l.b16 %v4532
    %v5940 = vunpack.c.h.b16 %v4532
    %v5941 = vunpack.c.l.b16 %v4533
    %v5942 = vunpack.c.h.b16 %v4533
    %v5943 = vunpack.c.l.b16 %v4534
    %v5944 = vunpack.c.h.b16 %v4534
    %v5945 = vunpack.c.l.b16 %v4535
    %v5946 = vunpack.c.h.b16 %v4535
    %v5947 = vunpack.c.l.b16 %v4536
    %v5948 = vunpack.c.h.b16 %v4536
    %v5949 = vunpack.c.l.b16 %v4537
    %v5950 = vunpack.c.h.b16 %v4537
    %v5951 = vunpack.c.l.b16 %v4538
    %v5952 = vunpack.c.h.b16 %v4538
    %v5953 = vunpack.c.l.b16 %v4539
    %v5954 = vunpack.c.h.b16 %v4539
    %v5955 = vunpack.c.l.b16 %v4540
    %v5956 = vunpack.c.h.b16 %v4540
    %v5957 = vunpack.c.l.b16 %v4541
    %v5958 = vunpack.c.h.b16 %v4541
    %v5959 = vunpack.c.l.b16 %v4542
    %v5960 = vunpack.c.h.b16 %v4542
    %v5961 = vunpack.c.l.b16 %v4543
    %v5962 = vunpack.c.h.b16 %v4543
    %v5963 = vunpack.c.l.b16 %v4544
    %v5964 = vunpack.c.h.b16 %v4544
    %v5965 = vunpack.c.l.b16 %v4545
    %v5966 = vunpack.c.h.b16 %v4545
    %v5967 = vunpack.c.l.b16 %v4546
    %v5968 = vunpack.c.h.b16 %v4546
    %v5969 = vunpack.c.l.b16 %v4547
    %v5970 = vunpack.c.h.b16 %v4547
    %v5971 = vunpack.c.l.b16 %v4548
    %v5972 = vunpack.c.h.b16 %v4548
    %v5973 = vunpack.c.l.b16 %v4549
    %v5974 = vunpack.c.h.b16 %v4549
    %v5975 = vunpack.c.l.b16 %v4550
    %v5976 = vunpack.c.h.b16 %v4550
    %v5977 = vunpack.c.l.b16 %v4551
    %v5978 = vunpack.c.h.b16 %v4551
    %v5979 = vunpack.c.l.b16 %v4552
    %v5980 = vunpack.c.h.b16 %v4552
    %v5981 = vunpack.c.l.b16 %v4553
    %v5982 = vunpack.c.h.b16 %v4553
    %v5983 = vunpack.c.l.b16 %v4554
    %v5984 = vunpack.c.h.b16 %v4554
    %v5985 = vunpack.c.l.b16 %v4555
    %v5986 = vunpack.c.h.b16 %v4555
    %v5987 = vunpack.c.l.b16 %v4556
    %v5988 = vunpack.c.h.b16 %v4556
    %v5989 = vunpack.c.l.b16 %v4557
    %v5990 = vunpack.c.h.b16 %v4557
    %v5991 = vunpack.c.l.b16 %v4558
    %v5992 = vunpack.c.h.b16 %v4558
    %v5993 = vunpack.c.l.b16 %v4559
    %v5994 = vunpack.c.h.b16 %v4559
    %v5995 = vunpack.c.l.b16 %v4560
    %v5996 = vunpack.c.h.b16 %v4560
    %v5997 = vunpack.c.l.b16 %v4561
    %v5998 = vunpack.c.h.b16 %v4561
    %v5999 = vunpack.c.l.b16 %v4562
    %v6000 = vunpack.c.h.b16 %v4562
    %v6001 = vunpack.c.l.b16 %v4563
    %v6002 = vunpack.c.h.b16 %v4563
    %v6003 = vunpack.c.l.b16 %v4564
    %v6004 = vunpack.c.h.b16 %v4564
    %v6005 = vunpack.c.l.b16 %v4565
    %v6006 = vunpack.c.h.b16 %v4565
    %v6007 = vunpack.c.l.b16 %v4566
    %v6008 = vunpack.c.h.b16 %v4566
    %v6009 = vunpack.c.l.b16 %v4567
    %v6010 = vunpack.c.h.b16 %v4567
    %v6011 = vunpack.c.l.b16 %v4568
    %v6012 = vunpack.c.h.b16 %v4568
    %v6013 = vunpack.c.l.b16 %v4569
    %v6014 = vunpack.c.h.b16 %v4569
    %v6015 = vunpack.c.l.b16 %v4570
    %v6016 = vunpack.c.h.b16 %v4570
    %v6017 = vunpack.c.l.b16 %v4571
    %v6018 = vunpack.c.h.b16 %v4571
    %v6019 = vunpack.c.l.b16 %v4572
    %v6020 = vunpack.c.h.b16 %v4572
    %v6021 = vunpack.c.l.b16 %v4573
    %v6022 = vunpack.c.h.b16 %v4573
    %v6023 = vunpack.c.l.b16 %v4574
    %v6024 = vunpack.c.h.b16 %v4574
    %v6025 = vunpack.c.l.b16 %v4575
    %v6026 = vunpack.c.h.b16 %v4575
    %v6027 = vunpack.c.l.b16 %v4576
    %v6028 = vunpack.c.h.b16 %v4576
    %v6029 = vunpack.c.l.b16 %v4577
    %v6030 = vunpack.c.h.b16 %v4577
    %v6031 = vunpack.c.l.b16 %v4578
    %v6032 = vunpack.c.h.b16 %v4578
    %v6033 = vunpack.c.l.b16 %v4579
    %v6034 = vunpack.c.h.b16 %v4579
    %v6035 = vunpack.c.l.b16 %v4580
    %v6036 = vunpack.c.h.b16 %v4580
    %v6037 = vunpack.c.l.b16 %v4581
    %v6038 = vunpack.c.h.b16 %v4581
    %v6039 = vunpack.c.l.b16 %v4582
    %v6040 = vunpack.c.h.b16 %v4582
    %v6041 = vunpack.c.l.b16 %v4583
    %v6042 = vunpack.c.h.b16 %v4583
    %v6043 = vunpack.c.l.b16 %v4584
    %v6044 = vunpack.c.h.b16 %v4584
    %v6045 = vunpack.c.l.b16 %v4585
    %v6046 = vunpack.c.h.b16 %v4585
    %v6047 = vunpack.c.l.b16 %v4586
    %v6048 = vunpack.c.h.b16 %v4586
    %v6049 = vunpack.c.l.b16 %v4587
    %v6050 = vunpack.c.h.b16 %v4587
    %v6051 = vunpack.c.l.b16 %v4588
    %v6052 = vunpack.c.h.b16 %v4588
    %v6053 = vunpack.c.l.b16 %v4589
    %v6054 = vunpack.c.h.b16 %v4589
    %v6055 = vunpack.c.l.b16 %v4590
    %v6056 = vunpack.c.h.b16 %v4590
    %v6057 = vunpack.c.l.b16 %v4591
    %v6058 = vunpack.c.h.b16 %v4591
    %v6059 = vunpack.c.l.b16 %v4592
    %v6060 = vunpack.c.h.b16 %v4592
    %v6061 = vunpack.c.l.b16 %v4593
    %v6062 = vunpack.c.h.b16 %v4593
    %v6063 = vunpack.c.l.b16 %v4594
    %v6064 = vunpack.c.h.b16 %v4594
    %v6065 = vunpack.c.l.b16 %v4595
    %v6066 = vunpack.c.h.b16 %v4595
    %v6067 = vunpack.c.l.b16 %v4596
    %v6068 = vunpack.c.h.b16 %v4596
    %v6069 = vunpack.c.l.b16 %v4597
    %v6070 = vunpack.c.h.b16 %v4597
    %v6071 = vunpack.c.l.b16 %v4598
    %v6072 = vunpack.c.h.b16 %v4598
    %v6073 = vunpack.c.l.b16 %v4599
    %v6074 = vunpack.c.h.b16 %v4599
    %v6075 = vunpack.c.l.b16 %v4600
    %v6076 = vunpack.c.h.b16 %v4600
    %v6077 = vunpack.c.l.b16 %v4601
    %v6078 = vunpack.c.h.b16 %v4601
    %v6079 = vunpack.c.l.b16 %v4602
    %v6080 = vunpack.c.h.b16 %v4602
    %v6081 = vunpack.c.l.b16 %v4603
    %v6082 = vunpack.c.h.b16 %v4603
    %v6083 = vunpack.c.l.b16 %v4604
    %v6084 = vunpack.c.h.b16 %v4604
    %v6085 = vunpack.c.l.b16 %v4605
    %v6086 = vunpack.c.h.b16 %v4605
    %v6087 = vunpack.c.l.b16 %v4606
    %v6088 = vunpack.c.h.b16 %v4606
    %v6089 = vunpack.c.l.b16 %v4607
    %v6090 = vunpack.c.h.b16 %v4607
    %v6091 = vunpack.c.l.b16 %v4608
    %v6092 = vunpack.c.h.b16 %v4608
    %v6093 = vunpack.c.l.b16 %v4609
    %v6094 = vunpack.c.h.b16 %v4609
    %v6095 = vunpack.c.l.b16 %v4610
    %v6096 = vunpack.c.h.b16 %v4610
    %v6097 = vunpack.c.l.b16 %v4611
    %v6098 = vunpack.c.h.b16 %v4611
    %v6099 = vunpack.c.l.b16 %v4612
    %v6100 = vunpack.c.h.b16 %v4612
    %v6101 = vunpack.c.l.b16 %v4613
    %v6102 = vunpack.c.h.b16 %v4613
    %v6103 = vunpack.c.l.b16 %v4614
    %v6104 = vunpack.c.h.b16 %v4614
    %v6105 = vunpack.c.l.b16 %v4615
    %v6106 = vunpack.c.h.b16 %v4615
    %v6107 = vunpack.c.l.b16 %v4616
    %v6108 = vunpack.c.h.b16 %v4616
    %v6109 = vunpack.c.l.b16 %v4617
    %v6110 = vunpack.c.h.b16 %v4617
    %v6111 = vunpack.c.l.b16 %v4618
    %v6112 = vunpack.c.h.b16 %v4618
    %v6113 = vunpack.c.l.b16 %v4619
    %v6114 = vunpack.c.h.b16 %v4619
    %v6115 = vunpack.c.l.b16 %v4620
    %v6116 = vunpack.c.h.b16 %v4620
    %v6117 = vunpack.c.l.b16 %v4621
    %v6118 = vunpack.c.h.b16 %v4621
    %v6119 = vunpack.c.l.b16 %v4622
    %v6120 = vunpack.c.h.b16 %v4622
    %v6121 = vunpack.c.l.b16 %v4623
    %v6122 = vunpack.c.h.b16 %v4623
    %v6123 = vunpack.c.l.b16 %v4624
    %v6124 = vunpack.c.h.b16 %v4624
    %v6125 = vunpack.c.l.b16 %v4625
    %v6126 = vunpack.c.h.b16 %v4625
    %v6127 = vunpack.c.l.b16 %v4626
    %v6128 = vunpack.c.h.b16 %v4626
    %v6129 = vunpack.c.l.b16 %v4627
    %v6130 = vunpack.c.h.b16 %v4627
    %v6131 = vunpack.c.l.b16 %v4628
    %v6132 = vunpack.c.h.b16 %v4628
    %v6133 = vunpack.c.l.b16 %v4629
    %v6134 = vunpack.c.h.b16 %v4629
    %v6135 = vunpack.c.l.b16 %v4630
    %v6136 = vunpack.c.h.b16 %v4630
    %v6137 = vunpack.c.l.b16 %v4631
    %v6138 = vunpack.c.h.b16 %v4631
    %v6139 = vunpack.c.l.b16 %v4632
    %v6140 = vunpack.c.h.b16 %v4632
    %v6141 = vunpack.c.l.b16 %v4633
    %v6142 = vunpack.c.h.b16 %v4633
    %v6143 = vunpack.c.l.b16 %v4634
    %v6144 = vunpack.c.h.b16 %v4634
    %v6145 = vunpack.c.l.b16 %v4635
    %v6146 = vunpack.c.h.b16 %v4635
    %v6147 = vunpack.c.l.b16 %v4636
    %v6148 = vunpack.c.h.b16 %v4636
    %v6149 = vunpack.c.l.b16 %v4637
    %v6150 = vunpack.c.h.b16 %v4637
    %v6151 = vunpack.c.l.b16 %v4638
    %v6152 = vunpack.c.h.b16 %v4638
    %v6153 = vunpack.c.l.b16 %v4639
    %v6154 = vunpack.c.h.b16 %v4639
    %v6155 = vunpack.c.l.b16 %v4640
    %v6156 = vunpack.c.h.b16 %v4640
    %v6157 = vunpack.c.l.b16 %v4641
    %v6158 = vunpack.c.h.b16 %v4641
    %v6159 = vunpack.c.l.b16 %v4642
    %v6160 = vunpack.c.h.b16 %v4642
    %v6161 = vunpack.c.l.b16 %v4643
    %v6162 = vunpack.c.h.b16 %v4643
    %v6163 = vunpack.c.l.b16 %v4644
    %v6164 = vunpack.c.h.b16 %v4644
    %v6165 = vunpack.c.l.b16 %v4645
    %v6166 = vunpack.c.h.b16 %v4645
    %v6167 = vunpack.c.l.b16 %v4646
    %v6168 = vunpack.c.h.b16 %v4646
    %v6169 = vunpack.c.l.b16 %v4647
    %v6170 = vunpack.c.h.b16 %v4647
    %v6171 = vunpack.c.l.b16 %v4648
    %v6172 = vunpack.c.h.b16 %v4648
    %v6173 = vunpack.c.l.b16 %v4649
    %v6174 = vunpack.c.h.b16 %v4649
    %v6175 = vunpack.c.l.b16 %v4650
    %v6176 = vunpack.c.h.b16 %v4650
    %v6177 = vunpack.c.l.b16 %v4651
    %v6178 = vunpack.c.h.b16 %v4651
    %v6179 = vunpack.c.l.b16 %v4652
    %v6180 = vunpack.c.h.b16 %v4652
    %v6181 = vunpack.c.l.b16 %v4653
    %v6182 = vunpack.c.h.b16 %v4653
    %v6183 = vunpack.c.l.b16 %v4654
    %v6184 = vunpack.c.h.b16 %v4654
    %v6185 = vunpack.c.l.b16 %v4655
    %v6186 = vunpack.c.h.b16 %v4655
    %v6187 = vunpack.c.l.b16 %v4656
    %v6188 = vunpack.c.h.b16 %v4656
    %v6189 = vunpack.c.l.b16 %v4657
    %v6190 = vunpack.c.h.b16 %v4657
    %v6191 = vunpack.c.l.b16 %v4658
    %v6192 = vunpack.c.h.b16 %v4658
    %v6193 = vunpack.c.l.b16 %v4659
    %v6194 = vunpack.c.h.b16 %v4659
    %v6195 = vunpack.c.l.b16 %v4660
    %v6196 = vunpack.c.h.b16 %v4660
    %v6197 = vunpack.c.l.b16 %v4661
    %v6198 = vunpack.c.h.b16 %v4661
    %v6199 = vunpack.c.l.b16 %v4662
    %v6200 = vunpack.c.h.b16 %v4662
    %v6201 = vunpack.c.l.b16 %v4663
    %v6202 = vunpack.c.h.b16 %v4663
    %v6203 = vunpack.c.l.b16 %v4664
    %v6204 = vunpack.c.h.b16 %v4664
    %v6205 = vunpack.c.l.b16 %v4665
    %v6206 = vunpack.c.h.b16 %v4665
    %v6207 = vunpack.c.l.b16 %v4666
    %v6208 = vunpack.c.h.b16 %v4666
    %v6209 = vunpack.c.l.b16 %v4667
    %v6210 = vunpack.c.h.b16 %v4667
    %v6211 = vunpack.c.l.b16 %v4668
    %v6212 = vunpack.c.h.b16 %v4668
    %v6213 = vunpack.c.l.b16 %v4669
    %v6214 = vunpack.c.h.b16 %v4669
    %v6215 = vunpack.c.l.b16 %v4670
    %v6216 = vunpack.c.h.b16 %v4670
    %v6217 = vpack.c.b16 %v5197, %v5193
    %v6218 = vpack.c.b16 %v5198, %v5194
    %v6219 = vpack.c.b16 %v5199, %v5195
    %v6220 = vpack.c.b16 %v5200, %v5196
    %v6221 = vpack.c.b16 %v5205, %v5201
    %v6222 = vpack.c.b16 %v5206, %v5202
    %v6223 = vpack.c.b16 %v5207, %v5203
    %v6224 = vpack.c.b16 %v5208, %v5204
    %v6225 = vpack.c.b16 %v5213, %v5209
    %v6226 = vpack.c.b16 %v5214, %v5210
    %v6227 = vpack.c.b16 %v5215, %v5211
    %v6228 = vpack.c.b16 %v5216, %v5212
    %v6229 = vpack.c.b16 %v5221, %v5217
    %v6230 = vpack.c.b16 %v5222, %v5218
    %v6231 = vpack.c.b16 %v5223, %v5219
    %v6232 = vpack.c.b16 %v5224, %v5220
    %v6233 = vpack.c.b16 %v5229, %v5225
    %v6234 = vpack.c.b16 %v5230, %v5226
    %v6235 = vpack.c.b16 %v5231, %v5227
    %v6236 = vpack.c.b16 %v5232, %v5228
    %v6237 = vpack.c.b16 %v5237, %v5233
    %v6238 = vpack.c.b16 %v5238, %v5234
    %v6239 = vpack.c.b16 %v5239, %v5235
    %v6240 = vpack.c.b16 %v5240, %v5236
    %v6241 = vpack.c.b16 %v5245, %v5241
    %v6242 = vpack.c.b16 %v5246, %v5242
    %v6243 = vpack.c.b16 %v5247, %v5243
    %v6244 = vpack.c.b16 %v5248, %v5244
    %v6245 = vpack.c.b16 %v5253, %v5249
    %v6246 = vpack.c.b16 %v5254, %v5250
    %v6247 = vpack.c.b16 %v5255, %v5251
    %v6248 = vpack.c.b16 %v5256, %v5252
    %v6249 = vpack.c.b16 %v5261, %v5257
    %v6250 = vpack.c.b16 %v5262, %v5258
    %v6251 = vpack.c.b16 %v5263, %v5259
    %v6252 = vpack.c.b16 %v5264, %v5260
    %v6253 = vpack.c.b16 %v5269, %v5265
    %v6254 = vpack.c.b16 %v5270, %v5266
    %v6255 = vpack.c.b16 %v5271, %v5267
    %v6256 = vpack.c.b16 %v5272, %v5268
    %v6257 = vpack.c.b16 %v5277, %v5273
    %v6258 = vpack.c.b16 %v5278, %v5274
    %v6259 = vpack.c.b16 %v5279, %v5275
    %v6260 = vpack.c.b16 %v5280, %v5276
    %v6261 = vpack.c.b16 %v5285, %v5281
    %v6262 = vpack.c.b16 %v5286, %v5282
    %v6263 = vpack.c.b16 %v5287, %v5283
    %v6264 = vpack.c.b16 %v5288, %v5284
    %v6265 = vpack.c.b16 %v5293, %v5289
    %v6266 = vpack.c.b16 %v5294, %v5290
    %v6267 = vpack.c.b16 %v5295, %v5291
    %v6268 = vpack.c.b16 %v5296, %v5292
    %v6269 = vpack.c.b16 %v5301, %v5297
    %v6270 = vpack.c.b16 %v5302, %v5298
    %v6271 = vpack.c.b16 %v5303, %v5299
    %v6272 = vpack.c.b16 %v5304, %v5300
    %v6273 = vpack.c.b16 %v5309, %v5305
    %v6274 = vpack.c.b16 %v5310, %v5306
    %v6275 = vpack.c.b16 %v5311, %v5307
    %v6276 = vpack.c.b16 %v5312, %v5308
    %v6277 = vpack.c.b16 %v5317, %v5313
    %v6278 = vpack.c.b16 %v5318, %v5314
    %v6279 = vpack.c.b16 %v5319, %v5315
    %v6280 = vpack.c.b16 %v5320, %v5316
    %v6281 = vpack.c.b16 %v5325, %v5321
    %v6282 = vpack.c.b16 %v5326, %v5322
    %v6283 = vpack.c.b16 %v5327, %v5323
    %v6284 = vpack.c.b16 %v5328, %v5324
    %v6285 = vpack.c.b16 %v5333, %v5329
    %v6286 = vpack.c.b16 %v5334, %v5330
    %v6287 = vpack.c.b16 %v5335, %v5331
    %v6288 = vpack.c.b16 %v5336, %v5332
    %v6289 = vpack.c.b16 %v5341, %v5337
    %v6290 = vpack.c.b16 %v5342, %v5338
    %v6291 = vpack.c.b16 %v5343, %v5339
    %v6292 = vpack.c.b16 %v5344, %v5340
    %v6293 = vpack.c.b16 %v5349, %v5345
    %v6294 = vpack.c.b16 %v5350, %v5346
    %v6295 = vpack.c.b16 %v5351, %v5347
    %v6296 = vpack.c.b16 %v5352, %v5348
    %v6297 = vpack.c.b16 %v5357, %v5353
    %v6298 = vpack.c.b16 %v5358, %v5354
    %v6299 = vpack.c.b16 %v5359, %v5355
    %v6300 = vpack.c.b16 %v5360, %v5356
    %v6301 = vpack.c.b16 %v5365, %v5361
    %v6302 = vpack.c.b16 %v5366, %v5362
    %v6303 = vpack.c.b16 %v5367, %v5363
    %v6304 = vpack.c.b16 %v5368, %v5364
    %v6305 = vpack.c.b16 %v5373, %v5369
    %v6306 = vpack.c.b16 %v5374, %v5370
    %v6307 = vpack.c.b16 %v5375, %v5371
    %v6308 = vpack.c.b16 %v5376, %v5372
    %v6309 = vpack.c.b16 %v5381, %v5377
    %v6310 = vpack.c.b16 %v5382, %v5378
    %v6311 = vpack.c.b16 %v5383, %v5379
    %v6312 = vpack.c.b16 %v5384, %v5380
    %v6313 = vpack.c.b16 %v5389, %v5385
    %v6314 = vpack.c.b16 %v5390, %v5386
    %v6315 = vpack.c.b16 %v5391, %v5387
    %v6316 = vpack.c.b16 %v5392, %v5388
    %v6317 = vpack.c.b16 %v5397, %v5393
    %v6318 = vpack.c.b16 %v5398, %v5394
    %v6319 = vpack.c.b16 %v5399, %v5395
    %v6320 = vpack.c.b16 %v5400, %v5396
    %v6321 = vpack.c.b16 %v5405, %v5401
    %v6322 = vpack.c.b16 %v5406, %v5402
    %v6323 = vpack.c.b16 %v5407, %v5403
    %v6324 = vpack.c.b16 %v5408, %v5404
    %v6325 = vpack.c.b16 %v5413, %v5409
    %v6326 = vpack.c.b16 %v5414, %v5410
    %v6327 = vpack.c.b16 %v5415, %v5411
    %v6328 = vpack.c.b16 %v5416, %v5412
    %v6329 = vpack.c.b16 %v5421, %v5417
    %v6330 = vpack.c.b16 %v5422, %v5418
    %v6331 = vpack.c.b16 %v5423, %v5419
    %v6332 = vpack.c.b16 %v5424, %v5420
    %v6333 = vpack.c.b16 %v5429, %v5425
    %v6334 = vpack.c.b16 %v5430, %v5426
    %v6335 = vpack.c.b16 %v5431, %v5427
    %v6336 = vpack.c.b16 %v5432, %v5428
    %v6337 = vpack.c.b16 %v5437, %v5433
    %v6338 = vpack.c.b16 %v5438, %v5434
    %v6339 = vpack.c.b16 %v5439, %v5435
    %v6340 = vpack.c.b16 %v5440, %v5436
    %v6341 = vpack.c.b16 %v5445, %v5441
    %v6342 = vpack.c.b16 %v5446, %v5442
    %v6343 = vpack.c.b16 %v5447, %v5443
    %v6344 = vpack.c.b16 %v5448, %v5444
    %v6345 = vpack.c.b16 %v5453, %v5449
    %v6346 = vpack.c.b16 %v5454, %v5450
    %v6347 = vpack.c.b16 %v5455, %v5451
    %v6348 = vpack.c.b16 %v5456, %v5452
    %v6349 = vpack.c.b16 %v5461, %v5457
    %v6350 = vpack.c.b16 %v5462, %v5458
    %v6351 = vpack.c.b16 %v5463, %v5459
    %v6352 = vpack.c.b16 %v5464, %v5460
    %v6353 = vpack.c.b16 %v5469, %v5465
    %v6354 = vpack.c.b16 %v5470, %v5466
    %v6355 = vpack.c.b16 %v5471, %v5467
    %v6356 = vpack.c.b16 %v5472, %v5468
    %v6357 = vpack.c.b16 %v5477, %v5473
    %v6358 = vpack.c.b16 %v5478, %v5474
    %v6359 = vpack.c.b16 %v5479, %v5475
    %v6360 = vpack.c.b16 %v5480, %v5476
    %v6361 = vpack.c.b16 %v5485, %v5481
    %v6362 = vpack.c.b16 %v5486, %v5482
    %v6363 = vpack.c.b16 %v5487, %v5483
    %v6364 = vpack.c.b16 %v5488, %v5484
    %v6365 = vpack.c.b16 %v5493, %v5489
    %v6366 = vpack.c.b16 %v5494, %v5490
    %v6367 = vpack.c.b16 %v5495, %v5491
    %v6368 = vpack.c.b16 %v5496, %v5492
    %v6369 = vpack.c.b16 %v5501, %v5497
    %v6370 = vpack.c.b16 %v5502, %v5498
    %v6371 = vpack.c.b16 %v5503, %v5499
    %v6372 = vpack.c.b16 %v5504, %v5500
    %v6373 = vpack.c.b16 %v5509, %v5505
    %v6374 = vpack.c.b16 %v5510, %v5506
    %v6375 = vpack.c.b16 %v5511, %v5507
    %v6376 = vpack.c.b16 %v5512, %v5508
    %v6377 = vpack.c.b16 %v5517, %v5513
    %v6378 = vpack.c.b16 %v5518, %v5514
    %v6379 = vpack.c.b16 %v5519, %v5515
    %v6380 = vpack.c.b16 %v5520, %v5516
    %v6381 = vpack.c.b16 %v5525, %v5521
    %v6382 = vpack.c.b16 %v5526, %v5522
    %v6383 = vpack.c.b16 %v5527, %v5523
    %v6384 = vpack.c.b16 %v5528, %v5524
    %v6385 = vpack.c.b16 %v5533, %v5529
    %v6386 = vpack.c.b16 %v5534, %v5530
    %v6387 = vpack.c.b16 %v5535, %v5531
    %v6388 = vpack.c.b16 %v5536, %v5532
    %v6389 = vpack.c.b16 %v5541, %v5537
    %v6390 = vpack.c.b16 %v5542, %v5538
    %v6391 = vpack.c.b16 %v5543, %v5539
    %v6392 = vpack.c.b16 %v5544, %v5540
    %v6393 = vpack.c.b16 %v5549, %v5545
    %v6394 = vpack.c.b16 %v5550, %v5546
    %v6395 = vpack.c.b16 %v5551, %v5547
    %v6396 = vpack.c.b16 %v5552, %v5548
    %v6397 = vpack.c.b16 %v5557, %v5553
    %v6398 = vpack.c.b16 %v5558, %v5554
    %v6399 = vpack.c.b16 %v5559, %v5555
    %v6400 = vpack.c.b16 %v5560, %v5556
    %v6401 = vpack.c.b16 %v5565, %v5561
    %v6402 = vpack.c.b16 %v5566, %v5562
    %v6403 = vpack.c.b16 %v5567, %v5563
    %v6404 = vpack.c.b16 %v5568, %v5564
    %v6405 = vpack.c.b16 %v5573, %v5569
    %v6406 = vpack.c.b16 %v5574, %v5570
    %v6407 = vpack.c.b16 %v5575, %v5571
    %v6408 = vpack.c.b16 %v5576, %v5572
    %v6409 = vpack.c.b16 %v5581, %v5577
    %v6410 = vpack.c.b16 %v5582, %v5578
    %v6411 = vpack.c.b16 %v5583, %v5579
    %v6412 = vpack.c.b16 %v5584, %v5580
    %v6413 = vpack.c.b16 %v5589, %v5585
    %v6414 = vpack.c.b16 %v5590, %v5586
    %v6415 = vpack.c.b16 %v5591, %v5587
    %v6416 = vpack.c.b16 %v5592, %v5588
    %v6417 = vpack.c.b16 %v5597, %v5593
    %v6418 = vpack.c.b16 %v5598, %v5594
    %v6419 = vpack.c.b16 %v5599, %v5595
    %v6420 = vpack.c.b16 %v5600, %v5596
    %v6421 = vpack.c.b16 %v5605, %v5601
    %v6422 = vpack.c.b16 %v5606, %v5602
    %v6423 = vpack.c.b16 %v5607, %v5603
    %v6424 = vpack.c.b16 %v5608, %v5604
    %v6425 = vpack.c.b16 %v5613, %v5609
    %v6426 = vpack.c.b16 %v5614, %v5610
    %v6427 = vpack.c.b16 %v5615, %v5611
    %v6428 = vpack.c.b16 %v5616, %v5612
    %v6429 = vpack.c.b16 %v5621, %v5617
    %v6430 = vpack.c.b16 %v5622, %v5618
    %v6431 = vpack.c.b16 %v5623, %v5619
    %v6432 = vpack.c.b16 %v5624, %v5620
    %v6433 = vpack.c.b16 %v5629, %v5625
    %v6434 = vpack.c.b16 %v5630, %v5626
    %v6435 = vpack.c.b16 %v5631, %v5627
    %v6436 = vpack.c.b16 %v5632, %v5628
    %v6437 = vpack.c.b16 %v5637, %v5633
    %v6438 = vpack.c.b16 %v5638, %v5634
    %v6439 = vpack.c.b16 %v5639, %v5635
    %v6440 = vpack.c.b16 %v5640, %v5636
    %v6441 = vpack.c.b16 %v5645, %v5641
    %v6442 = vpack.c.b16 %v5646, %v5642
    %v6443 = vpack.c.b16 %v5647, %v5643
    %v6444 = vpack.c.b16 %v5648, %v5644
    %v6445 = vpack.c.b16 %v5653, %v5649
    %v6446 = vpack.c.b16 %v5654, %v5650
    %v6447 = vpack.c.b16 %v5655, %v5651
    %v6448 = vpack.c.b16 %v5656, %v5652
    %v6449 = vpack.c.b16 %v5661, %v5657
    %v6450 = vpack.c.b16 %v5662, %v5658
    %v6451 = vpack.c.b16 %v5663, %v5659
    %v6452 = vpack.c.b16 %v5664, %v5660
    %v6453 = vpack.c.b16 %v5669, %v5665
    %v6454 = vpack.c.b16 %v5670, %v5666
    %v6455 = vpack.c.b16 %v5671, %v5667
    %v6456 = vpack.c.b16 %v5672, %v5668
    %v6457 = vpack.c.b16 %v5677, %v5673
    %v6458 = vpack.c.b16 %v5678, %v5674
    %v6459 = vpack.c.b16 %v5679, %v5675
    %v6460 = vpack.c.b16 %v5680, %v5676
    %v6461 = vpack.c.b16 %v5685, %v5681
    %v6462 = vpack.c.b16 %v5686, %v5682
    %v6463 = vpack.c.b16 %v5687, %v5683
    %v6464 = vpack.c.b16 %v5688, %v5684
    %v6465 = vpack.c.b16 %v5693, %v5689
    %v6466 = vpack.c.b16 %v5694, %v5690
    %v6467 = vpack.c.b16 %v5695, %v5691
    %v6468 = vpack.c.b16 %v5696, %v5692
    %v6469 = vpack.c.b16 %v5701, %v5697
    %v6470 = vpack.c.b16 %v5702, %v5698
    %v6471 = vpack.c.b16 %v5703, %v5699
    %v6472 = vpack.c.b16 %v5704, %v5700
    %v6473 = vpack.c.b16 %v5709, %v5705
    %v6474 = vpack.c.b16 %v5710, %v5706
    %v6475 = vpack.c.b16 %v5711, %v5707
    %v6476 = vpack.c.b16 %v5712, %v5708
    %v6477 = vpack.c.b16 %v5717, %v5713
    %v6478 = vpack.c.b16 %v5718, %v5714
    %v6479 = vpack.c.b16 %v5719, %v5715
    %v6480 = vpack.c.b16 %v5720, %v5716
    %v6481 = vpack.c.b16 %v5725, %v5721
    %v6482 = vpack.c.b16 %v5726, %v5722
    %v6483 = vpack.c.b16 %v5727, %v5723
    %v6484 = vpack.c.b16 %v5728, %v5724
    %v6485 = vpack.c.b16 %v5733, %v5729
    %v6486 = vpack.c.b16 %v5734, %v5730
    %v6487 = vpack.c.b16 %v5735, %v5731
    %v6488 = vpack.c.b16 %v5736, %v5732
    %v6489 = vpack.c.b16 %v5741, %v5737
    %v6490 = vpack.c.b16 %v5742, %v5738
    %v6491 = vpack.c.b16 %v5743, %v5739
    %v6492 = vpack.c.b16 %v5744, %v5740
    %v6493 = vpack.c.b16 %v5749, %v5745
    %v6494 = vpack.c.b16 %v5750, %v5746
    %v6495 = vpack.c.b16 %v5751, %v5747
    %v6496 = vpack.c.b16 %v5752, %v5748
    %v6497 = vpack.c.b16 %v5757, %v5753
    %v6498 = vpack.c.b16 %v5758, %v5754
    %v6499 = vpack.c.b16 %v5759, %v5755
    %v6500 = vpack.c.b16 %v5760, %v5756
    %v6501 = vpack.c.b16 %v5765, %v5761
    %v6502 = vpack.c.b16 %v5766, %v5762
    %v6503 = vpack.c.b16 %v5767, %v5763
    %v6504 = vpack.c.b16 %v5768, %v5764
    %v6505 = vpack.c.b16 %v5773, %v5769
    %v6506 = vpack.c.b16 %v5774, %v5770
    %v6507 = vpack.c.b16 %v5775, %v5771
    %v6508 = vpack.c.b16 %v5776, %v5772
    %v6509 = vpack.c.b16 %v5781, %v5777
    %v6510 = vpack.c.b16 %v5782, %v5778
    %v6511 = vpack.c.b16 %v5783, %v5779
    %v6512 = vpack.c.b16 %v5784, %v5780
    %v6513 = vpack.c.b16 %v5789, %v5785
    %v6514 = vpack.c.b16 %v5790, %v5786
    %v6515 = vpack.c.b16 %v5791, %v5787
    %v6516 = vpack.c.b16 %v5792, %v5788
    %v6517 = vpack.c.b16 %v5797, %v5793
    %v6518 = vpack.c.b16 %v5798, %v5794
    %v6519 = vpack.c.b16 %v5799, %v5795
    %v6520 = vpack.c.b16 %v5800, %v5796
    %v6521 = vpack.c.b16 %v5805, %v5801
    %v6522 = vpack.c.b16 %v5806, %v5802
    %v6523 = vpack.c.b16 %v5807, %v5803
    %v6524 = vpack.c.b16 %v5808, %v5804
    %v6525 = vpack.c.b16 %v5813, %v5809
    %v6526 = vpack.c.b16 %v5814, %v5810
    %v6527 = vpack.c.b16 %v5815, %v5811
    %v6528 = vpack.c.b16 %v5816, %v5812
    %v6529 = vpack.c.b16 %v5821, %v5817
    %v6530 = vpack.c.b16 %v5822, %v5818
    %v6531 = vpack.c.b16 %v5823, %v5819
    %v6532 = vpack.c.b16 %v5824, %v5820
    %v6533 = vpack.c.b16 %v5829, %v5825
    %v6534 = vpack.c.b16 %v5830, %v5826
    %v6535 = vpack.c.b16 %v5831, %v5827
    %v6536 = vpack.c.b16 %v5832, %v5828
    %v6537 = vpack.c.b16 %v5837, %v5833
    %v6538 = vpack.c.b16 %v5838, %v5834
    %v6539 = vpack.c.b16 %v5839, %v5835
    %v6540 = vpack.c.b16 %v5840, %v5836
    %v6541 = vpack.c.b16 %v5845, %v5841
    %v6542 = vpack.c.b16 %v5846, %v5842
    %v6543 = vpack.c.b16 %v5847, %v5843
    %v6544 = vpack.c.b16 %v5848, %v5844
    %v6545 = vpack.c.b16 %v5853, %v5849
    %v6546 = vpack.c.b16 %v5854, %v5850
    %v6547 = vpack.c.b16 %v5855, %v5851
    %v6548 = vpack.c.b16 %v5856, %v5852
    %v6549 = vpack.c.b16 %v5861, %v5857
    %v6550 = vpack.c.b16 %v5862, %v5858
    %v6551 = vpack.c.b16 %v5863, %v5859
    %v6552 = vpack.c.b16 %v5864, %v5860
    %v6553 = vpack.c.b16 %v5869, %v5865
    %v6554 = vpack.c.b16 %v5870, %v5866
    %v6555 = vpack.c.b16 %v5871, %v5867
    %v6556 = vpack.c.b16 %v5872, %v5868
    %v6557 = vpack.c.b16 %v5877, %v5873
    %v6558 = vpack.c.b16 %v5878, %v5874
    %v6559 = vpack.c.b16 %v5879, %v5875
    %v6560 = vpack.c.b16 %v5880, %v5876
    %v6561 = vpack.c.b16 %v5885, %v5881
    %v6562 = vpack.c.b16 %v5886, %v5882
    %v6563 = vpack.c.b16 %v5887, %v5883
    %v6564 = vpack.c.b16 %v5888, %v5884
    %v6565 = vpack.c.b16 %v5893, %v5889
    %v6566 = vpack.c.b16 %v5894, %v5890
    %v6567 = vpack.c.b16 %v5895, %v5891
    %v6568 = vpack.c.b16 %v5896, %v5892
    %v6569 = vpack.c.b16 %v5901, %v5897
    %v6570 = vpack.c.b16 %v5902, %v5898
    %v6571 = vpack.c.b16 %v5903, %v5899
    %v6572 = vpack.c.b16 %v5904, %v5900
    %v6573 = vpack.c.b16 %v5909, %v5905
    %v6574 = vpack.c.b16 %v5910, %v5906
    %v6575 = vpack.c.b16 %v5911, %v5907
    %v6576 = vpack.c.b16 %v5912, %v5908
    %v6577 = vpack.c.b16 %v5917, %v5913
    %v6578 = vpack.c.b16 %v5918, %v5914
    %v6579 = vpack.c.b16 %v5919, %v5915
    %v6580 = vpack.c.b16 %v5920, %v5916
    %v6581 = vpack.c.b16 %v5925, %v5921
    %v6582 = vpack.c.b16 %v5926, %v5922
    %v6583 = vpack.c.b16 %v5927, %v5923
    %v6584 = vpack.c.b16 %v5928, %v5924
    %v6585 = vpack.c.b16 %v5933, %v5929
    %v6586 = vpack.c.b16 %v5934, %v5930
    %v6587 = vpack.c.b16 %v5935, %v5931
    %v6588 = vpack.c.b16 %v5936, %v5932
    %v6589 = vpack.c.b16 %v5941, %v5937
    %v6590 = vpack.c.b16 %v5942, %v5938
    %v6591 = vpack.c.b16 %v5943, %v5939
    %v6592 = vpack.c.b16 %v5944, %v5940
    %v6593 = vpack.c.b16 %v5949, %v5945
    %v6594 = vpack.c.b16 %v5950, %v5946
    %v6595 = vpack.c.b16 %v5951, %v5947
    %v6596 = vpack.c.b16 %v5952, %v5948
    %v6597 = vpack.c.b16 %v5957, %v5953
    %v6598 = vpack.c.b16 %v5958, %v5954
    %v6599 = vpack.c.b16 %v5959, %v5955
    %v6600 = vpack.c.b16 %v5960, %v5956
    %v6601 = vpack.c.b16 %v5965, %v5961
    %v6602 = vpack.c.b16 %v5966, %v5962
    %v6603 = vpack.c.b16 %v5967, %v5963
    %v6604 = vpack.c.b16 %v5968, %v5964
    %v6605 = vpack.c.b16 %v5973, %v5969
    %v6606 = vpack.c.b16 %v5974, %v5970
    %v6607 = vpack.c.b16 %v5975, %v5971
    %v6608 = vpack.c.b16 %v5976, %v5972
    %v6609 = vpack.c.b16 %v5981, %v5977
    %v6610 = vpack.c.b16 %v5982, %v5978
    %v6611 = vpack.c.b16 %v5983, %v5979
    %v6612 = vpack.c.b16 %v5984, %v5980
    %v6613 = vpack.c.b16 %v5989, %v5985
    %v6614 = vpack.c.b16 %v5990, %v5986
    %v6615 = vpack.c.b16 %v5991, %v5987
    %v6616 = vpack.c.b16 %v5992, %v5988
    %v6617 = vpack.c.b16 %v5997, %v5993
    %v6618 = vpack.c.b16 %v5998, %v5994
    %v6619 = vpack.c.b16 %v5999, %v5995
    %v6620 = vpack.c.b16 %v6000, %v5996
    %v6621 = vpack.c.b16 %v6005, %v6001
    %v6622 = vpack.c.b16 %v6006, %v6002
    %v6623 = vpack.c.b16 %v6007, %v6003
    %v6624 = vpack.c.b16 %v6008, %v6004
    %v6625 = vpack.c.b16 %v6013, %v6009
    %v6626 = vpack.c.b16 %v6014, %v6010
    %v6627 = vpack.c.b16 %v6015, %v6011
    %v6628 = vpack.c.b16 %v6016, %v6012
    %v6629 = vpack.c.b16 %v6021, %v6017
    %v6630 = vpack.c.b16 %v6022, %v6018
    %v6631 = vpack.c.b16 %v6023, %v6019
    %v6632 = vpack.c.b16 %v6024, %v6020
    %v6633 = vpack.c.b16 %v6029, %v6025
    %v6634 = vpack.c.b16 %v6030, %v6026
    %v6635 = vpack.c.b16 %v6031, %v6027
    %v6636 = vpack.c.b16 %v6032, %v6028
    %v6637 = vpack.c.b16 %v6037, %v6033
    %v6638 = vpack.c.b16 %v6038, %v6034
    %v6639 = vpack.c.b16 %v6039, %v6035
    %v6640 = vpack.c.b16 %v6040, %v6036
    %v6641 = vpack.c.b16 %v6045, %v6041
    %v6642 = vpack.c.b16 %v6046, %v6042
    %v6643 = vpack.c.b16 %v6047, %v6043
    %v6644 = vpack.c.b16 %v6048, %v6044
    %v6645 = vpack.c.b16 %v6053, %v6049
    %v6646 = vpack.c.b16 %v6054, %v6050
    %v6647 = vpack.c.b16 %v6055, %v6051
    %v6648 = vpack.c.b16 %v6056, %v6052
    %v6649 = vpack.c.b16 %v6061, %v6057
    %v6650 = vpack.c.b16 %v6062, %v6058
    %v6651 = vpack.c.b16 %v6063, %v6059
    %v6652 = vpack.c.b16 %v6064, %v6060
    %v6653 = vpack.c.b16 %v6069, %v6065
    %v6654 = vpack.c.b16 %v6070, %v6066
    %v6655 = vpack.c.b16 %v6071, %v6067
    %v6656 = vpack.c.b16 %v6072, %v6068
    %v6657 = vpack.c.b16 %v6077, %v6073
    %v6658 = vpack.c.b16 %v6078, %v6074
    %v6659 = vpack.c.b16 %v6079, %v6075
    %v6660 = vpack.c.b16 %v6080, %v6076
    %v6661 = vpack.c.b16 %v6085, %v6081
    %v6662 = vpack.c.b16 %v6086, %v6082
    %v6663 = vpack.c.b16 %v6087, %v6083
    %v6664 = vpack.c.b16 %v6088, %v6084
    %v6665 = vpack.c.b16 %v6093, %v6089
    %v6666 = vpack.c.b16 %v6094, %v6090
    %v6667 = vpack.c.b16 %v6095, %v6091
    %v6668 = vpack.c.b16 %v6096, %v6092
    %v6669 = vpack.c.b16 %v6101, %v6097
    %v6670 = vpack.c.b16 %v6102, %v6098
    %v6671 = vpack.c.b16 %v6103, %v6099
    %v6672 = vpack.c.b16 %v6104, %v6100
    %v6673 = vpack.c.b16 %v6109, %v6105
    %v6674 = vpack.c.b16 %v6110, %v6106
    %v6675 = vpack.c.b16 %v6111, %v6107
    %v6676 = vpack.c.b16 %v6112, %v6108
    %v6677 = vpack.c.b16 %v6117, %v6113
    %v6678 = vpack.c.b16 %v6118, %v6114
    %v6679 = vpack.c.b16 %v6119, %v6115
    %v6680 = vpack.c.b16 %v6120, %v6116
    %v6681 = vpack.c.b16 %v6125, %v6121
    %v6682 = vpack.c.b16 %v6126, %v6122
    %v6683 = vpack.c.b16 %v6127, %v6123
    %v6684 = vpack.c.b16 %v6128, %v6124
    %v6685 = vpack.c.b16 %v6133, %v6129
    %v6686 = vpack.c.b16 %v6134, %v6130
    %v6687 = vpack.c.b16 %v6135, %v6131
    %v6688 = vpack.c.b16 %v6136, %v6132
    %v6689 = vpack.c.b16 %v6141, %v6137
    %v6690 = vpack.c.b16 %v6142, %v6138
    %v6691 = vpack.c.b16 %v6143, %v6139
    %v6692 = vpack.c.b16 %v6144, %v6140
    %v6693 = vpack.c.b16 %v6149, %v6145
    %v6694 = vpack.c.b16 %v6150, %v6146
    %v6695 = vpack.c.b16 %v6151, %v6147
    %v6696 = vpack.c.b16 %v6152, %v6148
    %v6697 = vpack.c.b16 %v6157, %v6153
    %v6698 = vpack.c.b16 %v6158, %v6154
    %v6699 = vpack.c.b16 %v6159, %v6155
    %v6700 = vpack.c.b16 %v6160, %v6156
    %v6701 = vpack.c.b16 %v6165, %v6161
    %v6702 = vpack.c.b16 %v6166, %v6162
    %v6703 = vpack.c.b16 %v6167, %v6163
    %v6704 = vpack.c.b16 %v6168, %v6164
    %v6705 = vpack.c.b16 %v6173, %v6169
    %v6706 = vpack.c.b16 %v6174, %v6170
    %v6707 = vpack.c.b16 %v6175, %v6171
    %v6708 = vpack.c.b16 %v6176, %v6172
    %v6709 = vpack.c.b16 %v6181, %v6177
    %v6710 = vpack.c.b16 %v6182, %v6178
    %v6711 = vpack.c.b16 %v6183, %v6179
    %v6712 = vpack.c.b16 %v6184, %v6180
    %v6713 = vpack.c.b16 %v6189, %v6185
    %v6714 = vpack.c.b16 %v6190, %v6186
    %v6715 = vpack.c.b16 %v6191, %v6187
    %v6716 = vpack.c.b16 %v6192, %v6188
    %v6717 = vpack.c.b16 %v6197, %v6193
    %v6718 = vpack.c.b16 %v6198, %v6194
    %v6719 = vpack.c.b16 %v6199, %v6195
    %v6720 = vpack.c.b16 %v6200, %v6196
    %v6721 = vpack.c.b16 %v6205, %v6201
    %v6722 = vpack.c.b16 %v6206, %v6202
    %v6723 = vpack.c.b16 %v6207, %v6203
    %v6724 = vpack.c.b16 %v6208, %v6204
    %v6725 = vpack.c.b16 %v6213, %v6209
    %v6726 = vpack.c.b16 %v6214, %v6210
    %v6727 = vpack.c.b16 %v6215, %v6211
    %v6728 = vpack.c.b16 %v6216, %v6212
    %7241 = vmatpush.bf16.msra.mxu0 %v6245
    %7242 = vmatpush.bf16.msra.mxu0 %v6241
    %7243 = vmatpush.bf16.msra.mxu0 %v6237
    %7244 = vmatpush.bf16.msra.mxu0 %v6233
    %7245 = vmatpush.bf16.msra.mxu0 %v6229
    %7246 = vmatpush.bf16.msra.mxu0 %v6225
    %7247 = vmatpush.bf16.msra.mxu0 %v6221
    %7248 = vmatpush.bf16.msra.mxu0 %v6217
    %7249 = vmatmul.bf16.gmra.mxu0 %v4143
    %v7250 = vpop.f32.mrf.mxu0
    %v7251 = vadd.f32 %v4673, %v7250
    %v7252 = vpop.f32.mrf.mxu0
    %v7253 = vadd.f32 %v4673, %v7252
    %7254 = vdwg.mxu0
    %7255 = vmatpush.bf16.msra.mxu0 %v6277
    %7256 = vmatpush.bf16.msra.mxu0 %v6273
    %7257 = vmatpush.bf16.msra.mxu0 %v6269
    %7258 = vmatpush.bf16.msra.mxu0 %v6265
    %7259 = vmatpush.bf16.msra.mxu0 %v6261
    %7260 = vmatpush.bf16.msra.mxu0 %v6257
    %7261 = vmatpush.bf16.msra.mxu0 %v6253
    %7262 = vmatpush.bf16.msra.mxu0 %v6249
    %7263 = vmatmul.bf16.gmra.mxu0 %v4144
    %v7264 = vpop.f32.mrf.mxu0
    %v7265 = vadd.f32 %v7251, %v7264
    %v7266 = vpop.f32.mrf.mxu0
    %v7267 = vadd.f32 %v7253, %v7266
    %7268 = vdwg.mxu0
    %7269 = vmatpush.bf16.msra.mxu0 %v6309
    %7270 = vmatpush.bf16.msra.mxu0 %v6305
    %7271 = vmatpush.bf16.msra.mxu0 %v6301
    %7272 = vmatpush.bf16.msra.mxu0 %v6297
    %7273 = vmatpush.bf16.msra.mxu0 %v6293
    %7274 = vmatpush.bf16.msra.mxu0 %v6289
    %7275 = vmatpush.bf16.msra.mxu0 %v6285
    %7276 = vmatpush.bf16.msra.mxu0 %v6281
    %7277 = vmatmul.bf16.gmra.mxu0 %v4145
    %v7278 = vpop.f32.mrf.mxu0
    %v7279 = vadd.f32 %v7265, %v7278
    %v7280 = vpop.f32.mrf.mxu0
    %v7281 = vadd.f32 %v7267, %v7280
    %7282 = vdwg.mxu0
    %7283 = vmatpush.bf16.msra.mxu0 %v6341
    %7284 = vmatpush.bf16.msra.mxu0 %v6337
    %7285 = vmatpush.bf16.msra.mxu0 %v6333
    %7286 = vmatpush.bf16.msra.mxu0 %v6329
    %7287 = vmatpush.bf16.msra.mxu0 %v6325
    %7288 = vmatpush.bf16.msra.mxu0 %v6321
    %7289 = vmatpush.bf16.msra.mxu0 %v6317
    %7290 = vmatpush.bf16.msra.mxu0 %v6313
    %7291 = vmatmul.bf16.gmra.mxu0 %v4146
    %v7292 = vpop.f32.mrf.mxu0
    %v7293 = vadd.f32 %v7279, %v7292
    %v7294 = vpop.f32.mrf.mxu0
    %v7295 = vadd.f32 %v7281, %v7294
    %7296 = vdwg.mxu0
    %7297 = vmatpush.bf16.msra.mxu0 %v6373
    %7298 = vmatpush.bf16.msra.mxu0 %v6369
    %7299 = vmatpush.bf16.msra.mxu0 %v6365
    %7300 = vmatpush.bf16.msra.mxu0 %v6361
    %7301 = vmatpush.bf16.msra.mxu0 %v6357
    %7302 = vmatpush.bf16.msra.mxu0 %v6353
    %7303 = vmatpush.bf16.msra.mxu0 %v6349
    %7304 = vmatpush.bf16.msra.mxu0 %v6345
    %7305 = vmatmul.bf16.gmra.mxu0 %v4147
    %v7306 = vpop.f32.mrf.mxu0
    %v7307 = vadd.f32 %v7293, %v7306
    %v7308 = vpop.f32.mrf.mxu0
    %v7309 = vadd.f32 %v7295, %v7308
    %7310 = vdwg.mxu0
    %7311 = vmatpush.bf16.msra.mxu0 %v6405
    %7312 = vmatpush.bf16.msra.mxu0 %v6401
    %7313 = vmatpush.bf16.msra.mxu0 %v6397
    %7314 = vmatpush.bf16.msra.mxu0 %v6393
    %7315 = vmatpush.bf16.msra.mxu0 %v6389
    %7316 = vmatpush.bf16.msra.mxu0 %v6385
    %7317 = vmatpush.bf16.msra.mxu0 %v6381
    %7318 = vmatpush.bf16.msra.mxu0 %v6377
    %7319 = vmatmul.bf16.gmra.mxu0 %v4148
    %v7320 = vpop.f32.mrf.mxu0
    %v7321 = vadd.f32 %v7307, %v7320
    %v7322 = vpop.f32.mrf.mxu0
    %v7323 = vadd.f32 %v7309, %v7322
    %7324 = vdwg.mxu0
    %7325 = vmatpush.bf16.msra.mxu0 %v6437
    %7326 = vmatpush.bf16.msra.mxu0 %v6433
    %7327 = vmatpush.bf16.msra.mxu0 %v6429
    %7328 = vmatpush.bf16.msra.mxu0 %v6425
    %7329 = vmatpush.bf16.msra.mxu0 %v6421
    %7330 = vmatpush.bf16.msra.mxu0 %v6417
    %7331 = vmatpush.bf16.msra.mxu0 %v6413
    %7332 = vmatpush.bf16.msra.mxu0 %v6409
    %7333 = vmatmul.bf16.gmra.mxu0 %v4149
    %v7334 = vpop.f32.mrf.mxu0
    %v7335 = vadd.f32 %v7321, %v7334
    %v7336 = vpop.f32.mrf.mxu0
    %v7337 = vadd.f32 %v7323, %v7336
    %7338 = vdwg.mxu0
    %7339 = vmatpush.bf16.msra.mxu0 %v6469
    %7340 = vmatpush.bf16.msra.mxu0 %v6465
    %7341 = vmatpush.bf16.msra.mxu0 %v6461
    %7342 = vmatpush.bf16.msra.mxu0 %v6457
    %7343 = vmatpush.bf16.msra.mxu0 %v6453
    %7344 = vmatpush.bf16.msra.mxu0 %v6449
    %7345 = vmatpush.bf16.msra.mxu0 %v6445
    %7346 = vmatpush.bf16.msra.mxu0 %v6441
    %7347 = vmatmul.bf16.gmra.mxu0 %v4150
    %v7348 = vpop.f32.mrf.mxu0
    %v7349 = vadd.f32 %v7335, %v7348
    %v7350 = vpop.f32.mrf.mxu0
    %v7351 = vadd.f32 %v7337, %v7350
    %7352 = vdwg.mxu0
    %7353 = vmatpush.bf16.msra.mxu0 %v6501
    %7354 = vmatpush.bf16.msra.mxu0 %v6497
    %7355 = vmatpush.bf16.msra.mxu0 %v6493
    %7356 = vmatpush.bf16.msra.mxu0 %v6489
    %7357 = vmatpush.bf16.msra.mxu0 %v6485
    %7358 = vmatpush.bf16.msra.mxu0 %v6481
    %7359 = vmatpush.bf16.msra.mxu0 %v6477
    %7360 = vmatpush.bf16.msra.mxu0 %v6473
    %7361 = vmatmul.bf16.gmra.mxu0 %v4151
    %v7362 = vpop.f32.mrf.mxu0
    %v7363 = vadd.f32 %v7349, %v7362
    %v7364 = vpop.f32.mrf.mxu0
    %v7365 = vadd.f32 %v7351, %v7364
    %7366 = vdwg.mxu0
    %7367 = vmatpush.bf16.msra.mxu0 %v6533
    %7368 = vmatpush.bf16.msra.mxu0 %v6529
    %7369 = vmatpush.bf16.msra.mxu0 %v6525
    %7370 = vmatpush.bf16.msra.mxu0 %v6521
    %7371 = vmatpush.bf16.msra.mxu0 %v6517
    %7372 = vmatpush.bf16.msra.mxu0 %v6513
    %7373 = vmatpush.bf16.msra.mxu0 %v6509
    %7374 = vmatpush.bf16.msra.mxu0 %v6505
    %7375 = vmatmul.bf16.gmra.mxu0 %v4152
    %v7376 = vpop.f32.mrf.mxu0
    %v7377 = vadd.f32 %v7363, %v7376
    %v7378 = vpop.f32.mrf.mxu0
    %v7379 = vadd.f32 %v7365, %v7378
    %7380 = vdwg.mxu0
    %7381 = vmatpush.bf16.msra.mxu0 %v6565
    %7382 = vmatpush.bf16.msra.mxu0 %v6561
    %7383 = vmatpush.bf16.msra.mxu0 %v6557
    %7384 = vmatpush.bf16.msra.mxu0 %v6553
    %7385 = vmatpush.bf16.msra.mxu0 %v6549
    %7386 = vmatpush.bf16.msra.mxu0 %v6545
    %7387 = vmatpush.bf16.msra.mxu0 %v6541
    %7388 = vmatpush.bf16.msra.mxu0 %v6537
    %7389 = vmatmul.bf16.gmra.mxu0 %v4153
    %v7390 = vpop.f32.mrf.mxu0
    %v7391 = vadd.f32 %v7377, %v7390
    %v7392 = vpop.f32.mrf.mxu0
    %v7393 = vadd.f32 %v7379, %v7392
    %7394 = vdwg.mxu0
    %7395 = vmatpush.bf16.msra.mxu0 %v6597
    %7396 = vmatpush.bf16.msra.mxu0 %v6593
    %7397 = vmatpush.bf16.msra.mxu0 %v6589
    %7398 = vmatpush.bf16.msra.mxu0 %v6585
    %7399 = vmatpush.bf16.msra.mxu0 %v6581
    %7400 = vmatpush.bf16.msra.mxu0 %v6577
    %7401 = vmatpush.bf16.msra.mxu0 %v6573
    %7402 = vmatpush.bf16.msra.mxu0 %v6569
    %7403 = vmatmul.bf16.gmra.mxu0 %v4154
    %v7404 = vpop.f32.mrf.mxu0
    %v7405 = vadd.f32 %v7391, %v7404
    %v7406 = vpop.f32.mrf.mxu0
    %v7407 = vadd.f32 %v7393, %v7406
    %7408 = vdwg.mxu0
    %7409 = vmatpush.bf16.msra.mxu0 %v6629
    %7410 = vmatpush.bf16.msra.mxu0 %v6625
    %7411 = vmatpush.bf16.msra.mxu0 %v6621
    %7412 = vmatpush.bf16.msra.mxu0 %v6617
    %7413 = vmatpush.bf16.msra.mxu0 %v6613
    %7414 = vmatpush.bf16.msra.mxu0 %v6609
    %7415 = vmatpush.bf16.msra.mxu0 %v6605
    %7416 = vmatpush.bf16.msra.mxu0 %v6601
    %7417 = vmatmul.bf16.gmra.mxu0 %v4155
    %v7418 = vpop.f32.mrf.mxu0
    %v7419 = vadd.f32 %v7405, %v7418
    %v7420 = vpop.f32.mrf.mxu0
    %v7421 = vadd.f32 %v7407, %v7420
    %7422 = vdwg.mxu0
    %7423 = vmatpush.bf16.msra.mxu0 %v6661
    %7424 = vmatpush.bf16.msra.mxu0 %v6657
    %7425 = vmatpush.bf16.msra.mxu0 %v6653
    %7426 = vmatpush.bf16.msra.mxu0 %v6649
    %7427 = vmatpush.bf16.msra.mxu0 %v6645
    %7428 = vmatpush.bf16.msra.mxu0 %v6641
    %7429 = vmatpush.bf16.msra.mxu0 %v6637
    %7430 = vmatpush.bf16.msra.mxu0 %v6633
    %7431 = vmatmul.bf16.gmra.mxu0 %v4156
    %v7432 = vpop.f32.mrf.mxu0
    %v7433 = vadd.f32 %v7419, %v7432
    %v7434 = vpop.f32.mrf.mxu0
    %v7435 = vadd.f32 %v7421, %v7434
    %7436 = vdwg.mxu0
    %7437 = vmatpush.bf16.msra.mxu0 %v6693
    %7438 = vmatpush.bf16.msra.mxu0 %v6689
    %7439 = vmatpush.bf16.msra.mxu0 %v6685
    %7440 = vmatpush.bf16.msra.mxu0 %v6681
    %7441 = vmatpush.bf16.msra.mxu0 %v6677
    %7442 = vmatpush.bf16.msra.mxu0 %v6673
    %7443 = vmatpush.bf16.msra.mxu0 %v6669
    %7444 = vmatpush.bf16.msra.mxu0 %v6665
    %7445 = vmatmul.bf16.gmra.mxu0 %v4157
    %v7446 = vpop.f32.mrf.mxu0
    %v7447 = vadd.f32 %v7433, %v7446
    %v7448 = vpop.f32.mrf.mxu0
    %v7449 = vadd.f32 %v7435, %v7448
    %7450 = vdwg.mxu0
    %7451 = vmatpush.bf16.msra.mxu0 %v6725
    %7452 = vmatpush.bf16.msra.mxu0 %v6721
    %7453 = vmatpush.bf16.msra.mxu0 %v6717
    %7454 = vmatpush.bf16.msra.mxu0 %v6713
    %7455 = vmatpush.bf16.msra.mxu0 %v6709
    %7456 = vmatpush.bf16.msra.mxu0 %v6705
    %7457 = vmatpush.bf16.msra.mxu0 %v6701
    %7458 = vmatpush.bf16.msra.mxu0 %v6697
    %7459 = vmatmul.bf16.gmra.mxu0 %v4158
    %v7460 = vpop.f32.mrf.mxu0
    %v7461 = vadd.f32 %v7447, %v7460
    %v7462 = vpop.f32.mrf.mxu0
    %v7463 = vadd.f32 %v7449, %v7462
    %7464 = vdwg.mxu0
    %7465 = vmatpush.bf16.msra.mxu0 %v6246
    %7466 = vmatpush.bf16.msra.mxu0 %v6242
    %7467 = vmatpush.bf16.msra.mxu0 %v6238
    %7468 = vmatpush.bf16.msra.mxu0 %v6234
    %7469 = vmatpush.bf16.msra.mxu0 %v6230
    %7470 = vmatpush.bf16.msra.mxu0 %v6226
    %7471 = vmatpush.bf16.msra.mxu0 %v6222
    %7472 = vmatpush.bf16.msra.mxu0 %v6218
    %7473 = vmatmul.bf16.gmra.mxu0 %v4143
    %v7474 = vpop.f32.mrf.mxu0
    %v7475 = vadd.f32 %v4674, %v7474
    %v7476 = vpop.f32.mrf.mxu0
    %v7477 = vadd.f32 %v4674, %v7476
    %7478 = vdwg.mxu0
    %7479 = vmatpush.bf16.msra.mxu0 %v6278
    %7480 = vmatpush.bf16.msra.mxu0 %v6274
    %7481 = vmatpush.bf16.msra.mxu0 %v6270
    %7482 = vmatpush.bf16.msra.mxu0 %v6266
    %7483 = vmatpush.bf16.msra.mxu0 %v6262
    %7484 = vmatpush.bf16.msra.mxu0 %v6258
    %7485 = vmatpush.bf16.msra.mxu0 %v6254
    %7486 = vmatpush.bf16.msra.mxu0 %v6250
    %7487 = vmatmul.bf16.gmra.mxu0 %v4144
    %v7488 = vpop.f32.mrf.mxu0
    %v7489 = vadd.f32 %v7475, %v7488
    %v7490 = vpop.f32.mrf.mxu0
    %v7491 = vadd.f32 %v7477, %v7490
    %7492 = vdwg.mxu0
    %7493 = vmatpush.bf16.msra.mxu0 %v6310
    %7494 = vmatpush.bf16.msra.mxu0 %v6306
    %7495 = vmatpush.bf16.msra.mxu0 %v6302
    %7496 = vmatpush.bf16.msra.mxu0 %v6298
    %7497 = vmatpush.bf16.msra.mxu0 %v6294
    %7498 = vmatpush.bf16.msra.mxu0 %v6290
    %7499 = vmatpush.bf16.msra.mxu0 %v6286
    %7500 = vmatpush.bf16.msra.mxu0 %v6282
    %7501 = vmatmul.bf16.gmra.mxu0 %v4145
    %v7502 = vpop.f32.mrf.mxu0
    %v7503 = vadd.f32 %v7489, %v7502
    %v7504 = vpop.f32.mrf.mxu0
    %v7505 = vadd.f32 %v7491, %v7504
    %7506 = vdwg.mxu0
    %7507 = vmatpush.bf16.msra.mxu0 %v6342
    %7508 = vmatpush.bf16.msra.mxu0 %v6338
    %7509 = vmatpush.bf16.msra.mxu0 %v6334
    %7510 = vmatpush.bf16.msra.mxu0 %v6330
    %7511 = vmatpush.bf16.msra.mxu0 %v6326
    %7512 = vmatpush.bf16.msra.mxu0 %v6322
    %7513 = vmatpush.bf16.msra.mxu0 %v6318
    %7514 = vmatpush.bf16.msra.mxu0 %v6314
    %7515 = vmatmul.bf16.gmra.mxu0 %v4146
    %v7516 = vpop.f32.mrf.mxu0
    %v7517 = vadd.f32 %v7503, %v7516
    %v7518 = vpop.f32.mrf.mxu0
    %v7519 = vadd.f32 %v7505, %v7518
    %7520 = vdwg.mxu0
    %7521 = vmatpush.bf16.msra.mxu0 %v6374
    %7522 = vmatpush.bf16.msra.mxu0 %v6370
    %7523 = vmatpush.bf16.msra.mxu0 %v6366
    %7524 = vmatpush.bf16.msra.mxu0 %v6362
    %7525 = vmatpush.bf16.msra.mxu0 %v6358
    %7526 = vmatpush.bf16.msra.mxu0 %v6354
    %7527 = vmatpush.bf16.msra.mxu0 %v6350
    %7528 = vmatpush.bf16.msra.mxu0 %v6346
    %7529 = vmatmul.bf16.gmra.mxu0 %v4147
    %v7530 = vpop.f32.mrf.mxu0
    %v7531 = vadd.f32 %v7517, %v7530
    %v7532 = vpop.f32.mrf.mxu0
    %v7533 = vadd.f32 %v7519, %v7532
    %7534 = vdwg.mxu0
    %7535 = vmatpush.bf16.msra.mxu0 %v6406
    %7536 = vmatpush.bf16.msra.mxu0 %v6402
    %7537 = vmatpush.bf16.msra.mxu0 %v6398
    %7538 = vmatpush.bf16.msra.mxu0 %v6394
    %7539 = vmatpush.bf16.msra.mxu0 %v6390
    %7540 = vmatpush.bf16.msra.mxu0 %v6386
    %7541 = vmatpush.bf16.msra.mxu0 %v6382
    %7542 = vmatpush.bf16.msra.mxu0 %v6378
    %7543 = vmatmul.bf16.gmra.mxu0 %v4148
    %v7544 = vpop.f32.mrf.mxu0
    %v7545 = vadd.f32 %v7531, %v7544
    %v7546 = vpop.f32.mrf.mxu0
    %v7547 = vadd.f32 %v7533, %v7546
    %7548 = vdwg.mxu0
    %7549 = vmatpush.bf16.msra.mxu0 %v6438
    %7550 = vmatpush.bf16.msra.mxu0 %v6434
    %7551 = vmatpush.bf16.msra.mxu0 %v6430
    %7552 = vmatpush.bf16.msra.mxu0 %v6426
    %7553 = vmatpush.bf16.msra.mxu0 %v6422
    %7554 = vmatpush.bf16.msra.mxu0 %v6418
    %7555 = vmatpush.bf16.msra.mxu0 %v6414
    %7556 = vmatpush.bf16.msra.mxu0 %v6410
    %7557 = vmatmul.bf16.gmra.mxu0 %v4149
    %v7558 = vpop.f32.mrf.mxu0
    %v7559 = vadd.f32 %v7545, %v7558
    %v7560 = vpop.f32.mrf.mxu0
    %v7561 = vadd.f32 %v7547, %v7560
    %7562 = vdwg.mxu0
    %7563 = vmatpush.bf16.msra.mxu0 %v6470
    %7564 = vmatpush.bf16.msra.mxu0 %v6466
    %7565 = vmatpush.bf16.msra.mxu0 %v6462
    %7566 = vmatpush.bf16.msra.mxu0 %v6458
    %7567 = vmatpush.bf16.msra.mxu0 %v6454
    %7568 = vmatpush.bf16.msra.mxu0 %v6450
    %7569 = vmatpush.bf16.msra.mxu0 %v6446
    %7570 = vmatpush.bf16.msra.mxu0 %v6442
    %7571 = vmatmul.bf16.gmra.mxu0 %v4150
    %v7572 = vpop.f32.mrf.mxu0
    %v7573 = vadd.f32 %v7559, %v7572
    %v7574 = vpop.f32.mrf.mxu0
    %v7575 = vadd.f32 %v7561, %v7574
    %7576 = vdwg.mxu0
    %7577 = vmatpush.bf16.msra.mxu0 %v6502
    %7578 = vmatpush.bf16.msra.mxu0 %v6498
    %7579 = vmatpush.bf16.msra.mxu0 %v6494
    %7580 = vmatpush.bf16.msra.mxu0 %v6490
    %7581 = vmatpush.bf16.msra.mxu0 %v6486
    %7582 = vmatpush.bf16.msra.mxu0 %v6482
    %7583 = vmatpush.bf16.msra.mxu0 %v6478
    %7584 = vmatpush.bf16.msra.mxu0 %v6474
    %7585 = vmatmul.bf16.gmra.mxu0 %v4151
    %v7586 = vpop.f32.mrf.mxu0
    %v7587 = vadd.f32 %v7573, %v7586
    %v7588 = vpop.f32.mrf.mxu0
    %v7589 = vadd.f32 %v7575, %v7588
    %7590 = vdwg.mxu0
    %7591 = vmatpush.bf16.msra.mxu0 %v6534
    %7592 = vmatpush.bf16.msra.mxu0 %v6530
    %7593 = vmatpush.bf16.msra.mxu0 %v6526
    %7594 = vmatpush.bf16.msra.mxu0 %v6522
    %7595 = vmatpush.bf16.msra.mxu0 %v6518
    %7596 = vmatpush.bf16.msra.mxu0 %v6514
    %7597 = vmatpush.bf16.msra.mxu0 %v6510
    %7598 = vmatpush.bf16.msra.mxu0 %v6506
    %7599 = vmatmul.bf16.gmra.mxu0 %v4152
    %v7600 = vpop.f32.mrf.mxu0
    %v7601 = vadd.f32 %v7587, %v7600
    %v7602 = vpop.f32.mrf.mxu0
    %v7603 = vadd.f32 %v7589, %v7602
    %7604 = vdwg.mxu0
    %7605 = vmatpush.bf16.msra.mxu0 %v6566
    %7606 = vmatpush.bf16.msra.mxu0 %v6562
    %7607 = vmatpush.bf16.msra.mxu0 %v6558
    %7608 = vmatpush.bf16.msra.mxu0 %v6554
    %7609 = vmatpush.bf16.msra.mxu0 %v6550
    %7610 = vmatpush.bf16.msra.mxu0 %v6546
    %7611 = vmatpush.bf16.msra.mxu0 %v6542
    %7612 = vmatpush.bf16.msra.mxu0 %v6538
    %7613 = vmatmul.bf16.gmra.mxu0 %v4153
    %v7614 = vpop.f32.mrf.mxu0
    %v7615 = vadd.f32 %v7601, %v7614
    %v7616 = vpop.f32.mrf.mxu0
    %v7617 = vadd.f32 %v7603, %v7616
    %7618 = vdwg.mxu0
    %7619 = vmatpush.bf16.msra.mxu0 %v6598
    %7620 = vmatpush.bf16.msra.mxu0 %v6594
    %7621 = vmatpush.bf16.msra.mxu0 %v6590
    %7622 = vmatpush.bf16.msra.mxu0 %v6586
    %7623 = vmatpush.bf16.msra.mxu0 %v6582
    %7624 = vmatpush.bf16.msra.mxu0 %v6578
    %7625 = vmatpush.bf16.msra.mxu0 %v6574
    %7626 = vmatpush.bf16.msra.mxu0 %v6570
    %7627 = vmatmul.bf16.gmra.mxu0 %v4154
    %v7628 = vpop.f32.mrf.mxu0
    %v7629 = vadd.f32 %v7615, %v7628
    %v7630 = vpop.f32.mrf.mxu0
    %v7631 = vadd.f32 %v7617, %v7630
    %7632 = vdwg.mxu0
    %7633 = vmatpush.bf16.msra.mxu0 %v6630
    %7634 = vmatpush.bf16.msra.mxu0 %v6626
    %7635 = vmatpush.bf16.msra.mxu0 %v6622
    %7636 = vmatpush.bf16.msra.mxu0 %v6618
    %7637 = vmatpush.bf16.msra.mxu0 %v6614
    %7638 = vmatpush.bf16.msra.mxu0 %v6610
    %7639 = vmatpush.bf16.msra.mxu0 %v6606
    %7640 = vmatpush.bf16.msra.mxu0 %v6602
    %7641 = vmatmul.bf16.gmra.mxu0 %v4155
    %v7642 = vpop.f32.mrf.mxu0
    %v7643 = vadd.f32 %v7629, %v7642
    %v7644 = vpop.f32.mrf.mxu0
    %v7645 = vadd.f32 %v7631, %v7644
    %7646 = vdwg.mxu0
    %7647 = vmatpush.bf16.msra.mxu0 %v6662
    %7648 = vmatpush.bf16.msra.mxu0 %v6658
    %7649 = vmatpush.bf16.msra.mxu0 %v6654
    %7650 = vmatpush.bf16.msra.mxu0 %v6650
    %7651 = vmatpush.bf16.msra.mxu0 %v6646
    %7652 = vmatpush.bf16.msra.mxu0 %v6642
    %7653 = vmatpush.bf16.msra.mxu0 %v6638
    %7654 = vmatpush.bf16.msra.mxu0 %v6634
    %7655 = vmatmul.bf16.gmra.mxu0 %v4156
    %v7656 = vpop.f32.mrf.mxu0
    %v7657 = vadd.f32 %v7643, %v7656
    %v7658 = vpop.f32.mrf.mxu0
    %v7659 = vadd.f32 %v7645, %v7658
    %7660 = vdwg.mxu0
    %7661 = vmatpush.bf16.msra.mxu0 %v6694
    %7662 = vmatpush.bf16.msra.mxu0 %v6690
    %7663 = vmatpush.bf16.msra.mxu0 %v6686
    %7664 = vmatpush.bf16.msra.mxu0 %v6682
    %7665 = vmatpush.bf16.msra.mxu0 %v6678
    %7666 = vmatpush.bf16.msra.mxu0 %v6674
    %7667 = vmatpush.bf16.msra.mxu0 %v6670
    %7668 = vmatpush.bf16.msra.mxu0 %v6666
    %7669 = vmatmul.bf16.gmra.mxu0 %v4157
    %v7670 = vpop.f32.mrf.mxu0
    %v7671 = vadd.f32 %v7657, %v7670
    %v7672 = vpop.f32.mrf.mxu0
    %v7673 = vadd.f32 %v7659, %v7672
    %7674 = vdwg.mxu0
    %7675 = vmatpush.bf16.msra.mxu0 %v6726
    %7676 = vmatpush.bf16.msra.mxu0 %v6722
    %7677 = vmatpush.bf16.msra.mxu0 %v6718
    %7678 = vmatpush.bf16.msra.mxu0 %v6714
    %7679 = vmatpush.bf16.msra.mxu0 %v6710
    %7680 = vmatpush.bf16.msra.mxu0 %v6706
    %7681 = vmatpush.bf16.msra.mxu0 %v6702
    %7682 = vmatpush.bf16.msra.mxu0 %v6698
    %7683 = vmatmul.bf16.gmra.mxu0 %v4158
    %v7684 = vpop.f32.mrf.mxu0
    %v7685 = vadd.f32 %v7671, %v7684
    %v7686 = vpop.f32.mrf.mxu0
    %v7687 = vadd.f32 %v7673, %v7686
    %7688 = vdwg.mxu0
    %7689 = vmatpush.bf16.msra.mxu0 %v6247
    %7690 = vmatpush.bf16.msra.mxu0 %v6243
    %7691 = vmatpush.bf16.msra.mxu0 %v6239
    %7692 = vmatpush.bf16.msra.mxu0 %v6235
    %7693 = vmatpush.bf16.msra.mxu0 %v6231
    %7694 = vmatpush.bf16.msra.mxu0 %v6227
    %7695 = vmatpush.bf16.msra.mxu0 %v6223
    %7696 = vmatpush.bf16.msra.mxu0 %v6219
    %7697 = vmatmul.bf16.gmra.mxu0 %v4143
    %v7698 = vpop.f32.mrf.mxu0
    %v7699 = vadd.f32 %v4675, %v7698
    %v7700 = vpop.f32.mrf.mxu0
    %v7701 = vadd.f32 %v4675, %v7700
    %7702 = vdwg.mxu0
    %7703 = vmatpush.bf16.msra.mxu0 %v6279
    %7704 = vmatpush.bf16.msra.mxu0 %v6275
    %7705 = vmatpush.bf16.msra.mxu0 %v6271
    %7706 = vmatpush.bf16.msra.mxu0 %v6267
    %7707 = vmatpush.bf16.msra.mxu0 %v6263
    %7708 = vmatpush.bf16.msra.mxu0 %v6259
    %7709 = vmatpush.bf16.msra.mxu0 %v6255
    %7710 = vmatpush.bf16.msra.mxu0 %v6251
    %7711 = vmatmul.bf16.gmra.mxu0 %v4144
    %v7712 = vpop.f32.mrf.mxu0
    %v7713 = vadd.f32 %v7699, %v7712
    %v7714 = vpop.f32.mrf.mxu0
    %v7715 = vadd.f32 %v7701, %v7714
    %7716 = vdwg.mxu0
    %7717 = vmatpush.bf16.msra.mxu0 %v6311
    %7718 = vmatpush.bf16.msra.mxu0 %v6307
    %7719 = vmatpush.bf16.msra.mxu0 %v6303
    %7720 = vmatpush.bf16.msra.mxu0 %v6299
    %7721 = vmatpush.bf16.msra.mxu0 %v6295
    %7722 = vmatpush.bf16.msra.mxu0 %v6291
    %7723 = vmatpush.bf16.msra.mxu0 %v6287
    %7724 = vmatpush.bf16.msra.mxu0 %v6283
    %7725 = vmatmul.bf16.gmra.mxu0 %v4145
    %v7726 = vpop.f32.mrf.mxu0
    %v7727 = vadd.f32 %v7713, %v7726
    %v7728 = vpop.f32.mrf.mxu0
    %v7729 = vadd.f32 %v7715, %v7728
    %7730 = vdwg.mxu0
    %7731 = vmatpush.bf16.msra.mxu0 %v6343
    %7732 = vmatpush.bf16.msra.mxu0 %v6339
    %7733 = vmatpush.bf16.msra.mxu0 %v6335
    %7734 = vmatpush.bf16.msra.mxu0 %v6331
    %7735 = vmatpush.bf16.msra.mxu0 %v6327
    %7736 = vmatpush.bf16.msra.mxu0 %v6323
    %7737 = vmatpush.bf16.msra.mxu0 %v6319
    %7738 = vmatpush.bf16.msra.mxu0 %v6315
    %7739 = vmatmul.bf16.gmra.mxu0 %v4146
    %v7740 = vpop.f32.mrf.mxu0
    %v7741 = vadd.f32 %v7727, %v7740
    %v7742 = vpop.f32.mrf.mxu0
    %v7743 = vadd.f32 %v7729, %v7742
    %7744 = vdwg.mxu0
    %7745 = vmatpush.bf16.msra.mxu0 %v6375
    %7746 = vmatpush.bf16.msra.mxu0 %v6371
    %7747 = vmatpush.bf16.msra.mxu0 %v6367
    %7748 = vmatpush.bf16.msra.mxu0 %v6363
    %7749 = vmatpush.bf16.msra.mxu0 %v6359
    %7750 = vmatpush.bf16.msra.mxu0 %v6355
    %7751 = vmatpush.bf16.msra.mxu0 %v6351
    %7752 = vmatpush.bf16.msra.mxu0 %v6347
    %7753 = vmatmul.bf16.gmra.mxu0 %v4147
    %v7754 = vpop.f32.mrf.mxu0
    %v7755 = vadd.f32 %v7741, %v7754
    %v7756 = vpop.f32.mrf.mxu0
    %v7757 = vadd.f32 %v7743, %v7756
    %7758 = vdwg.mxu0
    %7759 = vmatpush.bf16.msra.mxu0 %v6407
    %7760 = vmatpush.bf16.msra.mxu0 %v6403
    %7761 = vmatpush.bf16.msra.mxu0 %v6399
    %7762 = vmatpush.bf16.msra.mxu0 %v6395
    %7763 = vmatpush.bf16.msra.mxu0 %v6391
    %7764 = vmatpush.bf16.msra.mxu0 %v6387
    %7765 = vmatpush.bf16.msra.mxu0 %v6383
    %7766 = vmatpush.bf16.msra.mxu0 %v6379
    %7767 = vmatmul.bf16.gmra.mxu0 %v4148
    %v7768 = vpop.f32.mrf.mxu0
    %v7769 = vadd.f32 %v7755, %v7768
    %v7770 = vpop.f32.mrf.mxu0
    %v7771 = vadd.f32 %v7757, %v7770
    %7772 = vdwg.mxu0
    %7773 = vmatpush.bf16.msra.mxu0 %v6439
    %7774 = vmatpush.bf16.msra.mxu0 %v6435
    %7775 = vmatpush.bf16.msra.mxu0 %v6431
    %7776 = vmatpush.bf16.msra.mxu0 %v6427
    %7777 = vmatpush.bf16.msra.mxu0 %v6423
    %7778 = vmatpush.bf16.msra.mxu0 %v6419
    %7779 = vmatpush.bf16.msra.mxu0 %v6415
    %7780 = vmatpush.bf16.msra.mxu0 %v6411
    %7781 = vmatmul.bf16.gmra.mxu0 %v4149
    %v7782 = vpop.f32.mrf.mxu0
    %v7783 = vadd.f32 %v7769, %v7782
    %v7784 = vpop.f32.mrf.mxu0
    %v7785 = vadd.f32 %v7771, %v7784
    %7786 = vdwg.mxu0
    %7787 = vmatpush.bf16.msra.mxu0 %v6471
    %7788 = vmatpush.bf16.msra.mxu0 %v6467
    %7789 = vmatpush.bf16.msra.mxu0 %v6463
    %7790 = vmatpush.bf16.msra.mxu0 %v6459
    %7791 = vmatpush.bf16.msra.mxu0 %v6455
    %7792 = vmatpush.bf16.msra.mxu0 %v6451
    %7793 = vmatpush.bf16.msra.mxu0 %v6447
    %7794 = vmatpush.bf16.msra.mxu0 %v6443
    %7795 = vmatmul.bf16.gmra.mxu0 %v4150
    %v7796 = vpop.f32.mrf.mxu0
    %v7797 = vadd.f32 %v7783, %v7796
    %v7798 = vpop.f32.mrf.mxu0
    %v7799 = vadd.f32 %v7785, %v7798
    %7800 = vdwg.mxu0
    %7801 = vmatpush.bf16.msra.mxu0 %v6503
    %7802 = vmatpush.bf16.msra.mxu0 %v6499
    %7803 = vmatpush.bf16.msra.mxu0 %v6495
    %7804 = vmatpush.bf16.msra.mxu0 %v6491
    %7805 = vmatpush.bf16.msra.mxu0 %v6487
    %7806 = vmatpush.bf16.msra.mxu0 %v6483
    %7807 = vmatpush.bf16.msra.mxu0 %v6479
    %7808 = vmatpush.bf16.msra.mxu0 %v6475
    %7809 = vmatmul.bf16.gmra.mxu0 %v4151
    %v7810 = vpop.f32.mrf.mxu0
    %v7811 = vadd.f32 %v7797, %v7810
    %v7812 = vpop.f32.mrf.mxu0
    %v7813 = vadd.f32 %v7799, %v7812
    %7814 = vdwg.mxu0
    %7815 = vmatpush.bf16.msra.mxu0 %v6535
    %7816 = vmatpush.bf16.msra.mxu0 %v6531
    %7817 = vmatpush.bf16.msra.mxu0 %v6527
    %7818 = vmatpush.bf16.msra.mxu0 %v6523
    %7819 = vmatpush.bf16.msra.mxu0 %v6519
    %7820 = vmatpush.bf16.msra.mxu0 %v6515
    %7821 = vmatpush.bf16.msra.mxu0 %v6511
    %7822 = vmatpush.bf16.msra.mxu0 %v6507
    %7823 = vmatmul.bf16.gmra.mxu0 %v4152
    %v7824 = vpop.f32.mrf.mxu0
    %v7825 = vadd.f32 %v7811, %v7824
    %v7826 = vpop.f32.mrf.mxu0
    %v7827 = vadd.f32 %v7813, %v7826
    %7828 = vdwg.mxu0
    %7829 = vmatpush.bf16.msra.mxu0 %v6567
    %7830 = vmatpush.bf16.msra.mxu0 %v6563
    %7831 = vmatpush.bf16.msra.mxu0 %v6559
    %7832 = vmatpush.bf16.msra.mxu0 %v6555
    %7833 = vmatpush.bf16.msra.mxu0 %v6551
    %7834 = vmatpush.bf16.msra.mxu0 %v6547
    %7835 = vmatpush.bf16.msra.mxu0 %v6543
    %7836 = vmatpush.bf16.msra.mxu0 %v6539
    %7837 = vmatmul.bf16.gmra.mxu0 %v4153
    %v7838 = vpop.f32.mrf.mxu0
    %v7839 = vadd.f32 %v7825, %v7838
    %v7840 = vpop.f32.mrf.mxu0
    %v7841 = vadd.f32 %v7827, %v7840
    %7842 = vdwg.mxu0
    %7843 = vmatpush.bf16.msra.mxu0 %v6599
    %7844 = vmatpush.bf16.msra.mxu0 %v6595
    %7845 = vmatpush.bf16.msra.mxu0 %v6591
    %7846 = vmatpush.bf16.msra.mxu0 %v6587
    %7847 = vmatpush.bf16.msra.mxu0 %v6583
    %7848 = vmatpush.bf16.msra.mxu0 %v6579
    %7849 = vmatpush.bf16.msra.mxu0 %v6575
    %7850 = vmatpush.bf16.msra.mxu0 %v6571
    %7851 = vmatmul.bf16.gmra.mxu0 %v4154
    %v7852 = vpop.f32.mrf.mxu0
    %v7853 = vadd.f32 %v7839, %v7852
    %v7854 = vpop.f32.mrf.mxu0
    %v7855 = vadd.f32 %v7841, %v7854
    %7856 = vdwg.mxu0
    %7857 = vmatpush.bf16.msra.mxu0 %v6631
    %7858 = vmatpush.bf16.msra.mxu0 %v6627
    %7859 = vmatpush.bf16.msra.mxu0 %v6623
    %7860 = vmatpush.bf16.msra.mxu0 %v6619
    %7861 = vmatpush.bf16.msra.mxu0 %v6615
    %7862 = vmatpush.bf16.msra.mxu0 %v6611
    %7863 = vmatpush.bf16.msra.mxu0 %v6607
    %7864 = vmatpush.bf16.msra.mxu0 %v6603
    %7865 = vmatmul.bf16.gmra.mxu0 %v4155
    %v7866 = vpop.f32.mrf.mxu0
    %v7867 = vadd.f32 %v7853, %v7866
    %v7868 = vpop.f32.mrf.mxu0
    %v7869 = vadd.f32 %v7855, %v7868
    %7870 = vdwg.mxu0
    %7871 = vmatpush.bf16.msra.mxu0 %v6663
    %7872 = vmatpush.bf16.msra.mxu0 %v6659
    %7873 = vmatpush.bf16.msra.mxu0 %v6655
    %7874 = vmatpush.bf16.msra.mxu0 %v6651
    %7875 = vmatpush.bf16.msra.mxu0 %v6647
    %7876 = vmatpush.bf16.msra.mxu0 %v6643
    %7877 = vmatpush.bf16.msra.mxu0 %v6639
    %7878 = vmatpush.bf16.msra.mxu0 %v6635
    %7879 = vmatmul.bf16.gmra.mxu0 %v4156
    %v7880 = vpop.f32.mrf.mxu0
    %v7881 = vadd.f32 %v7867, %v7880
    %v7882 = vpop.f32.mrf.mxu0
    %v7883 = vadd.f32 %v7869, %v7882
    %7884 = vdwg.mxu0
    %7885 = vmatpush.bf16.msra.mxu0 %v6695
    %7886 = vmatpush.bf16.msra.mxu0 %v6691
    %7887 = vmatpush.bf16.msra.mxu0 %v6687
    %7888 = vmatpush.bf16.msra.mxu0 %v6683
    %7889 = vmatpush.bf16.msra.mxu0 %v6679
    %7890 = vmatpush.bf16.msra.mxu0 %v6675
    %7891 = vmatpush.bf16.msra.mxu0 %v6671
    %7892 = vmatpush.bf16.msra.mxu0 %v6667
    %7893 = vmatmul.bf16.gmra.mxu0 %v4157
    %v7894 = vpop.f32.mrf.mxu0
    %v7895 = vadd.f32 %v7881, %v7894
    %v7896 = vpop.f32.mrf.mxu0
    %v7897 = vadd.f32 %v7883, %v7896
    %7898 = vdwg.mxu0
    %7899 = vmatpush.bf16.msra.mxu0 %v6727
    %7900 = vmatpush.bf16.msra.mxu0 %v6723
    %7901 = vmatpush.bf16.msra.mxu0 %v6719
    %7902 = vmatpush.bf16.msra.mxu0 %v6715
    %7903 = vmatpush.bf16.msra.mxu0 %v6711
    %7904 = vmatpush.bf16.msra.mxu0 %v6707
    %7905 = vmatpush.bf16.msra.mxu0 %v6703
    %7906 = vmatpush.bf16.msra.mxu0 %v6699
    %7907 = vmatmul.bf16.gmra.mxu0 %v4158
    %v7908 = vpop.f32.mrf.mxu0
    %v7909 = vadd.f32 %v7895, %v7908
    %v7910 = vpop.f32.mrf.mxu0
    %v7911 = vadd.f32 %v7897, %v7910
    %7912 = vdwg.mxu0
    %7913 = vmatpush.bf16.msra.mxu0 %v6248
    %7914 = vmatpush.bf16.msra.mxu0 %v6244
    %7915 = vmatpush.bf16.msra.mxu0 %v6240
    %7916 = vmatpush.bf16.msra.mxu0 %v6236
    %7917 = vmatpush.bf16.msra.mxu0 %v6232
    %7918 = vmatpush.bf16.msra.mxu0 %v6228
    %7919 = vmatpush.bf16.msra.mxu0 %v6224
    %7920 = vmatpush.bf16.msra.mxu0 %v6220
    %7921 = vmatmul.bf16.gmra.mxu0 %v4143
    %v7922 = vpop.f32.mrf.mxu0
    %v7923 = vadd.f32 %v4676, %v7922
    %v7924 = vpop.f32.mrf.mxu0
    %v7925 = vadd.f32 %v4676, %v7924
    %7926 = vdwg.mxu0
    %7927 = vmatpush.bf16.msra.mxu0 %v6280
    %7928 = vmatpush.bf16.msra.mxu0 %v6276
    %7929 = vmatpush.bf16.msra.mxu0 %v6272
    %7930 = vmatpush.bf16.msra.mxu0 %v6268
    %7931 = vmatpush.bf16.msra.mxu0 %v6264
    %7932 = vmatpush.bf16.msra.mxu0 %v6260
    %7933 = vmatpush.bf16.msra.mxu0 %v6256
    %7934 = vmatpush.bf16.msra.mxu0 %v6252
    %7935 = vmatmul.bf16.gmra.mxu0 %v4144
    %v7936 = vpop.f32.mrf.mxu0
    %v7937 = vadd.f32 %v7923, %v7936
    %v7938 = vpop.f32.mrf.mxu0
    %v7939 = vadd.f32 %v7925, %v7938
    %7940 = vdwg.mxu0
    %7941 = vmatpush.bf16.msra.mxu0 %v6312
    %7942 = vmatpush.bf16.msra.mxu0 %v6308
    %7943 = vmatpush.bf16.msra.mxu0 %v6304
    %7944 = vmatpush.bf16.msra.mxu0 %v6300
    %7945 = vmatpush.bf16.msra.mxu0 %v6296
    %7946 = vmatpush.bf16.msra.mxu0 %v6292
    %7947 = vmatpush.bf16.msra.mxu0 %v6288
    %7948 = vmatpush.bf16.msra.mxu0 %v6284
    %7949 = vmatmul.bf16.gmra.mxu0 %v4145
    %v7950 = vpop.f32.mrf.mxu0
    %v7951 = vadd.f32 %v7937, %v7950
    %v7952 = vpop.f32.mrf.mxu0
    %v7953 = vadd.f32 %v7939, %v7952
    %7954 = vdwg.mxu0
    %7955 = vmatpush.bf16.msra.mxu0 %v6344
    %7956 = vmatpush.bf16.msra.mxu0 %v6340
    %7957 = vmatpush.bf16.msra.mxu0 %v6336
    %7958 = vmatpush.bf16.msra.mxu0 %v6332
    %7959 = vmatpush.bf16.msra.mxu0 %v6328
    %7960 = vmatpush.bf16.msra.mxu0 %v6324
    %7961 = vmatpush.bf16.msra.mxu0 %v6320
    %7962 = vmatpush.bf16.msra.mxu0 %v6316
    %7963 = vmatmul.bf16.gmra.mxu0 %v4146
    %v7964 = vpop.f32.mrf.mxu0
    %v7965 = vadd.f32 %v7951, %v7964
    %v7966 = vpop.f32.mrf.mxu0
    %v7967 = vadd.f32 %v7953, %v7966
    %7968 = vdwg.mxu0
    %7969 = vmatpush.bf16.msra.mxu0 %v6376
    %7970 = vmatpush.bf16.msra.mxu0 %v6372
    %7971 = vmatpush.bf16.msra.mxu0 %v6368
    %7972 = vmatpush.bf16.msra.mxu0 %v6364
    %7973 = vmatpush.bf16.msra.mxu0 %v6360
    %7974 = vmatpush.bf16.msra.mxu0 %v6356
    %7975 = vmatpush.bf16.msra.mxu0 %v6352
    %7976 = vmatpush.bf16.msra.mxu0 %v6348
    %7977 = vmatmul.bf16.gmra.mxu0 %v4147
    %v7978 = vpop.f32.mrf.mxu0
    %v7979 = vadd.f32 %v7965, %v7978
    %v7980 = vpop.f32.mrf.mxu0
    %v7981 = vadd.f32 %v7967, %v7980
    %7982 = vdwg.mxu0
    %7983 = vmatpush.bf16.msra.mxu0 %v6408
    %7984 = vmatpush.bf16.msra.mxu0 %v6404
    %7985 = vmatpush.bf16.msra.mxu0 %v6400
    %7986 = vmatpush.bf16.msra.mxu0 %v6396
    %7987 = vmatpush.bf16.msra.mxu0 %v6392
    %7988 = vmatpush.bf16.msra.mxu0 %v6388
    %7989 = vmatpush.bf16.msra.mxu0 %v6384
    %7990 = vmatpush.bf16.msra.mxu0 %v6380
    %7991 = vmatmul.bf16.gmra.mxu0 %v4148
    %v7992 = vpop.f32.mrf.mxu0
    %v7993 = vadd.f32 %v7979, %v7992
    %v7994 = vpop.f32.mrf.mxu0
    %v7995 = vadd.f32 %v7981, %v7994
    %7996 = vdwg.mxu0
    %7997 = vmatpush.bf16.msra.mxu0 %v6440
    %7998 = vmatpush.bf16.msra.mxu0 %v6436
    %7999 = vmatpush.bf16.msra.mxu0 %v6432
    %8000 = vmatpush.bf16.msra.mxu0 %v6428
    %8001 = vmatpush.bf16.msra.mxu0 %v6424
    %8002 = vmatpush.bf16.msra.mxu0 %v6420
    %8003 = vmatpush.bf16.msra.mxu0 %v6416
    %8004 = vmatpush.bf16.msra.mxu0 %v6412
    %8005 = vmatmul.bf16.gmra.mxu0 %v4149
    %v8006 = vpop.f32.mrf.mxu0
    %v8007 = vadd.f32 %v7993, %v8006
    %v8008 = vpop.f32.mrf.mxu0
    %v8009 = vadd.f32 %v7995, %v8008
    %8010 = vdwg.mxu0
    %8011 = vmatpush.bf16.msra.mxu0 %v6472
    %8012 = vmatpush.bf16.msra.mxu0 %v6468
    %8013 = vmatpush.bf16.msra.mxu0 %v6464
    %8014 = vmatpush.bf16.msra.mxu0 %v6460
    %8015 = vmatpush.bf16.msra.mxu0 %v6456
    %8016 = vmatpush.bf16.msra.mxu0 %v6452
    %8017 = vmatpush.bf16.msra.mxu0 %v6448
    %8018 = vmatpush.bf16.msra.mxu0 %v6444
    %8019 = vmatmul.bf16.gmra.mxu0 %v4150
    %v8020 = vpop.f32.mrf.mxu0
    %v8021 = vadd.f32 %v8007, %v8020
    %v8022 = vpop.f32.mrf.mxu0
    %v8023 = vadd.f32 %v8009, %v8022
    %8024 = vdwg.mxu0
    %8025 = vmatpush.bf16.msra.mxu0 %v6504
    %8026 = vmatpush.bf16.msra.mxu0 %v6500
    %8027 = vmatpush.bf16.msra.mxu0 %v6496
    %8028 = vmatpush.bf16.msra.mxu0 %v6492
    %8029 = vmatpush.bf16.msra.mxu0 %v6488
    %8030 = vmatpush.bf16.msra.mxu0 %v6484
    %8031 = vmatpush.bf16.msra.mxu0 %v6480
    %8032 = vmatpush.bf16.msra.mxu0 %v6476
    %8033 = vmatmul.bf16.gmra.mxu0 %v4151
    %v8034 = vpop.f32.mrf.mxu0
    %v8035 = vadd.f32 %v8021, %v8034
    %v8036 = vpop.f32.mrf.mxu0
    %v8037 = vadd.f32 %v8023, %v8036
    %8038 = vdwg.mxu0
    %8039 = vmatpush.bf16.msra.mxu0 %v6536
    %8040 = vmatpush.bf16.msra.mxu0 %v6532
    %8041 = vmatpush.bf16.msra.mxu0 %v6528
    %8042 = vmatpush.bf16.msra.mxu0 %v6524
    %8043 = vmatpush.bf16.msra.mxu0 %v6520
    %8044 = vmatpush.bf16.msra.mxu0 %v6516
    %8045 = vmatpush.bf16.msra.mxu0 %v6512
    %8046 = vmatpush.bf16.msra.mxu0 %v6508
    %8047 = vmatmul.bf16.gmra.mxu0 %v4152
    %v8048 = vpop.f32.mrf.mxu0
    %v8049 = vadd.f32 %v8035, %v8048
    %v8050 = vpop.f32.mrf.mxu0
    %v8051 = vadd.f32 %v8037, %v8050
    %8052 = vdwg.mxu0
    %8053 = vmatpush.bf16.msra.mxu0 %v6568
    %8054 = vmatpush.bf16.msra.mxu0 %v6564
    %8055 = vmatpush.bf16.msra.mxu0 %v6560
    %8056 = vmatpush.bf16.msra.mxu0 %v6556
    %8057 = vmatpush.bf16.msra.mxu0 %v6552
    %8058 = vmatpush.bf16.msra.mxu0 %v6548
    %8059 = vmatpush.bf16.msra.mxu0 %v6544
    %8060 = vmatpush.bf16.msra.mxu0 %v6540
    %8061 = vmatmul.bf16.gmra.mxu0 %v4153
    %v8062 = vpop.f32.mrf.mxu0
    %v8063 = vadd.f32 %v8049, %v8062
    %v8064 = vpop.f32.mrf.mxu0
    %v8065 = vadd.f32 %v8051, %v8064
    %8066 = vdwg.mxu0
    %8067 = vmatpush.bf16.msra.mxu0 %v6600
    %8068 = vmatpush.bf16.msra.mxu0 %v6596
    %8069 = vmatpush.bf16.msra.mxu0 %v6592
    %8070 = vmatpush.bf16.msra.mxu0 %v6588
    %8071 = vmatpush.bf16.msra.mxu0 %v6584
    %8072 = vmatpush.bf16.msra.mxu0 %v6580
    %8073 = vmatpush.bf16.msra.mxu0 %v6576
    %8074 = vmatpush.bf16.msra.mxu0 %v6572
    %8075 = vmatmul.bf16.gmra.mxu0 %v4154
    %v8076 = vpop.f32.mrf.mxu0
    %v8077 = vadd.f32 %v8063, %v8076
    %v8078 = vpop.f32.mrf.mxu0
    %v8079 = vadd.f32 %v8065, %v8078
    %8080 = vdwg.mxu0
    %8081 = vmatpush.bf16.msra.mxu0 %v6632
    %8082 = vmatpush.bf16.msra.mxu0 %v6628
    %8083 = vmatpush.bf16.msra.mxu0 %v6624
    %8084 = vmatpush.bf16.msra.mxu0 %v6620
    %8085 = vmatpush.bf16.msra.mxu0 %v6616
    %8086 = vmatpush.bf16.msra.mxu0 %v6612
    %8087 = vmatpush.bf16.msra.mxu0 %v6608
    %8088 = vmatpush.bf16.msra.mxu0 %v6604
    %8089 = vmatmul.bf16.gmra.mxu0 %v4155
    %v8090 = vpop.f32.mrf.mxu0
    %v8091 = vadd.f32 %v8077, %v8090
    %v8092 = vpop.f32.mrf.mxu0
    %v8093 = vadd.f32 %v8079, %v8092
    %8094 = vdwg.mxu0
    %8095 = vmatpush.bf16.msra.mxu0 %v6664
    %8096 = vmatpush.bf16.msra.mxu0 %v6660
    %8097 = vmatpush.bf16.msra.mxu0 %v6656
    %8098 = vmatpush.bf16.msra.mxu0 %v6652
    %8099 = vmatpush.bf16.msra.mxu0 %v6648
    %8100 = vmatpush.bf16.msra.mxu0 %v6644
    %8101 = vmatpush.bf16.msra.mxu0 %v6640
    %8102 = vmatpush.bf16.msra.mxu0 %v6636
    %8103 = vmatmul.bf16.gmra.mxu0 %v4156
    %v8104 = vpop.f32.mrf.mxu0
    %v8105 = vadd.f32 %v8091, %v8104
    %v8106 = vpop.f32.mrf.mxu0
    %v8107 = vadd.f32 %v8093, %v8106
    %8108 = vdwg.mxu0
    %8109 = vmatpush.bf16.msra.mxu0 %v6696
    %8110 = vmatpush.bf16.msra.mxu0 %v6692
    %8111 = vmatpush.bf16.msra.mxu0 %v6688
    %8112 = vmatpush.bf16.msra.mxu0 %v6684
    %8113 = vmatpush.bf16.msra.mxu0 %v6680
    %8114 = vmatpush.bf16.msra.mxu0 %v6676
    %8115 = vmatpush.bf16.msra.mxu0 %v6672
    %8116 = vmatpush.bf16.msra.mxu0 %v6668
    %8117 = vmatmul.bf16.gmra.mxu0 %v4157
    %v8118 = vpop.f32.mrf.mxu0
    %v8119 = vadd.f32 %v8105, %v8118
    %v8120 = vpop.f32.mrf.mxu0
    %v8121 = vadd.f32 %v8107, %v8120
    %8122 = vdwg.mxu0
    %8123 = vmatpush.bf16.msra.mxu0 %v6728
    %8124 = vmatpush.bf16.msra.mxu0 %v6724
    %8125 = vmatpush.bf16.msra.mxu0 %v6720
    %8126 = vmatpush.bf16.msra.mxu0 %v6716
    %8127 = vmatpush.bf16.msra.mxu0 %v6712
    %8128 = vmatpush.bf16.msra.mxu0 %v6708
    %8129 = vmatpush.bf16.msra.mxu0 %v6704
    %8130 = vmatpush.bf16.msra.mxu0 %v6700
    %8131 = vmatmul.bf16.gmra.mxu0 %v4158
    %v8132 = vpop.f32.mrf.mxu0
    %v8133 = vadd.f32 %v8119, %v8132
    %v8134 = vpop.f32.mrf.mxu0
    %v8135 = vadd.f32 %v8121, %v8134
    %8136 = vdwg.mxu0
    %8137 = vst [vmem:[#allocation11] sm:$0xff] %v7461
    %8138 = vst [vmem:[#allocation11 + $0x8] sm:$0xff] %v7685
    %8139 = vst [vmem:[#allocation11 + $0x10] sm:$0xff] %v7909
    %8140 = vst [vmem:[#allocation11 + $0x18] sm:$0xff] %v8133
    %8141 = vst [vmem:[#allocation11 + $0x20] sm:$0xff] %v7463
    %8142 = vst [vmem:[#allocation11 + $0x28] sm:$0xff] %v7687
    %8143 = vst [vmem:[#allocation11 + $0x30] sm:$0xff] %v7911
    %8144 = vst [vmem:[#allocation11 + $0x38] sm:$0xff] %v8135
    // Predicated region
    $region42: #{feed_forward.1} parent=1 // pred_check
      _
    $region43: #{feed_forward.1} parent=1 // pred_check_branch
      %8146 = sbr.rel (0) target = $region45
    $region44: #{feed_forward.1} parent=1 // pred_region
      %8148 = vsyncadd [#allocation4], 0
      %s8149 = sshll.u32 [#allocation11], 4
      %s8150 = int_to_ptr.vmem [resolvable:$true] %s8149
      %s8151 = sshll.u32 %s5, 4
      %s8152 = int_to_ptr.hbm [resolvable:$true] %s8151
      %8157 = dma.vmem_to_hbm [thread:$0]  %s8150, 1024, %s8152, [#allocation4], 512, 512, 32
    $region45: #{feed_forward.1} parent=1 // pred_fallthru
      _
    // Predicated region
    $region46: #{feed_forward.1} parent=1 // pred_check
      _
    $region47: #{feed_forward.1} parent=1 // pred_check_branch
      %8159 = sbr.rel (0) target = $region49
    $region48: #{feed_forward.1} parent=1 // pred_region
      %8161 = dma.done [#allocation4], 1024
    $region49: #{feed_forward.1} parent=1 // pred_fallthru
      _
    %8162 = vsyncpa [#allocation3], 1
    %8163 = vsyncpa [#allocation6], 1
    %8164 = vsyncpa [#allocation9], 1
    %8165 = vsyncpa [#allocation4], 1

</llo_original>
